<compile_context>
chip_gen: v7x
topology: tpu7x:2x2x1
jax: 0.10.0
libtpu: 0.0.40
codegen_flags: <defaults>
</compile_context>

<pallas_src>
import math

import jax
import jax.numpy as jnp
from jax import lax
from jax.experimental import pallas as pl
from jax.experimental.pallas import tpu as pltpu


def _round_up(x, m):
    return ((x + m - 1) // m) * m


def _pad2d(a, shape):
    """Zero-pad a 2-D array up to `shape`."""
    pads = [(0, s - d) for d, s in zip(a.shape, shape)]
    return jnp.pad(a, pads)


def _make_rnn_kernel(n_steps, batch_pad, precision):
    """Single-invocation kernel: fused input projection + serial recurrence."""

    def kernel(x_ref, wih_ref, whh_ref, b_ref, wfc_ref, bfc_ref, out_ref, xp_ref):
        # x_ref   : (n_steps*batch_pad, n_in_pad)  time-major, lane-dense X
        # wih_ref : (n_in_pad, n_pad)              W_ih^T, zero-padded
        # whh_ref : (n_pad, n_pad)                 W_hh^T, zero-padded
        # b_ref   : (1, n_pad)                     b_ih + b_hh, zero-padded (f32)
        # wfc_ref : (n_pad, n_out_pad)             W_fc^T, zero-padded
        # bfc_ref : (1, n_out_pad)                 b_fc, zero-padded (f32)
        # out_ref : (batch_pad, n_out_pad)         f32
        # xp_ref  : (n_steps*batch_pad, n_pad)     f32 scratch, fused projection
        n_pad = whh_ref.shape[0]

        # Fused, non-recurrent input projection for ALL time steps: one big
        # MXU matmul (M = n_steps*batch_pad) instead of n_steps tiny ones.
        xp_ref[...] = (
            jnp.dot(x_ref[...], wih_ref[...],
                    preferred_element_type=jnp.float32, precision=precision)
            + b_ref[...]
        )

        whh = whh_ref[...]              # loaded once; loop-invariant MXU RHS
        mm_dtype = whh.dtype

        def step(t, h):
            # Sublane-aligned slice: batch_pad % 8 == 0 by construction.
            start = pl.multiple_of(t * batch_pad, 8)
            xp_t = xp_ref[pl.ds(start, batch_pad), :]
            pre = xp_t + jnp.dot(h.astype(mm_dtype), whh,
                                 preferred_element_type=jnp.float32,
                                 precision=precision)
            return jnp.tanh(pre)

        h0 = jnp.zeros((batch_pad, n_pad), jnp.float32)
        # fori_loop carries h as a value (vregs); unroll=True keeps LLO
        # scheduler visibility for the short fixed trip count.
        h = lax.fori_loop(0, n_steps, step, h0, unroll=True)

        # FC head on the final hidden state; lane-dense (128-wide) store,
        # always written (no last-grid-step hazard: there is no grid).
        out_ref[...] = (
            jnp.dot(h.astype(wfc_ref.dtype), wfc_ref[...],
                    preferred_element_type=jnp.float32, precision=precision)
            + bfc_ref[...]
        ).astype(out_ref.dtype)

    return kernel


def image_rnn_forward(x, params, *, use_bf16=False):
    """x: (batch, n_steps, n_inputs). Returns (batch, n_outputs) float32.

    use_bf16=True casts MXU operands to bf16 (f32 accumulation) — the v6e/v7x
    throughput path; use_bf16=False keeps f32 operands at HIGHEST precision
    (bit-comparable with an f32 HIGHEST-precision reference).
    """
    batch, n_steps, n_inputs = x.shape
    w_ih, w_hh, b_ih, b_hh, w_fc, b_fc = (
        params["w_ih"], params["w_hh"], params["b_ih"],
        params["b_hh"], params["w_fc"], params["b_fc"],
    )
    n_neurons = w_ih.shape[0]
    n_outputs = w_fc.shape[0]

    batch_pad = _round_up(batch, 8)         # sublane-align the batch dim
    n_in_pad = _round_up(n_inputs, 128)     # lane-dense contraction dim
    n_pad = _round_up(n_neurons, 128)       # lane-pad hidden dim
    n_out_pad = _round_up(n_outputs, 128)   # lane-pad output dim

    mm_dtype = jnp.bfloat16 if use_bf16 else jnp.float32
    precision = lax.Precision.DEFAULT if use_bf16 else lax.Precision.HIGHEST

    # X.permute(1,0,2), pad batch->batch_pad and n_inputs->128, then flatten to
    # (n_steps*batch_pad, n_in_pad) with row = t*batch_pad + b.  Padded batch
    # rows / input lanes are zeros and are sliced off / have no effect.
    x_tm = jnp.transpose(x.astype(jnp.float32), (1, 0, 2))
    x_tm = jnp.pad(x_tm, ((0, 0), (0, batch_pad - batch), (0, n_in_pad - n_inputs)))
    x_tm = x_tm.reshape(n_steps * batch_pad, n_in_pad).astype(mm_dtype)

    # Pre-transpose PyTorch-convention weights (kernel does x @ W) and zero-pad
    # all lane/contraction dims — exact: padded hidden lanes stay 0 through
    # tanh(0)=0 and padded output lanes are sliced off below.
    wih_p = _pad2d(w_ih.T.astype(jnp.float32), (n_in_pad, n_pad)).astype(mm_dtype)
    whh_p = _pad2d(w_hh.T.astype(jnp.float32), (n_pad, n_pad)).astype(mm_dtype)
    b_p = _pad2d((b_ih + b_hh).astype(jnp.float32)[None, :], (1, n_pad))
    wfc_p = _pad2d(w_fc.T.astype(jnp.float32), (n_pad, n_out_pad)).astype(mm_dtype)
    bfc_p = _pad2d(b_fc.astype(jnp.float32)[None, :], (1, n_out_pad))

    kernel = _make_rnn_kernel(n_steps, batch_pad, precision)
    operands = (x_tm, wih_p, whh_p, b_p, wfc_p, bfc_p)

    # Explicit scoped-VMEM budget (v5e defaults to only 16 MiB): operands + out
    # + xp scratch, with headroom, clamped to v7x's 64 MiB physical per-TC VMEM.
    vmem_needed = sum(int(math.prod(a.shape)) * a.dtype.itemsize for a in operands)
    vmem_needed += batch_pad * n_out_pad * 4                 # output block
    vmem_needed += n_steps * batch_pad * n_pad * 4           # xp scratch
    vmem_limit = int(min(max(2 * vmem_needed, 32 << 20), 64 << 20))

    out_pad = pl.pallas_call(
        kernel,
        out_shape=jax.ShapeDtypeStruct((batch_pad, n_out_pad), jnp.float32),
        # Single invocation (no grid): every operand is a whole-array VMEM
        # block, DMA'd exactly once.
        in_specs=[pl.BlockSpec(memory_space=pltpu.MemorySpace.VMEM)] * 6,
        out_specs=pl.BlockSpec(memory_space=pltpu.MemorySpace.VMEM),
        scratch_shapes=[pltpu.VMEM((n_steps * batch_pad, n_pad), jnp.float32)],
        compiler_params=pltpu.CompilerParams(vmem_limit_bytes=vmem_limit),
    )(*operands)

    # out.view(-1, n_outputs): drop batch and lane padding.
    return out_pad[:batch, :n_outputs]


def init_params(key, n_inputs, n_neurons, n_outputs):
    """Deterministic synthetic parameters matching nn.RNN / nn.Linear shapes."""
    ks = jax.random.split(key, 6)
    k_rnn = 1.0 / jnp.sqrt(n_neurons)
    k_fc = 1.0 / jnp.sqrt(n_neurons)
    return {
        "w_ih": jax.random.uniform(ks[0], (n_neurons, n_inputs), jnp.float32, -k_rnn, k_rnn),
        "w_hh": jax.random.uniform(ks[1], (n_neurons, n_neurons), jnp.float32, -k_rnn, k_rnn),
        "b_ih": jax.random.uniform(ks[2], (n_neurons,), jnp.float32, -k_rnn, k_rnn),
        "b_hh": jax.random.uniform(ks[3], (n_neurons,), jnp.float32, -k_rnn, k_rnn),
        "w_fc": jax.random.uniform(ks[4], (n_outputs, n_neurons), jnp.float32, -k_fc, k_fc),
        "b_fc": jax.random.uniform(ks[5], (n_outputs,), jnp.float32, -k_fc, k_fc),
    }


def _reference_forward(x, params):
    """Pure-JAX f32 reference (HIGHEST-precision matmuls) of the forward pass."""
    hp = lax.Precision.HIGHEST
    x_tm = jnp.transpose(x, (1, 0, 2))
    batch = x_tm.shape[1]
    h = jnp.zeros((batch, params["w_hh"].shape[0]), jnp.float32)
    for t in range(x_tm.shape[0]):
        h = jnp.tanh(
            jnp.dot(x_tm[t], params["w_ih"].T, precision=hp) + params["b_ih"]
            + jnp.dot(h, params["w_hh"].T, precision=hp) + params["b_hh"]
        )
    return jnp.dot(h, params["w_fc"].T, precision=hp) + params["b_fc"]


if __name__ == "__main__":
    # MNIST-row-scan-like small shapes: 16x16 "image" -> 16 steps of 16 inputs.
    batch, n_steps, n_inputs, n_neurons, n_outputs = 8, 16, 16, 32, 10

    key = jax.random.PRNGKey(0)
    kx, kp = jax.random.split(key)
    x = jax.random.normal(kx, (batch, n_steps, n_inputs), jnp.float32)
    params = init_params(kp, n_inputs, n_neurons, n_outputs)

    ref = _reference_forward(x, params)

    # f32 path (HIGHEST precision): exact vs the f32 reference.
    fwd = jax.jit(image_rnn_forward)
    out = jax.block_until_ready(fwd(x, params))
    assert out.shape == (batch, n_outputs)
    assert jnp.allclose(out, ref, atol=1e-5, rtol=1e-5), "f32 mismatch vs reference"

    # bf16 MXU-operand path (v6e/v7x throughput path, f32 accumulation).
    fwd_bf16 = jax.jit(lambda xx, pp: image_rnn_forward(xx, pp, use_bf16=True))
    out_bf16 = jax.block_until_ready(fwd_bf16(x, params))
    assert out_bf16.shape == (batch, n_outputs)
    assert bool(jnp.all(jnp.isfinite(out_bf16)))
    assert float(jnp.max(jnp.abs(out_bf16 - ref))) < 0.25, "bf16 path drifted too far"

    print("KERNEL_OK")
</pallas_src>

<mosaic_0001>
module attributes {stable_mosaic.version = 11 : i64} {
  func.func @kernel(%arg0: memref<128x128xf32, #tpu.memory_space<vmem>>, %arg1: memref<128x128xf32, #tpu.memory_space<vmem>>, %arg2: memref<128x128xf32, #tpu.memory_space<vmem>>, %arg3: memref<1x128xf32, #tpu.memory_space<vmem>>, %arg4: memref<128x128xf32, #tpu.memory_space<vmem>>, %arg5: memref<1x128xf32, #tpu.memory_space<vmem>>, %arg6: memref<8x128xf32, #tpu.memory_space<vmem>>, %arg7: memref<128x128xf32, #tpu.memory_space<vmem>>) attributes {dimension_semantics = [], scalar_prefetch = 0 : i64, scratch_operands = 1 : i64, tpu.core_type = #tpu.core_type<tc>} {
    %c0 = arith.constant 0 : index
    %c0_0 = arith.constant 0 : index
    %0 = vector.load %arg0[%c0, %c0_0] : memref<128x128xf32, #tpu.memory_space<vmem>>, vector<128x128xf32>
    %c0_1 = arith.constant 0 : index
    %c0_2 = arith.constant 0 : index
    %1 = vector.load %arg1[%c0_1, %c0_2] : memref<128x128xf32, #tpu.memory_space<vmem>>, vector<128x128xf32>
    %cst = arith.constant dense<0.000000e+00> : vector<128x128xf32>
    %2 = tpu.matmul %0, %1, %cst {dimension_numbers = #tpu.dot_dimension_numbers<[1], [0], [0], [1], [0, 0, 1, 1], [], []>, precision = #tpu.contract_precision<fp32>} : vector<128x128xf32>, vector<128x128xf32>, vector<128x128xf32> -> vector<128x128xf32>
    %c0_3 = arith.constant 0 : index
    %c0_4 = arith.constant 0 : index
    %3 = vector.load %arg3[%c0_3, %c0_4] : memref<1x128xf32, #tpu.memory_space<vmem>>, vector<1x128xf32>
    %4 = vector.broadcast %3 : vector<1x128xf32> to vector<128x128xf32>
    %5 = arith.addf %2, %4 : vector<128x128xf32>
    %c0_5 = arith.constant 0 : index
    %c0_6 = arith.constant 0 : index
    %6 = vector.load %arg7[%c0_5, %c0_6] : memref<128x128xf32, #tpu.memory_space<vmem>>, vector<128x128xf32>
    tpu.vector_store %arg7[%c0_5, %c0_6], %5 {strides = array<i32>} : memref<128x128xf32, #tpu.memory_space<vmem>>, vector<128x128xf32>,
    %c0_7 = arith.constant 0 : index
    %c0_8 = arith.constant 0 : index
    %7 = vector.load %arg2[%c0_7, %c0_8] : memref<128x128xf32, #tpu.memory_space<vmem>>, vector<128x128xf32>
    %cst_9 = arith.constant 0.000000e+00 : f32
    %8 = vector.broadcast %cst_9 : f32 to vector<8x128xf32>
    %c0_i32 = arith.constant 0 : i32
    %c8_i32 = arith.constant 8 : i32
    %9 = arith.muli %c0_i32, %c8_i32 : i32
    %10 = tpu.assume_multiple %9, 8 : i32
    %11 = arith.index_cast %10 : i32 to index
    %c0_10 = arith.constant 0 : index
    %12 = vector.load %arg7[%11, %c0_10] : memref<128x128xf32, #tpu.memory_space<vmem>>, vector<8x128xf32>
    %cst_11 = arith.constant dense<0.000000e+00> : vector<8x128xf32>
    %13 = tpu.matmul %8, %7, %cst_11 {dimension_numbers = #tpu.dot_dimension_numbers<[1], [0], [0], [1], [0, 0, 1, 1], [], []>, precision = #tpu.contract_precision<fp32>} : vector<8x128xf32>, vector<128x128xf32>, vector<8x128xf32> -> vector<8x128xf32>
    %14 = arith.addf %12, %13 : vector<8x128xf32>
    %15 = math.tanh %14 : vector<8x128xf32>
    %c1_i32 = arith.constant 1 : i32
    %c8_i32_12 = arith.constant 8 : i32
    %16 = arith.muli %c1_i32, %c8_i32_12 : i32
    %17 = tpu.assume_multiple %16, 8 : i32
    %18 = arith.index_cast %17 : i32 to index
    %c0_13 = arith.constant 0 : index
    %19 = vector.load %arg7[%18, %c0_13] : memref<128x128xf32, #tpu.memory_space<vmem>>, vector<8x128xf32>
    %cst_14 = arith.constant dense<0.000000e+00> : vector<8x128xf32>
    %20 = tpu.matmul %15, %7, %cst_14 {dimension_numbers = #tpu.dot_dimension_numbers<[1], [0], [0], [1], [0, 0, 1, 1], [], []>, precision = #tpu.contract_precision<fp32>} : vector<8x128xf32>, vector<128x128xf32>, vector<8x128xf32> -> vector<8x128xf32>
    %21 = arith.addf %19, %20 : vector<8x128xf32>
    %22 = math.tanh %21 : vector<8x128xf32>
    %c2_i32 = arith.constant 2 : i32
    %c8_i32_15 = arith.constant 8 : i32
    %23 = arith.muli %c2_i32, %c8_i32_15 : i32
    %24 = tpu.assume_multiple %23, 8 : i32
    %25 = arith.index_cast %24 : i32 to index
    %c0_16 = arith.constant 0 : index
    %26 = vector.load %arg7[%25, %c0_16] : memref<128x128xf32, #tpu.memory_space<vmem>>, vector<8x128xf32>
    %cst_17 = arith.constant dense<0.000000e+00> : vector<8x128xf32>
    %27 = tpu.matmul %22, %7, %cst_17 {dimension_numbers = #tpu.dot_dimension_numbers<[1], [0], [0], [1], [0, 0, 1, 1], [], []>, precision = #tpu.contract_precision<fp32>} : vector<8x128xf32>, vector<128x128xf32>, vector<8x128xf32> -> vector<8x128xf32>
    %28 = arith.addf %26, %27 : vector<8x128xf32>
    %29 = math.tanh %28 : vector<8x128xf32>
    %c3_i32 = arith.constant 3 : i32
    %c8_i32_18 = arith.constant 8 : i32
    %30 = arith.muli %c3_i32, %c8_i32_18 : i32
    %31 = tpu.assume_multiple %30, 8 : i32
    %32 = arith.index_cast %31 : i32 to index
    %c0_19 = arith.constant 0 : index
    %33 = vector.load %arg7[%32, %c0_19] : memref<128x128xf32, #tpu.memory_space<vmem>>, vector<8x128xf32>
    %cst_20 = arith.constant dense<0.000000e+00> : vector<8x128xf32>
    %34 = tpu.matmul %29, %7, %cst_20 {dimension_numbers = #tpu.dot_dimension_numbers<[1], [0], [0], [1], [0, 0, 1, 1], [], []>, precision = #tpu.contract_precision<fp32>} : vector<8x128xf32>, vector<128x128xf32>, vector<8x128xf32> -> vector<8x128xf32>
    %35 = arith.addf %33, %34 : vector<8x128xf32>
    %36 = math.tanh %35 : vector<8x128xf32>
    %c4_i32 = arith.constant 4 : i32
    %c8_i32_21 = arith.constant 8 : i32
    %37 = arith.muli %c4_i32, %c8_i32_21 : i32
    %38 = tpu.assume_multiple %37, 8 : i32
    %39 = arith.index_cast %38 : i32 to index
    %c0_22 = arith.constant 0 : index
    %40 = vector.load %arg7[%39, %c0_22] : memref<128x128xf32, #tpu.memory_space<vmem>>, vector<8x128xf32>
    %cst_23 = arith.constant dense<0.000000e+00> : vector<8x128xf32>
    %41 = tpu.matmul %36, %7, %cst_23 {dimension_numbers = #tpu.dot_dimension_numbers<[1], [0], [0], [1], [0, 0, 1, 1], [], []>, precision = #tpu.contract_precision<fp32>} : vector<8x128xf32>, vector<128x128xf32>, vector<8x128xf32> -> vector<8x128xf32>
    %42 = arith.addf %40, %41 : vector<8x128xf32>
    %43 = math.tanh %42 : vector<8x128xf32>
    %c5_i32 = arith.constant 5 : i32
    %c8_i32_24 = arith.constant 8 : i32
    %44 = arith.muli %c5_i32, %c8_i32_24 : i32
    %45 = tpu.assume_multiple %44, 8 : i32
    %46 = arith.index_cast %45 : i32 to index
    %c0_25 = arith.constant 0 : index
    %47 = vector.load %arg7[%46, %c0_25] : memref<128x128xf32, #tpu.memory_space<vmem>>, vector<8x128xf32>
    %cst_26 = arith.constant dense<0.000000e+00> : vector<8x128xf32>
    %48 = tpu.matmul %43, %7, %cst_26 {dimension_numbers = #tpu.dot_dimension_numbers<[1], [0], [0], [1], [0, 0, 1, 1], [], []>, precision = #tpu.contract_precision<fp32>} : vector<8x128xf32>, vector<128x128xf32>, vector<8x128xf32> -> vector<8x128xf32>
    %49 = arith.addf %47, %48 : vector<8x128xf32>
    %50 = math.tanh %49 : vector<8x128xf32>
    %c6_i32 = arith.constant 6 : i32
    %c8_i32_27 = arith.constant 8 : i32
    %51 = arith.muli %c6_i32, %c8_i32_27 : i32
    %52 = tpu.assume_multiple %51, 8 : i32
    %53 = arith.index_cast %52 : i32 to index
    %c0_28 = arith.constant 0 : index
    %54 = vector.load %arg7[%53, %c0_28] : memref<128x128xf32, #tpu.memory_space<vmem>>, vector<8x128xf32>
    %cst_29 = arith.constant dense<0.000000e+00> : vector<8x128xf32>
    %55 = tpu.matmul %50, %7, %cst_29 {dimension_numbers = #tpu.dot_dimension_numbers<[1], [0], [0], [1], [0, 0, 1, 1], [], []>, precision = #tpu.contract_precision<fp32>} : vector<8x128xf32>, vector<128x128xf32>, vector<8x128xf32> -> vector<8x128xf32>
    %56 = arith.addf %54, %55 : vector<8x128xf32>
    %57 = math.tanh %56 : vector<8x128xf32>
    %c7_i32 = arith.constant 7 : i32
    %c8_i32_30 = arith.constant 8 : i32
    %58 = arith.muli %c7_i32, %c8_i32_30 : i32
    %59 = tpu.assume_multiple %58, 8 : i32
    %60 = arith.index_cast %59 : i32 to index
    %c0_31 = arith.constant 0 : index
    %61 = vector.load %arg7[%60, %c0_31] : memref<128x128xf32, #tpu.memory_space<vmem>>, vector<8x128xf32>
    %cst_32 = arith.constant dense<0.000000e+00> : vector<8x128xf32>
    %62 = tpu.matmul %57, %7, %cst_32 {dimension_numbers = #tpu.dot_dimension_numbers<[1], [0], [0], [1], [0, 0, 1, 1], [], []>, precision = #tpu.contract_precision<fp32>} : vector<8x128xf32>, vector<128x128xf32>, vector<8x128xf32> -> vector<8x128xf32>
    %63 = arith.addf %61, %62 : vector<8x128xf32>
    %64 = math.tanh %63 : vector<8x128xf32>
    %c8_i32_33 = arith.constant 8 : i32
    %c8_i32_34 = arith.constant 8 : i32
    %65 = arith.muli %c8_i32_33, %c8_i32_34 : i32
    %66 = tpu.assume_multiple %65, 8 : i32
    %67 = arith.index_cast %66 : i32 to index
    %c0_35 = arith.constant 0 : index
    %68 = vector.load %arg7[%67, %c0_35] : memref<128x128xf32, #tpu.memory_space<vmem>>, vector<8x128xf32>
    %cst_36 = arith.constant dense<0.000000e+00> : vector<8x128xf32>
    %69 = tpu.matmul %64, %7, %cst_36 {dimension_numbers = #tpu.dot_dimension_numbers<[1], [0], [0], [1], [0, 0, 1, 1], [], []>, precision = #tpu.contract_precision<fp32>} : vector<8x128xf32>, vector<128x128xf32>, vector<8x128xf32> -> vector<8x128xf32>
    %70 = arith.addf %68, %69 : vector<8x128xf32>
    %71 = math.tanh %70 : vector<8x128xf32>
    %c9_i32 = arith.constant 9 : i32
    %c8_i32_37 = arith.constant 8 : i32
    %72 = arith.muli %c9_i32, %c8_i32_37 : i32
    %73 = tpu.assume_multiple %72, 8 : i32
    %74 = arith.index_cast %73 : i32 to index
    %c0_38 = arith.constant 0 : index
    %75 = vector.load %arg7[%74, %c0_38] : memref<128x128xf32, #tpu.memory_space<vmem>>, vector<8x128xf32>
    %cst_39 = arith.constant dense<0.000000e+00> : vector<8x128xf32>
    %76 = tpu.matmul %71, %7, %cst_39 {dimension_numbers = #tpu.dot_dimension_numbers<[1], [0], [0], [1], [0, 0, 1, 1], [], []>, precision = #tpu.contract_precision<fp32>} : vector<8x128xf32>, vector<128x128xf32>, vector<8x128xf32> -> vector<8x128xf32>
    %77 = arith.addf %75, %76 : vector<8x128xf32>
    %78 = math.tanh %77 : vector<8x128xf32>
    %c10_i32 = arith.constant 10 : i32
    %c8_i32_40 = arith.constant 8 : i32
    %79 = arith.muli %c10_i32, %c8_i32_40 : i32
    %80 = tpu.assume_multiple %79, 8 : i32
    %81 = arith.index_cast %80 : i32 to index
    %c0_41 = arith.constant 0 : index
    %82 = vector.load %arg7[%81, %c0_41] : memref<128x128xf32, #tpu.memory_space<vmem>>, vector<8x128xf32>
    %cst_42 = arith.constant dense<0.000000e+00> : vector<8x128xf32>
    %83 = tpu.matmul %78, %7, %cst_42 {dimension_numbers = #tpu.dot_dimension_numbers<[1], [0], [0], [1], [0, 0, 1, 1], [], []>, precision = #tpu.contract_precision<fp32>} : vector<8x128xf32>, vector<128x128xf32>, vector<8x128xf32> -> vector<8x128xf32>
    %84 = arith.addf %82, %83 : vector<8x128xf32>
    %85 = math.tanh %84 : vector<8x128xf32>
    %c11_i32 = arith.constant 11 : i32
    %c8_i32_43 = arith.constant 8 : i32
    %86 = arith.muli %c11_i32, %c8_i32_43 : i32
    %87 = tpu.assume_multiple %86, 8 : i32
    %88 = arith.index_cast %87 : i32 to index
    %c0_44 = arith.constant 0 : index
    %89 = vector.load %arg7[%88, %c0_44] : memref<128x128xf32, #tpu.memory_space<vmem>>, vector<8x128xf32>
    %cst_45 = arith.constant dense<0.000000e+00> : vector<8x128xf32>
    %90 = tpu.matmul %85, %7, %cst_45 {dimension_numbers = #tpu.dot_dimension_numbers<[1], [0], [0], [1], [0, 0, 1, 1], [], []>, precision = #tpu.contract_precision<fp32>} : vector<8x128xf32>, vector<128x128xf32>, vector<8x128xf32> -> vector<8x128xf32>
    %91 = arith.addf %89, %90 : vector<8x128xf32>
    %92 = math.tanh %91 : vector<8x128xf32>
    %c12_i32 = arith.constant 12 : i32
    %c8_i32_46 = arith.constant 8 : i32
    %93 = arith.muli %c12_i32, %c8_i32_46 : i32
    %94 = tpu.assume_multiple %93, 8 : i32
    %95 = arith.index_cast %94 : i32 to index
    %c0_47 = arith.constant 0 : index
    %96 = vector.load %arg7[%95, %c0_47] : memref<128x128xf32, #tpu.memory_space<vmem>>, vector<8x128xf32>
    %cst_48 = arith.constant dense<0.000000e+00> : vector<8x128xf32>
    %97 = tpu.matmul %92, %7, %cst_48 {dimension_numbers = #tpu.dot_dimension_numbers<[1], [0], [0], [1], [0, 0, 1, 1], [], []>, precision = #tpu.contract_precision<fp32>} : vector<8x128xf32>, vector<128x128xf32>, vector<8x128xf32> -> vector<8x128xf32>
    %98 = arith.addf %96, %97 : vector<8x128xf32>
    %99 = math.tanh %98 : vector<8x128xf32>
    %c13_i32 = arith.constant 13 : i32
    %c8_i32_49 = arith.constant 8 : i32
    %100 = arith.muli %c13_i32, %c8_i32_49 : i32
    %101 = tpu.assume_multiple %100, 8 : i32
    %102 = arith.index_cast %101 : i32 to index
    %c0_50 = arith.constant 0 : index
    %103 = vector.load %arg7[%102, %c0_50] : memref<128x128xf32, #tpu.memory_space<vmem>>, vector<8x128xf32>
    %cst_51 = arith.constant dense<0.000000e+00> : vector<8x128xf32>
    %104 = tpu.matmul %99, %7, %cst_51 {dimension_numbers = #tpu.dot_dimension_numbers<[1], [0], [0], [1], [0, 0, 1, 1], [], []>, precision = #tpu.contract_precision<fp32>} : vector<8x128xf32>, vector<128x128xf32>, vector<8x128xf32> -> vector<8x128xf32>
    %105 = arith.addf %103, %104 : vector<8x128xf32>
    %106 = math.tanh %105 : vector<8x128xf32>
    %c14_i32 = arith.constant 14 : i32
    %c8_i32_52 = arith.constant 8 : i32
    %107 = arith.muli %c14_i32, %c8_i32_52 : i32
    %108 = tpu.assume_multiple %107, 8 : i32
    %109 = arith.index_cast %108 : i32 to index
    %c0_53 = arith.constant 0 : index
    %110 = vector.load %arg7[%109, %c0_53] : memref<128x128xf32, #tpu.memory_space<vmem>>, vector<8x128xf32>
    %cst_54 = arith.constant dense<0.000000e+00> : vector<8x128xf32>
    %111 = tpu.matmul %106, %7, %cst_54 {dimension_numbers = #tpu.dot_dimension_numbers<[1], [0], [0], [1], [0, 0, 1, 1], [], []>, precision = #tpu.contract_precision<fp32>} : vector<8x128xf32>, vector<128x128xf32>, vector<8x128xf32> -> vector<8x128xf32>
    %112 = arith.addf %110, %111 : vector<8x128xf32>
    %113 = math.tanh %112 : vector<8x128xf32>
    %c15_i32 = arith.constant 15 : i32
    %c8_i32_55 = arith.constant 8 : i32
    %114 = arith.muli %c15_i32, %c8_i32_55 : i32
    %115 = tpu.assume_multiple %114, 8 : i32
    %116 = arith.index_cast %115 : i32 to index
    %c0_56 = arith.constant 0 : index
    %117 = vector.load %arg7[%116, %c0_56] : memref<128x128xf32, #tpu.memory_space<vmem>>, vector<8x128xf32>
    %cst_57 = arith.constant dense<0.000000e+00> : vector<8x128xf32>
    %118 = tpu.matmul %113, %7, %cst_57 {dimension_numbers = #tpu.dot_dimension_numbers<[1], [0], [0], [1], [0, 0, 1, 1], [], []>, precision = #tpu.contract_precision<fp32>} : vector<8x128xf32>, vector<128x128xf32>, vector<8x128xf32> -> vector<8x128xf32>
    %119 = arith.addf %117, %118 : vector<8x128xf32>
    %120 = math.tanh %119 : vector<8x128xf32>
    %c16_i32 = arith.constant 16 : i32
    %c0_58 = arith.constant 0 : index
    %c0_59 = arith.constant 0 : index
    %121 = vector.load %arg4[%c0_58, %c0_59] : memref<128x128xf32, #tpu.memory_space<vmem>>, vector<128x128xf32>
    %cst_60 = arith.constant dense<0.000000e+00> : vector<8x128xf32>
    %122 = tpu.matmul %120, %121, %cst_60 {dimension_numbers = #tpu.dot_dimension_numbers<[1], [0], [0], [1], [0, 0, 1, 1], [], []>, precision = #tpu.contract_precision<fp32>} : vector<8x128xf32>, vector<128x128xf32>, vector<8x128xf32> -> vector<8x128xf32>
    %c0_61 = arith.constant 0 : index
    %c0_62 = arith.constant 0 : index
    %123 = vector.load %arg5[%c0_61, %c0_62] : memref<1x128xf32, #tpu.memory_space<vmem>>, vector<1x128xf32>
    %124 = vector.broadcast %123 : vector<1x128xf32> to vector<8x128xf32>
    %125 = arith.addf %122, %124 : vector<8x128xf32>
    %c0_63 = arith.constant 0 : index
    %c0_64 = arith.constant 0 : index
    %126 = vector.load %arg6[%c0_63, %c0_64] : memref<8x128xf32, #tpu.memory_space<vmem>>, vector<8x128xf32>
    tpu.vector_store %arg6[%c0_63, %c0_64], %125 {strides = array<i32>} : memref<8x128xf32, #tpu.memory_space<vmem>>, vector<8x128xf32>,
    return
  }
}

</mosaic_0001>

<llo_original>
// kernel: image_rnn_forward.1
$region0: #{image_rnn_forward.1}
  #allocation0 [shape = 'u32[]', space=smem, size = 0x4, offset = 0x4, fixed_abs, tag = 'smem constant byte address 0x4 - core index']
  #allocation1 [shape = 'u32[144,128]{1,0:T(1,128)}', space=vmem, size = 0x12000, scoped, tag = 'internal scratch']
  #allocation2 [shape = 'f32[128,128]{1,0:T(8,128)}', space=vmem, size = 0x10000, scoped, tag = 'scratch operand']
  %s0 = inlined_call_operand.vmem [shape: f32[128,128], index: 0, kind: input, shape index: {}]
  %s1 = inlined_call_operand.vmem [shape: f32[128,128], index: 1, kind: input, shape index: {}]
  %s2 = inlined_call_operand.vmem [shape: f32[128,128], index: 2, kind: input, shape index: {}]
  %s3 = inlined_call_operand.vmem [shape: f32[1,128], index: 3, kind: input, shape index: {}]
  %s4 = inlined_call_operand.vmem [shape: f32[128,128], index: 4, kind: input, shape index: {}]
  %s5 = inlined_call_operand.vmem [shape: f32[1,128], index: 5, kind: input, shape index: {}]
  %s6 = inlined_call_operand.hbm [shape: f32[8,128], index: 6, kind: output, shape index: {}]
  %s7 = sld [smem:[#allocation0]]
  $region34: #{image_rnn_forward.1} parent=0
    _
  %s9 = ssub.s32 1, %s7
  %s10 = scalar_select 0, %s9, %s7
  $region1: #{image_rnn_forward.1} parent=0
    #allocation3 [shape = 'u8[4096]{0}', space=vmem, size = 0x1000, scoped, tag = 'output window, operand 0, single buffered']
    #allocation4 [shape = 's32[1]{0}', space=sflag, size = 0x4, scoped, tag = 'scoped memory for image_rnn_forward.1']
    %11 = vsyncpa [#allocation4], 0
    // Predicated region
    $region2: #{image_rnn_forward.1} parent=1 // pred_check
      _
    $region3: #{image_rnn_forward.1} parent=1 // pred_check_branch
      %13 = sbr.rel (0) target = $region5
    $region4: #{image_rnn_forward.1} parent=1 // pred_region
      _
    $region5: #{image_rnn_forward.1} parent=1 // pred_fallthru
      _
    // Predicated region
    $region6: #{image_rnn_forward.1} parent=1 // pred_check
      _
    $region7: #{image_rnn_forward.1} parent=1 // pred_check_branch
      %15 = sbr.rel (0) target = $region9
    $region8: #{image_rnn_forward.1} parent=1 // pred_region
      _
    $region9: #{image_rnn_forward.1} parent=1 // pred_fallthru
      _
    // Predicated region
    $region10: #{image_rnn_forward.1} parent=1 // pred_check
      _
    $region11: #{image_rnn_forward.1} parent=1 // pred_check_branch
      %17 = sbr.rel (0) target = $region13
    $region12: #{image_rnn_forward.1} parent=1 // pred_region
      _
    $region13: #{image_rnn_forward.1} parent=1 // pred_fallthru
      _
    // Predicated region
    $region14: #{image_rnn_forward.1} parent=1 // pred_check
      _
    $region15: #{image_rnn_forward.1} parent=1 // pred_check_branch
      %19 = sbr.rel (0) target = $region17
    $region16: #{image_rnn_forward.1} parent=1 // pred_region
      _
    $region17: #{image_rnn_forward.1} parent=1 // pred_fallthru
      _
    // Predicated region
    $region18: #{image_rnn_forward.1} parent=1 // pred_check
      _
    $region19: #{image_rnn_forward.1} parent=1 // pred_check_branch
      %21 = sbr.rel (0) target = $region21
    $region20: #{image_rnn_forward.1} parent=1 // pred_region
      _
    $region21: #{image_rnn_forward.1} parent=1 // pred_fallthru
      _
    // Predicated region
    $region22: #{image_rnn_forward.1} parent=1 // pred_check
      _
    $region23: #{image_rnn_forward.1} parent=1 // pred_check_branch
      %23 = sbr.rel (0) target = $region25
    $region24: #{image_rnn_forward.1} parent=1 // pred_region
      _
    $region25: #{image_rnn_forward.1} parent=1 // pred_fallthru
      _
    %v24 = vld [vmem:[%s0] sm:$0xff]
    %v25 = vld [vmem:[%s0 + $0x8] sm:$0xff]
    %v26 = vld [vmem:[%s0 + $0x10] sm:$0xff]
    %v27 = vld [vmem:[%s0 + $0x18] sm:$0xff]
    %v28 = vld [vmem:[%s0 + $0x20] sm:$0xff]
    %v29 = vld [vmem:[%s0 + $0x28] sm:$0xff]
    %v30 = vld [vmem:[%s0 + $0x30] sm:$0xff]
    %v31 = vld [vmem:[%s0 + $0x38] sm:$0xff]
    %v32 = vld [vmem:[%s0 + $0x40] sm:$0xff]
    %v33 = vld [vmem:[%s0 + $0x48] sm:$0xff]
    %v34 = vld [vmem:[%s0 + $0x50] sm:$0xff]
    %v35 = vld [vmem:[%s0 + $0x58] sm:$0xff]
    %v36 = vld [vmem:[%s0 + $0x60] sm:$0xff]
    %v37 = vld [vmem:[%s0 + $0x68] sm:$0xff]
    %v38 = vld [vmem:[%s0 + $0x70] sm:$0xff]
    %v39 = vld [vmem:[%s0 + $0x78] sm:$0xff]
    %v40 = vld [vmem:[%s1] sm:$0xff]
    %v41 = vld [vmem:[%s1 + $0x8] sm:$0xff]
    %v42 = vld [vmem:[%s1 + $0x10] sm:$0xff]
    %v43 = vld [vmem:[%s1 + $0x18] sm:$0xff]
    %v44 = vld [vmem:[%s1 + $0x20] sm:$0xff]
    %v45 = vld [vmem:[%s1 + $0x28] sm:$0xff]
    %v46 = vld [vmem:[%s1 + $0x30] sm:$0xff]
    %v47 = vld [vmem:[%s1 + $0x38] sm:$0xff]
    %v48 = vld [vmem:[%s1 + $0x40] sm:$0xff]
    %v49 = vld [vmem:[%s1 + $0x48] sm:$0xff]
    %v50 = vld [vmem:[%s1 + $0x50] sm:$0xff]
    %v51 = vld [vmem:[%s1 + $0x58] sm:$0xff]
    %v52 = vld [vmem:[%s1 + $0x60] sm:$0xff]
    %v53 = vld [vmem:[%s1 + $0x68] sm:$0xff]
    %v54 = vld [vmem:[%s1 + $0x70] sm:$0xff]
    %v55 = vld [vmem:[%s1 + $0x78] sm:$0xff]
    %v56 = vld [vmem:[%s3] sm:$0x1]
    %v58 = vlaneseq
    %v59 = vshrl.u32 %v58, 7
    %v60 = vsub.s32 0, %v59
    %v61 = vrot.slane %v56, %v60
    %63 = vmatprep.subr.mxu0 0.0
    %v64 = vand.u32 %v40, 4294901760
    %65 = vmatpush1.msra.mxu0 %v64
    %66 = vmatprep.subr.mxu0 0.0
    %v67 = vand.u32 %v41, 4294901760
    %68 = vmatpush1.msra.mxu0 %v67
    %69 = vmatprep.subr.mxu0 0.0
    %v70 = vand.u32 %v42, 4294901760
    %71 = vmatpush1.msra.mxu0 %v70
    %72 = vmatprep.subr.mxu0 0.0
    %v73 = vand.u32 %v43, 4294901760
    %74 = vmatpush1.msra.mxu0 %v73
    %75 = vmatprep.subr.mxu0 0.0
    %v76 = vand.u32 %v44, 4294901760
    %77 = vmatpush1.msra.mxu0 %v76
    %78 = vmatprep.subr.mxu0 0.0
    %v79 = vand.u32 %v45, 4294901760
    %80 = vmatpush1.msra.mxu0 %v79
    %81 = vmatprep.subr.mxu0 0.0
    %v82 = vand.u32 %v46, 4294901760
    %83 = vmatpush1.msra.mxu0 %v82
    %84 = vmatprep.subr.mxu0 0.0
    %v85 = vand.u32 %v47, 4294901760
    %86 = vmatpush1.msra.mxu0 %v85
    %87 = vmatprep.subr.mxu0 0.0
    %v88 = vand.u32 %v48, 4294901760
    %89 = vmatpush1.msra.mxu0 %v88
    %90 = vmatprep.subr.mxu0 0.0
    %v91 = vand.u32 %v49, 4294901760
    %92 = vmatpush1.msra.mxu0 %v91
    %93 = vmatprep.subr.mxu0 0.0
    %v94 = vand.u32 %v50, 4294901760
    %95 = vmatpush1.msra.mxu0 %v94
    %96 = vmatprep.subr.mxu0 0.0
    %v97 = vand.u32 %v51, 4294901760
    %98 = vmatpush1.msra.mxu0 %v97
    %99 = vmatprep.subr.mxu0 0.0
    %v100 = vand.u32 %v52, 4294901760
    %101 = vmatpush1.msra.mxu0 %v100
    %102 = vmatprep.subr.mxu0 0.0
    %v103 = vand.u32 %v53, 4294901760
    %104 = vmatpush1.msra.mxu0 %v103
    %105 = vmatprep.subr.mxu0 0.0
    %v106 = vand.u32 %v54, 4294901760
    %107 = vmatpush1.msra.mxu0 %v106
    %108 = vmatprep.subr.mxu0 0.0
    %v109 = vand.u32 %v55, 4294901760
    %110 = vmatpush1.msra.mxu0 %v109
    %111 = vmatprep.subr.mxu0 0.0
    %112 = vmatpush1.msra.mxu0 0.0
    %113 = vmatprep.subr.mxu0 0.0
    %114 = vmatpush1.msra.mxu0 0.0
    %115 = vmatprep.subr.mxu0 0.0
    %116 = vmatpush1.msra.mxu0 0.0
    %117 = vmatprep.subr.mxu0 0.0
    %118 = vmatpush1.msra.mxu0 0.0
    %119 = vmatprep.subr.mxu0 0.0
    %120 = vmatpush1.msra.mxu0 0.0
    %121 = vmatprep.subr.mxu0 0.0
    %122 = vmatpush1.msra.mxu0 0.0
    %123 = vmatprep.subr.mxu0 0.0
    %124 = vmatpush1.msra.mxu0 0.0
    %125 = vmatprep.subr.mxu0 0.0
    %126 = vmatpush1.msra.mxu0 0.0
    %127 = vmatprep.subr.mxu0 0.0
    %128 = vmatpush1.msra.mxu0 0.0
    %129 = vmatprep.subr.mxu0 0.0
    %130 = vmatpush1.msra.mxu0 0.0
    %131 = vmatprep.subr.mxu0 0.0
    %132 = vmatpush1.msra.mxu0 0.0
    %133 = vmatprep.subr.mxu0 0.0
    %134 = vmatpush1.msra.mxu0 0.0
    %135 = vmatprep.subr.mxu0 0.0
    %136 = vmatpush1.msra.mxu0 0.0
    %137 = vmatprep.subr.mxu0 0.0
    %138 = vmatpush1.msra.mxu0 0.0
    %139 = vmatprep.subr.mxu0 0.0
    %140 = vmatpush1.msra.mxu0 0.0
    %141 = vmatprep.subr.mxu0 0.0
    %142 = vmatpush1.msra.mxu0 0.0
    %143 = vmatprep.mubr.f32.mxu0 0.0
    %v144 = vand.u32 %v24, 4294901760
    %v145 = vsub.f32 %v24, %v144
    %v146 = vand.u32 %v145, 4294901760
    %v147 = vsub.f32 %v145, %v146
    %v148 = vand.u32 %v147, 4294901760
    %149 = vmatmul.mubr.f32.gmra.mrb[0].mxu0 %v148
    %v150 = vpop.f32.mrb[0].mxu0
    %v151 = vadd.f32 %v61, %v150
    %v152 = vpop.f32.mrb[0].mxu0
    %153 = vmatprep.mubr.f32.mxu0 0.0
    %v154 = vand.u32 %v25, 4294901760
    %v155 = vsub.f32 %v25, %v154
    %v156 = vand.u32 %v155, 4294901760
    %v157 = vsub.f32 %v155, %v156
    %v158 = vand.u32 %v157, 4294901760
    %159 = vmatmul.mubr.f32.gmra.mrb[0].mxu0 %v158
    %v160 = vpop.f32.mrb[0].mxu0
    %v161 = vadd.f32 %v61, %v160
    %v162 = vpop.f32.mrb[0].mxu0
    %163 = vmatprep.mubr.f32.mxu0 0.0
    %v164 = vand.u32 %v26, 4294901760
    %v165 = vsub.f32 %v26, %v164
    %v166 = vand.u32 %v165, 4294901760
    %v167 = vsub.f32 %v165, %v166
    %v168 = vand.u32 %v167, 4294901760
    %169 = vmatmul.mubr.f32.gmra.mrb[0].mxu0 %v168
    %v170 = vpop.f32.mrb[0].mxu0
    %v171 = vadd.f32 %v61, %v170
    %v172 = vpop.f32.mrb[0].mxu0
    %173 = vmatprep.mubr.f32.mxu0 0.0
    %v174 = vand.u32 %v27, 4294901760
    %v175 = vsub.f32 %v27, %v174
    %v176 = vand.u32 %v175, 4294901760
    %v177 = vsub.f32 %v175, %v176
    %v178 = vand.u32 %v177, 4294901760
    %179 = vmatmul.mubr.f32.gmra.mrb[0].mxu0 %v178
    %v180 = vpop.f32.mrb[0].mxu0
    %v181 = vadd.f32 %v61, %v180
    %v182 = vpop.f32.mrb[0].mxu0
    %183 = vmatprep.mubr.f32.mxu0 0.0
    %v184 = vand.u32 %v28, 4294901760
    %v185 = vsub.f32 %v28, %v184
    %v186 = vand.u32 %v185, 4294901760
    %v187 = vsub.f32 %v185, %v186
    %v188 = vand.u32 %v187, 4294901760
    %189 = vmatmul.mubr.f32.gmra.mrb[0].mxu0 %v188
    %v190 = vpop.f32.mrb[0].mxu0
    %v191 = vadd.f32 %v61, %v190
    %v192 = vpop.f32.mrb[0].mxu0
    %193 = vmatprep.mubr.f32.mxu0 0.0
    %v194 = vand.u32 %v29, 4294901760
    %v195 = vsub.f32 %v29, %v194
    %v196 = vand.u32 %v195, 4294901760
    %v197 = vsub.f32 %v195, %v196
    %v198 = vand.u32 %v197, 4294901760
    %199 = vmatmul.mubr.f32.gmra.mrb[0].mxu0 %v198
    %v200 = vpop.f32.mrb[0].mxu0
    %v201 = vadd.f32 %v61, %v200
    %v202 = vpop.f32.mrb[0].mxu0
    %203 = vmatprep.mubr.f32.mxu0 0.0
    %v204 = vand.u32 %v30, 4294901760
    %v205 = vsub.f32 %v30, %v204
    %v206 = vand.u32 %v205, 4294901760
    %v207 = vsub.f32 %v205, %v206
    %v208 = vand.u32 %v207, 4294901760
    %209 = vmatmul.mubr.f32.gmra.mrb[0].mxu0 %v208
    %v210 = vpop.f32.mrb[0].mxu0
    %v211 = vadd.f32 %v61, %v210
    %v212 = vpop.f32.mrb[0].mxu0
    %213 = vmatprep.mubr.f32.mxu0 0.0
    %v214 = vand.u32 %v31, 4294901760
    %v215 = vsub.f32 %v31, %v214
    %v216 = vand.u32 %v215, 4294901760
    %v217 = vsub.f32 %v215, %v216
    %v218 = vand.u32 %v217, 4294901760
    %219 = vmatmul.mubr.f32.gmra.mrb[0].mxu0 %v218
    %v220 = vpop.f32.mrb[0].mxu0
    %v221 = vadd.f32 %v61, %v220
    %v222 = vpop.f32.mrb[0].mxu0
    %223 = vmatprep.mubr.f32.mxu0 0.0
    %v224 = vand.u32 %v32, 4294901760
    %v225 = vsub.f32 %v32, %v224
    %v226 = vand.u32 %v225, 4294901760
    %v227 = vsub.f32 %v225, %v226
    %v228 = vand.u32 %v227, 4294901760
    %229 = vmatmul.mubr.f32.gmra.mrb[0].mxu0 %v228
    %v230 = vpop.f32.mrb[0].mxu0
    %v231 = vadd.f32 %v61, %v230
    %v232 = vpop.f32.mrb[0].mxu0
    %233 = vmatprep.mubr.f32.mxu0 0.0
    %v234 = vand.u32 %v33, 4294901760
    %v235 = vsub.f32 %v33, %v234
    %v236 = vand.u32 %v235, 4294901760
    %v237 = vsub.f32 %v235, %v236
    %v238 = vand.u32 %v237, 4294901760
    %239 = vmatmul.mubr.f32.gmra.mrb[0].mxu0 %v238
    %v240 = vpop.f32.mrb[0].mxu0
    %v241 = vadd.f32 %v61, %v240
    %v242 = vpop.f32.mrb[0].mxu0
    %243 = vmatprep.mubr.f32.mxu0 0.0
    %v244 = vand.u32 %v34, 4294901760
    %v245 = vsub.f32 %v34, %v244
    %v246 = vand.u32 %v245, 4294901760
    %v247 = vsub.f32 %v245, %v246
    %v248 = vand.u32 %v247, 4294901760
    %249 = vmatmul.mubr.f32.gmra.mrb[0].mxu0 %v248
    %v250 = vpop.f32.mrb[0].mxu0
    %v251 = vadd.f32 %v61, %v250
    %v252 = vpop.f32.mrb[0].mxu0
    %253 = vmatprep.mubr.f32.mxu0 0.0
    %v254 = vand.u32 %v35, 4294901760
    %v255 = vsub.f32 %v35, %v254
    %v256 = vand.u32 %v255, 4294901760
    %v257 = vsub.f32 %v255, %v256
    %v258 = vand.u32 %v257, 4294901760
    %259 = vmatmul.mubr.f32.gmra.mrb[0].mxu0 %v258
    %v260 = vpop.f32.mrb[0].mxu0
    %v261 = vadd.f32 %v61, %v260
    %v262 = vpop.f32.mrb[0].mxu0
    %263 = vmatprep.mubr.f32.mxu0 0.0
    %v264 = vand.u32 %v36, 4294901760
    %v265 = vsub.f32 %v36, %v264
    %v266 = vand.u32 %v265, 4294901760
    %v267 = vsub.f32 %v265, %v266
    %v268 = vand.u32 %v267, 4294901760
    %269 = vmatmul.mubr.f32.gmra.mrb[0].mxu0 %v268
    %v270 = vpop.f32.mrb[0].mxu0
    %v271 = vadd.f32 %v61, %v270
    %v272 = vpop.f32.mrb[0].mxu0
    %273 = vmatprep.mubr.f32.mxu0 0.0
    %v274 = vand.u32 %v37, 4294901760
    %v275 = vsub.f32 %v37, %v274
    %v276 = vand.u32 %v275, 4294901760
    %v277 = vsub.f32 %v275, %v276
    %v278 = vand.u32 %v277, 4294901760
    %279 = vmatmul.mubr.f32.gmra.mrb[0].mxu0 %v278
    %v280 = vpop.f32.mrb[0].mxu0
    %v281 = vadd.f32 %v61, %v280
    %v282 = vpop.f32.mrb[0].mxu0
    %283 = vmatprep.mubr.f32.mxu0 0.0
    %v284 = vand.u32 %v38, 4294901760
    %v285 = vsub.f32 %v38, %v284
    %v286 = vand.u32 %v285, 4294901760
    %v287 = vsub.f32 %v285, %v286
    %v288 = vand.u32 %v287, 4294901760
    %289 = vmatmul.mubr.f32.gmra.mrb[0].mxu0 %v288
    %v290 = vpop.f32.mrb[0].mxu0
    %v291 = vadd.f32 %v61, %v290
    %v292 = vpop.f32.mrb[0].mxu0
    %293 = vmatprep.mubr.f32.mxu0 0.0
    %v294 = vand.u32 %v39, 4294901760
    %v295 = vsub.f32 %v39, %v294
    %v296 = vand.u32 %v295, 4294901760
    %v297 = vsub.f32 %v295, %v296
    %v298 = vand.u32 %v297, 4294901760
    %299 = vmatmul.mubr.f32.gmra.mrb[0].mxu0 %v298
    %v300 = vpop.f32.mrb[0].mxu0
    %v301 = vadd.f32 %v61, %v300
    %v302 = vpop.f32.mrb[0].mxu0
    %303 = vdwg.mxu0
    %304 = vmatprep.subr.mxu0 0.0
    %v305 = vand.u32 %v40, 4294901760
    %v306 = vsub.f32 %v40, %v305
    %v307 = vand.u32 %v306, 4294901760
    %v308 = vsub.f32 %v306, %v307
    %v309 = vand.u32 %v308, 4294901760
    %310 = vmatpush1.msra.mxu0 %v309
    %311 = vmatprep.subr.mxu0 0.0
    %v312 = vand.u32 %v41, 4294901760
    %v313 = vsub.f32 %v41, %v312
    %v314 = vand.u32 %v313, 4294901760
    %v315 = vsub.f32 %v313, %v314
    %v316 = vand.u32 %v315, 4294901760
    %317 = vmatpush1.msra.mxu0 %v316
    %318 = vmatprep.subr.mxu0 0.0
    %v319 = vand.u32 %v42, 4294901760
    %v320 = vsub.f32 %v42, %v319
    %v321 = vand.u32 %v320, 4294901760
    %v322 = vsub.f32 %v320, %v321
    %v323 = vand.u32 %v322, 4294901760
    %324 = vmatpush1.msra.mxu0 %v323
    %325 = vmatprep.subr.mxu0 0.0
    %v326 = vand.u32 %v43, 4294901760
    %v327 = vsub.f32 %v43, %v326
    %v328 = vand.u32 %v327, 4294901760
    %v329 = vsub.f32 %v327, %v328
    %v330 = vand.u32 %v329, 4294901760
    %331 = vmatpush1.msra.mxu0 %v330
    %332 = vmatprep.subr.mxu0 0.0
    %v333 = vand.u32 %v44, 4294901760
    %v334 = vsub.f32 %v44, %v333
    %v335 = vand.u32 %v334, 4294901760
    %v336 = vsub.f32 %v334, %v335
    %v337 = vand.u32 %v336, 4294901760
    %338 = vmatpush1.msra.mxu0 %v337
    %339 = vmatprep.subr.mxu0 0.0
    %v340 = vand.u32 %v45, 4294901760
    %v341 = vsub.f32 %v45, %v340
    %v342 = vand.u32 %v341, 4294901760
    %v343 = vsub.f32 %v341, %v342
    %v344 = vand.u32 %v343, 4294901760
    %345 = vmatpush1.msra.mxu0 %v344
    %346 = vmatprep.subr.mxu0 0.0
    %v347 = vand.u32 %v46, 4294901760
    %v348 = vsub.f32 %v46, %v347
    %v349 = vand.u32 %v348, 4294901760
    %v350 = vsub.f32 %v348, %v349
    %v351 = vand.u32 %v350, 4294901760
    %352 = vmatpush1.msra.mxu0 %v351
    %353 = vmatprep.subr.mxu0 0.0
    %v354 = vand.u32 %v47, 4294901760
    %v355 = vsub.f32 %v47, %v354
    %v356 = vand.u32 %v355, 4294901760
    %v357 = vsub.f32 %v355, %v356
    %v358 = vand.u32 %v357, 4294901760
    %359 = vmatpush1.msra.mxu0 %v358
    %360 = vmatprep.subr.mxu0 0.0
    %v361 = vand.u32 %v48, 4294901760
    %v362 = vsub.f32 %v48, %v361
    %v363 = vand.u32 %v362, 4294901760
    %v364 = vsub.f32 %v362, %v363
    %v365 = vand.u32 %v364, 4294901760
    %366 = vmatpush1.msra.mxu0 %v365
    %367 = vmatprep.subr.mxu0 0.0
    %v368 = vand.u32 %v49, 4294901760
    %v369 = vsub.f32 %v49, %v368
    %v370 = vand.u32 %v369, 4294901760
    %v371 = vsub.f32 %v369, %v370
    %v372 = vand.u32 %v371, 4294901760
    %373 = vmatpush1.msra.mxu0 %v372
    %374 = vmatprep.subr.mxu0 0.0
    %v375 = vand.u32 %v50, 4294901760
    %v376 = vsub.f32 %v50, %v375
    %v377 = vand.u32 %v376, 4294901760
    %v378 = vsub.f32 %v376, %v377
    %v379 = vand.u32 %v378, 4294901760
    %380 = vmatpush1.msra.mxu0 %v379
    %381 = vmatprep.subr.mxu0 0.0
    %v382 = vand.u32 %v51, 4294901760
    %v383 = vsub.f32 %v51, %v382
    %v384 = vand.u32 %v383, 4294901760
    %v385 = vsub.f32 %v383, %v384
    %v386 = vand.u32 %v385, 4294901760
    %387 = vmatpush1.msra.mxu0 %v386
    %388 = vmatprep.subr.mxu0 0.0
    %v389 = vand.u32 %v52, 4294901760
    %v390 = vsub.f32 %v52, %v389
    %v391 = vand.u32 %v390, 4294901760
    %v392 = vsub.f32 %v390, %v391
    %v393 = vand.u32 %v392, 4294901760
    %394 = vmatpush1.msra.mxu0 %v393
    %395 = vmatprep.subr.mxu0 0.0
    %v396 = vand.u32 %v53, 4294901760
    %v397 = vsub.f32 %v53, %v396
    %v398 = vand.u32 %v397, 4294901760
    %v399 = vsub.f32 %v397, %v398
    %v400 = vand.u32 %v399, 4294901760
    %401 = vmatpush1.msra.mxu0 %v400
    %402 = vmatprep.subr.mxu0 0.0
    %v403 = vand.u32 %v54, 4294901760
    %v404 = vsub.f32 %v54, %v403
    %v405 = vand.u32 %v404, 4294901760
    %v406 = vsub.f32 %v404, %v405
    %v407 = vand.u32 %v406, 4294901760
    %408 = vmatpush1.msra.mxu0 %v407
    %409 = vmatprep.subr.mxu0 0.0
    %v410 = vand.u32 %v55, 4294901760
    %v411 = vsub.f32 %v55, %v410
    %v412 = vand.u32 %v411, 4294901760
    %v413 = vsub.f32 %v411, %v412
    %v414 = vand.u32 %v413, 4294901760
    %415 = vmatpush1.msra.mxu0 %v414
    %416 = vmatprep.subr.mxu0 0.0
    %417 = vmatpush1.msra.mxu0 0.0
    %418 = vmatprep.subr.mxu0 0.0
    %419 = vmatpush1.msra.mxu0 0.0
    %420 = vmatprep.subr.mxu0 0.0
    %421 = vmatpush1.msra.mxu0 0.0
    %422 = vmatprep.subr.mxu0 0.0
    %423 = vmatpush1.msra.mxu0 0.0
    %424 = vmatprep.subr.mxu0 0.0
    %425 = vmatpush1.msra.mxu0 0.0
    %426 = vmatprep.subr.mxu0 0.0
    %427 = vmatpush1.msra.mxu0 0.0
    %428 = vmatprep.subr.mxu0 0.0
    %429 = vmatpush1.msra.mxu0 0.0
    %430 = vmatprep.subr.mxu0 0.0
    %431 = vmatpush1.msra.mxu0 0.0
    %432 = vmatprep.subr.mxu0 0.0
    %433 = vmatpush1.msra.mxu0 0.0
    %434 = vmatprep.subr.mxu0 0.0
    %435 = vmatpush1.msra.mxu0 0.0
    %436 = vmatprep.subr.mxu0 0.0
    %437 = vmatpush1.msra.mxu0 0.0
    %438 = vmatprep.subr.mxu0 0.0
    %439 = vmatpush1.msra.mxu0 0.0
    %440 = vmatprep.subr.mxu0 0.0
    %441 = vmatpush1.msra.mxu0 0.0
    %442 = vmatprep.subr.mxu0 0.0
    %443 = vmatpush1.msra.mxu0 0.0
    %444 = vmatprep.subr.mxu0 0.0
    %445 = vmatpush1.msra.mxu0 0.0
    %446 = vmatprep.subr.mxu0 0.0
    %447 = vmatpush1.msra.mxu0 0.0
    %448 = vmatprep.mubr.f32.mxu0 0.0
    %v449 = vand.u32 %v24, 4294901760
    %450 = vmatmul.mubr.f32.gmra.mrb[0].mxu0 %v449
    %v451 = vpop.f32.mrb[0].mxu0
    %v452 = vadd.f32 %v151, %v451
    %v453 = vpop.f32.mrb[0].mxu0
    %454 = vmatprep.mubr.f32.mxu0 0.0
    %v455 = vand.u32 %v25, 4294901760
    %456 = vmatmul.mubr.f32.gmra.mrb[0].mxu0 %v455
    %v457 = vpop.f32.mrb[0].mxu0
    %v458 = vadd.f32 %v161, %v457
    %v459 = vpop.f32.mrb[0].mxu0
    %460 = vmatprep.mubr.f32.mxu0 0.0
    %v461 = vand.u32 %v26, 4294901760
    %462 = vmatmul.mubr.f32.gmra.mrb[0].mxu0 %v461
    %v463 = vpop.f32.mrb[0].mxu0
    %v464 = vadd.f32 %v171, %v463
    %v465 = vpop.f32.mrb[0].mxu0
    %466 = vmatprep.mubr.f32.mxu0 0.0
    %v467 = vand.u32 %v27, 4294901760
    %468 = vmatmul.mubr.f32.gmra.mrb[0].mxu0 %v467
    %v469 = vpop.f32.mrb[0].mxu0
    %v470 = vadd.f32 %v181, %v469
    %v471 = vpop.f32.mrb[0].mxu0
    %472 = vmatprep.mubr.f32.mxu0 0.0
    %v473 = vand.u32 %v28, 4294901760
    %474 = vmatmul.mubr.f32.gmra.mrb[0].mxu0 %v473
    %v475 = vpop.f32.mrb[0].mxu0
    %v476 = vadd.f32 %v191, %v475
    %v477 = vpop.f32.mrb[0].mxu0
    %478 = vmatprep.mubr.f32.mxu0 0.0
    %v479 = vand.u32 %v29, 4294901760
    %480 = vmatmul.mubr.f32.gmra.mrb[0].mxu0 %v479
    %v481 = vpop.f32.mrb[0].mxu0
    %v482 = vadd.f32 %v201, %v481
    %v483 = vpop.f32.mrb[0].mxu0
    %484 = vmatprep.mubr.f32.mxu0 0.0
    %v485 = vand.u32 %v30, 4294901760
    %486 = vmatmul.mubr.f32.gmra.mrb[0].mxu0 %v485
    %v487 = vpop.f32.mrb[0].mxu0
    %v488 = vadd.f32 %v211, %v487
    %v489 = vpop.f32.mrb[0].mxu0
    %490 = vmatprep.mubr.f32.mxu0 0.0
    %v491 = vand.u32 %v31, 4294901760
    %492 = vmatmul.mubr.f32.gmra.mrb[0].mxu0 %v491
    %v493 = vpop.f32.mrb[0].mxu0
    %v494 = vadd.f32 %v221, %v493
    %v495 = vpop.f32.mrb[0].mxu0
    %496 = vmatprep.mubr.f32.mxu0 0.0
    %v497 = vand.u32 %v32, 4294901760
    %498 = vmatmul.mubr.f32.gmra.mrb[0].mxu0 %v497
    %v499 = vpop.f32.mrb[0].mxu0
    %v500 = vadd.f32 %v231, %v499
    %v501 = vpop.f32.mrb[0].mxu0
    %502 = vmatprep.mubr.f32.mxu0 0.0
    %v503 = vand.u32 %v33, 4294901760
    %504 = vmatmul.mubr.f32.gmra.mrb[0].mxu0 %v503
    %v505 = vpop.f32.mrb[0].mxu0
    %v506 = vadd.f32 %v241, %v505
    %v507 = vpop.f32.mrb[0].mxu0
    %508 = vmatprep.mubr.f32.mxu0 0.0
    %v509 = vand.u32 %v34, 4294901760
    %510 = vmatmul.mubr.f32.gmra.mrb[0].mxu0 %v509
    %v511 = vpop.f32.mrb[0].mxu0
    %v512 = vadd.f32 %v251, %v511
    %v513 = vpop.f32.mrb[0].mxu0
    %514 = vmatprep.mubr.f32.mxu0 0.0
    %v515 = vand.u32 %v35, 4294901760
    %516 = vmatmul.mubr.f32.gmra.mrb[0].mxu0 %v515
    %v517 = vpop.f32.mrb[0].mxu0
    %v518 = vadd.f32 %v261, %v517
    %v519 = vpop.f32.mrb[0].mxu0
    %520 = vmatprep.mubr.f32.mxu0 0.0
    %v521 = vand.u32 %v36, 4294901760
    %522 = vmatmul.mubr.f32.gmra.mrb[0].mxu0 %v521
    %v523 = vpop.f32.mrb[0].mxu0
    %v524 = vadd.f32 %v271, %v523
    %v525 = vpop.f32.mrb[0].mxu0
    %526 = vmatprep.mubr.f32.mxu0 0.0
    %v527 = vand.u32 %v37, 4294901760
    %528 = vmatmul.mubr.f32.gmra.mrb[0].mxu0 %v527
    %v529 = vpop.f32.mrb[0].mxu0
    %v530 = vadd.f32 %v281, %v529
    %v531 = vpop.f32.mrb[0].mxu0
    %532 = vmatprep.mubr.f32.mxu0 0.0
    %v533 = vand.u32 %v38, 4294901760
    %534 = vmatmul.mubr.f32.gmra.mrb[0].mxu0 %v533
    %v535 = vpop.f32.mrb[0].mxu0
    %v536 = vadd.f32 %v291, %v535
    %v537 = vpop.f32.mrb[0].mxu0
    %538 = vmatprep.mubr.f32.mxu0 0.0
    %v539 = vand.u32 %v39, 4294901760
    %540 = vmatmul.mubr.f32.gmra.mrb[0].mxu0 %v539
    %v541 = vpop.f32.mrb[0].mxu0
    %v542 = vadd.f32 %v301, %v541
    %v543 = vpop.f32.mrb[0].mxu0
    %544 = vdwg.mxu0
    %545 = vmatprep.subr.mxu0 0.0
    %v546 = vand.u32 %v40, 4294901760
    %v547 = vsub.f32 %v40, %v546
    %548 = vmatpush1.msra.mxu0 %v547
    %549 = vmatprep.subr.mxu0 0.0
    %v550 = vand.u32 %v41, 4294901760
    %v551 = vsub.f32 %v41, %v550
    %552 = vmatpush1.msra.mxu0 %v551
    %553 = vmatprep.subr.mxu0 0.0
    %v554 = vand.u32 %v42, 4294901760
    %v555 = vsub.f32 %v42, %v554
    %556 = vmatpush1.msra.mxu0 %v555
    %557 = vmatprep.subr.mxu0 0.0
    %v558 = vand.u32 %v43, 4294901760
    %v559 = vsub.f32 %v43, %v558
    %560 = vmatpush1.msra.mxu0 %v559
    %561 = vmatprep.subr.mxu0 0.0
    %v562 = vand.u32 %v44, 4294901760
    %v563 = vsub.f32 %v44, %v562
    %564 = vmatpush1.msra.mxu0 %v563
    %565 = vmatprep.subr.mxu0 0.0
    %v566 = vand.u32 %v45, 4294901760
    %v567 = vsub.f32 %v45, %v566
    %568 = vmatpush1.msra.mxu0 %v567
    %569 = vmatprep.subr.mxu0 0.0
    %v570 = vand.u32 %v46, 4294901760
    %v571 = vsub.f32 %v46, %v570
    %572 = vmatpush1.msra.mxu0 %v571
    %573 = vmatprep.subr.mxu0 0.0
    %v574 = vand.u32 %v47, 4294901760
    %v575 = vsub.f32 %v47, %v574
    %576 = vmatpush1.msra.mxu0 %v575
    %577 = vmatprep.subr.mxu0 0.0
    %v578 = vand.u32 %v48, 4294901760
    %v579 = vsub.f32 %v48, %v578
    %580 = vmatpush1.msra.mxu0 %v579
    %581 = vmatprep.subr.mxu0 0.0
    %v582 = vand.u32 %v49, 4294901760
    %v583 = vsub.f32 %v49, %v582
    %584 = vmatpush1.msra.mxu0 %v583
    %585 = vmatprep.subr.mxu0 0.0
    %v586 = vand.u32 %v50, 4294901760
    %v587 = vsub.f32 %v50, %v586
    %588 = vmatpush1.msra.mxu0 %v587
    %589 = vmatprep.subr.mxu0 0.0
    %v590 = vand.u32 %v51, 4294901760
    %v591 = vsub.f32 %v51, %v590
    %592 = vmatpush1.msra.mxu0 %v591
    %593 = vmatprep.subr.mxu0 0.0
    %v594 = vand.u32 %v52, 4294901760
    %v595 = vsub.f32 %v52, %v594
    %596 = vmatpush1.msra.mxu0 %v595
    %597 = vmatprep.subr.mxu0 0.0
    %v598 = vand.u32 %v53, 4294901760
    %v599 = vsub.f32 %v53, %v598
    %600 = vmatpush1.msra.mxu0 %v599
    %601 = vmatprep.subr.mxu0 0.0
    %v602 = vand.u32 %v54, 4294901760
    %v603 = vsub.f32 %v54, %v602
    %604 = vmatpush1.msra.mxu0 %v603
    %605 = vmatprep.subr.mxu0 0.0
    %v606 = vand.u32 %v55, 4294901760
    %v607 = vsub.f32 %v55, %v606
    %608 = vmatpush1.msra.mxu0 %v607
    %609 = vmatprep.subr.mxu0 0.0
    %610 = vmatpush1.msra.mxu0 0.0
    %611 = vmatprep.subr.mxu0 0.0
    %612 = vmatpush1.msra.mxu0 0.0
    %613 = vmatprep.subr.mxu0 0.0
    %614 = vmatpush1.msra.mxu0 0.0
    %615 = vmatprep.subr.mxu0 0.0
    %616 = vmatpush1.msra.mxu0 0.0
    %617 = vmatprep.subr.mxu0 0.0
    %618 = vmatpush1.msra.mxu0 0.0
    %619 = vmatprep.subr.mxu0 0.0
    %620 = vmatpush1.msra.mxu0 0.0
    %621 = vmatprep.subr.mxu0 0.0
    %622 = vmatpush1.msra.mxu0 0.0
    %623 = vmatprep.subr.mxu0 0.0
    %624 = vmatpush1.msra.mxu0 0.0
    %625 = vmatprep.subr.mxu0 0.0
    %626 = vmatpush1.msra.mxu0 0.0
    %627 = vmatprep.subr.mxu0 0.0
    %628 = vmatpush1.msra.mxu0 0.0
    %629 = vmatprep.subr.mxu0 0.0
    %630 = vmatpush1.msra.mxu0 0.0
    %631 = vmatprep.subr.mxu0 0.0
    %632 = vmatpush1.msra.mxu0 0.0
    %633 = vmatprep.subr.mxu0 0.0
    %634 = vmatpush1.msra.mxu0 0.0
    %635 = vmatprep.subr.mxu0 0.0
    %636 = vmatpush1.msra.mxu0 0.0
    %637 = vmatprep.subr.mxu0 0.0
    %638 = vmatpush1.msra.mxu0 0.0
    %639 = vmatprep.subr.mxu0 0.0
    %640 = vmatpush1.msra.mxu0 0.0
    %641 = vmatprep.mubr.f32.mxu0 0.0
    %v642 = vand.u32 %v24, 4294901760
    %v643 = vsub.f32 %v24, %v642
    %644 = vmatmul.mubr.f32.gmra.mrb[0].mxu0 %v643
    %v645 = vpop.f32.mrb[0].mxu0
    %v646 = vadd.f32 %v452, %v645
    %v647 = vpop.f32.mrb[0].mxu0
    %648 = vmatprep.mubr.f32.mxu0 0.0
    %v649 = vand.u32 %v25, 4294901760
    %v650 = vsub.f32 %v25, %v649
    %651 = vmatmul.mubr.f32.gmra.mrb[0].mxu0 %v650
    %v652 = vpop.f32.mrb[0].mxu0
    %v653 = vadd.f32 %v458, %v652
    %v654 = vpop.f32.mrb[0].mxu0
    %655 = vmatprep.mubr.f32.mxu0 0.0
    %v656 = vand.u32 %v26, 4294901760
    %v657 = vsub.f32 %v26, %v656
    %658 = vmatmul.mubr.f32.gmra.mrb[0].mxu0 %v657
    %v659 = vpop.f32.mrb[0].mxu0
    %v660 = vadd.f32 %v464, %v659
    %v661 = vpop.f32.mrb[0].mxu0
    %662 = vmatprep.mubr.f32.mxu0 0.0
    %v663 = vand.u32 %v27, 4294901760
    %v664 = vsub.f32 %v27, %v663
    %665 = vmatmul.mubr.f32.gmra.mrb[0].mxu0 %v664
    %v666 = vpop.f32.mrb[0].mxu0
    %v667 = vadd.f32 %v470, %v666
    %v668 = vpop.f32.mrb[0].mxu0
    %669 = vmatprep.mubr.f32.mxu0 0.0
    %v670 = vand.u32 %v28, 4294901760
    %v671 = vsub.f32 %v28, %v670
    %672 = vmatmul.mubr.f32.gmra.mrb[0].mxu0 %v671
    %v673 = vpop.f32.mrb[0].mxu0
    %v674 = vadd.f32 %v476, %v673
    %v675 = vpop.f32.mrb[0].mxu0
    %676 = vmatprep.mubr.f32.mxu0 0.0
    %v677 = vand.u32 %v29, 4294901760
    %v678 = vsub.f32 %v29, %v677
    %679 = vmatmul.mubr.f32.gmra.mrb[0].mxu0 %v678
    %v680 = vpop.f32.mrb[0].mxu0
    %v681 = vadd.f32 %v482, %v680
    %v682 = vpop.f32.mrb[0].mxu0
    %683 = vmatprep.mubr.f32.mxu0 0.0
    %v684 = vand.u32 %v30, 4294901760
    %v685 = vsub.f32 %v30, %v684
    %686 = vmatmul.mubr.f32.gmra.mrb[0].mxu0 %v685
    %v687 = vpop.f32.mrb[0].mxu0
    %v688 = vadd.f32 %v488, %v687
    %v689 = vpop.f32.mrb[0].mxu0
    %690 = vmatprep.mubr.f32.mxu0 0.0
    %v691 = vand.u32 %v31, 4294901760
    %v692 = vsub.f32 %v31, %v691
    %693 = vmatmul.mubr.f32.gmra.mrb[0].mxu0 %v692
    %v694 = vpop.f32.mrb[0].mxu0
    %v695 = vadd.f32 %v494, %v694
    %v696 = vpop.f32.mrb[0].mxu0
    %697 = vmatprep.mubr.f32.mxu0 0.0
    %v698 = vand.u32 %v32, 4294901760
    %v699 = vsub.f32 %v32, %v698
    %700 = vmatmul.mubr.f32.gmra.mrb[0].mxu0 %v699
    %v701 = vpop.f32.mrb[0].mxu0
    %v702 = vadd.f32 %v500, %v701
    %v703 = vpop.f32.mrb[0].mxu0
    %704 = vmatprep.mubr.f32.mxu0 0.0
    %v705 = vand.u32 %v33, 4294901760
    %v706 = vsub.f32 %v33, %v705
    %707 = vmatmul.mubr.f32.gmra.mrb[0].mxu0 %v706
    %v708 = vpop.f32.mrb[0].mxu0
    %v709 = vadd.f32 %v506, %v708
    %v710 = vpop.f32.mrb[0].mxu0
    %711 = vmatprep.mubr.f32.mxu0 0.0
    %v712 = vand.u32 %v34, 4294901760
    %v713 = vsub.f32 %v34, %v712
    %714 = vmatmul.mubr.f32.gmra.mrb[0].mxu0 %v713
    %v715 = vpop.f32.mrb[0].mxu0
    %v716 = vadd.f32 %v512, %v715
    %v717 = vpop.f32.mrb[0].mxu0
    %718 = vmatprep.mubr.f32.mxu0 0.0
    %v719 = vand.u32 %v35, 4294901760
    %v720 = vsub.f32 %v35, %v719
    %721 = vmatmul.mubr.f32.gmra.mrb[0].mxu0 %v720
    %v722 = vpop.f32.mrb[0].mxu0
    %v723 = vadd.f32 %v518, %v722
    %v724 = vpop.f32.mrb[0].mxu0
    %725 = vmatprep.mubr.f32.mxu0 0.0
    %v726 = vand.u32 %v36, 4294901760
    %v727 = vsub.f32 %v36, %v726
    %728 = vmatmul.mubr.f32.gmra.mrb[0].mxu0 %v727
    %v729 = vpop.f32.mrb[0].mxu0
    %v730 = vadd.f32 %v524, %v729
    %v731 = vpop.f32.mrb[0].mxu0
    %732 = vmatprep.mubr.f32.mxu0 0.0
    %v733 = vand.u32 %v37, 4294901760
    %v734 = vsub.f32 %v37, %v733
    %735 = vmatmul.mubr.f32.gmra.mrb[0].mxu0 %v734
    %v736 = vpop.f32.mrb[0].mxu0
    %v737 = vadd.f32 %v530, %v736
    %v738 = vpop.f32.mrb[0].mxu0
    %739 = vmatprep.mubr.f32.mxu0 0.0
    %v740 = vand.u32 %v38, 4294901760
    %v741 = vsub.f32 %v38, %v740
    %742 = vmatmul.mubr.f32.gmra.mrb[0].mxu0 %v741
    %v743 = vpop.f32.mrb[0].mxu0
    %v744 = vadd.f32 %v536, %v743
    %v745 = vpop.f32.mrb[0].mxu0
    %746 = vmatprep.mubr.f32.mxu0 0.0
    %v747 = vand.u32 %v39, 4294901760
    %v748 = vsub.f32 %v39, %v747
    %749 = vmatmul.mubr.f32.gmra.mrb[0].mxu0 %v748
    %v750 = vpop.f32.mrb[0].mxu0
    %v751 = vadd.f32 %v542, %v750
    %v752 = vpop.f32.mrb[0].mxu0
    %753 = vdwg.mxu0
    %754 = vmatprep.subr.mxu0 0.0
    %v755 = vand.u32 %v40, 4294901760
    %756 = vmatpush1.msra.mxu0 %v755
    %757 = vmatprep.subr.mxu0 0.0
    %v758 = vand.u32 %v41, 4294901760
    %759 = vmatpush1.msra.mxu0 %v758
    %760 = vmatprep.subr.mxu0 0.0
    %v761 = vand.u32 %v42, 4294901760
    %762 = vmatpush1.msra.mxu0 %v761
    %763 = vmatprep.subr.mxu0 0.0
    %v764 = vand.u32 %v43, 4294901760
    %765 = vmatpush1.msra.mxu0 %v764
    %766 = vmatprep.subr.mxu0 0.0
    %v767 = vand.u32 %v44, 4294901760
    %768 = vmatpush1.msra.mxu0 %v767
    %769 = vmatprep.subr.mxu0 0.0
    %v770 = vand.u32 %v45, 4294901760
    %771 = vmatpush1.msra.mxu0 %v770
    %772 = vmatprep.subr.mxu0 0.0
    %v773 = vand.u32 %v46, 4294901760
    %774 = vmatpush1.msra.mxu0 %v773
    %775 = vmatprep.subr.mxu0 0.0
    %v776 = vand.u32 %v47, 4294901760
    %777 = vmatpush1.msra.mxu0 %v776
    %778 = vmatprep.subr.mxu0 0.0
    %v779 = vand.u32 %v48, 4294901760
    %780 = vmatpush1.msra.mxu0 %v779
    %781 = vmatprep.subr.mxu0 0.0
    %v782 = vand.u32 %v49, 4294901760
    %783 = vmatpush1.msra.mxu0 %v782
    %784 = vmatprep.subr.mxu0 0.0
    %v785 = vand.u32 %v50, 4294901760
    %786 = vmatpush1.msra.mxu0 %v785
    %787 = vmatprep.subr.mxu0 0.0
    %v788 = vand.u32 %v51, 4294901760
    %789 = vmatpush1.msra.mxu0 %v788
    %790 = vmatprep.subr.mxu0 0.0
    %v791 = vand.u32 %v52, 4294901760
    %792 = vmatpush1.msra.mxu0 %v791
    %793 = vmatprep.subr.mxu0 0.0
    %v794 = vand.u32 %v53, 4294901760
    %795 = vmatpush1.msra.mxu0 %v794
    %796 = vmatprep.subr.mxu0 0.0
    %v797 = vand.u32 %v54, 4294901760
    %798 = vmatpush1.msra.mxu0 %v797
    %799 = vmatprep.subr.mxu0 0.0
    %v800 = vand.u32 %v55, 4294901760
    %801 = vmatpush1.msra.mxu0 %v800
    %802 = vmatprep.subr.mxu0 0.0
    %803 = vmatpush1.msra.mxu0 0.0
    %804 = vmatprep.subr.mxu0 0.0
    %805 = vmatpush1.msra.mxu0 0.0
    %806 = vmatprep.subr.mxu0 0.0
    %807 = vmatpush1.msra.mxu0 0.0
    %808 = vmatprep.subr.mxu0 0.0
    %809 = vmatpush1.msra.mxu0 0.0
    %810 = vmatprep.subr.mxu0 0.0
    %811 = vmatpush1.msra.mxu0 0.0
    %812 = vmatprep.subr.mxu0 0.0
    %813 = vmatpush1.msra.mxu0 0.0
    %814 = vmatprep.subr.mxu0 0.0
    %815 = vmatpush1.msra.mxu0 0.0
    %816 = vmatprep.subr.mxu0 0.0
    %817 = vmatpush1.msra.mxu0 0.0
    %818 = vmatprep.subr.mxu0 0.0
    %819 = vmatpush1.msra.mxu0 0.0
    %820 = vmatprep.subr.mxu0 0.0
    %821 = vmatpush1.msra.mxu0 0.0
    %822 = vmatprep.subr.mxu0 0.0
    %823 = vmatpush1.msra.mxu0 0.0
    %824 = vmatprep.subr.mxu0 0.0
    %825 = vmatpush1.msra.mxu0 0.0
    %826 = vmatprep.subr.mxu0 0.0
    %827 = vmatpush1.msra.mxu0 0.0
    %828 = vmatprep.subr.mxu0 0.0
    %829 = vmatpush1.msra.mxu0 0.0
    %830 = vmatprep.subr.mxu0 0.0
    %831 = vmatpush1.msra.mxu0 0.0
    %832 = vmatprep.subr.mxu0 0.0
    %833 = vmatpush1.msra.mxu0 0.0
    %834 = vmatprep.mubr.f32.mxu0 0.0
    %v835 = vand.u32 %v24, 4294901760
    %v836 = vsub.f32 %v24, %v835
    %v837 = vand.u32 %v836, 4294901760
    %838 = vmatmul.mubr.f32.gmra.mrb[0].mxu0 %v837
    %v839 = vpop.f32.mrb[0].mxu0
    %v840 = vadd.f32 %v646, %v839
    %v841 = vpop.f32.mrb[0].mxu0
    %842 = vmatprep.mubr.f32.mxu0 0.0
    %v843 = vand.u32 %v25, 4294901760
    %v844 = vsub.f32 %v25, %v843
    %v845 = vand.u32 %v844, 4294901760
    %846 = vmatmul.mubr.f32.gmra.mrb[0].mxu0 %v845
    %v847 = vpop.f32.mrb[0].mxu0
    %v848 = vadd.f32 %v653, %v847
    %v849 = vpop.f32.mrb[0].mxu0
    %850 = vmatprep.mubr.f32.mxu0 0.0
    %v851 = vand.u32 %v26, 4294901760
    %v852 = vsub.f32 %v26, %v851
    %v853 = vand.u32 %v852, 4294901760
    %854 = vmatmul.mubr.f32.gmra.mrb[0].mxu0 %v853
    %v855 = vpop.f32.mrb[0].mxu0
    %v856 = vadd.f32 %v660, %v855
    %v857 = vpop.f32.mrb[0].mxu0
    %858 = vmatprep.mubr.f32.mxu0 0.0
    %v859 = vand.u32 %v27, 4294901760
    %v860 = vsub.f32 %v27, %v859
    %v861 = vand.u32 %v860, 4294901760
    %862 = vmatmul.mubr.f32.gmra.mrb[0].mxu0 %v861
    %v863 = vpop.f32.mrb[0].mxu0
    %v864 = vadd.f32 %v667, %v863
    %v865 = vpop.f32.mrb[0].mxu0
    %866 = vmatprep.mubr.f32.mxu0 0.0
    %v867 = vand.u32 %v28, 4294901760
    %v868 = vsub.f32 %v28, %v867
    %v869 = vand.u32 %v868, 4294901760
    %870 = vmatmul.mubr.f32.gmra.mrb[0].mxu0 %v869
    %v871 = vpop.f32.mrb[0].mxu0
    %v872 = vadd.f32 %v674, %v871
    %v873 = vpop.f32.mrb[0].mxu0
    %874 = vmatprep.mubr.f32.mxu0 0.0
    %v875 = vand.u32 %v29, 4294901760
    %v876 = vsub.f32 %v29, %v875
    %v877 = vand.u32 %v876, 4294901760
    %878 = vmatmul.mubr.f32.gmra.mrb[0].mxu0 %v877
    %v879 = vpop.f32.mrb[0].mxu0
    %v880 = vadd.f32 %v681, %v879
    %v881 = vpop.f32.mrb[0].mxu0
    %882 = vmatprep.mubr.f32.mxu0 0.0
    %v883 = vand.u32 %v30, 4294901760
    %v884 = vsub.f32 %v30, %v883
    %v885 = vand.u32 %v884, 4294901760
    %886 = vmatmul.mubr.f32.gmra.mrb[0].mxu0 %v885
    %v887 = vpop.f32.mrb[0].mxu0
    %v888 = vadd.f32 %v688, %v887
    %v889 = vpop.f32.mrb[0].mxu0
    %890 = vmatprep.mubr.f32.mxu0 0.0
    %v891 = vand.u32 %v31, 4294901760
    %v892 = vsub.f32 %v31, %v891
    %v893 = vand.u32 %v892, 4294901760
    %894 = vmatmul.mubr.f32.gmra.mrb[0].mxu0 %v893
    %v895 = vpop.f32.mrb[0].mxu0
    %v896 = vadd.f32 %v695, %v895
    %v897 = vpop.f32.mrb[0].mxu0
    %898 = vmatprep.mubr.f32.mxu0 0.0
    %v899 = vand.u32 %v32, 4294901760
    %v900 = vsub.f32 %v32, %v899
    %v901 = vand.u32 %v900, 4294901760
    %902 = vmatmul.mubr.f32.gmra.mrb[0].mxu0 %v901
    %v903 = vpop.f32.mrb[0].mxu0
    %v904 = vadd.f32 %v702, %v903
    %v905 = vpop.f32.mrb[0].mxu0
    %906 = vmatprep.mubr.f32.mxu0 0.0
    %v907 = vand.u32 %v33, 4294901760
    %v908 = vsub.f32 %v33, %v907
    %v909 = vand.u32 %v908, 4294901760
    %910 = vmatmul.mubr.f32.gmra.mrb[0].mxu0 %v909
    %v911 = vpop.f32.mrb[0].mxu0
    %v912 = vadd.f32 %v709, %v911
    %v913 = vpop.f32.mrb[0].mxu0
    %914 = vmatprep.mubr.f32.mxu0 0.0
    %v915 = vand.u32 %v34, 4294901760
    %v916 = vsub.f32 %v34, %v915
    %v917 = vand.u32 %v916, 4294901760
    %918 = vmatmul.mubr.f32.gmra.mrb[0].mxu0 %v917
    %v919 = vpop.f32.mrb[0].mxu0
    %v920 = vadd.f32 %v716, %v919
    %v921 = vpop.f32.mrb[0].mxu0
    %922 = vmatprep.mubr.f32.mxu0 0.0
    %v923 = vand.u32 %v35, 4294901760
    %v924 = vsub.f32 %v35, %v923
    %v925 = vand.u32 %v924, 4294901760
    %926 = vmatmul.mubr.f32.gmra.mrb[0].mxu0 %v925
    %v927 = vpop.f32.mrb[0].mxu0
    %v928 = vadd.f32 %v723, %v927
    %v929 = vpop.f32.mrb[0].mxu0
    %930 = vmatprep.mubr.f32.mxu0 0.0
    %v931 = vand.u32 %v36, 4294901760
    %v932 = vsub.f32 %v36, %v931
    %v933 = vand.u32 %v932, 4294901760
    %934 = vmatmul.mubr.f32.gmra.mrb[0].mxu0 %v933
    %v935 = vpop.f32.mrb[0].mxu0
    %v936 = vadd.f32 %v730, %v935
    %v937 = vpop.f32.mrb[0].mxu0
    %938 = vmatprep.mubr.f32.mxu0 0.0
    %v939 = vand.u32 %v37, 4294901760
    %v940 = vsub.f32 %v37, %v939
    %v941 = vand.u32 %v940, 4294901760
    %942 = vmatmul.mubr.f32.gmra.mrb[0].mxu0 %v941
    %v943 = vpop.f32.mrb[0].mxu0
    %v944 = vadd.f32 %v737, %v943
    %v945 = vpop.f32.mrb[0].mxu0
    %946 = vmatprep.mubr.f32.mxu0 0.0
    %v947 = vand.u32 %v38, 4294901760
    %v948 = vsub.f32 %v38, %v947
    %v949 = vand.u32 %v948, 4294901760
    %950 = vmatmul.mubr.f32.gmra.mrb[0].mxu0 %v949
    %v951 = vpop.f32.mrb[0].mxu0
    %v952 = vadd.f32 %v744, %v951
    %v953 = vpop.f32.mrb[0].mxu0
    %954 = vmatprep.mubr.f32.mxu0 0.0
    %v955 = vand.u32 %v39, 4294901760
    %v956 = vsub.f32 %v39, %v955
    %v957 = vand.u32 %v956, 4294901760
    %958 = vmatmul.mubr.f32.gmra.mrb[0].mxu0 %v957
    %v959 = vpop.f32.mrb[0].mxu0
    %v960 = vadd.f32 %v751, %v959
    %v961 = vpop.f32.mrb[0].mxu0
    %962 = vdwg.mxu0
    %963 = vmatprep.subr.mxu0 0.0
    %v964 = vand.u32 %v40, 4294901760
    %v965 = vsub.f32 %v40, %v964
    %v966 = vand.u32 %v965, 4294901760
    %967 = vmatpush1.msra.mxu0 %v966
    %968 = vmatprep.subr.mxu0 0.0
    %v969 = vand.u32 %v41, 4294901760
    %v970 = vsub.f32 %v41, %v969
    %v971 = vand.u32 %v970, 4294901760
    %972 = vmatpush1.msra.mxu0 %v971
    %973 = vmatprep.subr.mxu0 0.0
    %v974 = vand.u32 %v42, 4294901760
    %v975 = vsub.f32 %v42, %v974
    %v976 = vand.u32 %v975, 4294901760
    %977 = vmatpush1.msra.mxu0 %v976
    %978 = vmatprep.subr.mxu0 0.0
    %v979 = vand.u32 %v43, 4294901760
    %v980 = vsub.f32 %v43, %v979
    %v981 = vand.u32 %v980, 4294901760
    %982 = vmatpush1.msra.mxu0 %v981
    %983 = vmatprep.subr.mxu0 0.0
    %v984 = vand.u32 %v44, 4294901760
    %v985 = vsub.f32 %v44, %v984
    %v986 = vand.u32 %v985, 4294901760
    %987 = vmatpush1.msra.mxu0 %v986
    %988 = vmatprep.subr.mxu0 0.0
    %v989 = vand.u32 %v45, 4294901760
    %v990 = vsub.f32 %v45, %v989
    %v991 = vand.u32 %v990, 4294901760
    %992 = vmatpush1.msra.mxu0 %v991
    %993 = vmatprep.subr.mxu0 0.0
    %v994 = vand.u32 %v46, 4294901760
    %v995 = vsub.f32 %v46, %v994
    %v996 = vand.u32 %v995, 4294901760
    %997 = vmatpush1.msra.mxu0 %v996
    %998 = vmatprep.subr.mxu0 0.0
    %v999 = vand.u32 %v47, 4294901760
    %v1000 = vsub.f32 %v47, %v999
    %v1001 = vand.u32 %v1000, 4294901760
    %1002 = vmatpush1.msra.mxu0 %v1001
    %1003 = vmatprep.subr.mxu0 0.0
    %v1004 = vand.u32 %v48, 4294901760
    %v1005 = vsub.f32 %v48, %v1004
    %v1006 = vand.u32 %v1005, 4294901760
    %1007 = vmatpush1.msra.mxu0 %v1006
    %1008 = vmatprep.subr.mxu0 0.0
    %v1009 = vand.u32 %v49, 4294901760
    %v1010 = vsub.f32 %v49, %v1009
    %v1011 = vand.u32 %v1010, 4294901760
    %1012 = vmatpush1.msra.mxu0 %v1011
    %1013 = vmatprep.subr.mxu0 0.0
    %v1014 = vand.u32 %v50, 4294901760
    %v1015 = vsub.f32 %v50, %v1014
    %v1016 = vand.u32 %v1015, 4294901760
    %1017 = vmatpush1.msra.mxu0 %v1016
    %1018 = vmatprep.subr.mxu0 0.0
    %v1019 = vand.u32 %v51, 4294901760
    %v1020 = vsub.f32 %v51, %v1019
    %v1021 = vand.u32 %v1020, 4294901760
    %1022 = vmatpush1.msra.mxu0 %v1021
    %1023 = vmatprep.subr.mxu0 0.0
    %v1024 = vand.u32 %v52, 4294901760
    %v1025 = vsub.f32 %v52, %v1024
    %v1026 = vand.u32 %v1025, 4294901760
    %1027 = vmatpush1.msra.mxu0 %v1026
    %1028 = vmatprep.subr.mxu0 0.0
    %v1029 = vand.u32 %v53, 4294901760
    %v1030 = vsub.f32 %v53, %v1029
    %v1031 = vand.u32 %v1030, 4294901760
    %1032 = vmatpush1.msra.mxu0 %v1031
    %1033 = vmatprep.subr.mxu0 0.0
    %v1034 = vand.u32 %v54, 4294901760
    %v1035 = vsub.f32 %v54, %v1034
    %v1036 = vand.u32 %v1035, 4294901760
    %1037 = vmatpush1.msra.mxu0 %v1036
    %1038 = vmatprep.subr.mxu0 0.0
    %v1039 = vand.u32 %v55, 4294901760
    %v1040 = vsub.f32 %v55, %v1039
    %v1041 = vand.u32 %v1040, 4294901760
    %1042 = vmatpush1.msra.mxu0 %v1041
    %1043 = vmatprep.subr.mxu0 0.0
    %1044 = vmatpush1.msra.mxu0 0.0
    %1045 = vmatprep.subr.mxu0 0.0
    %1046 = vmatpush1.msra.mxu0 0.0
    %1047 = vmatprep.subr.mxu0 0.0
    %1048 = vmatpush1.msra.mxu0 0.0
    %1049 = vmatprep.subr.mxu0 0.0
    %1050 = vmatpush1.msra.mxu0 0.0
    %1051 = vmatprep.subr.mxu0 0.0
    %1052 = vmatpush1.msra.mxu0 0.0
    %1053 = vmatprep.subr.mxu0 0.0
    %1054 = vmatpush1.msra.mxu0 0.0
    %1055 = vmatprep.subr.mxu0 0.0
    %1056 = vmatpush1.msra.mxu0 0.0
    %1057 = vmatprep.subr.mxu0 0.0
    %1058 = vmatpush1.msra.mxu0 0.0
    %1059 = vmatprep.subr.mxu0 0.0
    %1060 = vmatpush1.msra.mxu0 0.0
    %1061 = vmatprep.subr.mxu0 0.0
    %1062 = vmatpush1.msra.mxu0 0.0
    %1063 = vmatprep.subr.mxu0 0.0
    %1064 = vmatpush1.msra.mxu0 0.0
    %1065 = vmatprep.subr.mxu0 0.0
    %1066 = vmatpush1.msra.mxu0 0.0
    %1067 = vmatprep.subr.mxu0 0.0
    %1068 = vmatpush1.msra.mxu0 0.0
    %1069 = vmatprep.subr.mxu0 0.0
    %1070 = vmatpush1.msra.mxu0 0.0
    %1071 = vmatprep.subr.mxu0 0.0
    %1072 = vmatpush1.msra.mxu0 0.0
    %1073 = vmatprep.subr.mxu0 0.0
    %1074 = vmatpush1.msra.mxu0 0.0
    %1075 = vmatprep.mubr.f32.mxu0 0.0
    %v1076 = vand.u32 %v24, 4294901760
    %1077 = vmatmul.mubr.f32.gmra.mrb[0].mxu0 %v1076
    %v1078 = vpop.f32.mrb[0].mxu0
    %v1079 = vadd.f32 %v840, %v1078
    %v1080 = vpop.f32.mrb[0].mxu0
    %1081 = vmatprep.mubr.f32.mxu0 0.0
    %v1082 = vand.u32 %v25, 4294901760
    %1083 = vmatmul.mubr.f32.gmra.mrb[0].mxu0 %v1082
    %v1084 = vpop.f32.mrb[0].mxu0
    %v1085 = vadd.f32 %v848, %v1084
    %v1086 = vpop.f32.mrb[0].mxu0
    %1087 = vmatprep.mubr.f32.mxu0 0.0
    %v1088 = vand.u32 %v26, 4294901760
    %1089 = vmatmul.mubr.f32.gmra.mrb[0].mxu0 %v1088
    %v1090 = vpop.f32.mrb[0].mxu0
    %v1091 = vadd.f32 %v856, %v1090
    %v1092 = vpop.f32.mrb[0].mxu0
    %1093 = vmatprep.mubr.f32.mxu0 0.0
    %v1094 = vand.u32 %v27, 4294901760
    %1095 = vmatmul.mubr.f32.gmra.mrb[0].mxu0 %v1094
    %v1096 = vpop.f32.mrb[0].mxu0
    %v1097 = vadd.f32 %v864, %v1096
    %v1098 = vpop.f32.mrb[0].mxu0
    %1099 = vmatprep.mubr.f32.mxu0 0.0
    %v1100 = vand.u32 %v28, 4294901760
    %1101 = vmatmul.mubr.f32.gmra.mrb[0].mxu0 %v1100
    %v1102 = vpop.f32.mrb[0].mxu0
    %v1103 = vadd.f32 %v872, %v1102
    %v1104 = vpop.f32.mrb[0].mxu0
    %1105 = vmatprep.mubr.f32.mxu0 0.0
    %v1106 = vand.u32 %v29, 4294901760
    %1107 = vmatmul.mubr.f32.gmra.mrb[0].mxu0 %v1106
    %v1108 = vpop.f32.mrb[0].mxu0
    %v1109 = vadd.f32 %v880, %v1108
    %v1110 = vpop.f32.mrb[0].mxu0
    %1111 = vmatprep.mubr.f32.mxu0 0.0
    %v1112 = vand.u32 %v30, 4294901760
    %1113 = vmatmul.mubr.f32.gmra.mrb[0].mxu0 %v1112
    %v1114 = vpop.f32.mrb[0].mxu0
    %v1115 = vadd.f32 %v888, %v1114
    %v1116 = vpop.f32.mrb[0].mxu0
    %1117 = vmatprep.mubr.f32.mxu0 0.0
    %v1118 = vand.u32 %v31, 4294901760
    %1119 = vmatmul.mubr.f32.gmra.mrb[0].mxu0 %v1118
    %v1120 = vpop.f32.mrb[0].mxu0
    %v1121 = vadd.f32 %v896, %v1120
    %v1122 = vpop.f32.mrb[0].mxu0
    %1123 = vmatprep.mubr.f32.mxu0 0.0
    %v1124 = vand.u32 %v32, 4294901760
    %1125 = vmatmul.mubr.f32.gmra.mrb[0].mxu0 %v1124
    %v1126 = vpop.f32.mrb[0].mxu0
    %v1127 = vadd.f32 %v904, %v1126
    %v1128 = vpop.f32.mrb[0].mxu0
    %1129 = vmatprep.mubr.f32.mxu0 0.0
    %v1130 = vand.u32 %v33, 4294901760
    %1131 = vmatmul.mubr.f32.gmra.mrb[0].mxu0 %v1130
    %v1132 = vpop.f32.mrb[0].mxu0
    %v1133 = vadd.f32 %v912, %v1132
    %v1134 = vpop.f32.mrb[0].mxu0
    %1135 = vmatprep.mubr.f32.mxu0 0.0
    %v1136 = vand.u32 %v34, 4294901760
    %1137 = vmatmul.mubr.f32.gmra.mrb[0].mxu0 %v1136
    %v1138 = vpop.f32.mrb[0].mxu0
    %v1139 = vadd.f32 %v920, %v1138
    %v1140 = vpop.f32.mrb[0].mxu0
    %1141 = vmatprep.mubr.f32.mxu0 0.0
    %v1142 = vand.u32 %v35, 4294901760
    %1143 = vmatmul.mubr.f32.gmra.mrb[0].mxu0 %v1142
    %v1144 = vpop.f32.mrb[0].mxu0
    %v1145 = vadd.f32 %v928, %v1144
    %v1146 = vpop.f32.mrb[0].mxu0
    %1147 = vmatprep.mubr.f32.mxu0 0.0
    %v1148 = vand.u32 %v36, 4294901760
    %1149 = vmatmul.mubr.f32.gmra.mrb[0].mxu0 %v1148
    %v1150 = vpop.f32.mrb[0].mxu0
    %v1151 = vadd.f32 %v936, %v1150
    %v1152 = vpop.f32.mrb[0].mxu0
    %1153 = vmatprep.mubr.f32.mxu0 0.0
    %v1154 = vand.u32 %v37, 4294901760
    %1155 = vmatmul.mubr.f32.gmra.mrb[0].mxu0 %v1154
    %v1156 = vpop.f32.mrb[0].mxu0
    %v1157 = vadd.f32 %v944, %v1156
    %v1158 = vpop.f32.mrb[0].mxu0
    %1159 = vmatprep.mubr.f32.mxu0 0.0
    %v1160 = vand.u32 %v38, 4294901760
    %1161 = vmatmul.mubr.f32.gmra.mrb[0].mxu0 %v1160
    %v1162 = vpop.f32.mrb[0].mxu0
    %v1163 = vadd.f32 %v952, %v1162
    %v1164 = vpop.f32.mrb[0].mxu0
    %1165 = vmatprep.mubr.f32.mxu0 0.0
    %v1166 = vand.u32 %v39, 4294901760
    %1167 = vmatmul.mubr.f32.gmra.mrb[0].mxu0 %v1166
    %v1168 = vpop.f32.mrb[0].mxu0
    %v1169 = vadd.f32 %v960, %v1168
    %v1170 = vpop.f32.mrb[0].mxu0
    %1171 = vdwg.mxu0
    %1172 = vmatprep.subr.mxu0 0.0
    %v1173 = vand.u32 %v40, 4294901760
    %1174 = vmatpush1.msra.mxu0 %v1173
    %1175 = vmatprep.subr.mxu0 0.0
    %v1176 = vand.u32 %v41, 4294901760
    %1177 = vmatpush1.msra.mxu0 %v1176
    %1178 = vmatprep.subr.mxu0 0.0
    %v1179 = vand.u32 %v42, 4294901760
    %1180 = vmatpush1.msra.mxu0 %v1179
    %1181 = vmatprep.subr.mxu0 0.0
    %v1182 = vand.u32 %v43, 4294901760
    %1183 = vmatpush1.msra.mxu0 %v1182
    %1184 = vmatprep.subr.mxu0 0.0
    %v1185 = vand.u32 %v44, 4294901760
    %1186 = vmatpush1.msra.mxu0 %v1185
    %1187 = vmatprep.subr.mxu0 0.0
    %v1188 = vand.u32 %v45, 4294901760
    %1189 = vmatpush1.msra.mxu0 %v1188
    %1190 = vmatprep.subr.mxu0 0.0
    %v1191 = vand.u32 %v46, 4294901760
    %1192 = vmatpush1.msra.mxu0 %v1191
    %1193 = vmatprep.subr.mxu0 0.0
    %v1194 = vand.u32 %v47, 4294901760
    %1195 = vmatpush1.msra.mxu0 %v1194
    %1196 = vmatprep.subr.mxu0 0.0
    %v1197 = vand.u32 %v48, 4294901760
    %1198 = vmatpush1.msra.mxu0 %v1197
    %1199 = vmatprep.subr.mxu0 0.0
    %v1200 = vand.u32 %v49, 4294901760
    %1201 = vmatpush1.msra.mxu0 %v1200
    %1202 = vmatprep.subr.mxu0 0.0
    %v1203 = vand.u32 %v50, 4294901760
    %1204 = vmatpush1.msra.mxu0 %v1203
    %1205 = vmatprep.subr.mxu0 0.0
    %v1206 = vand.u32 %v51, 4294901760
    %1207 = vmatpush1.msra.mxu0 %v1206
    %1208 = vmatprep.subr.mxu0 0.0
    %v1209 = vand.u32 %v52, 4294901760
    %1210 = vmatpush1.msra.mxu0 %v1209
    %1211 = vmatprep.subr.mxu0 0.0
    %v1212 = vand.u32 %v53, 4294901760
    %1213 = vmatpush1.msra.mxu0 %v1212
    %1214 = vmatprep.subr.mxu0 0.0
    %v1215 = vand.u32 %v54, 4294901760
    %1216 = vmatpush1.msra.mxu0 %v1215
    %1217 = vmatprep.subr.mxu0 0.0
    %v1218 = vand.u32 %v55, 4294901760
    %1219 = vmatpush1.msra.mxu0 %v1218
    %1220 = vmatprep.subr.mxu0 0.0
    %1221 = vmatpush1.msra.mxu0 0.0
    %1222 = vmatprep.subr.mxu0 0.0
    %1223 = vmatpush1.msra.mxu0 0.0
    %1224 = vmatprep.subr.mxu0 0.0
    %1225 = vmatpush1.msra.mxu0 0.0
    %1226 = vmatprep.subr.mxu0 0.0
    %1227 = vmatpush1.msra.mxu0 0.0
    %1228 = vmatprep.subr.mxu0 0.0
    %1229 = vmatpush1.msra.mxu0 0.0
    %1230 = vmatprep.subr.mxu0 0.0
    %1231 = vmatpush1.msra.mxu0 0.0
    %1232 = vmatprep.subr.mxu0 0.0
    %1233 = vmatpush1.msra.mxu0 0.0
    %1234 = vmatprep.subr.mxu0 0.0
    %1235 = vmatpush1.msra.mxu0 0.0
    %1236 = vmatprep.subr.mxu0 0.0
    %1237 = vmatpush1.msra.mxu0 0.0
    %1238 = vmatprep.subr.mxu0 0.0
    %1239 = vmatpush1.msra.mxu0 0.0
    %1240 = vmatprep.subr.mxu0 0.0
    %1241 = vmatpush1.msra.mxu0 0.0
    %1242 = vmatprep.subr.mxu0 0.0
    %1243 = vmatpush1.msra.mxu0 0.0
    %1244 = vmatprep.subr.mxu0 0.0
    %1245 = vmatpush1.msra.mxu0 0.0
    %1246 = vmatprep.subr.mxu0 0.0
    %1247 = vmatpush1.msra.mxu0 0.0
    %1248 = vmatprep.subr.mxu0 0.0
    %1249 = vmatpush1.msra.mxu0 0.0
    %1250 = vmatprep.subr.mxu0 0.0
    %1251 = vmatpush1.msra.mxu0 0.0
    %1252 = vmatprep.mubr.f32.mxu0 0.0
    %v1253 = vand.u32 %v24, 4294901760
    %1254 = vmatmul.mubr.f32.gmra.mrb[0].mxu0 %v1253
    %v1255 = vpop.f32.mrb[0].mxu0
    %v1256 = vadd.f32 %v1079, %v1255
    %v1257 = vpop.f32.mrb[0].mxu0
    %1258 = vmatprep.mubr.f32.mxu0 0.0
    %v1259 = vand.u32 %v25, 4294901760
    %1260 = vmatmul.mubr.f32.gmra.mrb[0].mxu0 %v1259
    %v1261 = vpop.f32.mrb[0].mxu0
    %v1262 = vadd.f32 %v1085, %v1261
    %v1263 = vpop.f32.mrb[0].mxu0
    %1264 = vmatprep.mubr.f32.mxu0 0.0
    %v1265 = vand.u32 %v26, 4294901760
    %1266 = vmatmul.mubr.f32.gmra.mrb[0].mxu0 %v1265
    %v1267 = vpop.f32.mrb[0].mxu0
    %v1268 = vadd.f32 %v1091, %v1267
    %v1269 = vpop.f32.mrb[0].mxu0
    %1270 = vmatprep.mubr.f32.mxu0 0.0
    %v1271 = vand.u32 %v27, 4294901760
    %1272 = vmatmul.mubr.f32.gmra.mrb[0].mxu0 %v1271
    %v1273 = vpop.f32.mrb[0].mxu0
    %v1274 = vadd.f32 %v1097, %v1273
    %v1275 = vpop.f32.mrb[0].mxu0
    %1276 = vmatprep.mubr.f32.mxu0 0.0
    %v1277 = vand.u32 %v28, 4294901760
    %1278 = vmatmul.mubr.f32.gmra.mrb[0].mxu0 %v1277
    %v1279 = vpop.f32.mrb[0].mxu0
    %v1280 = vadd.f32 %v1103, %v1279
    %v1281 = vpop.f32.mrb[0].mxu0
    %1282 = vmatprep.mubr.f32.mxu0 0.0
    %v1283 = vand.u32 %v29, 4294901760
    %1284 = vmatmul.mubr.f32.gmra.mrb[0].mxu0 %v1283
    %v1285 = vpop.f32.mrb[0].mxu0
    %v1286 = vadd.f32 %v1109, %v1285
    %v1287 = vpop.f32.mrb[0].mxu0
    %1288 = vmatprep.mubr.f32.mxu0 0.0
    %v1289 = vand.u32 %v30, 4294901760
    %1290 = vmatmul.mubr.f32.gmra.mrb[0].mxu0 %v1289
    %v1291 = vpop.f32.mrb[0].mxu0
    %v1292 = vadd.f32 %v1115, %v1291
    %v1293 = vpop.f32.mrb[0].mxu0
    %1294 = vmatprep.mubr.f32.mxu0 0.0
    %v1295 = vand.u32 %v31, 4294901760
    %1296 = vmatmul.mubr.f32.gmra.mrb[0].mxu0 %v1295
    %v1297 = vpop.f32.mrb[0].mxu0
    %v1298 = vadd.f32 %v1121, %v1297
    %v1299 = vpop.f32.mrb[0].mxu0
    %1300 = vmatprep.mubr.f32.mxu0 0.0
    %v1301 = vand.u32 %v32, 4294901760
    %1302 = vmatmul.mubr.f32.gmra.mrb[0].mxu0 %v1301
    %v1303 = vpop.f32.mrb[0].mxu0
    %v1304 = vadd.f32 %v1127, %v1303
    %v1305 = vpop.f32.mrb[0].mxu0
    %1306 = vmatprep.mubr.f32.mxu0 0.0
    %v1307 = vand.u32 %v33, 4294901760
    %1308 = vmatmul.mubr.f32.gmra.mrb[0].mxu0 %v1307
    %v1309 = vpop.f32.mrb[0].mxu0
    %v1310 = vadd.f32 %v1133, %v1309
    %v1311 = vpop.f32.mrb[0].mxu0
    %1312 = vmatprep.mubr.f32.mxu0 0.0
    %v1313 = vand.u32 %v34, 4294901760
    %1314 = vmatmul.mubr.f32.gmra.mrb[0].mxu0 %v1313
    %v1315 = vpop.f32.mrb[0].mxu0
    %v1316 = vadd.f32 %v1139, %v1315
    %v1317 = vpop.f32.mrb[0].mxu0
    %1318 = vmatprep.mubr.f32.mxu0 0.0
    %v1319 = vand.u32 %v35, 4294901760
    %1320 = vmatmul.mubr.f32.gmra.mrb[0].mxu0 %v1319
    %v1321 = vpop.f32.mrb[0].mxu0
    %v1322 = vadd.f32 %v1145, %v1321
    %v1323 = vpop.f32.mrb[0].mxu0
    %1324 = vmatprep.mubr.f32.mxu0 0.0
    %v1325 = vand.u32 %v36, 4294901760
    %1326 = vmatmul.mubr.f32.gmra.mrb[0].mxu0 %v1325
    %v1327 = vpop.f32.mrb[0].mxu0
    %v1328 = vadd.f32 %v1151, %v1327
    %v1329 = vpop.f32.mrb[0].mxu0
    %1330 = vmatprep.mubr.f32.mxu0 0.0
    %v1331 = vand.u32 %v37, 4294901760
    %1332 = vmatmul.mubr.f32.gmra.mrb[0].mxu0 %v1331
    %v1333 = vpop.f32.mrb[0].mxu0
    %v1334 = vadd.f32 %v1157, %v1333
    %v1335 = vpop.f32.mrb[0].mxu0
    %1336 = vmatprep.mubr.f32.mxu0 0.0
    %v1337 = vand.u32 %v38, 4294901760
    %1338 = vmatmul.mubr.f32.gmra.mrb[0].mxu0 %v1337
    %v1339 = vpop.f32.mrb[0].mxu0
    %v1340 = vadd.f32 %v1163, %v1339
    %v1341 = vpop.f32.mrb[0].mxu0
    %1342 = vmatprep.mubr.f32.mxu0 0.0
    %v1343 = vand.u32 %v39, 4294901760
    %1344 = vmatmul.mubr.f32.gmra.mrb[0].mxu0 %v1343
    %v1345 = vpop.f32.mrb[0].mxu0
    %v1346 = vadd.f32 %v1169, %v1345
    %v1347 = vpop.f32.mrb[0].mxu0
    %1348 = vdwg.mxu0
    %1349 = vst [vmem:[#allocation2] sm:$0xff] %v1256
    %1350 = vst [vmem:[#allocation2 + $0x8] sm:$0xff] %v1262
    %1351 = vst [vmem:[#allocation2 + $0x10] sm:$0xff] %v1268
    %1352 = vst [vmem:[#allocation2 + $0x18] sm:$0xff] %v1274
    %1353 = vst [vmem:[#allocation2 + $0x20] sm:$0xff] %v1280
    %1354 = vst [vmem:[#allocation2 + $0x28] sm:$0xff] %v1286
    %1355 = vst [vmem:[#allocation2 + $0x30] sm:$0xff] %v1292
    %1356 = vst [vmem:[#allocation2 + $0x38] sm:$0xff] %v1298
    %1357 = vst [vmem:[#allocation2 + $0x40] sm:$0xff] %v1304
    %1358 = vst [vmem:[#allocation2 + $0x48] sm:$0xff] %v1310
    %1359 = vst [vmem:[#allocation2 + $0x50] sm:$0xff] %v1316
    %1360 = vst [vmem:[#allocation2 + $0x58] sm:$0xff] %v1322
    %1361 = vst [vmem:[#allocation2 + $0x60] sm:$0xff] %v1328
    %1362 = vst [vmem:[#allocation2 + $0x68] sm:$0xff] %v1334
    %1363 = vst [vmem:[#allocation2 + $0x70] sm:$0xff] %v1340
    %1364 = vst [vmem:[#allocation2 + $0x78] sm:$0xff] %v1346
    %v1365 = vld [vmem:[%s2] sm:$0xff]
    %v1366 = vld [vmem:[%s2 + $0x8] sm:$0xff]
    %v1367 = vld [vmem:[%s2 + $0x10] sm:$0xff]
    %v1368 = vld [vmem:[%s2 + $0x18] sm:$0xff]
    %v1369 = vld [vmem:[%s2 + $0x20] sm:$0xff]
    %v1370 = vld [vmem:[%s2 + $0x28] sm:$0xff]
    %v1371 = vld [vmem:[%s2 + $0x30] sm:$0xff]
    %v1372 = vld [vmem:[%s2 + $0x38] sm:$0xff]
    %v1373 = vld [vmem:[%s2 + $0x40] sm:$0xff]
    %v1374 = vld [vmem:[%s2 + $0x48] sm:$0xff]
    %v1375 = vld [vmem:[%s2 + $0x50] sm:$0xff]
    %v1376 = vld [vmem:[%s2 + $0x58] sm:$0xff]
    %v1377 = vld [vmem:[%s2 + $0x60] sm:$0xff]
    %v1378 = vld [vmem:[%s2 + $0x68] sm:$0xff]
    %v1379 = vld [vmem:[%s2 + $0x70] sm:$0xff]
    %v1380 = vld [vmem:[%s2 + $0x78] sm:$0xff]
    %v1381 = vld [vmem:[#allocation2] sm:$0xff]
    %1382 = vmatprep.subr.mxu0 0.0
    %v1383 = vand.u32 %v1365, 4294901760
    %1384 = vmatpush1.msra.mxu0 %v1383
    %1385 = vmatprep.subr.mxu0 0.0
    %v1386 = vand.u32 %v1366, 4294901760
    %1387 = vmatpush1.msra.mxu0 %v1386
    %1388 = vmatprep.subr.mxu0 0.0
    %v1389 = vand.u32 %v1367, 4294901760
    %1390 = vmatpush1.msra.mxu0 %v1389
    %1391 = vmatprep.subr.mxu0 0.0
    %v1392 = vand.u32 %v1368, 4294901760
    %1393 = vmatpush1.msra.mxu0 %v1392
    %1394 = vmatprep.subr.mxu0 0.0
    %v1395 = vand.u32 %v1369, 4294901760
    %1396 = vmatpush1.msra.mxu0 %v1395
    %1397 = vmatprep.subr.mxu0 0.0
    %v1398 = vand.u32 %v1370, 4294901760
    %1399 = vmatpush1.msra.mxu0 %v1398
    %1400 = vmatprep.subr.mxu0 0.0
    %v1401 = vand.u32 %v1371, 4294901760
    %1402 = vmatpush1.msra.mxu0 %v1401
    %1403 = vmatprep.subr.mxu0 0.0
    %v1404 = vand.u32 %v1372, 4294901760
    %1405 = vmatpush1.msra.mxu0 %v1404
    %1406 = vmatprep.subr.mxu0 0.0
    %v1407 = vand.u32 %v1373, 4294901760
    %1408 = vmatpush1.msra.mxu0 %v1407
    %1409 = vmatprep.subr.mxu0 0.0
    %v1410 = vand.u32 %v1374, 4294901760
    %1411 = vmatpush1.msra.mxu0 %v1410
    %1412 = vmatprep.subr.mxu0 0.0
    %v1413 = vand.u32 %v1375, 4294901760
    %1414 = vmatpush1.msra.mxu0 %v1413
    %1415 = vmatprep.subr.mxu0 0.0
    %v1416 = vand.u32 %v1376, 4294901760
    %1417 = vmatpush1.msra.mxu0 %v1416
    %1418 = vmatprep.subr.mxu0 0.0
    %v1419 = vand.u32 %v1377, 4294901760
    %1420 = vmatpush1.msra.mxu0 %v1419
    %1421 = vmatprep.subr.mxu0 0.0
    %v1422 = vand.u32 %v1378, 4294901760
    %1423 = vmatpush1.msra.mxu0 %v1422
    %1424 = vmatprep.subr.mxu0 0.0
    %v1425 = vand.u32 %v1379, 4294901760
    %1426 = vmatpush1.msra.mxu0 %v1425
    %1427 = vmatprep.subr.mxu0 0.0
    %v1428 = vand.u32 %v1380, 4294901760
    %1429 = vmatpush1.msra.mxu0 %v1428
    %1430 = vmatprep.subr.mxu0 0.0
    %1431 = vmatpush1.msra.mxu0 0.0
    %1432 = vmatprep.subr.mxu0 0.0
    %1433 = vmatpush1.msra.mxu0 0.0
    %1434 = vmatprep.subr.mxu0 0.0
    %1435 = vmatpush1.msra.mxu0 0.0
    %1436 = vmatprep.subr.mxu0 0.0
    %1437 = vmatpush1.msra.mxu0 0.0
    %1438 = vmatprep.subr.mxu0 0.0
    %1439 = vmatpush1.msra.mxu0 0.0
    %1440 = vmatprep.subr.mxu0 0.0
    %1441 = vmatpush1.msra.mxu0 0.0
    %1442 = vmatprep.subr.mxu0 0.0
    %1443 = vmatpush1.msra.mxu0 0.0
    %1444 = vmatprep.subr.mxu0 0.0
    %1445 = vmatpush1.msra.mxu0 0.0
    %1446 = vmatprep.subr.mxu0 0.0
    %1447 = vmatpush1.msra.mxu0 0.0
    %1448 = vmatprep.subr.mxu0 0.0
    %1449 = vmatpush1.msra.mxu0 0.0
    %1450 = vmatprep.subr.mxu0 0.0
    %1451 = vmatpush1.msra.mxu0 0.0
    %1452 = vmatprep.subr.mxu0 0.0
    %1453 = vmatpush1.msra.mxu0 0.0
    %1454 = vmatprep.subr.mxu0 0.0
    %1455 = vmatpush1.msra.mxu0 0.0
    %1456 = vmatprep.subr.mxu0 0.0
    %1457 = vmatpush1.msra.mxu0 0.0
    %1458 = vmatprep.subr.mxu0 0.0
    %1459 = vmatpush1.msra.mxu0 0.0
    %1460 = vmatprep.subr.mxu0 0.0
    %1461 = vmatpush1.msra.mxu0 0.0
    %1462 = vmatprep.mubr.f32.mxu0 0.0
    %1463 = vmatmul.mubr.f32.gmra.mrb[0].mxu0 0.0
    %v1464 = vpop.f32.mrb[0].mxu0
    %v1465 = vadd.f32 0.0, %v1464
    %v1466 = vpop.f32.mrb[0].mxu0
    %1467 = vdwg.mxu0
    %1468 = vmatprep.subr.mxu0 0.0
    %v1469 = vand.u32 %v1365, 4294901760
    %v1470 = vsub.f32 %v1365, %v1469
    %v1471 = vand.u32 %v1470, 4294901760
    %v1472 = vsub.f32 %v1470, %v1471
    %v1473 = vand.u32 %v1472, 4294901760
    %1474 = vmatpush1.msra.mxu0 %v1473
    %1475 = vmatprep.subr.mxu0 0.0
    %v1476 = vand.u32 %v1366, 4294901760
    %v1477 = vsub.f32 %v1366, %v1476
    %v1478 = vand.u32 %v1477, 4294901760
    %v1479 = vsub.f32 %v1477, %v1478
    %v1480 = vand.u32 %v1479, 4294901760
    %1481 = vmatpush1.msra.mxu0 %v1480
    %1482 = vmatprep.subr.mxu0 0.0
    %v1483 = vand.u32 %v1367, 4294901760
    %v1484 = vsub.f32 %v1367, %v1483
    %v1485 = vand.u32 %v1484, 4294901760
    %v1486 = vsub.f32 %v1484, %v1485
    %v1487 = vand.u32 %v1486, 4294901760
    %1488 = vmatpush1.msra.mxu0 %v1487
    %1489 = vmatprep.subr.mxu0 0.0
    %v1490 = vand.u32 %v1368, 4294901760
    %v1491 = vsub.f32 %v1368, %v1490
    %v1492 = vand.u32 %v1491, 4294901760
    %v1493 = vsub.f32 %v1491, %v1492
    %v1494 = vand.u32 %v1493, 4294901760
    %1495 = vmatpush1.msra.mxu0 %v1494
    %1496 = vmatprep.subr.mxu0 0.0
    %v1497 = vand.u32 %v1369, 4294901760
    %v1498 = vsub.f32 %v1369, %v1497
    %v1499 = vand.u32 %v1498, 4294901760
    %v1500 = vsub.f32 %v1498, %v1499
    %v1501 = vand.u32 %v1500, 4294901760
    %1502 = vmatpush1.msra.mxu0 %v1501
    %1503 = vmatprep.subr.mxu0 0.0
    %v1504 = vand.u32 %v1370, 4294901760
    %v1505 = vsub.f32 %v1370, %v1504
    %v1506 = vand.u32 %v1505, 4294901760
    %v1507 = vsub.f32 %v1505, %v1506
    %v1508 = vand.u32 %v1507, 4294901760
    %1509 = vmatpush1.msra.mxu0 %v1508
    %1510 = vmatprep.subr.mxu0 0.0
    %v1511 = vand.u32 %v1371, 4294901760
    %v1512 = vsub.f32 %v1371, %v1511
    %v1513 = vand.u32 %v1512, 4294901760
    %v1514 = vsub.f32 %v1512, %v1513
    %v1515 = vand.u32 %v1514, 4294901760
    %1516 = vmatpush1.msra.mxu0 %v1515
    %1517 = vmatprep.subr.mxu0 0.0
    %v1518 = vand.u32 %v1372, 4294901760
    %v1519 = vsub.f32 %v1372, %v1518
    %v1520 = vand.u32 %v1519, 4294901760
    %v1521 = vsub.f32 %v1519, %v1520
    %v1522 = vand.u32 %v1521, 4294901760
    %1523 = vmatpush1.msra.mxu0 %v1522
    %1524 = vmatprep.subr.mxu0 0.0
    %v1525 = vand.u32 %v1373, 4294901760
    %v1526 = vsub.f32 %v1373, %v1525
    %v1527 = vand.u32 %v1526, 4294901760
    %v1528 = vsub.f32 %v1526, %v1527
    %v1529 = vand.u32 %v1528, 4294901760
    %1530 = vmatpush1.msra.mxu0 %v1529
    %1531 = vmatprep.subr.mxu0 0.0
    %v1532 = vand.u32 %v1374, 4294901760
    %v1533 = vsub.f32 %v1374, %v1532
    %v1534 = vand.u32 %v1533, 4294901760
    %v1535 = vsub.f32 %v1533, %v1534
    %v1536 = vand.u32 %v1535, 4294901760
    %1537 = vmatpush1.msra.mxu0 %v1536
    %1538 = vmatprep.subr.mxu0 0.0
    %v1539 = vand.u32 %v1375, 4294901760
    %v1540 = vsub.f32 %v1375, %v1539
    %v1541 = vand.u32 %v1540, 4294901760
    %v1542 = vsub.f32 %v1540, %v1541
    %v1543 = vand.u32 %v1542, 4294901760
    %1544 = vmatpush1.msra.mxu0 %v1543
    %1545 = vmatprep.subr.mxu0 0.0
    %v1546 = vand.u32 %v1376, 4294901760
    %v1547 = vsub.f32 %v1376, %v1546
    %v1548 = vand.u32 %v1547, 4294901760
    %v1549 = vsub.f32 %v1547, %v1548
    %v1550 = vand.u32 %v1549, 4294901760
    %1551 = vmatpush1.msra.mxu0 %v1550
    %1552 = vmatprep.subr.mxu0 0.0
    %v1553 = vand.u32 %v1377, 4294901760
    %v1554 = vsub.f32 %v1377, %v1553
    %v1555 = vand.u32 %v1554, 4294901760
    %v1556 = vsub.f32 %v1554, %v1555
    %v1557 = vand.u32 %v1556, 4294901760
    %1558 = vmatpush1.msra.mxu0 %v1557
    %1559 = vmatprep.subr.mxu0 0.0
    %v1560 = vand.u32 %v1378, 4294901760
    %v1561 = vsub.f32 %v1378, %v1560
    %v1562 = vand.u32 %v1561, 4294901760
    %v1563 = vsub.f32 %v1561, %v1562
    %v1564 = vand.u32 %v1563, 4294901760
    %1565 = vmatpush1.msra.mxu0 %v1564
    %1566 = vmatprep.subr.mxu0 0.0
    %v1567 = vand.u32 %v1379, 4294901760
    %v1568 = vsub.f32 %v1379, %v1567
    %v1569 = vand.u32 %v1568, 4294901760
    %v1570 = vsub.f32 %v1568, %v1569
    %v1571 = vand.u32 %v1570, 4294901760
    %1572 = vmatpush1.msra.mxu0 %v1571
    %1573 = vmatprep.subr.mxu0 0.0
    %v1574 = vand.u32 %v1380, 4294901760
    %v1575 = vsub.f32 %v1380, %v1574
    %v1576 = vand.u32 %v1575, 4294901760
    %v1577 = vsub.f32 %v1575, %v1576
    %v1578 = vand.u32 %v1577, 4294901760
    %1579 = vmatpush1.msra.mxu0 %v1578
    %1580 = vmatprep.subr.mxu0 0.0
    %1581 = vmatpush1.msra.mxu0 0.0
    %1582 = vmatprep.subr.mxu0 0.0
    %1583 = vmatpush1.msra.mxu0 0.0
    %1584 = vmatprep.subr.mxu0 0.0
    %1585 = vmatpush1.msra.mxu0 0.0
    %1586 = vmatprep.subr.mxu0 0.0
    %1587 = vmatpush1.msra.mxu0 0.0
    %1588 = vmatprep.subr.mxu0 0.0
    %1589 = vmatpush1.msra.mxu0 0.0
    %1590 = vmatprep.subr.mxu0 0.0
    %1591 = vmatpush1.msra.mxu0 0.0
    %1592 = vmatprep.subr.mxu0 0.0
    %1593 = vmatpush1.msra.mxu0 0.0
    %1594 = vmatprep.subr.mxu0 0.0
    %1595 = vmatpush1.msra.mxu0 0.0
    %1596 = vmatprep.subr.mxu0 0.0
    %1597 = vmatpush1.msra.mxu0 0.0
    %1598 = vmatprep.subr.mxu0 0.0
    %1599 = vmatpush1.msra.mxu0 0.0
    %1600 = vmatprep.subr.mxu0 0.0
    %1601 = vmatpush1.msra.mxu0 0.0
    %1602 = vmatprep.subr.mxu0 0.0
    %1603 = vmatpush1.msra.mxu0 0.0
    %1604 = vmatprep.subr.mxu0 0.0
    %1605 = vmatpush1.msra.mxu0 0.0
    %1606 = vmatprep.subr.mxu0 0.0
    %1607 = vmatpush1.msra.mxu0 0.0
    %1608 = vmatprep.subr.mxu0 0.0
    %1609 = vmatpush1.msra.mxu0 0.0
    %1610 = vmatprep.subr.mxu0 0.0
    %1611 = vmatpush1.msra.mxu0 0.0
    %1612 = vmatprep.mubr.f32.mxu0 0.0
    %1613 = vmatmul.mubr.f32.gmra.mrb[0].mxu0 0.0
    %v1614 = vpop.f32.mrb[0].mxu0
    %v1615 = vadd.f32 %v1465, %v1614
    %v1616 = vpop.f32.mrb[0].mxu0
    %1617 = vdwg.mxu0
    %1618 = vmatprep.subr.mxu0 0.0
    %v1619 = vand.u32 %v1365, 4294901760
    %v1620 = vsub.f32 %v1365, %v1619
    %1621 = vmatpush1.msra.mxu0 %v1620
    %1622 = vmatprep.subr.mxu0 0.0
    %v1623 = vand.u32 %v1366, 4294901760
    %v1624 = vsub.f32 %v1366, %v1623
    %1625 = vmatpush1.msra.mxu0 %v1624
    %1626 = vmatprep.subr.mxu0 0.0
    %v1627 = vand.u32 %v1367, 4294901760
    %v1628 = vsub.f32 %v1367, %v1627
    %1629 = vmatpush1.msra.mxu0 %v1628
    %1630 = vmatprep.subr.mxu0 0.0
    %v1631 = vand.u32 %v1368, 4294901760
    %v1632 = vsub.f32 %v1368, %v1631
    %1633 = vmatpush1.msra.mxu0 %v1632
    %1634 = vmatprep.subr.mxu0 0.0
    %v1635 = vand.u32 %v1369, 4294901760
    %v1636 = vsub.f32 %v1369, %v1635
    %1637 = vmatpush1.msra.mxu0 %v1636
    %1638 = vmatprep.subr.mxu0 0.0
    %v1639 = vand.u32 %v1370, 4294901760
    %v1640 = vsub.f32 %v1370, %v1639
    %1641 = vmatpush1.msra.mxu0 %v1640
    %1642 = vmatprep.subr.mxu0 0.0
    %v1643 = vand.u32 %v1371, 4294901760
    %v1644 = vsub.f32 %v1371, %v1643
    %1645 = vmatpush1.msra.mxu0 %v1644
    %1646 = vmatprep.subr.mxu0 0.0
    %v1647 = vand.u32 %v1372, 4294901760
    %v1648 = vsub.f32 %v1372, %v1647
    %1649 = vmatpush1.msra.mxu0 %v1648
    %1650 = vmatprep.subr.mxu0 0.0
    %v1651 = vand.u32 %v1373, 4294901760
    %v1652 = vsub.f32 %v1373, %v1651
    %1653 = vmatpush1.msra.mxu0 %v1652
    %1654 = vmatprep.subr.mxu0 0.0
    %v1655 = vand.u32 %v1374, 4294901760
    %v1656 = vsub.f32 %v1374, %v1655
    %1657 = vmatpush1.msra.mxu0 %v1656
    %1658 = vmatprep.subr.mxu0 0.0
    %v1659 = vand.u32 %v1375, 4294901760
    %v1660 = vsub.f32 %v1375, %v1659
    %1661 = vmatpush1.msra.mxu0 %v1660
    %1662 = vmatprep.subr.mxu0 0.0
    %v1663 = vand.u32 %v1376, 4294901760
    %v1664 = vsub.f32 %v1376, %v1663
    %1665 = vmatpush1.msra.mxu0 %v1664
    %1666 = vmatprep.subr.mxu0 0.0
    %v1667 = vand.u32 %v1377, 4294901760
    %v1668 = vsub.f32 %v1377, %v1667
    %1669 = vmatpush1.msra.mxu0 %v1668
    %1670 = vmatprep.subr.mxu0 0.0
    %v1671 = vand.u32 %v1378, 4294901760
    %v1672 = vsub.f32 %v1378, %v1671
    %1673 = vmatpush1.msra.mxu0 %v1672
    %1674 = vmatprep.subr.mxu0 0.0
    %v1675 = vand.u32 %v1379, 4294901760
    %v1676 = vsub.f32 %v1379, %v1675
    %1677 = vmatpush1.msra.mxu0 %v1676
    %1678 = vmatprep.subr.mxu0 0.0
    %v1679 = vand.u32 %v1380, 4294901760
    %v1680 = vsub.f32 %v1380, %v1679
    %1681 = vmatpush1.msra.mxu0 %v1680
    %1682 = vmatprep.subr.mxu0 0.0
    %1683 = vmatpush1.msra.mxu0 0.0
    %1684 = vmatprep.subr.mxu0 0.0
    %1685 = vmatpush1.msra.mxu0 0.0
    %1686 = vmatprep.subr.mxu0 0.0
    %1687 = vmatpush1.msra.mxu0 0.0
    %1688 = vmatprep.subr.mxu0 0.0
    %1689 = vmatpush1.msra.mxu0 0.0
    %1690 = vmatprep.subr.mxu0 0.0
    %1691 = vmatpush1.msra.mxu0 0.0
    %1692 = vmatprep.subr.mxu0 0.0
    %1693 = vmatpush1.msra.mxu0 0.0
    %1694 = vmatprep.subr.mxu0 0.0
    %1695 = vmatpush1.msra.mxu0 0.0
    %1696 = vmatprep.subr.mxu0 0.0
    %1697 = vmatpush1.msra.mxu0 0.0
    %1698 = vmatprep.subr.mxu0 0.0
    %1699 = vmatpush1.msra.mxu0 0.0
    %1700 = vmatprep.subr.mxu0 0.0
    %1701 = vmatpush1.msra.mxu0 0.0
    %1702 = vmatprep.subr.mxu0 0.0
    %1703 = vmatpush1.msra.mxu0 0.0
    %1704 = vmatprep.subr.mxu0 0.0
    %1705 = vmatpush1.msra.mxu0 0.0
    %1706 = vmatprep.subr.mxu0 0.0
    %1707 = vmatpush1.msra.mxu0 0.0
    %1708 = vmatprep.subr.mxu0 0.0
    %1709 = vmatpush1.msra.mxu0 0.0
    %1710 = vmatprep.subr.mxu0 0.0
    %1711 = vmatpush1.msra.mxu0 0.0
    %1712 = vmatprep.subr.mxu0 0.0
    %1713 = vmatpush1.msra.mxu0 0.0
    %1714 = vmatprep.mubr.f32.mxu0 0.0
    %1715 = vmatmul.mubr.f32.gmra.mrb[0].mxu0 0.0
    %v1716 = vpop.f32.mrb[0].mxu0
    %v1717 = vadd.f32 %v1615, %v1716
    %v1718 = vpop.f32.mrb[0].mxu0
    %1719 = vdwg.mxu0
    %1720 = vmatprep.subr.mxu0 0.0
    %v1721 = vand.u32 %v1365, 4294901760
    %1722 = vmatpush1.msra.mxu0 %v1721
    %1723 = vmatprep.subr.mxu0 0.0
    %v1724 = vand.u32 %v1366, 4294901760
    %1725 = vmatpush1.msra.mxu0 %v1724
    %1726 = vmatprep.subr.mxu0 0.0
    %v1727 = vand.u32 %v1367, 4294901760
    %1728 = vmatpush1.msra.mxu0 %v1727
    %1729 = vmatprep.subr.mxu0 0.0
    %v1730 = vand.u32 %v1368, 4294901760
    %1731 = vmatpush1.msra.mxu0 %v1730
    %1732 = vmatprep.subr.mxu0 0.0
    %v1733 = vand.u32 %v1369, 4294901760
    %1734 = vmatpush1.msra.mxu0 %v1733
    %1735 = vmatprep.subr.mxu0 0.0
    %v1736 = vand.u32 %v1370, 4294901760
    %1737 = vmatpush1.msra.mxu0 %v1736
    %1738 = vmatprep.subr.mxu0 0.0
    %v1739 = vand.u32 %v1371, 4294901760
    %1740 = vmatpush1.msra.mxu0 %v1739
    %1741 = vmatprep.subr.mxu0 0.0
    %v1742 = vand.u32 %v1372, 4294901760
    %1743 = vmatpush1.msra.mxu0 %v1742
    %1744 = vmatprep.subr.mxu0 0.0
    %v1745 = vand.u32 %v1373, 4294901760
    %1746 = vmatpush1.msra.mxu0 %v1745
    %1747 = vmatprep.subr.mxu0 0.0
    %v1748 = vand.u32 %v1374, 4294901760
    %1749 = vmatpush1.msra.mxu0 %v1748
    %1750 = vmatprep.subr.mxu0 0.0
    %v1751 = vand.u32 %v1375, 4294901760
    %1752 = vmatpush1.msra.mxu0 %v1751
    %1753 = vmatprep.subr.mxu0 0.0
    %v1754 = vand.u32 %v1376, 4294901760
    %1755 = vmatpush1.msra.mxu0 %v1754
    %1756 = vmatprep.subr.mxu0 0.0
    %v1757 = vand.u32 %v1377, 4294901760
    %1758 = vmatpush1.msra.mxu0 %v1757
    %1759 = vmatprep.subr.mxu0 0.0
    %v1760 = vand.u32 %v1378, 4294901760
    %1761 = vmatpush1.msra.mxu0 %v1760
    %1762 = vmatprep.subr.mxu0 0.0
    %v1763 = vand.u32 %v1379, 4294901760
    %1764 = vmatpush1.msra.mxu0 %v1763
    %1765 = vmatprep.subr.mxu0 0.0
    %v1766 = vand.u32 %v1380, 4294901760
    %1767 = vmatpush1.msra.mxu0 %v1766
    %1768 = vmatprep.subr.mxu0 0.0
    %1769 = vmatpush1.msra.mxu0 0.0
    %1770 = vmatprep.subr.mxu0 0.0
    %1771 = vmatpush1.msra.mxu0 0.0
    %1772 = vmatprep.subr.mxu0 0.0
    %1773 = vmatpush1.msra.mxu0 0.0
    %1774 = vmatprep.subr.mxu0 0.0
    %1775 = vmatpush1.msra.mxu0 0.0
    %1776 = vmatprep.subr.mxu0 0.0
    %1777 = vmatpush1.msra.mxu0 0.0
    %1778 = vmatprep.subr.mxu0 0.0
    %1779 = vmatpush1.msra.mxu0 0.0
    %1780 = vmatprep.subr.mxu0 0.0
    %1781 = vmatpush1.msra.mxu0 0.0
    %1782 = vmatprep.subr.mxu0 0.0
    %1783 = vmatpush1.msra.mxu0 0.0
    %1784 = vmatprep.subr.mxu0 0.0
    %1785 = vmatpush1.msra.mxu0 0.0
    %1786 = vmatprep.subr.mxu0 0.0
    %1787 = vmatpush1.msra.mxu0 0.0
    %1788 = vmatprep.subr.mxu0 0.0
    %1789 = vmatpush1.msra.mxu0 0.0
    %1790 = vmatprep.subr.mxu0 0.0
    %1791 = vmatpush1.msra.mxu0 0.0
    %1792 = vmatprep.subr.mxu0 0.0
    %1793 = vmatpush1.msra.mxu0 0.0
    %1794 = vmatprep.subr.mxu0 0.0
    %1795 = vmatpush1.msra.mxu0 0.0
    %1796 = vmatprep.subr.mxu0 0.0
    %1797 = vmatpush1.msra.mxu0 0.0
    %1798 = vmatprep.subr.mxu0 0.0
    %1799 = vmatpush1.msra.mxu0 0.0
    %1800 = vmatprep.mubr.f32.mxu0 0.0
    %1801 = vmatmul.mubr.f32.gmra.mrb[0].mxu0 0.0
    %v1802 = vpop.f32.mrb[0].mxu0
    %v1803 = vadd.f32 %v1717, %v1802
    %v1804 = vpop.f32.mrb[0].mxu0
    %1805 = vdwg.mxu0
    %1806 = vmatprep.subr.mxu0 0.0
    %v1807 = vand.u32 %v1365, 4294901760
    %v1808 = vsub.f32 %v1365, %v1807
    %v1809 = vand.u32 %v1808, 4294901760
    %1810 = vmatpush1.msra.mxu0 %v1809
    %1811 = vmatprep.subr.mxu0 0.0
    %v1812 = vand.u32 %v1366, 4294901760
    %v1813 = vsub.f32 %v1366, %v1812
    %v1814 = vand.u32 %v1813, 4294901760
    %1815 = vmatpush1.msra.mxu0 %v1814
    %1816 = vmatprep.subr.mxu0 0.0
    %v1817 = vand.u32 %v1367, 4294901760
    %v1818 = vsub.f32 %v1367, %v1817
    %v1819 = vand.u32 %v1818, 4294901760
    %1820 = vmatpush1.msra.mxu0 %v1819
    %1821 = vmatprep.subr.mxu0 0.0
    %v1822 = vand.u32 %v1368, 4294901760
    %v1823 = vsub.f32 %v1368, %v1822
    %v1824 = vand.u32 %v1823, 4294901760
    %1825 = vmatpush1.msra.mxu0 %v1824
    %1826 = vmatprep.subr.mxu0 0.0
    %v1827 = vand.u32 %v1369, 4294901760
    %v1828 = vsub.f32 %v1369, %v1827
    %v1829 = vand.u32 %v1828, 4294901760
    %1830 = vmatpush1.msra.mxu0 %v1829
    %1831 = vmatprep.subr.mxu0 0.0
    %v1832 = vand.u32 %v1370, 4294901760
    %v1833 = vsub.f32 %v1370, %v1832
    %v1834 = vand.u32 %v1833, 4294901760
    %1835 = vmatpush1.msra.mxu0 %v1834
    %1836 = vmatprep.subr.mxu0 0.0
    %v1837 = vand.u32 %v1371, 4294901760
    %v1838 = vsub.f32 %v1371, %v1837
    %v1839 = vand.u32 %v1838, 4294901760
    %1840 = vmatpush1.msra.mxu0 %v1839
    %1841 = vmatprep.subr.mxu0 0.0
    %v1842 = vand.u32 %v1372, 4294901760
    %v1843 = vsub.f32 %v1372, %v1842
    %v1844 = vand.u32 %v1843, 4294901760
    %1845 = vmatpush1.msra.mxu0 %v1844
    %1846 = vmatprep.subr.mxu0 0.0
    %v1847 = vand.u32 %v1373, 4294901760
    %v1848 = vsub.f32 %v1373, %v1847
    %v1849 = vand.u32 %v1848, 4294901760
    %1850 = vmatpush1.msra.mxu0 %v1849
    %1851 = vmatprep.subr.mxu0 0.0
    %v1852 = vand.u32 %v1374, 4294901760
    %v1853 = vsub.f32 %v1374, %v1852
    %v1854 = vand.u32 %v1853, 4294901760
    %1855 = vmatpush1.msra.mxu0 %v1854
    %1856 = vmatprep.subr.mxu0 0.0
    %v1857 = vand.u32 %v1375, 4294901760
    %v1858 = vsub.f32 %v1375, %v1857
    %v1859 = vand.u32 %v1858, 4294901760
    %1860 = vmatpush1.msra.mxu0 %v1859
    %1861 = vmatprep.subr.mxu0 0.0
    %v1862 = vand.u32 %v1376, 4294901760
    %v1863 = vsub.f32 %v1376, %v1862
    %v1864 = vand.u32 %v1863, 4294901760
    %1865 = vmatpush1.msra.mxu0 %v1864
    %1866 = vmatprep.subr.mxu0 0.0
    %v1867 = vand.u32 %v1377, 4294901760
    %v1868 = vsub.f32 %v1377, %v1867
    %v1869 = vand.u32 %v1868, 4294901760
    %1870 = vmatpush1.msra.mxu0 %v1869
    %1871 = vmatprep.subr.mxu0 0.0
    %v1872 = vand.u32 %v1378, 4294901760
    %v1873 = vsub.f32 %v1378, %v1872
    %v1874 = vand.u32 %v1873, 4294901760
    %1875 = vmatpush1.msra.mxu0 %v1874
    %1876 = vmatprep.subr.mxu0 0.0
    %v1877 = vand.u32 %v1379, 4294901760
    %v1878 = vsub.f32 %v1379, %v1877
    %v1879 = vand.u32 %v1878, 4294901760
    %1880 = vmatpush1.msra.mxu0 %v1879
    %1881 = vmatprep.subr.mxu0 0.0
    %v1882 = vand.u32 %v1380, 4294901760
    %v1883 = vsub.f32 %v1380, %v1882
    %v1884 = vand.u32 %v1883, 4294901760
    %1885 = vmatpush1.msra.mxu0 %v1884
    %1886 = vmatprep.subr.mxu0 0.0
    %1887 = vmatpush1.msra.mxu0 0.0
    %1888 = vmatprep.subr.mxu0 0.0
    %1889 = vmatpush1.msra.mxu0 0.0
    %1890 = vmatprep.subr.mxu0 0.0
    %1891 = vmatpush1.msra.mxu0 0.0
    %1892 = vmatprep.subr.mxu0 0.0
    %1893 = vmatpush1.msra.mxu0 0.0
    %1894 = vmatprep.subr.mxu0 0.0
    %1895 = vmatpush1.msra.mxu0 0.0
    %1896 = vmatprep.subr.mxu0 0.0
    %1897 = vmatpush1.msra.mxu0 0.0
    %1898 = vmatprep.subr.mxu0 0.0
    %1899 = vmatpush1.msra.mxu0 0.0
    %1900 = vmatprep.subr.mxu0 0.0
    %1901 = vmatpush1.msra.mxu0 0.0
    %1902 = vmatprep.subr.mxu0 0.0
    %1903 = vmatpush1.msra.mxu0 0.0
    %1904 = vmatprep.subr.mxu0 0.0
    %1905 = vmatpush1.msra.mxu0 0.0
    %1906 = vmatprep.subr.mxu0 0.0
    %1907 = vmatpush1.msra.mxu0 0.0
    %1908 = vmatprep.subr.mxu0 0.0
    %1909 = vmatpush1.msra.mxu0 0.0
    %1910 = vmatprep.subr.mxu0 0.0
    %1911 = vmatpush1.msra.mxu0 0.0
    %1912 = vmatprep.subr.mxu0 0.0
    %1913 = vmatpush1.msra.mxu0 0.0
    %1914 = vmatprep.subr.mxu0 0.0
    %1915 = vmatpush1.msra.mxu0 0.0
    %1916 = vmatprep.subr.mxu0 0.0
    %1917 = vmatpush1.msra.mxu0 0.0
    %1918 = vmatprep.mubr.f32.mxu0 0.0
    %1919 = vmatmul.mubr.f32.gmra.mrb[0].mxu0 0.0
    %v1920 = vpop.f32.mrb[0].mxu0
    %v1921 = vadd.f32 %v1803, %v1920
    %v1922 = vpop.f32.mrb[0].mxu0
    %1923 = vdwg.mxu0
    %1924 = vmatprep.subr.mxu0 0.0
    %v1925 = vand.u32 %v1365, 4294901760
    %1926 = vmatpush1.msra.mxu0 %v1925
    %1927 = vmatprep.subr.mxu0 0.0
    %v1928 = vand.u32 %v1366, 4294901760
    %1929 = vmatpush1.msra.mxu0 %v1928
    %1930 = vmatprep.subr.mxu0 0.0
    %v1931 = vand.u32 %v1367, 4294901760
    %1932 = vmatpush1.msra.mxu0 %v1931
    %1933 = vmatprep.subr.mxu0 0.0
    %v1934 = vand.u32 %v1368, 4294901760
    %1935 = vmatpush1.msra.mxu0 %v1934
    %1936 = vmatprep.subr.mxu0 0.0
    %v1937 = vand.u32 %v1369, 4294901760
    %1938 = vmatpush1.msra.mxu0 %v1937
    %1939 = vmatprep.subr.mxu0 0.0
    %v1940 = vand.u32 %v1370, 4294901760
    %1941 = vmatpush1.msra.mxu0 %v1940
    %1942 = vmatprep.subr.mxu0 0.0
    %v1943 = vand.u32 %v1371, 4294901760
    %1944 = vmatpush1.msra.mxu0 %v1943
    %1945 = vmatprep.subr.mxu0 0.0
    %v1946 = vand.u32 %v1372, 4294901760
    %1947 = vmatpush1.msra.mxu0 %v1946
    %1948 = vmatprep.subr.mxu0 0.0
    %v1949 = vand.u32 %v1373, 4294901760
    %1950 = vmatpush1.msra.mxu0 %v1949
    %1951 = vmatprep.subr.mxu0 0.0
    %v1952 = vand.u32 %v1374, 4294901760
    %1953 = vmatpush1.msra.mxu0 %v1952
    %1954 = vmatprep.subr.mxu0 0.0
    %v1955 = vand.u32 %v1375, 4294901760
    %1956 = vmatpush1.msra.mxu0 %v1955
    %1957 = vmatprep.subr.mxu0 0.0
    %v1958 = vand.u32 %v1376, 4294901760
    %1959 = vmatpush1.msra.mxu0 %v1958
    %1960 = vmatprep.subr.mxu0 0.0
    %v1961 = vand.u32 %v1377, 4294901760
    %1962 = vmatpush1.msra.mxu0 %v1961
    %1963 = vmatprep.subr.mxu0 0.0
    %v1964 = vand.u32 %v1378, 4294901760
    %1965 = vmatpush1.msra.mxu0 %v1964
    %1966 = vmatprep.subr.mxu0 0.0
    %v1967 = vand.u32 %v1379, 4294901760
    %1968 = vmatpush1.msra.mxu0 %v1967
    %1969 = vmatprep.subr.mxu0 0.0
    %v1970 = vand.u32 %v1380, 4294901760
    %1971 = vmatpush1.msra.mxu0 %v1970
    %1972 = vmatprep.subr.mxu0 0.0
    %1973 = vmatpush1.msra.mxu0 0.0
    %1974 = vmatprep.subr.mxu0 0.0
    %1975 = vmatpush1.msra.mxu0 0.0
    %1976 = vmatprep.subr.mxu0 0.0
    %1977 = vmatpush1.msra.mxu0 0.0
    %1978 = vmatprep.subr.mxu0 0.0
    %1979 = vmatpush1.msra.mxu0 0.0
    %1980 = vmatprep.subr.mxu0 0.0
    %1981 = vmatpush1.msra.mxu0 0.0
    %1982 = vmatprep.subr.mxu0 0.0
    %1983 = vmatpush1.msra.mxu0 0.0
    %1984 = vmatprep.subr.mxu0 0.0
    %1985 = vmatpush1.msra.mxu0 0.0
    %1986 = vmatprep.subr.mxu0 0.0
    %1987 = vmatpush1.msra.mxu0 0.0
    %1988 = vmatprep.subr.mxu0 0.0
    %1989 = vmatpush1.msra.mxu0 0.0
    %1990 = vmatprep.subr.mxu0 0.0
    %1991 = vmatpush1.msra.mxu0 0.0
    %1992 = vmatprep.subr.mxu0 0.0
    %1993 = vmatpush1.msra.mxu0 0.0
    %1994 = vmatprep.subr.mxu0 0.0
    %1995 = vmatpush1.msra.mxu0 0.0
    %1996 = vmatprep.subr.mxu0 0.0
    %1997 = vmatpush1.msra.mxu0 0.0
    %1998 = vmatprep.subr.mxu0 0.0
    %1999 = vmatpush1.msra.mxu0 0.0
    %2000 = vmatprep.subr.mxu0 0.0
    %2001 = vmatpush1.msra.mxu0 0.0
    %2002 = vmatprep.subr.mxu0 0.0
    %2003 = vmatpush1.msra.mxu0 0.0
    %2004 = vmatprep.mubr.f32.mxu0 0.0
    %2005 = vmatmul.mubr.f32.gmra.mrb[0].mxu0 0.0
    %v2006 = vpop.f32.mrb[0].mxu0
    %v2007 = vadd.f32 %v1921, %v2006
    %v2008 = vpop.f32.mrb[0].mxu0
    %2009 = vdwg.mxu0
    %v2010 = vadd.f32 %v1381, %v2007
    %v2011 = vtanh.pop %v2010
    %s2012 = scalar_lea.vmem [#allocation2], 8
    %v2013 = vld [vmem:[%s2012] sm:$0xff]
    %2014 = vmatprep.subr.mxu0 0.0
    %v2015 = vand.u32 %v1365, 4294901760
    %2016 = vmatpush1.msra.mxu0 %v2015
    %2017 = vmatprep.subr.mxu0 0.0
    %v2018 = vand.u32 %v1366, 4294901760
    %2019 = vmatpush1.msra.mxu0 %v2018
    %2020 = vmatprep.subr.mxu0 0.0
    %v2021 = vand.u32 %v1367, 4294901760
    %2022 = vmatpush1.msra.mxu0 %v2021
    %2023 = vmatprep.subr.mxu0 0.0
    %v2024 = vand.u32 %v1368, 4294901760
    %2025 = vmatpush1.msra.mxu0 %v2024
    %2026 = vmatprep.subr.mxu0 0.0
    %v2027 = vand.u32 %v1369, 4294901760
    %2028 = vmatpush1.msra.mxu0 %v2027
    %2029 = vmatprep.subr.mxu0 0.0
    %v2030 = vand.u32 %v1370, 4294901760
    %2031 = vmatpush1.msra.mxu0 %v2030
    %2032 = vmatprep.subr.mxu0 0.0
    %v2033 = vand.u32 %v1371, 4294901760
    %2034 = vmatpush1.msra.mxu0 %v2033
    %2035 = vmatprep.subr.mxu0 0.0
    %v2036 = vand.u32 %v1372, 4294901760
    %2037 = vmatpush1.msra.mxu0 %v2036
    %2038 = vmatprep.subr.mxu0 0.0
    %v2039 = vand.u32 %v1373, 4294901760
    %2040 = vmatpush1.msra.mxu0 %v2039
    %2041 = vmatprep.subr.mxu0 0.0
    %v2042 = vand.u32 %v1374, 4294901760
    %2043 = vmatpush1.msra.mxu0 %v2042
    %2044 = vmatprep.subr.mxu0 0.0
    %v2045 = vand.u32 %v1375, 4294901760
    %2046 = vmatpush1.msra.mxu0 %v2045
    %2047 = vmatprep.subr.mxu0 0.0
    %v2048 = vand.u32 %v1376, 4294901760
    %2049 = vmatpush1.msra.mxu0 %v2048
    %2050 = vmatprep.subr.mxu0 0.0
    %v2051 = vand.u32 %v1377, 4294901760
    %2052 = vmatpush1.msra.mxu0 %v2051
    %2053 = vmatprep.subr.mxu0 0.0
    %v2054 = vand.u32 %v1378, 4294901760
    %2055 = vmatpush1.msra.mxu0 %v2054
    %2056 = vmatprep.subr.mxu0 0.0
    %v2057 = vand.u32 %v1379, 4294901760
    %2058 = vmatpush1.msra.mxu0 %v2057
    %2059 = vmatprep.subr.mxu0 0.0
    %v2060 = vand.u32 %v1380, 4294901760
    %2061 = vmatpush1.msra.mxu0 %v2060
    %2062 = vmatprep.subr.mxu0 0.0
    %2063 = vmatpush1.msra.mxu0 0.0
    %2064 = vmatprep.subr.mxu0 0.0
    %2065 = vmatpush1.msra.mxu0 0.0
    %2066 = vmatprep.subr.mxu0 0.0
    %2067 = vmatpush1.msra.mxu0 0.0
    %2068 = vmatprep.subr.mxu0 0.0
    %2069 = vmatpush1.msra.mxu0 0.0
    %2070 = vmatprep.subr.mxu0 0.0
    %2071 = vmatpush1.msra.mxu0 0.0
    %2072 = vmatprep.subr.mxu0 0.0
    %2073 = vmatpush1.msra.mxu0 0.0
    %2074 = vmatprep.subr.mxu0 0.0
    %2075 = vmatpush1.msra.mxu0 0.0
    %2076 = vmatprep.subr.mxu0 0.0
    %2077 = vmatpush1.msra.mxu0 0.0
    %2078 = vmatprep.subr.mxu0 0.0
    %2079 = vmatpush1.msra.mxu0 0.0
    %2080 = vmatprep.subr.mxu0 0.0
    %2081 = vmatpush1.msra.mxu0 0.0
    %2082 = vmatprep.subr.mxu0 0.0
    %2083 = vmatpush1.msra.mxu0 0.0
    %2084 = vmatprep.subr.mxu0 0.0
    %2085 = vmatpush1.msra.mxu0 0.0
    %2086 = vmatprep.subr.mxu0 0.0
    %2087 = vmatpush1.msra.mxu0 0.0
    %2088 = vmatprep.subr.mxu0 0.0
    %2089 = vmatpush1.msra.mxu0 0.0
    %2090 = vmatprep.subr.mxu0 0.0
    %2091 = vmatpush1.msra.mxu0 0.0
    %2092 = vmatprep.subr.mxu0 0.0
    %2093 = vmatpush1.msra.mxu0 0.0
    %2094 = vmatprep.mubr.f32.mxu0 0.0
    %v2095 = vand.u32 %v2011, 4294901760
    %v2096 = vsub.f32 %v2011, %v2095
    %v2097 = vand.u32 %v2096, 4294901760
    %v2098 = vsub.f32 %v2096, %v2097
    %v2099 = vand.u32 %v2098, 4294901760
    %2100 = vmatmul.mubr.f32.gmra.mrb[0].mxu0 %v2099
    %v2101 = vpop.f32.mrb[0].mxu0
    %v2102 = vadd.f32 0.0, %v2101
    %v2103 = vpop.f32.mrb[0].mxu0
    %2104 = vdwg.mxu0
    %2105 = vmatprep.subr.mxu0 0.0
    %v2106 = vand.u32 %v1365, 4294901760
    %v2107 = vsub.f32 %v1365, %v2106
    %v2108 = vand.u32 %v2107, 4294901760
    %v2109 = vsub.f32 %v2107, %v2108
    %v2110 = vand.u32 %v2109, 4294901760
    %2111 = vmatpush1.msra.mxu0 %v2110
    %2112 = vmatprep.subr.mxu0 0.0
    %v2113 = vand.u32 %v1366, 4294901760
    %v2114 = vsub.f32 %v1366, %v2113
    %v2115 = vand.u32 %v2114, 4294901760
    %v2116 = vsub.f32 %v2114, %v2115
    %v2117 = vand.u32 %v2116, 4294901760
    %2118 = vmatpush1.msra.mxu0 %v2117
    %2119 = vmatprep.subr.mxu0 0.0
    %v2120 = vand.u32 %v1367, 4294901760
    %v2121 = vsub.f32 %v1367, %v2120
    %v2122 = vand.u32 %v2121, 4294901760
    %v2123 = vsub.f32 %v2121, %v2122
    %v2124 = vand.u32 %v2123, 4294901760
    %2125 = vmatpush1.msra.mxu0 %v2124
    %2126 = vmatprep.subr.mxu0 0.0
    %v2127 = vand.u32 %v1368, 4294901760
    %v2128 = vsub.f32 %v1368, %v2127
    %v2129 = vand.u32 %v2128, 4294901760
    %v2130 = vsub.f32 %v2128, %v2129
    %v2131 = vand.u32 %v2130, 4294901760
    %2132 = vmatpush1.msra.mxu0 %v2131
    %2133 = vmatprep.subr.mxu0 0.0
    %v2134 = vand.u32 %v1369, 4294901760
    %v2135 = vsub.f32 %v1369, %v2134
    %v2136 = vand.u32 %v2135, 4294901760
    %v2137 = vsub.f32 %v2135, %v2136
    %v2138 = vand.u32 %v2137, 4294901760
    %2139 = vmatpush1.msra.mxu0 %v2138
    %2140 = vmatprep.subr.mxu0 0.0
    %v2141 = vand.u32 %v1370, 4294901760
    %v2142 = vsub.f32 %v1370, %v2141
    %v2143 = vand.u32 %v2142, 4294901760
    %v2144 = vsub.f32 %v2142, %v2143
    %v2145 = vand.u32 %v2144, 4294901760
    %2146 = vmatpush1.msra.mxu0 %v2145
    %2147 = vmatprep.subr.mxu0 0.0
    %v2148 = vand.u32 %v1371, 4294901760
    %v2149 = vsub.f32 %v1371, %v2148
    %v2150 = vand.u32 %v2149, 4294901760
    %v2151 = vsub.f32 %v2149, %v2150
    %v2152 = vand.u32 %v2151, 4294901760
    %2153 = vmatpush1.msra.mxu0 %v2152
    %2154 = vmatprep.subr.mxu0 0.0
    %v2155 = vand.u32 %v1372, 4294901760
    %v2156 = vsub.f32 %v1372, %v2155
    %v2157 = vand.u32 %v2156, 4294901760
    %v2158 = vsub.f32 %v2156, %v2157
    %v2159 = vand.u32 %v2158, 4294901760
    %2160 = vmatpush1.msra.mxu0 %v2159
    %2161 = vmatprep.subr.mxu0 0.0
    %v2162 = vand.u32 %v1373, 4294901760
    %v2163 = vsub.f32 %v1373, %v2162
    %v2164 = vand.u32 %v2163, 4294901760
    %v2165 = vsub.f32 %v2163, %v2164
    %v2166 = vand.u32 %v2165, 4294901760
    %2167 = vmatpush1.msra.mxu0 %v2166
    %2168 = vmatprep.subr.mxu0 0.0
    %v2169 = vand.u32 %v1374, 4294901760
    %v2170 = vsub.f32 %v1374, %v2169
    %v2171 = vand.u32 %v2170, 4294901760
    %v2172 = vsub.f32 %v2170, %v2171
    %v2173 = vand.u32 %v2172, 4294901760
    %2174 = vmatpush1.msra.mxu0 %v2173
    %2175 = vmatprep.subr.mxu0 0.0
    %v2176 = vand.u32 %v1375, 4294901760
    %v2177 = vsub.f32 %v1375, %v2176
    %v2178 = vand.u32 %v2177, 4294901760
    %v2179 = vsub.f32 %v2177, %v2178
    %v2180 = vand.u32 %v2179, 4294901760
    %2181 = vmatpush1.msra.mxu0 %v2180
    %2182 = vmatprep.subr.mxu0 0.0
    %v2183 = vand.u32 %v1376, 4294901760
    %v2184 = vsub.f32 %v1376, %v2183
    %v2185 = vand.u32 %v2184, 4294901760
    %v2186 = vsub.f32 %v2184, %v2185
    %v2187 = vand.u32 %v2186, 4294901760
    %2188 = vmatpush1.msra.mxu0 %v2187
    %2189 = vmatprep.subr.mxu0 0.0
    %v2190 = vand.u32 %v1377, 4294901760
    %v2191 = vsub.f32 %v1377, %v2190
    %v2192 = vand.u32 %v2191, 4294901760
    %v2193 = vsub.f32 %v2191, %v2192
    %v2194 = vand.u32 %v2193, 4294901760
    %2195 = vmatpush1.msra.mxu0 %v2194
    %2196 = vmatprep.subr.mxu0 0.0
    %v2197 = vand.u32 %v1378, 4294901760
    %v2198 = vsub.f32 %v1378, %v2197
    %v2199 = vand.u32 %v2198, 4294901760
    %v2200 = vsub.f32 %v2198, %v2199
    %v2201 = vand.u32 %v2200, 4294901760
    %2202 = vmatpush1.msra.mxu0 %v2201
    %2203 = vmatprep.subr.mxu0 0.0
    %v2204 = vand.u32 %v1379, 4294901760
    %v2205 = vsub.f32 %v1379, %v2204
    %v2206 = vand.u32 %v2205, 4294901760
    %v2207 = vsub.f32 %v2205, %v2206
    %v2208 = vand.u32 %v2207, 4294901760
    %2209 = vmatpush1.msra.mxu0 %v2208
    %2210 = vmatprep.subr.mxu0 0.0
    %v2211 = vand.u32 %v1380, 4294901760
    %v2212 = vsub.f32 %v1380, %v2211
    %v2213 = vand.u32 %v2212, 4294901760
    %v2214 = vsub.f32 %v2212, %v2213
    %v2215 = vand.u32 %v2214, 4294901760
    %2216 = vmatpush1.msra.mxu0 %v2215
    %2217 = vmatprep.subr.mxu0 0.0
    %2218 = vmatpush1.msra.mxu0 0.0
    %2219 = vmatprep.subr.mxu0 0.0
    %2220 = vmatpush1.msra.mxu0 0.0
    %2221 = vmatprep.subr.mxu0 0.0
    %2222 = vmatpush1.msra.mxu0 0.0
    %2223 = vmatprep.subr.mxu0 0.0
    %2224 = vmatpush1.msra.mxu0 0.0
    %2225 = vmatprep.subr.mxu0 0.0
    %2226 = vmatpush1.msra.mxu0 0.0
    %2227 = vmatprep.subr.mxu0 0.0
    %2228 = vmatpush1.msra.mxu0 0.0
    %2229 = vmatprep.subr.mxu0 0.0
    %2230 = vmatpush1.msra.mxu0 0.0
    %2231 = vmatprep.subr.mxu0 0.0
    %2232 = vmatpush1.msra.mxu0 0.0
    %2233 = vmatprep.subr.mxu0 0.0
    %2234 = vmatpush1.msra.mxu0 0.0
    %2235 = vmatprep.subr.mxu0 0.0
    %2236 = vmatpush1.msra.mxu0 0.0
    %2237 = vmatprep.subr.mxu0 0.0
    %2238 = vmatpush1.msra.mxu0 0.0
    %2239 = vmatprep.subr.mxu0 0.0
    %2240 = vmatpush1.msra.mxu0 0.0
    %2241 = vmatprep.subr.mxu0 0.0
    %2242 = vmatpush1.msra.mxu0 0.0
    %2243 = vmatprep.subr.mxu0 0.0
    %2244 = vmatpush1.msra.mxu0 0.0
    %2245 = vmatprep.subr.mxu0 0.0
    %2246 = vmatpush1.msra.mxu0 0.0
    %2247 = vmatprep.subr.mxu0 0.0
    %2248 = vmatpush1.msra.mxu0 0.0
    %2249 = vmatprep.mubr.f32.mxu0 0.0
    %v2250 = vand.u32 %v2011, 4294901760
    %2251 = vmatmul.mubr.f32.gmra.mrb[0].mxu0 %v2250
    %v2252 = vpop.f32.mrb[0].mxu0
    %v2253 = vadd.f32 %v2102, %v2252
    %v2254 = vpop.f32.mrb[0].mxu0
    %2255 = vdwg.mxu0
    %2256 = vmatprep.subr.mxu0 0.0
    %v2257 = vand.u32 %v1365, 4294901760
    %v2258 = vsub.f32 %v1365, %v2257
    %2259 = vmatpush1.msra.mxu0 %v2258
    %2260 = vmatprep.subr.mxu0 0.0
    %v2261 = vand.u32 %v1366, 4294901760
    %v2262 = vsub.f32 %v1366, %v2261
    %2263 = vmatpush1.msra.mxu0 %v2262
    %2264 = vmatprep.subr.mxu0 0.0
    %v2265 = vand.u32 %v1367, 4294901760
    %v2266 = vsub.f32 %v1367, %v2265
    %2267 = vmatpush1.msra.mxu0 %v2266
    %2268 = vmatprep.subr.mxu0 0.0
    %v2269 = vand.u32 %v1368, 4294901760
    %v2270 = vsub.f32 %v1368, %v2269
    %2271 = vmatpush1.msra.mxu0 %v2270
    %2272 = vmatprep.subr.mxu0 0.0
    %v2273 = vand.u32 %v1369, 4294901760
    %v2274 = vsub.f32 %v1369, %v2273
    %2275 = vmatpush1.msra.mxu0 %v2274
    %2276 = vmatprep.subr.mxu0 0.0
    %v2277 = vand.u32 %v1370, 4294901760
    %v2278 = vsub.f32 %v1370, %v2277
    %2279 = vmatpush1.msra.mxu0 %v2278
    %2280 = vmatprep.subr.mxu0 0.0
    %v2281 = vand.u32 %v1371, 4294901760
    %v2282 = vsub.f32 %v1371, %v2281
    %2283 = vmatpush1.msra.mxu0 %v2282
    %2284 = vmatprep.subr.mxu0 0.0
    %v2285 = vand.u32 %v1372, 4294901760
    %v2286 = vsub.f32 %v1372, %v2285
    %2287 = vmatpush1.msra.mxu0 %v2286
    %2288 = vmatprep.subr.mxu0 0.0
    %v2289 = vand.u32 %v1373, 4294901760
    %v2290 = vsub.f32 %v1373, %v2289
    %2291 = vmatpush1.msra.mxu0 %v2290
    %2292 = vmatprep.subr.mxu0 0.0
    %v2293 = vand.u32 %v1374, 4294901760
    %v2294 = vsub.f32 %v1374, %v2293
    %2295 = vmatpush1.msra.mxu0 %v2294
    %2296 = vmatprep.subr.mxu0 0.0
    %v2297 = vand.u32 %v1375, 4294901760
    %v2298 = vsub.f32 %v1375, %v2297
    %2299 = vmatpush1.msra.mxu0 %v2298
    %2300 = vmatprep.subr.mxu0 0.0
    %v2301 = vand.u32 %v1376, 4294901760
    %v2302 = vsub.f32 %v1376, %v2301
    %2303 = vmatpush1.msra.mxu0 %v2302
    %2304 = vmatprep.subr.mxu0 0.0
    %v2305 = vand.u32 %v1377, 4294901760
    %v2306 = vsub.f32 %v1377, %v2305
    %2307 = vmatpush1.msra.mxu0 %v2306
    %2308 = vmatprep.subr.mxu0 0.0
    %v2309 = vand.u32 %v1378, 4294901760
    %v2310 = vsub.f32 %v1378, %v2309
    %2311 = vmatpush1.msra.mxu0 %v2310
    %2312 = vmatprep.subr.mxu0 0.0
    %v2313 = vand.u32 %v1379, 4294901760
    %v2314 = vsub.f32 %v1379, %v2313
    %2315 = vmatpush1.msra.mxu0 %v2314
    %2316 = vmatprep.subr.mxu0 0.0
    %v2317 = vand.u32 %v1380, 4294901760
    %v2318 = vsub.f32 %v1380, %v2317
    %2319 = vmatpush1.msra.mxu0 %v2318
    %2320 = vmatprep.subr.mxu0 0.0
    %2321 = vmatpush1.msra.mxu0 0.0
    %2322 = vmatprep.subr.mxu0 0.0
    %2323 = vmatpush1.msra.mxu0 0.0
    %2324 = vmatprep.subr.mxu0 0.0
    %2325 = vmatpush1.msra.mxu0 0.0
    %2326 = vmatprep.subr.mxu0 0.0
    %2327 = vmatpush1.msra.mxu0 0.0
    %2328 = vmatprep.subr.mxu0 0.0
    %2329 = vmatpush1.msra.mxu0 0.0
    %2330 = vmatprep.subr.mxu0 0.0
    %2331 = vmatpush1.msra.mxu0 0.0
    %2332 = vmatprep.subr.mxu0 0.0
    %2333 = vmatpush1.msra.mxu0 0.0
    %2334 = vmatprep.subr.mxu0 0.0
    %2335 = vmatpush1.msra.mxu0 0.0
    %2336 = vmatprep.subr.mxu0 0.0
    %2337 = vmatpush1.msra.mxu0 0.0
    %2338 = vmatprep.subr.mxu0 0.0
    %2339 = vmatpush1.msra.mxu0 0.0
    %2340 = vmatprep.subr.mxu0 0.0
    %2341 = vmatpush1.msra.mxu0 0.0
    %2342 = vmatprep.subr.mxu0 0.0
    %2343 = vmatpush1.msra.mxu0 0.0
    %2344 = vmatprep.subr.mxu0 0.0
    %2345 = vmatpush1.msra.mxu0 0.0
    %2346 = vmatprep.subr.mxu0 0.0
    %2347 = vmatpush1.msra.mxu0 0.0
    %2348 = vmatprep.subr.mxu0 0.0
    %2349 = vmatpush1.msra.mxu0 0.0
    %2350 = vmatprep.subr.mxu0 0.0
    %2351 = vmatpush1.msra.mxu0 0.0
    %2352 = vmatprep.mubr.f32.mxu0 0.0
    %v2353 = vand.u32 %v2011, 4294901760
    %v2354 = vsub.f32 %v2011, %v2353
    %2355 = vmatmul.mubr.f32.gmra.mrb[0].mxu0 %v2354
    %v2356 = vpop.f32.mrb[0].mxu0
    %v2357 = vadd.f32 %v2253, %v2356
    %v2358 = vpop.f32.mrb[0].mxu0
    %2359 = vdwg.mxu0
    %2360 = vmatprep.subr.mxu0 0.0
    %v2361 = vand.u32 %v1365, 4294901760
    %2362 = vmatpush1.msra.mxu0 %v2361
    %2363 = vmatprep.subr.mxu0 0.0
    %v2364 = vand.u32 %v1366, 4294901760
    %2365 = vmatpush1.msra.mxu0 %v2364
    %2366 = vmatprep.subr.mxu0 0.0
    %v2367 = vand.u32 %v1367, 4294901760
    %2368 = vmatpush1.msra.mxu0 %v2367
    %2369 = vmatprep.subr.mxu0 0.0
    %v2370 = vand.u32 %v1368, 4294901760
    %2371 = vmatpush1.msra.mxu0 %v2370
    %2372 = vmatprep.subr.mxu0 0.0
    %v2373 = vand.u32 %v1369, 4294901760
    %2374 = vmatpush1.msra.mxu0 %v2373
    %2375 = vmatprep.subr.mxu0 0.0
    %v2376 = vand.u32 %v1370, 4294901760
    %2377 = vmatpush1.msra.mxu0 %v2376
    %2378 = vmatprep.subr.mxu0 0.0
    %v2379 = vand.u32 %v1371, 4294901760
    %2380 = vmatpush1.msra.mxu0 %v2379
    %2381 = vmatprep.subr.mxu0 0.0
    %v2382 = vand.u32 %v1372, 4294901760
    %2383 = vmatpush1.msra.mxu0 %v2382
    %2384 = vmatprep.subr.mxu0 0.0
    %v2385 = vand.u32 %v1373, 4294901760
    %2386 = vmatpush1.msra.mxu0 %v2385
    %2387 = vmatprep.subr.mxu0 0.0
    %v2388 = vand.u32 %v1374, 4294901760
    %2389 = vmatpush1.msra.mxu0 %v2388
    %2390 = vmatprep.subr.mxu0 0.0
    %v2391 = vand.u32 %v1375, 4294901760
    %2392 = vmatpush1.msra.mxu0 %v2391
    %2393 = vmatprep.subr.mxu0 0.0
    %v2394 = vand.u32 %v1376, 4294901760
    %2395 = vmatpush1.msra.mxu0 %v2394
    %2396 = vmatprep.subr.mxu0 0.0
    %v2397 = vand.u32 %v1377, 4294901760
    %2398 = vmatpush1.msra.mxu0 %v2397
    %2399 = vmatprep.subr.mxu0 0.0
    %v2400 = vand.u32 %v1378, 4294901760
    %2401 = vmatpush1.msra.mxu0 %v2400
    %2402 = vmatprep.subr.mxu0 0.0
    %v2403 = vand.u32 %v1379, 4294901760
    %2404 = vmatpush1.msra.mxu0 %v2403
    %2405 = vmatprep.subr.mxu0 0.0
    %v2406 = vand.u32 %v1380, 4294901760
    %2407 = vmatpush1.msra.mxu0 %v2406
    %2408 = vmatprep.subr.mxu0 0.0
    %2409 = vmatpush1.msra.mxu0 0.0
    %2410 = vmatprep.subr.mxu0 0.0
    %2411 = vmatpush1.msra.mxu0 0.0
    %2412 = vmatprep.subr.mxu0 0.0
    %2413 = vmatpush1.msra.mxu0 0.0
    %2414 = vmatprep.subr.mxu0 0.0
    %2415 = vmatpush1.msra.mxu0 0.0
    %2416 = vmatprep.subr.mxu0 0.0
    %2417 = vmatpush1.msra.mxu0 0.0
    %2418 = vmatprep.subr.mxu0 0.0
    %2419 = vmatpush1.msra.mxu0 0.0
    %2420 = vmatprep.subr.mxu0 0.0
    %2421 = vmatpush1.msra.mxu0 0.0
    %2422 = vmatprep.subr.mxu0 0.0
    %2423 = vmatpush1.msra.mxu0 0.0
    %2424 = vmatprep.subr.mxu0 0.0
    %2425 = vmatpush1.msra.mxu0 0.0
    %2426 = vmatprep.subr.mxu0 0.0
    %2427 = vmatpush1.msra.mxu0 0.0
    %2428 = vmatprep.subr.mxu0 0.0
    %2429 = vmatpush1.msra.mxu0 0.0
    %2430 = vmatprep.subr.mxu0 0.0
    %2431 = vmatpush1.msra.mxu0 0.0
    %2432 = vmatprep.subr.mxu0 0.0
    %2433 = vmatpush1.msra.mxu0 0.0
    %2434 = vmatprep.subr.mxu0 0.0
    %2435 = vmatpush1.msra.mxu0 0.0
    %2436 = vmatprep.subr.mxu0 0.0
    %2437 = vmatpush1.msra.mxu0 0.0
    %2438 = vmatprep.subr.mxu0 0.0
    %2439 = vmatpush1.msra.mxu0 0.0
    %2440 = vmatprep.mubr.f32.mxu0 0.0
    %v2441 = vand.u32 %v2011, 4294901760
    %v2442 = vsub.f32 %v2011, %v2441
    %v2443 = vand.u32 %v2442, 4294901760
    %2444 = vmatmul.mubr.f32.gmra.mrb[0].mxu0 %v2443
    %v2445 = vpop.f32.mrb[0].mxu0
    %v2446 = vadd.f32 %v2357, %v2445
    %v2447 = vpop.f32.mrb[0].mxu0
    %2448 = vdwg.mxu0
    %2449 = vmatprep.subr.mxu0 0.0
    %v2450 = vand.u32 %v1365, 4294901760
    %v2451 = vsub.f32 %v1365, %v2450
    %v2452 = vand.u32 %v2451, 4294901760
    %2453 = vmatpush1.msra.mxu0 %v2452
    %2454 = vmatprep.subr.mxu0 0.0
    %v2455 = vand.u32 %v1366, 4294901760
    %v2456 = vsub.f32 %v1366, %v2455
    %v2457 = vand.u32 %v2456, 4294901760
    %2458 = vmatpush1.msra.mxu0 %v2457
    %2459 = vmatprep.subr.mxu0 0.0
    %v2460 = vand.u32 %v1367, 4294901760
    %v2461 = vsub.f32 %v1367, %v2460
    %v2462 = vand.u32 %v2461, 4294901760
    %2463 = vmatpush1.msra.mxu0 %v2462
    %2464 = vmatprep.subr.mxu0 0.0
    %v2465 = vand.u32 %v1368, 4294901760
    %v2466 = vsub.f32 %v1368, %v2465
    %v2467 = vand.u32 %v2466, 4294901760
    %2468 = vmatpush1.msra.mxu0 %v2467
    %2469 = vmatprep.subr.mxu0 0.0
    %v2470 = vand.u32 %v1369, 4294901760
    %v2471 = vsub.f32 %v1369, %v2470
    %v2472 = vand.u32 %v2471, 4294901760
    %2473 = vmatpush1.msra.mxu0 %v2472
    %2474 = vmatprep.subr.mxu0 0.0
    %v2475 = vand.u32 %v1370, 4294901760
    %v2476 = vsub.f32 %v1370, %v2475
    %v2477 = vand.u32 %v2476, 4294901760
    %2478 = vmatpush1.msra.mxu0 %v2477
    %2479 = vmatprep.subr.mxu0 0.0
    %v2480 = vand.u32 %v1371, 4294901760
    %v2481 = vsub.f32 %v1371, %v2480
    %v2482 = vand.u32 %v2481, 4294901760
    %2483 = vmatpush1.msra.mxu0 %v2482
    %2484 = vmatprep.subr.mxu0 0.0
    %v2485 = vand.u32 %v1372, 4294901760
    %v2486 = vsub.f32 %v1372, %v2485
    %v2487 = vand.u32 %v2486, 4294901760
    %2488 = vmatpush1.msra.mxu0 %v2487
    %2489 = vmatprep.subr.mxu0 0.0
    %v2490 = vand.u32 %v1373, 4294901760
    %v2491 = vsub.f32 %v1373, %v2490
    %v2492 = vand.u32 %v2491, 4294901760
    %2493 = vmatpush1.msra.mxu0 %v2492
    %2494 = vmatprep.subr.mxu0 0.0
    %v2495 = vand.u32 %v1374, 4294901760
    %v2496 = vsub.f32 %v1374, %v2495
    %v2497 = vand.u32 %v2496, 4294901760
    %2498 = vmatpush1.msra.mxu0 %v2497
    %2499 = vmatprep.subr.mxu0 0.0
    %v2500 = vand.u32 %v1375, 4294901760
    %v2501 = vsub.f32 %v1375, %v2500
    %v2502 = vand.u32 %v2501, 4294901760
    %2503 = vmatpush1.msra.mxu0 %v2502
    %2504 = vmatprep.subr.mxu0 0.0
    %v2505 = vand.u32 %v1376, 4294901760
    %v2506 = vsub.f32 %v1376, %v2505
    %v2507 = vand.u32 %v2506, 4294901760
    %2508 = vmatpush1.msra.mxu0 %v2507
    %2509 = vmatprep.subr.mxu0 0.0
    %v2510 = vand.u32 %v1377, 4294901760
    %v2511 = vsub.f32 %v1377, %v2510
    %v2512 = vand.u32 %v2511, 4294901760
    %2513 = vmatpush1.msra.mxu0 %v2512
    %2514 = vmatprep.subr.mxu0 0.0
    %v2515 = vand.u32 %v1378, 4294901760
    %v2516 = vsub.f32 %v1378, %v2515
    %v2517 = vand.u32 %v2516, 4294901760
    %2518 = vmatpush1.msra.mxu0 %v2517
    %2519 = vmatprep.subr.mxu0 0.0
    %v2520 = vand.u32 %v1379, 4294901760
    %v2521 = vsub.f32 %v1379, %v2520
    %v2522 = vand.u32 %v2521, 4294901760
    %2523 = vmatpush1.msra.mxu0 %v2522
    %2524 = vmatprep.subr.mxu0 0.0
    %v2525 = vand.u32 %v1380, 4294901760
    %v2526 = vsub.f32 %v1380, %v2525
    %v2527 = vand.u32 %v2526, 4294901760
    %2528 = vmatpush1.msra.mxu0 %v2527
    %2529 = vmatprep.subr.mxu0 0.0
    %2530 = vmatpush1.msra.mxu0 0.0
    %2531 = vmatprep.subr.mxu0 0.0
    %2532 = vmatpush1.msra.mxu0 0.0
    %2533 = vmatprep.subr.mxu0 0.0
    %2534 = vmatpush1.msra.mxu0 0.0
    %2535 = vmatprep.subr.mxu0 0.0
    %2536 = vmatpush1.msra.mxu0 0.0
    %2537 = vmatprep.subr.mxu0 0.0
    %2538 = vmatpush1.msra.mxu0 0.0
    %2539 = vmatprep.subr.mxu0 0.0
    %2540 = vmatpush1.msra.mxu0 0.0
    %2541 = vmatprep.subr.mxu0 0.0
    %2542 = vmatpush1.msra.mxu0 0.0
    %2543 = vmatprep.subr.mxu0 0.0
    %2544 = vmatpush1.msra.mxu0 0.0
    %2545 = vmatprep.subr.mxu0 0.0
    %2546 = vmatpush1.msra.mxu0 0.0
    %2547 = vmatprep.subr.mxu0 0.0
    %2548 = vmatpush1.msra.mxu0 0.0
    %2549 = vmatprep.subr.mxu0 0.0
    %2550 = vmatpush1.msra.mxu0 0.0
    %2551 = vmatprep.subr.mxu0 0.0
    %2552 = vmatpush1.msra.mxu0 0.0
    %2553 = vmatprep.subr.mxu0 0.0
    %2554 = vmatpush1.msra.mxu0 0.0
    %2555 = vmatprep.subr.mxu0 0.0
    %2556 = vmatpush1.msra.mxu0 0.0
    %2557 = vmatprep.subr.mxu0 0.0
    %2558 = vmatpush1.msra.mxu0 0.0
    %2559 = vmatprep.subr.mxu0 0.0
    %2560 = vmatpush1.msra.mxu0 0.0
    %2561 = vmatprep.mubr.f32.mxu0 0.0
    %v2562 = vand.u32 %v2011, 4294901760
    %2563 = vmatmul.mubr.f32.gmra.mrb[0].mxu0 %v2562
    %v2564 = vpop.f32.mrb[0].mxu0
    %v2565 = vadd.f32 %v2446, %v2564
    %v2566 = vpop.f32.mrb[0].mxu0
    %2567 = vdwg.mxu0
    %2568 = vmatprep.subr.mxu0 0.0
    %v2569 = vand.u32 %v1365, 4294901760
    %2570 = vmatpush1.msra.mxu0 %v2569
    %2571 = vmatprep.subr.mxu0 0.0
    %v2572 = vand.u32 %v1366, 4294901760
    %2573 = vmatpush1.msra.mxu0 %v2572
    %2574 = vmatprep.subr.mxu0 0.0
    %v2575 = vand.u32 %v1367, 4294901760
    %2576 = vmatpush1.msra.mxu0 %v2575
    %2577 = vmatprep.subr.mxu0 0.0
    %v2578 = vand.u32 %v1368, 4294901760
    %2579 = vmatpush1.msra.mxu0 %v2578
    %2580 = vmatprep.subr.mxu0 0.0
    %v2581 = vand.u32 %v1369, 4294901760
    %2582 = vmatpush1.msra.mxu0 %v2581
    %2583 = vmatprep.subr.mxu0 0.0
    %v2584 = vand.u32 %v1370, 4294901760
    %2585 = vmatpush1.msra.mxu0 %v2584
    %2586 = vmatprep.subr.mxu0 0.0
    %v2587 = vand.u32 %v1371, 4294901760
    %2588 = vmatpush1.msra.mxu0 %v2587
    %2589 = vmatprep.subr.mxu0 0.0
    %v2590 = vand.u32 %v1372, 4294901760
    %2591 = vmatpush1.msra.mxu0 %v2590
    %2592 = vmatprep.subr.mxu0 0.0
    %v2593 = vand.u32 %v1373, 4294901760
    %2594 = vmatpush1.msra.mxu0 %v2593
    %2595 = vmatprep.subr.mxu0 0.0
    %v2596 = vand.u32 %v1374, 4294901760
    %2597 = vmatpush1.msra.mxu0 %v2596
    %2598 = vmatprep.subr.mxu0 0.0
    %v2599 = vand.u32 %v1375, 4294901760
    %2600 = vmatpush1.msra.mxu0 %v2599
    %2601 = vmatprep.subr.mxu0 0.0
    %v2602 = vand.u32 %v1376, 4294901760
    %2603 = vmatpush1.msra.mxu0 %v2602
    %2604 = vmatprep.subr.mxu0 0.0
    %v2605 = vand.u32 %v1377, 4294901760
    %2606 = vmatpush1.msra.mxu0 %v2605
    %2607 = vmatprep.subr.mxu0 0.0
    %v2608 = vand.u32 %v1378, 4294901760
    %2609 = vmatpush1.msra.mxu0 %v2608
    %2610 = vmatprep.subr.mxu0 0.0
    %v2611 = vand.u32 %v1379, 4294901760
    %2612 = vmatpush1.msra.mxu0 %v2611
    %2613 = vmatprep.subr.mxu0 0.0
    %v2614 = vand.u32 %v1380, 4294901760
    %2615 = vmatpush1.msra.mxu0 %v2614
    %2616 = vmatprep.subr.mxu0 0.0
    %2617 = vmatpush1.msra.mxu0 0.0
    %2618 = vmatprep.subr.mxu0 0.0
    %2619 = vmatpush1.msra.mxu0 0.0
    %2620 = vmatprep.subr.mxu0 0.0
    %2621 = vmatpush1.msra.mxu0 0.0
    %2622 = vmatprep.subr.mxu0 0.0
    %2623 = vmatpush1.msra.mxu0 0.0
    %2624 = vmatprep.subr.mxu0 0.0
    %2625 = vmatpush1.msra.mxu0 0.0
    %2626 = vmatprep.subr.mxu0 0.0
    %2627 = vmatpush1.msra.mxu0 0.0
    %2628 = vmatprep.subr.mxu0 0.0
    %2629 = vmatpush1.msra.mxu0 0.0
    %2630 = vmatprep.subr.mxu0 0.0
    %2631 = vmatpush1.msra.mxu0 0.0
    %2632 = vmatprep.subr.mxu0 0.0
    %2633 = vmatpush1.msra.mxu0 0.0
    %2634 = vmatprep.subr.mxu0 0.0
    %2635 = vmatpush1.msra.mxu0 0.0
    %2636 = vmatprep.subr.mxu0 0.0
    %2637 = vmatpush1.msra.mxu0 0.0
    %2638 = vmatprep.subr.mxu0 0.0
    %2639 = vmatpush1.msra.mxu0 0.0
    %2640 = vmatprep.subr.mxu0 0.0
    %2641 = vmatpush1.msra.mxu0 0.0
    %2642 = vmatprep.subr.mxu0 0.0
    %2643 = vmatpush1.msra.mxu0 0.0
    %2644 = vmatprep.subr.mxu0 0.0
    %2645 = vmatpush1.msra.mxu0 0.0
    %2646 = vmatprep.subr.mxu0 0.0
    %2647 = vmatpush1.msra.mxu0 0.0
    %2648 = vmatprep.mubr.f32.mxu0 0.0
    %v2649 = vand.u32 %v2011, 4294901760
    %2650 = vmatmul.mubr.f32.gmra.mrb[0].mxu0 %v2649
    %v2651 = vpop.f32.mrb[0].mxu0
    %v2652 = vadd.f32 %v2565, %v2651
    %v2653 = vpop.f32.mrb[0].mxu0
    %2654 = vdwg.mxu0
    %v2655 = vadd.f32 %v2013, %v2652
    %v2656 = vtanh.pop %v2655
    %s2657 = scalar_lea.vmem [#allocation2], 16
    %v2658 = vld [vmem:[%s2657] sm:$0xff]
    %2659 = vmatprep.subr.mxu0 0.0
    %v2660 = vand.u32 %v1365, 4294901760
    %2661 = vmatpush1.msra.mxu0 %v2660
    %2662 = vmatprep.subr.mxu0 0.0
    %v2663 = vand.u32 %v1366, 4294901760
    %2664 = vmatpush1.msra.mxu0 %v2663
    %2665 = vmatprep.subr.mxu0 0.0
    %v2666 = vand.u32 %v1367, 4294901760
    %2667 = vmatpush1.msra.mxu0 %v2666
    %2668 = vmatprep.subr.mxu0 0.0
    %v2669 = vand.u32 %v1368, 4294901760
    %2670 = vmatpush1.msra.mxu0 %v2669
    %2671 = vmatprep.subr.mxu0 0.0
    %v2672 = vand.u32 %v1369, 4294901760
    %2673 = vmatpush1.msra.mxu0 %v2672
    %2674 = vmatprep.subr.mxu0 0.0
    %v2675 = vand.u32 %v1370, 4294901760
    %2676 = vmatpush1.msra.mxu0 %v2675
    %2677 = vmatprep.subr.mxu0 0.0
    %v2678 = vand.u32 %v1371, 4294901760
    %2679 = vmatpush1.msra.mxu0 %v2678
    %2680 = vmatprep.subr.mxu0 0.0
    %v2681 = vand.u32 %v1372, 4294901760
    %2682 = vmatpush1.msra.mxu0 %v2681
    %2683 = vmatprep.subr.mxu0 0.0
    %v2684 = vand.u32 %v1373, 4294901760
    %2685 = vmatpush1.msra.mxu0 %v2684
    %2686 = vmatprep.subr.mxu0 0.0
    %v2687 = vand.u32 %v1374, 4294901760
    %2688 = vmatpush1.msra.mxu0 %v2687
    %2689 = vmatprep.subr.mxu0 0.0
    %v2690 = vand.u32 %v1375, 4294901760
    %2691 = vmatpush1.msra.mxu0 %v2690
    %2692 = vmatprep.subr.mxu0 0.0
    %v2693 = vand.u32 %v1376, 4294901760
    %2694 = vmatpush1.msra.mxu0 %v2693
    %2695 = vmatprep.subr.mxu0 0.0
    %v2696 = vand.u32 %v1377, 4294901760
    %2697 = vmatpush1.msra.mxu0 %v2696
    %2698 = vmatprep.subr.mxu0 0.0
    %v2699 = vand.u32 %v1378, 4294901760
    %2700 = vmatpush1.msra.mxu0 %v2699
    %2701 = vmatprep.subr.mxu0 0.0
    %v2702 = vand.u32 %v1379, 4294901760
    %2703 = vmatpush1.msra.mxu0 %v2702
    %2704 = vmatprep.subr.mxu0 0.0
    %v2705 = vand.u32 %v1380, 4294901760
    %2706 = vmatpush1.msra.mxu0 %v2705
    %2707 = vmatprep.subr.mxu0 0.0
    %2708 = vmatpush1.msra.mxu0 0.0
    %2709 = vmatprep.subr.mxu0 0.0
    %2710 = vmatpush1.msra.mxu0 0.0
    %2711 = vmatprep.subr.mxu0 0.0
    %2712 = vmatpush1.msra.mxu0 0.0
    %2713 = vmatprep.subr.mxu0 0.0
    %2714 = vmatpush1.msra.mxu0 0.0
    %2715 = vmatprep.subr.mxu0 0.0
    %2716 = vmatpush1.msra.mxu0 0.0
    %2717 = vmatprep.subr.mxu0 0.0
    %2718 = vmatpush1.msra.mxu0 0.0
    %2719 = vmatprep.subr.mxu0 0.0
    %2720 = vmatpush1.msra.mxu0 0.0
    %2721 = vmatprep.subr.mxu0 0.0
    %2722 = vmatpush1.msra.mxu0 0.0
    %2723 = vmatprep.subr.mxu0 0.0
    %2724 = vmatpush1.msra.mxu0 0.0
    %2725 = vmatprep.subr.mxu0 0.0
    %2726 = vmatpush1.msra.mxu0 0.0
    %2727 = vmatprep.subr.mxu0 0.0
    %2728 = vmatpush1.msra.mxu0 0.0
    %2729 = vmatprep.subr.mxu0 0.0
    %2730 = vmatpush1.msra.mxu0 0.0
    %2731 = vmatprep.subr.mxu0 0.0
    %2732 = vmatpush1.msra.mxu0 0.0
    %2733 = vmatprep.subr.mxu0 0.0
    %2734 = vmatpush1.msra.mxu0 0.0
    %2735 = vmatprep.subr.mxu0 0.0
    %2736 = vmatpush1.msra.mxu0 0.0
    %2737 = vmatprep.subr.mxu0 0.0
    %2738 = vmatpush1.msra.mxu0 0.0
    %2739 = vmatprep.mubr.f32.mxu0 0.0
    %v2740 = vand.u32 %v2656, 4294901760
    %v2741 = vsub.f32 %v2656, %v2740
    %v2742 = vand.u32 %v2741, 4294901760
    %v2743 = vsub.f32 %v2741, %v2742
    %v2744 = vand.u32 %v2743, 4294901760
    %2745 = vmatmul.mubr.f32.gmra.mrb[0].mxu0 %v2744
    %v2746 = vpop.f32.mrb[0].mxu0
    %v2747 = vadd.f32 0.0, %v2746
    %v2748 = vpop.f32.mrb[0].mxu0
    %2749 = vdwg.mxu0
    %2750 = vmatprep.subr.mxu0 0.0
    %v2751 = vand.u32 %v1365, 4294901760
    %v2752 = vsub.f32 %v1365, %v2751
    %v2753 = vand.u32 %v2752, 4294901760
    %v2754 = vsub.f32 %v2752, %v2753
    %v2755 = vand.u32 %v2754, 4294901760
    %2756 = vmatpush1.msra.mxu0 %v2755
    %2757 = vmatprep.subr.mxu0 0.0
    %v2758 = vand.u32 %v1366, 4294901760
    %v2759 = vsub.f32 %v1366, %v2758
    %v2760 = vand.u32 %v2759, 4294901760
    %v2761 = vsub.f32 %v2759, %v2760
    %v2762 = vand.u32 %v2761, 4294901760
    %2763 = vmatpush1.msra.mxu0 %v2762
    %2764 = vmatprep.subr.mxu0 0.0
    %v2765 = vand.u32 %v1367, 4294901760
    %v2766 = vsub.f32 %v1367, %v2765
    %v2767 = vand.u32 %v2766, 4294901760
    %v2768 = vsub.f32 %v2766, %v2767
    %v2769 = vand.u32 %v2768, 4294901760
    %2770 = vmatpush1.msra.mxu0 %v2769
    %2771 = vmatprep.subr.mxu0 0.0
    %v2772 = vand.u32 %v1368, 4294901760
    %v2773 = vsub.f32 %v1368, %v2772
    %v2774 = vand.u32 %v2773, 4294901760
    %v2775 = vsub.f32 %v2773, %v2774
    %v2776 = vand.u32 %v2775, 4294901760
    %2777 = vmatpush1.msra.mxu0 %v2776
    %2778 = vmatprep.subr.mxu0 0.0
    %v2779 = vand.u32 %v1369, 4294901760
    %v2780 = vsub.f32 %v1369, %v2779
    %v2781 = vand.u32 %v2780, 4294901760
    %v2782 = vsub.f32 %v2780, %v2781
    %v2783 = vand.u32 %v2782, 4294901760
    %2784 = vmatpush1.msra.mxu0 %v2783
    %2785 = vmatprep.subr.mxu0 0.0
    %v2786 = vand.u32 %v1370, 4294901760
    %v2787 = vsub.f32 %v1370, %v2786
    %v2788 = vand.u32 %v2787, 4294901760
    %v2789 = vsub.f32 %v2787, %v2788
    %v2790 = vand.u32 %v2789, 4294901760
    %2791 = vmatpush1.msra.mxu0 %v2790
    %2792 = vmatprep.subr.mxu0 0.0
    %v2793 = vand.u32 %v1371, 4294901760
    %v2794 = vsub.f32 %v1371, %v2793
    %v2795 = vand.u32 %v2794, 4294901760
    %v2796 = vsub.f32 %v2794, %v2795
    %v2797 = vand.u32 %v2796, 4294901760
    %2798 = vmatpush1.msra.mxu0 %v2797
    %2799 = vmatprep.subr.mxu0 0.0
    %v2800 = vand.u32 %v1372, 4294901760
    %v2801 = vsub.f32 %v1372, %v2800
    %v2802 = vand.u32 %v2801, 4294901760
    %v2803 = vsub.f32 %v2801, %v2802
    %v2804 = vand.u32 %v2803, 4294901760
    %2805 = vmatpush1.msra.mxu0 %v2804
    %2806 = vmatprep.subr.mxu0 0.0
    %v2807 = vand.u32 %v1373, 4294901760
    %v2808 = vsub.f32 %v1373, %v2807
    %v2809 = vand.u32 %v2808, 4294901760
    %v2810 = vsub.f32 %v2808, %v2809
    %v2811 = vand.u32 %v2810, 4294901760
    %2812 = vmatpush1.msra.mxu0 %v2811
    %2813 = vmatprep.subr.mxu0 0.0
    %v2814 = vand.u32 %v1374, 4294901760
    %v2815 = vsub.f32 %v1374, %v2814
    %v2816 = vand.u32 %v2815, 4294901760
    %v2817 = vsub.f32 %v2815, %v2816
    %v2818 = vand.u32 %v2817, 4294901760
    %2819 = vmatpush1.msra.mxu0 %v2818
    %2820 = vmatprep.subr.mxu0 0.0
    %v2821 = vand.u32 %v1375, 4294901760
    %v2822 = vsub.f32 %v1375, %v2821
    %v2823 = vand.u32 %v2822, 4294901760
    %v2824 = vsub.f32 %v2822, %v2823
    %v2825 = vand.u32 %v2824, 4294901760
    %2826 = vmatpush1.msra.mxu0 %v2825
    %2827 = vmatprep.subr.mxu0 0.0
    %v2828 = vand.u32 %v1376, 4294901760
    %v2829 = vsub.f32 %v1376, %v2828
    %v2830 = vand.u32 %v2829, 4294901760
    %v2831 = vsub.f32 %v2829, %v2830
    %v2832 = vand.u32 %v2831, 4294901760
    %2833 = vmatpush1.msra.mxu0 %v2832
    %2834 = vmatprep.subr.mxu0 0.0
    %v2835 = vand.u32 %v1377, 4294901760
    %v2836 = vsub.f32 %v1377, %v2835
    %v2837 = vand.u32 %v2836, 4294901760
    %v2838 = vsub.f32 %v2836, %v2837
    %v2839 = vand.u32 %v2838, 4294901760
    %2840 = vmatpush1.msra.mxu0 %v2839
    %2841 = vmatprep.subr.mxu0 0.0
    %v2842 = vand.u32 %v1378, 4294901760
    %v2843 = vsub.f32 %v1378, %v2842
    %v2844 = vand.u32 %v2843, 4294901760
    %v2845 = vsub.f32 %v2843, %v2844
    %v2846 = vand.u32 %v2845, 4294901760
    %2847 = vmatpush1.msra.mxu0 %v2846
    %2848 = vmatprep.subr.mxu0 0.0
    %v2849 = vand.u32 %v1379, 4294901760
    %v2850 = vsub.f32 %v1379, %v2849
    %v2851 = vand.u32 %v2850, 4294901760
    %v2852 = vsub.f32 %v2850, %v2851
    %v2853 = vand.u32 %v2852, 4294901760
    %2854 = vmatpush1.msra.mxu0 %v2853
    %2855 = vmatprep.subr.mxu0 0.0
    %v2856 = vand.u32 %v1380, 4294901760
    %v2857 = vsub.f32 %v1380, %v2856
    %v2858 = vand.u32 %v2857, 4294901760
    %v2859 = vsub.f32 %v2857, %v2858
    %v2860 = vand.u32 %v2859, 4294901760
    %2861 = vmatpush1.msra.mxu0 %v2860
    %2862 = vmatprep.subr.mxu0 0.0
    %2863 = vmatpush1.msra.mxu0 0.0
    %2864 = vmatprep.subr.mxu0 0.0
    %2865 = vmatpush1.msra.mxu0 0.0
    %2866 = vmatprep.subr.mxu0 0.0
    %2867 = vmatpush1.msra.mxu0 0.0
    %2868 = vmatprep.subr.mxu0 0.0
    %2869 = vmatpush1.msra.mxu0 0.0
    %2870 = vmatprep.subr.mxu0 0.0
    %2871 = vmatpush1.msra.mxu0 0.0
    %2872 = vmatprep.subr.mxu0 0.0
    %2873 = vmatpush1.msra.mxu0 0.0
    %2874 = vmatprep.subr.mxu0 0.0
    %2875 = vmatpush1.msra.mxu0 0.0
    %2876 = vmatprep.subr.mxu0 0.0
    %2877 = vmatpush1.msra.mxu0 0.0
    %2878 = vmatprep.subr.mxu0 0.0
    %2879 = vmatpush1.msra.mxu0 0.0
    %2880 = vmatprep.subr.mxu0 0.0
    %2881 = vmatpush1.msra.mxu0 0.0
    %2882 = vmatprep.subr.mxu0 0.0
    %2883 = vmatpush1.msra.mxu0 0.0
    %2884 = vmatprep.subr.mxu0 0.0
    %2885 = vmatpush1.msra.mxu0 0.0
    %2886 = vmatprep.subr.mxu0 0.0
    %2887 = vmatpush1.msra.mxu0 0.0
    %2888 = vmatprep.subr.mxu0 0.0
    %2889 = vmatpush1.msra.mxu0 0.0
    %2890 = vmatprep.subr.mxu0 0.0
    %2891 = vmatpush1.msra.mxu0 0.0
    %2892 = vmatprep.subr.mxu0 0.0
    %2893 = vmatpush1.msra.mxu0 0.0
    %2894 = vmatprep.mubr.f32.mxu0 0.0
    %v2895 = vand.u32 %v2656, 4294901760
    %2896 = vmatmul.mubr.f32.gmra.mrb[0].mxu0 %v2895
    %v2897 = vpop.f32.mrb[0].mxu0
    %v2898 = vadd.f32 %v2747, %v2897
    %v2899 = vpop.f32.mrb[0].mxu0
    %2900 = vdwg.mxu0
    %2901 = vmatprep.subr.mxu0 0.0
    %v2902 = vand.u32 %v1365, 4294901760
    %v2903 = vsub.f32 %v1365, %v2902
    %2904 = vmatpush1.msra.mxu0 %v2903
    %2905 = vmatprep.subr.mxu0 0.0
    %v2906 = vand.u32 %v1366, 4294901760
    %v2907 = vsub.f32 %v1366, %v2906
    %2908 = vmatpush1.msra.mxu0 %v2907
    %2909 = vmatprep.subr.mxu0 0.0
    %v2910 = vand.u32 %v1367, 4294901760
    %v2911 = vsub.f32 %v1367, %v2910
    %2912 = vmatpush1.msra.mxu0 %v2911
    %2913 = vmatprep.subr.mxu0 0.0
    %v2914 = vand.u32 %v1368, 4294901760
    %v2915 = vsub.f32 %v1368, %v2914
    %2916 = vmatpush1.msra.mxu0 %v2915
    %2917 = vmatprep.subr.mxu0 0.0
    %v2918 = vand.u32 %v1369, 4294901760
    %v2919 = vsub.f32 %v1369, %v2918
    %2920 = vmatpush1.msra.mxu0 %v2919
    %2921 = vmatprep.subr.mxu0 0.0
    %v2922 = vand.u32 %v1370, 4294901760
    %v2923 = vsub.f32 %v1370, %v2922
    %2924 = vmatpush1.msra.mxu0 %v2923
    %2925 = vmatprep.subr.mxu0 0.0
    %v2926 = vand.u32 %v1371, 4294901760
    %v2927 = vsub.f32 %v1371, %v2926
    %2928 = vmatpush1.msra.mxu0 %v2927
    %2929 = vmatprep.subr.mxu0 0.0
    %v2930 = vand.u32 %v1372, 4294901760
    %v2931 = vsub.f32 %v1372, %v2930
    %2932 = vmatpush1.msra.mxu0 %v2931
    %2933 = vmatprep.subr.mxu0 0.0
    %v2934 = vand.u32 %v1373, 4294901760
    %v2935 = vsub.f32 %v1373, %v2934
    %2936 = vmatpush1.msra.mxu0 %v2935
    %2937 = vmatprep.subr.mxu0 0.0
    %v2938 = vand.u32 %v1374, 4294901760
    %v2939 = vsub.f32 %v1374, %v2938
    %2940 = vmatpush1.msra.mxu0 %v2939
    %2941 = vmatprep.subr.mxu0 0.0
    %v2942 = vand.u32 %v1375, 4294901760
    %v2943 = vsub.f32 %v1375, %v2942
    %2944 = vmatpush1.msra.mxu0 %v2943
    %2945 = vmatprep.subr.mxu0 0.0
    %v2946 = vand.u32 %v1376, 4294901760
    %v2947 = vsub.f32 %v1376, %v2946
    %2948 = vmatpush1.msra.mxu0 %v2947
    %2949 = vmatprep.subr.mxu0 0.0
    %v2950 = vand.u32 %v1377, 4294901760
    %v2951 = vsub.f32 %v1377, %v2950
    %2952 = vmatpush1.msra.mxu0 %v2951
    %2953 = vmatprep.subr.mxu0 0.0
    %v2954 = vand.u32 %v1378, 4294901760
    %v2955 = vsub.f32 %v1378, %v2954
    %2956 = vmatpush1.msra.mxu0 %v2955
    %2957 = vmatprep.subr.mxu0 0.0
    %v2958 = vand.u32 %v1379, 4294901760
    %v2959 = vsub.f32 %v1379, %v2958
    %2960 = vmatpush1.msra.mxu0 %v2959
    %2961 = vmatprep.subr.mxu0 0.0
    %v2962 = vand.u32 %v1380, 4294901760
    %v2963 = vsub.f32 %v1380, %v2962
    %2964 = vmatpush1.msra.mxu0 %v2963
    %2965 = vmatprep.subr.mxu0 0.0
    %2966 = vmatpush1.msra.mxu0 0.0
    %2967 = vmatprep.subr.mxu0 0.0
    %2968 = vmatpush1.msra.mxu0 0.0
    %2969 = vmatprep.subr.mxu0 0.0
    %2970 = vmatpush1.msra.mxu0 0.0
    %2971 = vmatprep.subr.mxu0 0.0
    %2972 = vmatpush1.msra.mxu0 0.0
    %2973 = vmatprep.subr.mxu0 0.0
    %2974 = vmatpush1.msra.mxu0 0.0
    %2975 = vmatprep.subr.mxu0 0.0
    %2976 = vmatpush1.msra.mxu0 0.0
    %2977 = vmatprep.subr.mxu0 0.0
    %2978 = vmatpush1.msra.mxu0 0.0
    %2979 = vmatprep.subr.mxu0 0.0
    %2980 = vmatpush1.msra.mxu0 0.0
    %2981 = vmatprep.subr.mxu0 0.0
    %2982 = vmatpush1.msra.mxu0 0.0
    %2983 = vmatprep.subr.mxu0 0.0
    %2984 = vmatpush1.msra.mxu0 0.0
    %2985 = vmatprep.subr.mxu0 0.0
    %2986 = vmatpush1.msra.mxu0 0.0
    %2987 = vmatprep.subr.mxu0 0.0
    %2988 = vmatpush1.msra.mxu0 0.0
    %2989 = vmatprep.subr.mxu0 0.0
    %2990 = vmatpush1.msra.mxu0 0.0
    %2991 = vmatprep.subr.mxu0 0.0
    %2992 = vmatpush1.msra.mxu0 0.0
    %2993 = vmatprep.subr.mxu0 0.0
    %2994 = vmatpush1.msra.mxu0 0.0
    %2995 = vmatprep.subr.mxu0 0.0
    %2996 = vmatpush1.msra.mxu0 0.0
    %2997 = vmatprep.mubr.f32.mxu0 0.0
    %v2998 = vand.u32 %v2656, 4294901760
    %v2999 = vsub.f32 %v2656, %v2998
    %3000 = vmatmul.mubr.f32.gmra.mrb[0].mxu0 %v2999
    %v3001 = vpop.f32.mrb[0].mxu0
    %v3002 = vadd.f32 %v2898, %v3001
    %v3003 = vpop.f32.mrb[0].mxu0
    %3004 = vdwg.mxu0
    %3005 = vmatprep.subr.mxu0 0.0
    %v3006 = vand.u32 %v1365, 4294901760
    %3007 = vmatpush1.msra.mxu0 %v3006
    %3008 = vmatprep.subr.mxu0 0.0
    %v3009 = vand.u32 %v1366, 4294901760
    %3010 = vmatpush1.msra.mxu0 %v3009
    %3011 = vmatprep.subr.mxu0 0.0
    %v3012 = vand.u32 %v1367, 4294901760
    %3013 = vmatpush1.msra.mxu0 %v3012
    %3014 = vmatprep.subr.mxu0 0.0
    %v3015 = vand.u32 %v1368, 4294901760
    %3016 = vmatpush1.msra.mxu0 %v3015
    %3017 = vmatprep.subr.mxu0 0.0
    %v3018 = vand.u32 %v1369, 4294901760
    %3019 = vmatpush1.msra.mxu0 %v3018
    %3020 = vmatprep.subr.mxu0 0.0
    %v3021 = vand.u32 %v1370, 4294901760
    %3022 = vmatpush1.msra.mxu0 %v3021
    %3023 = vmatprep.subr.mxu0 0.0
    %v3024 = vand.u32 %v1371, 4294901760
    %3025 = vmatpush1.msra.mxu0 %v3024
    %3026 = vmatprep.subr.mxu0 0.0
    %v3027 = vand.u32 %v1372, 4294901760
    %3028 = vmatpush1.msra.mxu0 %v3027
    %3029 = vmatprep.subr.mxu0 0.0
    %v3030 = vand.u32 %v1373, 4294901760
    %3031 = vmatpush1.msra.mxu0 %v3030
    %3032 = vmatprep.subr.mxu0 0.0
    %v3033 = vand.u32 %v1374, 4294901760
    %3034 = vmatpush1.msra.mxu0 %v3033
    %3035 = vmatprep.subr.mxu0 0.0
    %v3036 = vand.u32 %v1375, 4294901760
    %3037 = vmatpush1.msra.mxu0 %v3036
    %3038 = vmatprep.subr.mxu0 0.0
    %v3039 = vand.u32 %v1376, 4294901760
    %3040 = vmatpush1.msra.mxu0 %v3039
    %3041 = vmatprep.subr.mxu0 0.0
    %v3042 = vand.u32 %v1377, 4294901760
    %3043 = vmatpush1.msra.mxu0 %v3042
    %3044 = vmatprep.subr.mxu0 0.0
    %v3045 = vand.u32 %v1378, 4294901760
    %3046 = vmatpush1.msra.mxu0 %v3045
    %3047 = vmatprep.subr.mxu0 0.0
    %v3048 = vand.u32 %v1379, 4294901760
    %3049 = vmatpush1.msra.mxu0 %v3048
    %3050 = vmatprep.subr.mxu0 0.0
    %v3051 = vand.u32 %v1380, 4294901760
    %3052 = vmatpush1.msra.mxu0 %v3051
    %3053 = vmatprep.subr.mxu0 0.0
    %3054 = vmatpush1.msra.mxu0 0.0
    %3055 = vmatprep.subr.mxu0 0.0
    %3056 = vmatpush1.msra.mxu0 0.0
    %3057 = vmatprep.subr.mxu0 0.0
    %3058 = vmatpush1.msra.mxu0 0.0
    %3059 = vmatprep.subr.mxu0 0.0
    %3060 = vmatpush1.msra.mxu0 0.0
    %3061 = vmatprep.subr.mxu0 0.0
    %3062 = vmatpush1.msra.mxu0 0.0
    %3063 = vmatprep.subr.mxu0 0.0
    %3064 = vmatpush1.msra.mxu0 0.0
    %3065 = vmatprep.subr.mxu0 0.0
    %3066 = vmatpush1.msra.mxu0 0.0
    %3067 = vmatprep.subr.mxu0 0.0
    %3068 = vmatpush1.msra.mxu0 0.0
    %3069 = vmatprep.subr.mxu0 0.0
    %3070 = vmatpush1.msra.mxu0 0.0
    %3071 = vmatprep.subr.mxu0 0.0
    %3072 = vmatpush1.msra.mxu0 0.0
    %3073 = vmatprep.subr.mxu0 0.0
    %3074 = vmatpush1.msra.mxu0 0.0
    %3075 = vmatprep.subr.mxu0 0.0
    %3076 = vmatpush1.msra.mxu0 0.0
    %3077 = vmatprep.subr.mxu0 0.0
    %3078 = vmatpush1.msra.mxu0 0.0
    %3079 = vmatprep.subr.mxu0 0.0
    %3080 = vmatpush1.msra.mxu0 0.0
    %3081 = vmatprep.subr.mxu0 0.0
    %3082 = vmatpush1.msra.mxu0 0.0
    %3083 = vmatprep.subr.mxu0 0.0
    %3084 = vmatpush1.msra.mxu0 0.0
    %3085 = vmatprep.mubr.f32.mxu0 0.0
    %v3086 = vand.u32 %v2656, 4294901760
    %v3087 = vsub.f32 %v2656, %v3086
    %v3088 = vand.u32 %v3087, 4294901760
    %3089 = vmatmul.mubr.f32.gmra.mrb[0].mxu0 %v3088
    %v3090 = vpop.f32.mrb[0].mxu0
    %v3091 = vadd.f32 %v3002, %v3090
    %v3092 = vpop.f32.mrb[0].mxu0
    %3093 = vdwg.mxu0
    %3094 = vmatprep.subr.mxu0 0.0
    %v3095 = vand.u32 %v1365, 4294901760
    %v3096 = vsub.f32 %v1365, %v3095
    %v3097 = vand.u32 %v3096, 4294901760
    %3098 = vmatpush1.msra.mxu0 %v3097
    %3099 = vmatprep.subr.mxu0 0.0
    %v3100 = vand.u32 %v1366, 4294901760
    %v3101 = vsub.f32 %v1366, %v3100
    %v3102 = vand.u32 %v3101, 4294901760
    %3103 = vmatpush1.msra.mxu0 %v3102
    %3104 = vmatprep.subr.mxu0 0.0
    %v3105 = vand.u32 %v1367, 4294901760
    %v3106 = vsub.f32 %v1367, %v3105
    %v3107 = vand.u32 %v3106, 4294901760
    %3108 = vmatpush1.msra.mxu0 %v3107
    %3109 = vmatprep.subr.mxu0 0.0
    %v3110 = vand.u32 %v1368, 4294901760
    %v3111 = vsub.f32 %v1368, %v3110
    %v3112 = vand.u32 %v3111, 4294901760
    %3113 = vmatpush1.msra.mxu0 %v3112
    %3114 = vmatprep.subr.mxu0 0.0
    %v3115 = vand.u32 %v1369, 4294901760
    %v3116 = vsub.f32 %v1369, %v3115
    %v3117 = vand.u32 %v3116, 4294901760
    %3118 = vmatpush1.msra.mxu0 %v3117
    %3119 = vmatprep.subr.mxu0 0.0
    %v3120 = vand.u32 %v1370, 4294901760
    %v3121 = vsub.f32 %v1370, %v3120
    %v3122 = vand.u32 %v3121, 4294901760
    %3123 = vmatpush1.msra.mxu0 %v3122
    %3124 = vmatprep.subr.mxu0 0.0
    %v3125 = vand.u32 %v1371, 4294901760
    %v3126 = vsub.f32 %v1371, %v3125
    %v3127 = vand.u32 %v3126, 4294901760
    %3128 = vmatpush1.msra.mxu0 %v3127
    %3129 = vmatprep.subr.mxu0 0.0
    %v3130 = vand.u32 %v1372, 4294901760
    %v3131 = vsub.f32 %v1372, %v3130
    %v3132 = vand.u32 %v3131, 4294901760
    %3133 = vmatpush1.msra.mxu0 %v3132
    %3134 = vmatprep.subr.mxu0 0.0
    %v3135 = vand.u32 %v1373, 4294901760
    %v3136 = vsub.f32 %v1373, %v3135
    %v3137 = vand.u32 %v3136, 4294901760
    %3138 = vmatpush1.msra.mxu0 %v3137
    %3139 = vmatprep.subr.mxu0 0.0
    %v3140 = vand.u32 %v1374, 4294901760
    %v3141 = vsub.f32 %v1374, %v3140
    %v3142 = vand.u32 %v3141, 4294901760
    %3143 = vmatpush1.msra.mxu0 %v3142
    %3144 = vmatprep.subr.mxu0 0.0
    %v3145 = vand.u32 %v1375, 4294901760
    %v3146 = vsub.f32 %v1375, %v3145
    %v3147 = vand.u32 %v3146, 4294901760
    %3148 = vmatpush1.msra.mxu0 %v3147
    %3149 = vmatprep.subr.mxu0 0.0
    %v3150 = vand.u32 %v1376, 4294901760
    %v3151 = vsub.f32 %v1376, %v3150
    %v3152 = vand.u32 %v3151, 4294901760
    %3153 = vmatpush1.msra.mxu0 %v3152
    %3154 = vmatprep.subr.mxu0 0.0
    %v3155 = vand.u32 %v1377, 4294901760
    %v3156 = vsub.f32 %v1377, %v3155
    %v3157 = vand.u32 %v3156, 4294901760
    %3158 = vmatpush1.msra.mxu0 %v3157
    %3159 = vmatprep.subr.mxu0 0.0
    %v3160 = vand.u32 %v1378, 4294901760
    %v3161 = vsub.f32 %v1378, %v3160
    %v3162 = vand.u32 %v3161, 4294901760
    %3163 = vmatpush1.msra.mxu0 %v3162
    %3164 = vmatprep.subr.mxu0 0.0
    %v3165 = vand.u32 %v1379, 4294901760
    %v3166 = vsub.f32 %v1379, %v3165
    %v3167 = vand.u32 %v3166, 4294901760
    %3168 = vmatpush1.msra.mxu0 %v3167
    %3169 = vmatprep.subr.mxu0 0.0
    %v3170 = vand.u32 %v1380, 4294901760
    %v3171 = vsub.f32 %v1380, %v3170
    %v3172 = vand.u32 %v3171, 4294901760
    %3173 = vmatpush1.msra.mxu0 %v3172
    %3174 = vmatprep.subr.mxu0 0.0
    %3175 = vmatpush1.msra.mxu0 0.0
    %3176 = vmatprep.subr.mxu0 0.0
    %3177 = vmatpush1.msra.mxu0 0.0
    %3178 = vmatprep.subr.mxu0 0.0
    %3179 = vmatpush1.msra.mxu0 0.0
    %3180 = vmatprep.subr.mxu0 0.0
    %3181 = vmatpush1.msra.mxu0 0.0
    %3182 = vmatprep.subr.mxu0 0.0
    %3183 = vmatpush1.msra.mxu0 0.0
    %3184 = vmatprep.subr.mxu0 0.0
    %3185 = vmatpush1.msra.mxu0 0.0
    %3186 = vmatprep.subr.mxu0 0.0
    %3187 = vmatpush1.msra.mxu0 0.0
    %3188 = vmatprep.subr.mxu0 0.0
    %3189 = vmatpush1.msra.mxu0 0.0
    %3190 = vmatprep.subr.mxu0 0.0
    %3191 = vmatpush1.msra.mxu0 0.0
    %3192 = vmatprep.subr.mxu0 0.0
    %3193 = vmatpush1.msra.mxu0 0.0
    %3194 = vmatprep.subr.mxu0 0.0
    %3195 = vmatpush1.msra.mxu0 0.0
    %3196 = vmatprep.subr.mxu0 0.0
    %3197 = vmatpush1.msra.mxu0 0.0
    %3198 = vmatprep.subr.mxu0 0.0
    %3199 = vmatpush1.msra.mxu0 0.0
    %3200 = vmatprep.subr.mxu0 0.0
    %3201 = vmatpush1.msra.mxu0 0.0
    %3202 = vmatprep.subr.mxu0 0.0
    %3203 = vmatpush1.msra.mxu0 0.0
    %3204 = vmatprep.subr.mxu0 0.0
    %3205 = vmatpush1.msra.mxu0 0.0
    %3206 = vmatprep.mubr.f32.mxu0 0.0
    %v3207 = vand.u32 %v2656, 4294901760
    %3208 = vmatmul.mubr.f32.gmra.mrb[0].mxu0 %v3207
    %v3209 = vpop.f32.mrb[0].mxu0
    %v3210 = vadd.f32 %v3091, %v3209
    %v3211 = vpop.f32.mrb[0].mxu0
    %3212 = vdwg.mxu0
    %3213 = vmatprep.subr.mxu0 0.0
    %v3214 = vand.u32 %v1365, 4294901760
    %3215 = vmatpush1.msra.mxu0 %v3214
    %3216 = vmatprep.subr.mxu0 0.0
    %v3217 = vand.u32 %v1366, 4294901760
    %3218 = vmatpush1.msra.mxu0 %v3217
    %3219 = vmatprep.subr.mxu0 0.0
    %v3220 = vand.u32 %v1367, 4294901760
    %3221 = vmatpush1.msra.mxu0 %v3220
    %3222 = vmatprep.subr.mxu0 0.0
    %v3223 = vand.u32 %v1368, 4294901760
    %3224 = vmatpush1.msra.mxu0 %v3223
    %3225 = vmatprep.subr.mxu0 0.0
    %v3226 = vand.u32 %v1369, 4294901760
    %3227 = vmatpush1.msra.mxu0 %v3226
    %3228 = vmatprep.subr.mxu0 0.0
    %v3229 = vand.u32 %v1370, 4294901760
    %3230 = vmatpush1.msra.mxu0 %v3229
    %3231 = vmatprep.subr.mxu0 0.0
    %v3232 = vand.u32 %v1371, 4294901760
    %3233 = vmatpush1.msra.mxu0 %v3232
    %3234 = vmatprep.subr.mxu0 0.0
    %v3235 = vand.u32 %v1372, 4294901760
    %3236 = vmatpush1.msra.mxu0 %v3235
    %3237 = vmatprep.subr.mxu0 0.0
    %v3238 = vand.u32 %v1373, 4294901760
    %3239 = vmatpush1.msra.mxu0 %v3238
    %3240 = vmatprep.subr.mxu0 0.0
    %v3241 = vand.u32 %v1374, 4294901760
    %3242 = vmatpush1.msra.mxu0 %v3241
    %3243 = vmatprep.subr.mxu0 0.0
    %v3244 = vand.u32 %v1375, 4294901760
    %3245 = vmatpush1.msra.mxu0 %v3244
    %3246 = vmatprep.subr.mxu0 0.0
    %v3247 = vand.u32 %v1376, 4294901760
    %3248 = vmatpush1.msra.mxu0 %v3247
    %3249 = vmatprep.subr.mxu0 0.0
    %v3250 = vand.u32 %v1377, 4294901760
    %3251 = vmatpush1.msra.mxu0 %v3250
    %3252 = vmatprep.subr.mxu0 0.0
    %v3253 = vand.u32 %v1378, 4294901760
    %3254 = vmatpush1.msra.mxu0 %v3253
    %3255 = vmatprep.subr.mxu0 0.0
    %v3256 = vand.u32 %v1379, 4294901760
    %3257 = vmatpush1.msra.mxu0 %v3256
    %3258 = vmatprep.subr.mxu0 0.0
    %v3259 = vand.u32 %v1380, 4294901760
    %3260 = vmatpush1.msra.mxu0 %v3259
    %3261 = vmatprep.subr.mxu0 0.0
    %3262 = vmatpush1.msra.mxu0 0.0
    %3263 = vmatprep.subr.mxu0 0.0
    %3264 = vmatpush1.msra.mxu0 0.0
    %3265 = vmatprep.subr.mxu0 0.0
    %3266 = vmatpush1.msra.mxu0 0.0
    %3267 = vmatprep.subr.mxu0 0.0
    %3268 = vmatpush1.msra.mxu0 0.0
    %3269 = vmatprep.subr.mxu0 0.0
    %3270 = vmatpush1.msra.mxu0 0.0
    %3271 = vmatprep.subr.mxu0 0.0
    %3272 = vmatpush1.msra.mxu0 0.0
    %3273 = vmatprep.subr.mxu0 0.0
    %3274 = vmatpush1.msra.mxu0 0.0
    %3275 = vmatprep.subr.mxu0 0.0
    %3276 = vmatpush1.msra.mxu0 0.0
    %3277 = vmatprep.subr.mxu0 0.0
    %3278 = vmatpush1.msra.mxu0 0.0
    %3279 = vmatprep.subr.mxu0 0.0
    %3280 = vmatpush1.msra.mxu0 0.0
    %3281 = vmatprep.subr.mxu0 0.0
    %3282 = vmatpush1.msra.mxu0 0.0
    %3283 = vmatprep.subr.mxu0 0.0
    %3284 = vmatpush1.msra.mxu0 0.0
    %3285 = vmatprep.subr.mxu0 0.0
    %3286 = vmatpush1.msra.mxu0 0.0
    %3287 = vmatprep.subr.mxu0 0.0
    %3288 = vmatpush1.msra.mxu0 0.0
    %3289 = vmatprep.subr.mxu0 0.0
    %3290 = vmatpush1.msra.mxu0 0.0
    %3291 = vmatprep.subr.mxu0 0.0
    %3292 = vmatpush1.msra.mxu0 0.0
    %3293 = vmatprep.mubr.f32.mxu0 0.0
    %v3294 = vand.u32 %v2656, 4294901760
    %3295 = vmatmul.mubr.f32.gmra.mrb[0].mxu0 %v3294
    %v3296 = vpop.f32.mrb[0].mxu0
    %v3297 = vadd.f32 %v3210, %v3296
    %v3298 = vpop.f32.mrb[0].mxu0
    %3299 = vdwg.mxu0
    %v3300 = vadd.f32 %v2658, %v3297
    %v3301 = vtanh.pop %v3300
    %s3302 = scalar_lea.vmem [#allocation2], 24
    %v3303 = vld [vmem:[%s3302] sm:$0xff]
    %3304 = vmatprep.subr.mxu0 0.0
    %v3305 = vand.u32 %v1365, 4294901760
    %3306 = vmatpush1.msra.mxu0 %v3305
    %3307 = vmatprep.subr.mxu0 0.0
    %v3308 = vand.u32 %v1366, 4294901760
    %3309 = vmatpush1.msra.mxu0 %v3308
    %3310 = vmatprep.subr.mxu0 0.0
    %v3311 = vand.u32 %v1367, 4294901760
    %3312 = vmatpush1.msra.mxu0 %v3311
    %3313 = vmatprep.subr.mxu0 0.0
    %v3314 = vand.u32 %v1368, 4294901760
    %3315 = vmatpush1.msra.mxu0 %v3314
    %3316 = vmatprep.subr.mxu0 0.0
    %v3317 = vand.u32 %v1369, 4294901760
    %3318 = vmatpush1.msra.mxu0 %v3317
    %3319 = vmatprep.subr.mxu0 0.0
    %v3320 = vand.u32 %v1370, 4294901760
    %3321 = vmatpush1.msra.mxu0 %v3320
    %3322 = vmatprep.subr.mxu0 0.0
    %v3323 = vand.u32 %v1371, 4294901760
    %3324 = vmatpush1.msra.mxu0 %v3323
    %3325 = vmatprep.subr.mxu0 0.0
    %v3326 = vand.u32 %v1372, 4294901760
    %3327 = vmatpush1.msra.mxu0 %v3326
    %3328 = vmatprep.subr.mxu0 0.0
    %v3329 = vand.u32 %v1373, 4294901760
    %3330 = vmatpush1.msra.mxu0 %v3329
    %3331 = vmatprep.subr.mxu0 0.0
    %v3332 = vand.u32 %v1374, 4294901760
    %3333 = vmatpush1.msra.mxu0 %v3332
    %3334 = vmatprep.subr.mxu0 0.0
    %v3335 = vand.u32 %v1375, 4294901760
    %3336 = vmatpush1.msra.mxu0 %v3335
    %3337 = vmatprep.subr.mxu0 0.0
    %v3338 = vand.u32 %v1376, 4294901760
    %3339 = vmatpush1.msra.mxu0 %v3338
    %3340 = vmatprep.subr.mxu0 0.0
    %v3341 = vand.u32 %v1377, 4294901760
    %3342 = vmatpush1.msra.mxu0 %v3341
    %3343 = vmatprep.subr.mxu0 0.0
    %v3344 = vand.u32 %v1378, 4294901760
    %3345 = vmatpush1.msra.mxu0 %v3344
    %3346 = vmatprep.subr.mxu0 0.0
    %v3347 = vand.u32 %v1379, 4294901760
    %3348 = vmatpush1.msra.mxu0 %v3347
    %3349 = vmatprep.subr.mxu0 0.0
    %v3350 = vand.u32 %v1380, 4294901760
    %3351 = vmatpush1.msra.mxu0 %v3350
    %3352 = vmatprep.subr.mxu0 0.0
    %3353 = vmatpush1.msra.mxu0 0.0
    %3354 = vmatprep.subr.mxu0 0.0
    %3355 = vmatpush1.msra.mxu0 0.0
    %3356 = vmatprep.subr.mxu0 0.0
    %3357 = vmatpush1.msra.mxu0 0.0
    %3358 = vmatprep.subr.mxu0 0.0
    %3359 = vmatpush1.msra.mxu0 0.0
    %3360 = vmatprep.subr.mxu0 0.0
    %3361 = vmatpush1.msra.mxu0 0.0
    %3362 = vmatprep.subr.mxu0 0.0
    %3363 = vmatpush1.msra.mxu0 0.0
    %3364 = vmatprep.subr.mxu0 0.0
    %3365 = vmatpush1.msra.mxu0 0.0
    %3366 = vmatprep.subr.mxu0 0.0
    %3367 = vmatpush1.msra.mxu0 0.0
    %3368 = vmatprep.subr.mxu0 0.0
    %3369 = vmatpush1.msra.mxu0 0.0
    %3370 = vmatprep.subr.mxu0 0.0
    %3371 = vmatpush1.msra.mxu0 0.0
    %3372 = vmatprep.subr.mxu0 0.0
    %3373 = vmatpush1.msra.mxu0 0.0
    %3374 = vmatprep.subr.mxu0 0.0
    %3375 = vmatpush1.msra.mxu0 0.0
    %3376 = vmatprep.subr.mxu0 0.0
    %3377 = vmatpush1.msra.mxu0 0.0
    %3378 = vmatprep.subr.mxu0 0.0
    %3379 = vmatpush1.msra.mxu0 0.0
    %3380 = vmatprep.subr.mxu0 0.0
    %3381 = vmatpush1.msra.mxu0 0.0
    %3382 = vmatprep.subr.mxu0 0.0
    %3383 = vmatpush1.msra.mxu0 0.0
    %3384 = vmatprep.mubr.f32.mxu0 0.0
    %v3385 = vand.u32 %v3301, 4294901760
    %v3386 = vsub.f32 %v3301, %v3385
    %v3387 = vand.u32 %v3386, 4294901760
    %v3388 = vsub.f32 %v3386, %v3387
    %v3389 = vand.u32 %v3388, 4294901760
    %3390 = vmatmul.mubr.f32.gmra.mrb[0].mxu0 %v3389
    %v3391 = vpop.f32.mrb[0].mxu0
    %v3392 = vadd.f32 0.0, %v3391
    %v3393 = vpop.f32.mrb[0].mxu0
    %3394 = vdwg.mxu0
    %3395 = vmatprep.subr.mxu0 0.0
    %v3396 = vand.u32 %v1365, 4294901760
    %v3397 = vsub.f32 %v1365, %v3396
    %v3398 = vand.u32 %v3397, 4294901760
    %v3399 = vsub.f32 %v3397, %v3398
    %v3400 = vand.u32 %v3399, 4294901760
    %3401 = vmatpush1.msra.mxu0 %v3400
    %3402 = vmatprep.subr.mxu0 0.0
    %v3403 = vand.u32 %v1366, 4294901760
    %v3404 = vsub.f32 %v1366, %v3403
    %v3405 = vand.u32 %v3404, 4294901760
    %v3406 = vsub.f32 %v3404, %v3405
    %v3407 = vand.u32 %v3406, 4294901760
    %3408 = vmatpush1.msra.mxu0 %v3407
    %3409 = vmatprep.subr.mxu0 0.0
    %v3410 = vand.u32 %v1367, 4294901760
    %v3411 = vsub.f32 %v1367, %v3410
    %v3412 = vand.u32 %v3411, 4294901760
    %v3413 = vsub.f32 %v3411, %v3412
    %v3414 = vand.u32 %v3413, 4294901760
    %3415 = vmatpush1.msra.mxu0 %v3414
    %3416 = vmatprep.subr.mxu0 0.0
    %v3417 = vand.u32 %v1368, 4294901760
    %v3418 = vsub.f32 %v1368, %v3417
    %v3419 = vand.u32 %v3418, 4294901760
    %v3420 = vsub.f32 %v3418, %v3419
    %v3421 = vand.u32 %v3420, 4294901760
    %3422 = vmatpush1.msra.mxu0 %v3421
    %3423 = vmatprep.subr.mxu0 0.0
    %v3424 = vand.u32 %v1369, 4294901760
    %v3425 = vsub.f32 %v1369, %v3424
    %v3426 = vand.u32 %v3425, 4294901760
    %v3427 = vsub.f32 %v3425, %v3426
    %v3428 = vand.u32 %v3427, 4294901760
    %3429 = vmatpush1.msra.mxu0 %v3428
    %3430 = vmatprep.subr.mxu0 0.0
    %v3431 = vand.u32 %v1370, 4294901760
    %v3432 = vsub.f32 %v1370, %v3431
    %v3433 = vand.u32 %v3432, 4294901760
    %v3434 = vsub.f32 %v3432, %v3433
    %v3435 = vand.u32 %v3434, 4294901760
    %3436 = vmatpush1.msra.mxu0 %v3435
    %3437 = vmatprep.subr.mxu0 0.0
    %v3438 = vand.u32 %v1371, 4294901760
    %v3439 = vsub.f32 %v1371, %v3438
    %v3440 = vand.u32 %v3439, 4294901760
    %v3441 = vsub.f32 %v3439, %v3440
    %v3442 = vand.u32 %v3441, 4294901760
    %3443 = vmatpush1.msra.mxu0 %v3442
    %3444 = vmatprep.subr.mxu0 0.0
    %v3445 = vand.u32 %v1372, 4294901760
    %v3446 = vsub.f32 %v1372, %v3445
    %v3447 = vand.u32 %v3446, 4294901760
    %v3448 = vsub.f32 %v3446, %v3447
    %v3449 = vand.u32 %v3448, 4294901760
    %3450 = vmatpush1.msra.mxu0 %v3449
    %3451 = vmatprep.subr.mxu0 0.0
    %v3452 = vand.u32 %v1373, 4294901760
    %v3453 = vsub.f32 %v1373, %v3452
    %v3454 = vand.u32 %v3453, 4294901760
    %v3455 = vsub.f32 %v3453, %v3454
    %v3456 = vand.u32 %v3455, 4294901760
    %3457 = vmatpush1.msra.mxu0 %v3456
    %3458 = vmatprep.subr.mxu0 0.0
    %v3459 = vand.u32 %v1374, 4294901760
    %v3460 = vsub.f32 %v1374, %v3459
    %v3461 = vand.u32 %v3460, 4294901760
    %v3462 = vsub.f32 %v3460, %v3461
    %v3463 = vand.u32 %v3462, 4294901760
    %3464 = vmatpush1.msra.mxu0 %v3463
    %3465 = vmatprep.subr.mxu0 0.0
    %v3466 = vand.u32 %v1375, 4294901760
    %v3467 = vsub.f32 %v1375, %v3466
    %v3468 = vand.u32 %v3467, 4294901760
    %v3469 = vsub.f32 %v3467, %v3468
    %v3470 = vand.u32 %v3469, 4294901760
    %3471 = vmatpush1.msra.mxu0 %v3470
    %3472 = vmatprep.subr.mxu0 0.0
    %v3473 = vand.u32 %v1376, 4294901760
    %v3474 = vsub.f32 %v1376, %v3473
    %v3475 = vand.u32 %v3474, 4294901760
    %v3476 = vsub.f32 %v3474, %v3475
    %v3477 = vand.u32 %v3476, 4294901760
    %3478 = vmatpush1.msra.mxu0 %v3477
    %3479 = vmatprep.subr.mxu0 0.0
    %v3480 = vand.u32 %v1377, 4294901760
    %v3481 = vsub.f32 %v1377, %v3480
    %v3482 = vand.u32 %v3481, 4294901760
    %v3483 = vsub.f32 %v3481, %v3482
    %v3484 = vand.u32 %v3483, 4294901760
    %3485 = vmatpush1.msra.mxu0 %v3484
    %3486 = vmatprep.subr.mxu0 0.0
    %v3487 = vand.u32 %v1378, 4294901760
    %v3488 = vsub.f32 %v1378, %v3487
    %v3489 = vand.u32 %v3488, 4294901760
    %v3490 = vsub.f32 %v3488, %v3489
    %v3491 = vand.u32 %v3490, 4294901760
    %3492 = vmatpush1.msra.mxu0 %v3491
    %3493 = vmatprep.subr.mxu0 0.0
    %v3494 = vand.u32 %v1379, 4294901760
    %v3495 = vsub.f32 %v1379, %v3494
    %v3496 = vand.u32 %v3495, 4294901760
    %v3497 = vsub.f32 %v3495, %v3496
    %v3498 = vand.u32 %v3497, 4294901760
    %3499 = vmatpush1.msra.mxu0 %v3498
    %3500 = vmatprep.subr.mxu0 0.0
    %v3501 = vand.u32 %v1380, 4294901760
    %v3502 = vsub.f32 %v1380, %v3501
    %v3503 = vand.u32 %v3502, 4294901760
    %v3504 = vsub.f32 %v3502, %v3503
    %v3505 = vand.u32 %v3504, 4294901760
    %3506 = vmatpush1.msra.mxu0 %v3505
    %3507 = vmatprep.subr.mxu0 0.0
    %3508 = vmatpush1.msra.mxu0 0.0
    %3509 = vmatprep.subr.mxu0 0.0
    %3510 = vmatpush1.msra.mxu0 0.0
    %3511 = vmatprep.subr.mxu0 0.0
    %3512 = vmatpush1.msra.mxu0 0.0
    %3513 = vmatprep.subr.mxu0 0.0
    %3514 = vmatpush1.msra.mxu0 0.0
    %3515 = vmatprep.subr.mxu0 0.0
    %3516 = vmatpush1.msra.mxu0 0.0
    %3517 = vmatprep.subr.mxu0 0.0
    %3518 = vmatpush1.msra.mxu0 0.0
    %3519 = vmatprep.subr.mxu0 0.0
    %3520 = vmatpush1.msra.mxu0 0.0
    %3521 = vmatprep.subr.mxu0 0.0
    %3522 = vmatpush1.msra.mxu0 0.0
    %3523 = vmatprep.subr.mxu0 0.0
    %3524 = vmatpush1.msra.mxu0 0.0
    %3525 = vmatprep.subr.mxu0 0.0
    %3526 = vmatpush1.msra.mxu0 0.0
    %3527 = vmatprep.subr.mxu0 0.0
    %3528 = vmatpush1.msra.mxu0 0.0
    %3529 = vmatprep.subr.mxu0 0.0
    %3530 = vmatpush1.msra.mxu0 0.0
    %3531 = vmatprep.subr.mxu0 0.0
    %3532 = vmatpush1.msra.mxu0 0.0
    %3533 = vmatprep.subr.mxu0 0.0
    %3534 = vmatpush1.msra.mxu0 0.0
    %3535 = vmatprep.subr.mxu0 0.0
    %3536 = vmatpush1.msra.mxu0 0.0
    %3537 = vmatprep.subr.mxu0 0.0
    %3538 = vmatpush1.msra.mxu0 0.0
    %3539 = vmatprep.mubr.f32.mxu0 0.0
    %v3540 = vand.u32 %v3301, 4294901760
    %3541 = vmatmul.mubr.f32.gmra.mrb[0].mxu0 %v3540
    %v3542 = vpop.f32.mrb[0].mxu0
    %v3543 = vadd.f32 %v3392, %v3542
    %v3544 = vpop.f32.mrb[0].mxu0
    %3545 = vdwg.mxu0
    %3546 = vmatprep.subr.mxu0 0.0
    %v3547 = vand.u32 %v1365, 4294901760
    %v3548 = vsub.f32 %v1365, %v3547
    %3549 = vmatpush1.msra.mxu0 %v3548
    %3550 = vmatprep.subr.mxu0 0.0
    %v3551 = vand.u32 %v1366, 4294901760
    %v3552 = vsub.f32 %v1366, %v3551
    %3553 = vmatpush1.msra.mxu0 %v3552
    %3554 = vmatprep.subr.mxu0 0.0
    %v3555 = vand.u32 %v1367, 4294901760
    %v3556 = vsub.f32 %v1367, %v3555
    %3557 = vmatpush1.msra.mxu0 %v3556
    %3558 = vmatprep.subr.mxu0 0.0
    %v3559 = vand.u32 %v1368, 4294901760
    %v3560 = vsub.f32 %v1368, %v3559
    %3561 = vmatpush1.msra.mxu0 %v3560
    %3562 = vmatprep.subr.mxu0 0.0
    %v3563 = vand.u32 %v1369, 4294901760
    %v3564 = vsub.f32 %v1369, %v3563
    %3565 = vmatpush1.msra.mxu0 %v3564
    %3566 = vmatprep.subr.mxu0 0.0
    %v3567 = vand.u32 %v1370, 4294901760
    %v3568 = vsub.f32 %v1370, %v3567
    %3569 = vmatpush1.msra.mxu0 %v3568
    %3570 = vmatprep.subr.mxu0 0.0
    %v3571 = vand.u32 %v1371, 4294901760
    %v3572 = vsub.f32 %v1371, %v3571
    %3573 = vmatpush1.msra.mxu0 %v3572
    %3574 = vmatprep.subr.mxu0 0.0
    %v3575 = vand.u32 %v1372, 4294901760
    %v3576 = vsub.f32 %v1372, %v3575
    %3577 = vmatpush1.msra.mxu0 %v3576
    %3578 = vmatprep.subr.mxu0 0.0
    %v3579 = vand.u32 %v1373, 4294901760
    %v3580 = vsub.f32 %v1373, %v3579
    %3581 = vmatpush1.msra.mxu0 %v3580
    %3582 = vmatprep.subr.mxu0 0.0
    %v3583 = vand.u32 %v1374, 4294901760
    %v3584 = vsub.f32 %v1374, %v3583
    %3585 = vmatpush1.msra.mxu0 %v3584
    %3586 = vmatprep.subr.mxu0 0.0
    %v3587 = vand.u32 %v1375, 4294901760
    %v3588 = vsub.f32 %v1375, %v3587
    %3589 = vmatpush1.msra.mxu0 %v3588
    %3590 = vmatprep.subr.mxu0 0.0
    %v3591 = vand.u32 %v1376, 4294901760
    %v3592 = vsub.f32 %v1376, %v3591
    %3593 = vmatpush1.msra.mxu0 %v3592
    %3594 = vmatprep.subr.mxu0 0.0
    %v3595 = vand.u32 %v1377, 4294901760
    %v3596 = vsub.f32 %v1377, %v3595
    %3597 = vmatpush1.msra.mxu0 %v3596
    %3598 = vmatprep.subr.mxu0 0.0
    %v3599 = vand.u32 %v1378, 4294901760
    %v3600 = vsub.f32 %v1378, %v3599
    %3601 = vmatpush1.msra.mxu0 %v3600
    %3602 = vmatprep.subr.mxu0 0.0
    %v3603 = vand.u32 %v1379, 4294901760
    %v3604 = vsub.f32 %v1379, %v3603
    %3605 = vmatpush1.msra.mxu0 %v3604
    %3606 = vmatprep.subr.mxu0 0.0
    %v3607 = vand.u32 %v1380, 4294901760
    %v3608 = vsub.f32 %v1380, %v3607
    %3609 = vmatpush1.msra.mxu0 %v3608
    %3610 = vmatprep.subr.mxu0 0.0
    %3611 = vmatpush1.msra.mxu0 0.0
    %3612 = vmatprep.subr.mxu0 0.0
    %3613 = vmatpush1.msra.mxu0 0.0
    %3614 = vmatprep.subr.mxu0 0.0
    %3615 = vmatpush1.msra.mxu0 0.0
    %3616 = vmatprep.subr.mxu0 0.0
    %3617 = vmatpush1.msra.mxu0 0.0
    %3618 = vmatprep.subr.mxu0 0.0
    %3619 = vmatpush1.msra.mxu0 0.0
    %3620 = vmatprep.subr.mxu0 0.0
    %3621 = vmatpush1.msra.mxu0 0.0
    %3622 = vmatprep.subr.mxu0 0.0
    %3623 = vmatpush1.msra.mxu0 0.0
    %3624 = vmatprep.subr.mxu0 0.0
    %3625 = vmatpush1.msra.mxu0 0.0
    %3626 = vmatprep.subr.mxu0 0.0
    %3627 = vmatpush1.msra.mxu0 0.0
    %3628 = vmatprep.subr.mxu0 0.0
    %3629 = vmatpush1.msra.mxu0 0.0
    %3630 = vmatprep.subr.mxu0 0.0
    %3631 = vmatpush1.msra.mxu0 0.0
    %3632 = vmatprep.subr.mxu0 0.0
    %3633 = vmatpush1.msra.mxu0 0.0
    %3634 = vmatprep.subr.mxu0 0.0
    %3635 = vmatpush1.msra.mxu0 0.0
    %3636 = vmatprep.subr.mxu0 0.0
    %3637 = vmatpush1.msra.mxu0 0.0
    %3638 = vmatprep.subr.mxu0 0.0
    %3639 = vmatpush1.msra.mxu0 0.0
    %3640 = vmatprep.subr.mxu0 0.0
    %3641 = vmatpush1.msra.mxu0 0.0
    %3642 = vmatprep.mubr.f32.mxu0 0.0
    %v3643 = vand.u32 %v3301, 4294901760
    %v3644 = vsub.f32 %v3301, %v3643
    %3645 = vmatmul.mubr.f32.gmra.mrb[0].mxu0 %v3644
    %v3646 = vpop.f32.mrb[0].mxu0
    %v3647 = vadd.f32 %v3543, %v3646
    %v3648 = vpop.f32.mrb[0].mxu0
    %3649 = vdwg.mxu0
    %3650 = vmatprep.subr.mxu0 0.0
    %v3651 = vand.u32 %v1365, 4294901760
    %3652 = vmatpush1.msra.mxu0 %v3651
    %3653 = vmatprep.subr.mxu0 0.0
    %v3654 = vand.u32 %v1366, 4294901760
    %3655 = vmatpush1.msra.mxu0 %v3654
    %3656 = vmatprep.subr.mxu0 0.0
    %v3657 = vand.u32 %v1367, 4294901760
    %3658 = vmatpush1.msra.mxu0 %v3657
    %3659 = vmatprep.subr.mxu0 0.0
    %v3660 = vand.u32 %v1368, 4294901760
    %3661 = vmatpush1.msra.mxu0 %v3660
    %3662 = vmatprep.subr.mxu0 0.0
    %v3663 = vand.u32 %v1369, 4294901760
    %3664 = vmatpush1.msra.mxu0 %v3663
    %3665 = vmatprep.subr.mxu0 0.0
    %v3666 = vand.u32 %v1370, 4294901760
    %3667 = vmatpush1.msra.mxu0 %v3666
    %3668 = vmatprep.subr.mxu0 0.0
    %v3669 = vand.u32 %v1371, 4294901760
    %3670 = vmatpush1.msra.mxu0 %v3669
    %3671 = vmatprep.subr.mxu0 0.0
    %v3672 = vand.u32 %v1372, 4294901760
    %3673 = vmatpush1.msra.mxu0 %v3672
    %3674 = vmatprep.subr.mxu0 0.0
    %v3675 = vand.u32 %v1373, 4294901760
    %3676 = vmatpush1.msra.mxu0 %v3675
    %3677 = vmatprep.subr.mxu0 0.0
    %v3678 = vand.u32 %v1374, 4294901760
    %3679 = vmatpush1.msra.mxu0 %v3678
    %3680 = vmatprep.subr.mxu0 0.0
    %v3681 = vand.u32 %v1375, 4294901760
    %3682 = vmatpush1.msra.mxu0 %v3681
    %3683 = vmatprep.subr.mxu0 0.0
    %v3684 = vand.u32 %v1376, 4294901760
    %3685 = vmatpush1.msra.mxu0 %v3684
    %3686 = vmatprep.subr.mxu0 0.0
    %v3687 = vand.u32 %v1377, 4294901760
    %3688 = vmatpush1.msra.mxu0 %v3687
    %3689 = vmatprep.subr.mxu0 0.0
    %v3690 = vand.u32 %v1378, 4294901760
    %3691 = vmatpush1.msra.mxu0 %v3690
    %3692 = vmatprep.subr.mxu0 0.0
    %v3693 = vand.u32 %v1379, 4294901760
    %3694 = vmatpush1.msra.mxu0 %v3693
    %3695 = vmatprep.subr.mxu0 0.0
    %v3696 = vand.u32 %v1380, 4294901760
    %3697 = vmatpush1.msra.mxu0 %v3696
    %3698 = vmatprep.subr.mxu0 0.0
    %3699 = vmatpush1.msra.mxu0 0.0
    %3700 = vmatprep.subr.mxu0 0.0
    %3701 = vmatpush1.msra.mxu0 0.0
    %3702 = vmatprep.subr.mxu0 0.0
    %3703 = vmatpush1.msra.mxu0 0.0
    %3704 = vmatprep.subr.mxu0 0.0
    %3705 = vmatpush1.msra.mxu0 0.0
    %3706 = vmatprep.subr.mxu0 0.0
    %3707 = vmatpush1.msra.mxu0 0.0
    %3708 = vmatprep.subr.mxu0 0.0
    %3709 = vmatpush1.msra.mxu0 0.0
    %3710 = vmatprep.subr.mxu0 0.0
    %3711 = vmatpush1.msra.mxu0 0.0
    %3712 = vmatprep.subr.mxu0 0.0
    %3713 = vmatpush1.msra.mxu0 0.0
    %3714 = vmatprep.subr.mxu0 0.0
    %3715 = vmatpush1.msra.mxu0 0.0
    %3716 = vmatprep.subr.mxu0 0.0
    %3717 = vmatpush1.msra.mxu0 0.0
    %3718 = vmatprep.subr.mxu0 0.0
    %3719 = vmatpush1.msra.mxu0 0.0
    %3720 = vmatprep.subr.mxu0 0.0
    %3721 = vmatpush1.msra.mxu0 0.0
    %3722 = vmatprep.subr.mxu0 0.0
    %3723 = vmatpush1.msra.mxu0 0.0
    %3724 = vmatprep.subr.mxu0 0.0
    %3725 = vmatpush1.msra.mxu0 0.0
    %3726 = vmatprep.subr.mxu0 0.0
    %3727 = vmatpush1.msra.mxu0 0.0
    %3728 = vmatprep.subr.mxu0 0.0
    %3729 = vmatpush1.msra.mxu0 0.0
    %3730 = vmatprep.mubr.f32.mxu0 0.0
    %v3731 = vand.u32 %v3301, 4294901760
    %v3732 = vsub.f32 %v3301, %v3731
    %v3733 = vand.u32 %v3732, 4294901760
    %3734 = vmatmul.mubr.f32.gmra.mrb[0].mxu0 %v3733
    %v3735 = vpop.f32.mrb[0].mxu0
    %v3736 = vadd.f32 %v3647, %v3735
    %v3737 = vpop.f32.mrb[0].mxu0
    %3738 = vdwg.mxu0
    %3739 = vmatprep.subr.mxu0 0.0
    %v3740 = vand.u32 %v1365, 4294901760
    %v3741 = vsub.f32 %v1365, %v3740
    %v3742 = vand.u32 %v3741, 4294901760
    %3743 = vmatpush1.msra.mxu0 %v3742
    %3744 = vmatprep.subr.mxu0 0.0
    %v3745 = vand.u32 %v1366, 4294901760
    %v3746 = vsub.f32 %v1366, %v3745
    %v3747 = vand.u32 %v3746, 4294901760
    %3748 = vmatpush1.msra.mxu0 %v3747
    %3749 = vmatprep.subr.mxu0 0.0
    %v3750 = vand.u32 %v1367, 4294901760
    %v3751 = vsub.f32 %v1367, %v3750
    %v3752 = vand.u32 %v3751, 4294901760
    %3753 = vmatpush1.msra.mxu0 %v3752
    %3754 = vmatprep.subr.mxu0 0.0
    %v3755 = vand.u32 %v1368, 4294901760
    %v3756 = vsub.f32 %v1368, %v3755
    %v3757 = vand.u32 %v3756, 4294901760
    %3758 = vmatpush1.msra.mxu0 %v3757
    %3759 = vmatprep.subr.mxu0 0.0
    %v3760 = vand.u32 %v1369, 4294901760
    %v3761 = vsub.f32 %v1369, %v3760
    %v3762 = vand.u32 %v3761, 4294901760
    %3763 = vmatpush1.msra.mxu0 %v3762
    %3764 = vmatprep.subr.mxu0 0.0
    %v3765 = vand.u32 %v1370, 4294901760
    %v3766 = vsub.f32 %v1370, %v3765
    %v3767 = vand.u32 %v3766, 4294901760
    %3768 = vmatpush1.msra.mxu0 %v3767
    %3769 = vmatprep.subr.mxu0 0.0
    %v3770 = vand.u32 %v1371, 4294901760
    %v3771 = vsub.f32 %v1371, %v3770
    %v3772 = vand.u32 %v3771, 4294901760
    %3773 = vmatpush1.msra.mxu0 %v3772
    %3774 = vmatprep.subr.mxu0 0.0
    %v3775 = vand.u32 %v1372, 4294901760
    %v3776 = vsub.f32 %v1372, %v3775
    %v3777 = vand.u32 %v3776, 4294901760
    %3778 = vmatpush1.msra.mxu0 %v3777
    %3779 = vmatprep.subr.mxu0 0.0
    %v3780 = vand.u32 %v1373, 4294901760
    %v3781 = vsub.f32 %v1373, %v3780
    %v3782 = vand.u32 %v3781, 4294901760
    %3783 = vmatpush1.msra.mxu0 %v3782
    %3784 = vmatprep.subr.mxu0 0.0
    %v3785 = vand.u32 %v1374, 4294901760
    %v3786 = vsub.f32 %v1374, %v3785
    %v3787 = vand.u32 %v3786, 4294901760
    %3788 = vmatpush1.msra.mxu0 %v3787
    %3789 = vmatprep.subr.mxu0 0.0
    %v3790 = vand.u32 %v1375, 4294901760
    %v3791 = vsub.f32 %v1375, %v3790
    %v3792 = vand.u32 %v3791, 4294901760
    %3793 = vmatpush1.msra.mxu0 %v3792
    %3794 = vmatprep.subr.mxu0 0.0
    %v3795 = vand.u32 %v1376, 4294901760
    %v3796 = vsub.f32 %v1376, %v3795
    %v3797 = vand.u32 %v3796, 4294901760
    %3798 = vmatpush1.msra.mxu0 %v3797
    %3799 = vmatprep.subr.mxu0 0.0
    %v3800 = vand.u32 %v1377, 4294901760
    %v3801 = vsub.f32 %v1377, %v3800
    %v3802 = vand.u32 %v3801, 4294901760
    %3803 = vmatpush1.msra.mxu0 %v3802
    %3804 = vmatprep.subr.mxu0 0.0
    %v3805 = vand.u32 %v1378, 4294901760
    %v3806 = vsub.f32 %v1378, %v3805
    %v3807 = vand.u32 %v3806, 4294901760
    %3808 = vmatpush1.msra.mxu0 %v3807
    %3809 = vmatprep.subr.mxu0 0.0
    %v3810 = vand.u32 %v1379, 4294901760
    %v3811 = vsub.f32 %v1379, %v3810
    %v3812 = vand.u32 %v3811, 4294901760
    %3813 = vmatpush1.msra.mxu0 %v3812
    %3814 = vmatprep.subr.mxu0 0.0
    %v3815 = vand.u32 %v1380, 4294901760
    %v3816 = vsub.f32 %v1380, %v3815
    %v3817 = vand.u32 %v3816, 4294901760
    %3818 = vmatpush1.msra.mxu0 %v3817
    %3819 = vmatprep.subr.mxu0 0.0
    %3820 = vmatpush1.msra.mxu0 0.0
    %3821 = vmatprep.subr.mxu0 0.0
    %3822 = vmatpush1.msra.mxu0 0.0
    %3823 = vmatprep.subr.mxu0 0.0
    %3824 = vmatpush1.msra.mxu0 0.0
    %3825 = vmatprep.subr.mxu0 0.0
    %3826 = vmatpush1.msra.mxu0 0.0
    %3827 = vmatprep.subr.mxu0 0.0
    %3828 = vmatpush1.msra.mxu0 0.0
    %3829 = vmatprep.subr.mxu0 0.0
    %3830 = vmatpush1.msra.mxu0 0.0
    %3831 = vmatprep.subr.mxu0 0.0
    %3832 = vmatpush1.msra.mxu0 0.0
    %3833 = vmatprep.subr.mxu0 0.0
    %3834 = vmatpush1.msra.mxu0 0.0
    %3835 = vmatprep.subr.mxu0 0.0
    %3836 = vmatpush1.msra.mxu0 0.0
    %3837 = vmatprep.subr.mxu0 0.0
    %3838 = vmatpush1.msra.mxu0 0.0
    %3839 = vmatprep.subr.mxu0 0.0
    %3840 = vmatpush1.msra.mxu0 0.0
    %3841 = vmatprep.subr.mxu0 0.0
    %3842 = vmatpush1.msra.mxu0 0.0
    %3843 = vmatprep.subr.mxu0 0.0
    %3844 = vmatpush1.msra.mxu0 0.0
    %3845 = vmatprep.subr.mxu0 0.0
    %3846 = vmatpush1.msra.mxu0 0.0
    %3847 = vmatprep.subr.mxu0 0.0
    %3848 = vmatpush1.msra.mxu0 0.0
    %3849 = vmatprep.subr.mxu0 0.0
    %3850 = vmatpush1.msra.mxu0 0.0
    %3851 = vmatprep.mubr.f32.mxu0 0.0
    %v3852 = vand.u32 %v3301, 4294901760
    %3853 = vmatmul.mubr.f32.gmra.mrb[0].mxu0 %v3852
    %v3854 = vpop.f32.mrb[0].mxu0
    %v3855 = vadd.f32 %v3736, %v3854
    %v3856 = vpop.f32.mrb[0].mxu0
    %3857 = vdwg.mxu0
    %3858 = vmatprep.subr.mxu0 0.0
    %v3859 = vand.u32 %v1365, 4294901760
    %3860 = vmatpush1.msra.mxu0 %v3859
    %3861 = vmatprep.subr.mxu0 0.0
    %v3862 = vand.u32 %v1366, 4294901760
    %3863 = vmatpush1.msra.mxu0 %v3862
    %3864 = vmatprep.subr.mxu0 0.0
    %v3865 = vand.u32 %v1367, 4294901760
    %3866 = vmatpush1.msra.mxu0 %v3865
    %3867 = vmatprep.subr.mxu0 0.0
    %v3868 = vand.u32 %v1368, 4294901760
    %3869 = vmatpush1.msra.mxu0 %v3868
    %3870 = vmatprep.subr.mxu0 0.0
    %v3871 = vand.u32 %v1369, 4294901760
    %3872 = vmatpush1.msra.mxu0 %v3871
    %3873 = vmatprep.subr.mxu0 0.0
    %v3874 = vand.u32 %v1370, 4294901760
    %3875 = vmatpush1.msra.mxu0 %v3874
    %3876 = vmatprep.subr.mxu0 0.0
    %v3877 = vand.u32 %v1371, 4294901760
    %3878 = vmatpush1.msra.mxu0 %v3877
    %3879 = vmatprep.subr.mxu0 0.0
    %v3880 = vand.u32 %v1372, 4294901760
    %3881 = vmatpush1.msra.mxu0 %v3880
    %3882 = vmatprep.subr.mxu0 0.0
    %v3883 = vand.u32 %v1373, 4294901760
    %3884 = vmatpush1.msra.mxu0 %v3883
    %3885 = vmatprep.subr.mxu0 0.0
    %v3886 = vand.u32 %v1374, 4294901760
    %3887 = vmatpush1.msra.mxu0 %v3886
    %3888 = vmatprep.subr.mxu0 0.0
    %v3889 = vand.u32 %v1375, 4294901760
    %3890 = vmatpush1.msra.mxu0 %v3889
    %3891 = vmatprep.subr.mxu0 0.0
    %v3892 = vand.u32 %v1376, 4294901760
    %3893 = vmatpush1.msra.mxu0 %v3892
    %3894 = vmatprep.subr.mxu0 0.0
    %v3895 = vand.u32 %v1377, 4294901760
    %3896 = vmatpush1.msra.mxu0 %v3895
    %3897 = vmatprep.subr.mxu0 0.0
    %v3898 = vand.u32 %v1378, 4294901760
    %3899 = vmatpush1.msra.mxu0 %v3898
    %3900 = vmatprep.subr.mxu0 0.0
    %v3901 = vand.u32 %v1379, 4294901760
    %3902 = vmatpush1.msra.mxu0 %v3901
    %3903 = vmatprep.subr.mxu0 0.0
    %v3904 = vand.u32 %v1380, 4294901760
    %3905 = vmatpush1.msra.mxu0 %v3904
    %3906 = vmatprep.subr.mxu0 0.0
    %3907 = vmatpush1.msra.mxu0 0.0
    %3908 = vmatprep.subr.mxu0 0.0
    %3909 = vmatpush1.msra.mxu0 0.0
    %3910 = vmatprep.subr.mxu0 0.0
    %3911 = vmatpush1.msra.mxu0 0.0
    %3912 = vmatprep.subr.mxu0 0.0
    %3913 = vmatpush1.msra.mxu0 0.0
    %3914 = vmatprep.subr.mxu0 0.0
    %3915 = vmatpush1.msra.mxu0 0.0
    %3916 = vmatprep.subr.mxu0 0.0
    %3917 = vmatpush1.msra.mxu0 0.0
    %3918 = vmatprep.subr.mxu0 0.0
    %3919 = vmatpush1.msra.mxu0 0.0
    %3920 = vmatprep.subr.mxu0 0.0
    %3921 = vmatpush1.msra.mxu0 0.0
    %3922 = vmatprep.subr.mxu0 0.0
    %3923 = vmatpush1.msra.mxu0 0.0
    %3924 = vmatprep.subr.mxu0 0.0
    %3925 = vmatpush1.msra.mxu0 0.0
    %3926 = vmatprep.subr.mxu0 0.0
    %3927 = vmatpush1.msra.mxu0 0.0
    %3928 = vmatprep.subr.mxu0 0.0
    %3929 = vmatpush1.msra.mxu0 0.0
    %3930 = vmatprep.subr.mxu0 0.0
    %3931 = vmatpush1.msra.mxu0 0.0
    %3932 = vmatprep.subr.mxu0 0.0
    %3933 = vmatpush1.msra.mxu0 0.0
    %3934 = vmatprep.subr.mxu0 0.0
    %3935 = vmatpush1.msra.mxu0 0.0
    %3936 = vmatprep.subr.mxu0 0.0
    %3937 = vmatpush1.msra.mxu0 0.0
    %3938 = vmatprep.mubr.f32.mxu0 0.0
    %v3939 = vand.u32 %v3301, 4294901760
    %3940 = vmatmul.mubr.f32.gmra.mrb[0].mxu0 %v3939
    %v3941 = vpop.f32.mrb[0].mxu0
    %v3942 = vadd.f32 %v3855, %v3941
    %v3943 = vpop.f32.mrb[0].mxu0
    %3944 = vdwg.mxu0
    %v3945 = vadd.f32 %v3303, %v3942
    %v3946 = vtanh.pop %v3945
    %s3947 = scalar_lea.vmem [#allocation2], 32
    %v3948 = vld [vmem:[%s3947] sm:$0xff]
    %3949 = vmatprep.subr.mxu0 0.0
    %v3950 = vand.u32 %v1365, 4294901760
    %3951 = vmatpush1.msra.mxu0 %v3950
    %3952 = vmatprep.subr.mxu0 0.0
    %v3953 = vand.u32 %v1366, 4294901760
    %3954 = vmatpush1.msra.mxu0 %v3953
    %3955 = vmatprep.subr.mxu0 0.0
    %v3956 = vand.u32 %v1367, 4294901760
    %3957 = vmatpush1.msra.mxu0 %v3956
    %3958 = vmatprep.subr.mxu0 0.0
    %v3959 = vand.u32 %v1368, 4294901760
    %3960 = vmatpush1.msra.mxu0 %v3959
    %3961 = vmatprep.subr.mxu0 0.0
    %v3962 = vand.u32 %v1369, 4294901760
    %3963 = vmatpush1.msra.mxu0 %v3962
    %3964 = vmatprep.subr.mxu0 0.0
    %v3965 = vand.u32 %v1370, 4294901760
    %3966 = vmatpush1.msra.mxu0 %v3965
    %3967 = vmatprep.subr.mxu0 0.0
    %v3968 = vand.u32 %v1371, 4294901760
    %3969 = vmatpush1.msra.mxu0 %v3968
    %3970 = vmatprep.subr.mxu0 0.0
    %v3971 = vand.u32 %v1372, 4294901760
    %3972 = vmatpush1.msra.mxu0 %v3971
    %3973 = vmatprep.subr.mxu0 0.0
    %v3974 = vand.u32 %v1373, 4294901760
    %3975 = vmatpush1.msra.mxu0 %v3974
    %3976 = vmatprep.subr.mxu0 0.0
    %v3977 = vand.u32 %v1374, 4294901760
    %3978 = vmatpush1.msra.mxu0 %v3977
    %3979 = vmatprep.subr.mxu0 0.0
    %v3980 = vand.u32 %v1375, 4294901760
    %3981 = vmatpush1.msra.mxu0 %v3980
    %3982 = vmatprep.subr.mxu0 0.0
    %v3983 = vand.u32 %v1376, 4294901760
    %3984 = vmatpush1.msra.mxu0 %v3983
    %3985 = vmatprep.subr.mxu0 0.0
    %v3986 = vand.u32 %v1377, 4294901760
    %3987 = vmatpush1.msra.mxu0 %v3986
    %3988 = vmatprep.subr.mxu0 0.0
    %v3989 = vand.u32 %v1378, 4294901760
    %3990 = vmatpush1.msra.mxu0 %v3989
    %3991 = vmatprep.subr.mxu0 0.0
    %v3992 = vand.u32 %v1379, 4294901760
    %3993 = vmatpush1.msra.mxu0 %v3992
    %3994 = vmatprep.subr.mxu0 0.0
    %v3995 = vand.u32 %v1380, 4294901760
    %3996 = vmatpush1.msra.mxu0 %v3995
    %3997 = vmatprep.subr.mxu0 0.0
    %3998 = vmatpush1.msra.mxu0 0.0
    %3999 = vmatprep.subr.mxu0 0.0
    %4000 = vmatpush1.msra.mxu0 0.0
    %4001 = vmatprep.subr.mxu0 0.0
    %4002 = vmatpush1.msra.mxu0 0.0
    %4003 = vmatprep.subr.mxu0 0.0
    %4004 = vmatpush1.msra.mxu0 0.0
    %4005 = vmatprep.subr.mxu0 0.0
    %4006 = vmatpush1.msra.mxu0 0.0
    %4007 = vmatprep.subr.mxu0 0.0
    %4008 = vmatpush1.msra.mxu0 0.0
    %4009 = vmatprep.subr.mxu0 0.0
    %4010 = vmatpush1.msra.mxu0 0.0
    %4011 = vmatprep.subr.mxu0 0.0
    %4012 = vmatpush1.msra.mxu0 0.0
    %4013 = vmatprep.subr.mxu0 0.0
    %4014 = vmatpush1.msra.mxu0 0.0
    %4015 = vmatprep.subr.mxu0 0.0
    %4016 = vmatpush1.msra.mxu0 0.0
    %4017 = vmatprep.subr.mxu0 0.0
    %4018 = vmatpush1.msra.mxu0 0.0
    %4019 = vmatprep.subr.mxu0 0.0
    %4020 = vmatpush1.msra.mxu0 0.0
    %4021 = vmatprep.subr.mxu0 0.0
    %4022 = vmatpush1.msra.mxu0 0.0
    %4023 = vmatprep.subr.mxu0 0.0
    %4024 = vmatpush1.msra.mxu0 0.0
    %4025 = vmatprep.subr.mxu0 0.0
    %4026 = vmatpush1.msra.mxu0 0.0
    %4027 = vmatprep.subr.mxu0 0.0
    %4028 = vmatpush1.msra.mxu0 0.0
    %4029 = vmatprep.mubr.f32.mxu0 0.0
    %v4030 = vand.u32 %v3946, 4294901760
    %v4031 = vsub.f32 %v3946, %v4030
    %v4032 = vand.u32 %v4031, 4294901760
    %v4033 = vsub.f32 %v4031, %v4032
    %v4034 = vand.u32 %v4033, 4294901760
    %4035 = vmatmul.mubr.f32.gmra.mrb[0].mxu0 %v4034
    %v4036 = vpop.f32.mrb[0].mxu0
    %v4037 = vadd.f32 0.0, %v4036
    %v4038 = vpop.f32.mrb[0].mxu0
    %4039 = vdwg.mxu0
    %4040 = vmatprep.subr.mxu0 0.0
    %v4041 = vand.u32 %v1365, 4294901760
    %v4042 = vsub.f32 %v1365, %v4041
    %v4043 = vand.u32 %v4042, 4294901760
    %v4044 = vsub.f32 %v4042, %v4043
    %v4045 = vand.u32 %v4044, 4294901760
    %4046 = vmatpush1.msra.mxu0 %v4045
    %4047 = vmatprep.subr.mxu0 0.0
    %v4048 = vand.u32 %v1366, 4294901760
    %v4049 = vsub.f32 %v1366, %v4048
    %v4050 = vand.u32 %v4049, 4294901760
    %v4051 = vsub.f32 %v4049, %v4050
    %v4052 = vand.u32 %v4051, 4294901760
    %4053 = vmatpush1.msra.mxu0 %v4052
    %4054 = vmatprep.subr.mxu0 0.0
    %v4055 = vand.u32 %v1367, 4294901760
    %v4056 = vsub.f32 %v1367, %v4055
    %v4057 = vand.u32 %v4056, 4294901760
    %v4058 = vsub.f32 %v4056, %v4057
    %v4059 = vand.u32 %v4058, 4294901760
    %4060 = vmatpush1.msra.mxu0 %v4059
    %4061 = vmatprep.subr.mxu0 0.0
    %v4062 = vand.u32 %v1368, 4294901760
    %v4063 = vsub.f32 %v1368, %v4062
    %v4064 = vand.u32 %v4063, 4294901760
    %v4065 = vsub.f32 %v4063, %v4064
    %v4066 = vand.u32 %v4065, 4294901760
    %4067 = vmatpush1.msra.mxu0 %v4066
    %4068 = vmatprep.subr.mxu0 0.0
    %v4069 = vand.u32 %v1369, 4294901760
    %v4070 = vsub.f32 %v1369, %v4069
    %v4071 = vand.u32 %v4070, 4294901760
    %v4072 = vsub.f32 %v4070, %v4071
    %v4073 = vand.u32 %v4072, 4294901760
    %4074 = vmatpush1.msra.mxu0 %v4073
    %4075 = vmatprep.subr.mxu0 0.0
    %v4076 = vand.u32 %v1370, 4294901760
    %v4077 = vsub.f32 %v1370, %v4076
    %v4078 = vand.u32 %v4077, 4294901760
    %v4079 = vsub.f32 %v4077, %v4078
    %v4080 = vand.u32 %v4079, 4294901760
    %4081 = vmatpush1.msra.mxu0 %v4080
    %4082 = vmatprep.subr.mxu0 0.0
    %v4083 = vand.u32 %v1371, 4294901760
    %v4084 = vsub.f32 %v1371, %v4083
    %v4085 = vand.u32 %v4084, 4294901760
    %v4086 = vsub.f32 %v4084, %v4085
    %v4087 = vand.u32 %v4086, 4294901760
    %4088 = vmatpush1.msra.mxu0 %v4087
    %4089 = vmatprep.subr.mxu0 0.0
    %v4090 = vand.u32 %v1372, 4294901760
    %v4091 = vsub.f32 %v1372, %v4090
    %v4092 = vand.u32 %v4091, 4294901760
    %v4093 = vsub.f32 %v4091, %v4092
    %v4094 = vand.u32 %v4093, 4294901760
    %4095 = vmatpush1.msra.mxu0 %v4094
    %4096 = vmatprep.subr.mxu0 0.0
    %v4097 = vand.u32 %v1373, 4294901760
    %v4098 = vsub.f32 %v1373, %v4097
    %v4099 = vand.u32 %v4098, 4294901760
    %v4100 = vsub.f32 %v4098, %v4099
    %v4101 = vand.u32 %v4100, 4294901760
    %4102 = vmatpush1.msra.mxu0 %v4101
    %4103 = vmatprep.subr.mxu0 0.0
    %v4104 = vand.u32 %v1374, 4294901760
    %v4105 = vsub.f32 %v1374, %v4104
    %v4106 = vand.u32 %v4105, 4294901760
    %v4107 = vsub.f32 %v4105, %v4106
    %v4108 = vand.u32 %v4107, 4294901760
    %4109 = vmatpush1.msra.mxu0 %v4108
    %4110 = vmatprep.subr.mxu0 0.0
    %v4111 = vand.u32 %v1375, 4294901760
    %v4112 = vsub.f32 %v1375, %v4111
    %v4113 = vand.u32 %v4112, 4294901760
    %v4114 = vsub.f32 %v4112, %v4113
    %v4115 = vand.u32 %v4114, 4294901760
    %4116 = vmatpush1.msra.mxu0 %v4115
    %4117 = vmatprep.subr.mxu0 0.0
    %v4118 = vand.u32 %v1376, 4294901760
    %v4119 = vsub.f32 %v1376, %v4118
    %v4120 = vand.u32 %v4119, 4294901760
    %v4121 = vsub.f32 %v4119, %v4120
    %v4122 = vand.u32 %v4121, 4294901760
    %4123 = vmatpush1.msra.mxu0 %v4122
    %4124 = vmatprep.subr.mxu0 0.0
    %v4125 = vand.u32 %v1377, 4294901760
    %v4126 = vsub.f32 %v1377, %v4125
    %v4127 = vand.u32 %v4126, 4294901760
    %v4128 = vsub.f32 %v4126, %v4127
    %v4129 = vand.u32 %v4128, 4294901760
    %4130 = vmatpush1.msra.mxu0 %v4129
    %4131 = vmatprep.subr.mxu0 0.0
    %v4132 = vand.u32 %v1378, 4294901760
    %v4133 = vsub.f32 %v1378, %v4132
    %v4134 = vand.u32 %v4133, 4294901760
    %v4135 = vsub.f32 %v4133, %v4134
    %v4136 = vand.u32 %v4135, 4294901760
    %4137 = vmatpush1.msra.mxu0 %v4136
    %4138 = vmatprep.subr.mxu0 0.0
    %v4139 = vand.u32 %v1379, 4294901760
    %v4140 = vsub.f32 %v1379, %v4139
    %v4141 = vand.u32 %v4140, 4294901760
    %v4142 = vsub.f32 %v4140, %v4141
    %v4143 = vand.u32 %v4142, 4294901760
    %4144 = vmatpush1.msra.mxu0 %v4143
    %4145 = vmatprep.subr.mxu0 0.0
    %v4146 = vand.u32 %v1380, 4294901760
    %v4147 = vsub.f32 %v1380, %v4146
    %v4148 = vand.u32 %v4147, 4294901760
    %v4149 = vsub.f32 %v4147, %v4148
    %v4150 = vand.u32 %v4149, 4294901760
    %4151 = vmatpush1.msra.mxu0 %v4150
    %4152 = vmatprep.subr.mxu0 0.0
    %4153 = vmatpush1.msra.mxu0 0.0
    %4154 = vmatprep.subr.mxu0 0.0
    %4155 = vmatpush1.msra.mxu0 0.0
    %4156 = vmatprep.subr.mxu0 0.0
    %4157 = vmatpush1.msra.mxu0 0.0
    %4158 = vmatprep.subr.mxu0 0.0
    %4159 = vmatpush1.msra.mxu0 0.0
    %4160 = vmatprep.subr.mxu0 0.0
    %4161 = vmatpush1.msra.mxu0 0.0
    %4162 = vmatprep.subr.mxu0 0.0
    %4163 = vmatpush1.msra.mxu0 0.0
    %4164 = vmatprep.subr.mxu0 0.0
    %4165 = vmatpush1.msra.mxu0 0.0
    %4166 = vmatprep.subr.mxu0 0.0
    %4167 = vmatpush1.msra.mxu0 0.0
    %4168 = vmatprep.subr.mxu0 0.0
    %4169 = vmatpush1.msra.mxu0 0.0
    %4170 = vmatprep.subr.mxu0 0.0
    %4171 = vmatpush1.msra.mxu0 0.0
    %4172 = vmatprep.subr.mxu0 0.0
    %4173 = vmatpush1.msra.mxu0 0.0
    %4174 = vmatprep.subr.mxu0 0.0
    %4175 = vmatpush1.msra.mxu0 0.0
    %4176 = vmatprep.subr.mxu0 0.0
    %4177 = vmatpush1.msra.mxu0 0.0
    %4178 = vmatprep.subr.mxu0 0.0
    %4179 = vmatpush1.msra.mxu0 0.0
    %4180 = vmatprep.subr.mxu0 0.0
    %4181 = vmatpush1.msra.mxu0 0.0
    %4182 = vmatprep.subr.mxu0 0.0
    %4183 = vmatpush1.msra.mxu0 0.0
    %4184 = vmatprep.mubr.f32.mxu0 0.0
    %v4185 = vand.u32 %v3946, 4294901760
    %4186 = vmatmul.mubr.f32.gmra.mrb[0].mxu0 %v4185
    %v4187 = vpop.f32.mrb[0].mxu0
    %v4188 = vadd.f32 %v4037, %v4187
    %v4189 = vpop.f32.mrb[0].mxu0
    %4190 = vdwg.mxu0
    %4191 = vmatprep.subr.mxu0 0.0
    %v4192 = vand.u32 %v1365, 4294901760
    %v4193 = vsub.f32 %v1365, %v4192
    %4194 = vmatpush1.msra.mxu0 %v4193
    %4195 = vmatprep.subr.mxu0 0.0
    %v4196 = vand.u32 %v1366, 4294901760
    %v4197 = vsub.f32 %v1366, %v4196
    %4198 = vmatpush1.msra.mxu0 %v4197
    %4199 = vmatprep.subr.mxu0 0.0
    %v4200 = vand.u32 %v1367, 4294901760
    %v4201 = vsub.f32 %v1367, %v4200
    %4202 = vmatpush1.msra.mxu0 %v4201
    %4203 = vmatprep.subr.mxu0 0.0
    %v4204 = vand.u32 %v1368, 4294901760
    %v4205 = vsub.f32 %v1368, %v4204
    %4206 = vmatpush1.msra.mxu0 %v4205
    %4207 = vmatprep.subr.mxu0 0.0
    %v4208 = vand.u32 %v1369, 4294901760
    %v4209 = vsub.f32 %v1369, %v4208
    %4210 = vmatpush1.msra.mxu0 %v4209
    %4211 = vmatprep.subr.mxu0 0.0
    %v4212 = vand.u32 %v1370, 4294901760
    %v4213 = vsub.f32 %v1370, %v4212
    %4214 = vmatpush1.msra.mxu0 %v4213
    %4215 = vmatprep.subr.mxu0 0.0
    %v4216 = vand.u32 %v1371, 4294901760
    %v4217 = vsub.f32 %v1371, %v4216
    %4218 = vmatpush1.msra.mxu0 %v4217
    %4219 = vmatprep.subr.mxu0 0.0
    %v4220 = vand.u32 %v1372, 4294901760
    %v4221 = vsub.f32 %v1372, %v4220
    %4222 = vmatpush1.msra.mxu0 %v4221
    %4223 = vmatprep.subr.mxu0 0.0
    %v4224 = vand.u32 %v1373, 4294901760
    %v4225 = vsub.f32 %v1373, %v4224
    %4226 = vmatpush1.msra.mxu0 %v4225
    %4227 = vmatprep.subr.mxu0 0.0
    %v4228 = vand.u32 %v1374, 4294901760
    %v4229 = vsub.f32 %v1374, %v4228
    %4230 = vmatpush1.msra.mxu0 %v4229
    %4231 = vmatprep.subr.mxu0 0.0
    %v4232 = vand.u32 %v1375, 4294901760
    %v4233 = vsub.f32 %v1375, %v4232
    %4234 = vmatpush1.msra.mxu0 %v4233
    %4235 = vmatprep.subr.mxu0 0.0
    %v4236 = vand.u32 %v1376, 4294901760
    %v4237 = vsub.f32 %v1376, %v4236
    %4238 = vmatpush1.msra.mxu0 %v4237
    %4239 = vmatprep.subr.mxu0 0.0
    %v4240 = vand.u32 %v1377, 4294901760
    %v4241 = vsub.f32 %v1377, %v4240
    %4242 = vmatpush1.msra.mxu0 %v4241
    %4243 = vmatprep.subr.mxu0 0.0
    %v4244 = vand.u32 %v1378, 4294901760
    %v4245 = vsub.f32 %v1378, %v4244
    %4246 = vmatpush1.msra.mxu0 %v4245
    %4247 = vmatprep.subr.mxu0 0.0
    %v4248 = vand.u32 %v1379, 4294901760
    %v4249 = vsub.f32 %v1379, %v4248
    %4250 = vmatpush1.msra.mxu0 %v4249
    %4251 = vmatprep.subr.mxu0 0.0
    %v4252 = vand.u32 %v1380, 4294901760
    %v4253 = vsub.f32 %v1380, %v4252
    %4254 = vmatpush1.msra.mxu0 %v4253
    %4255 = vmatprep.subr.mxu0 0.0
    %4256 = vmatpush1.msra.mxu0 0.0
    %4257 = vmatprep.subr.mxu0 0.0
    %4258 = vmatpush1.msra.mxu0 0.0
    %4259 = vmatprep.subr.mxu0 0.0
    %4260 = vmatpush1.msra.mxu0 0.0
    %4261 = vmatprep.subr.mxu0 0.0
    %4262 = vmatpush1.msra.mxu0 0.0
    %4263 = vmatprep.subr.mxu0 0.0
    %4264 = vmatpush1.msra.mxu0 0.0
    %4265 = vmatprep.subr.mxu0 0.0
    %4266 = vmatpush1.msra.mxu0 0.0
    %4267 = vmatprep.subr.mxu0 0.0
    %4268 = vmatpush1.msra.mxu0 0.0
    %4269 = vmatprep.subr.mxu0 0.0
    %4270 = vmatpush1.msra.mxu0 0.0
    %4271 = vmatprep.subr.mxu0 0.0
    %4272 = vmatpush1.msra.mxu0 0.0
    %4273 = vmatprep.subr.mxu0 0.0
    %4274 = vmatpush1.msra.mxu0 0.0
    %4275 = vmatprep.subr.mxu0 0.0
    %4276 = vmatpush1.msra.mxu0 0.0
    %4277 = vmatprep.subr.mxu0 0.0
    %4278 = vmatpush1.msra.mxu0 0.0
    %4279 = vmatprep.subr.mxu0 0.0
    %4280 = vmatpush1.msra.mxu0 0.0
    %4281 = vmatprep.subr.mxu0 0.0
    %4282 = vmatpush1.msra.mxu0 0.0
    %4283 = vmatprep.subr.mxu0 0.0
    %4284 = vmatpush1.msra.mxu0 0.0
    %4285 = vmatprep.subr.mxu0 0.0
    %4286 = vmatpush1.msra.mxu0 0.0
    %4287 = vmatprep.mubr.f32.mxu0 0.0
    %v4288 = vand.u32 %v3946, 4294901760
    %v4289 = vsub.f32 %v3946, %v4288
    %4290 = vmatmul.mubr.f32.gmra.mrb[0].mxu0 %v4289
    %v4291 = vpop.f32.mrb[0].mxu0
    %v4292 = vadd.f32 %v4188, %v4291
    %v4293 = vpop.f32.mrb[0].mxu0
    %4294 = vdwg.mxu0
    %4295 = vmatprep.subr.mxu0 0.0
    %v4296 = vand.u32 %v1365, 4294901760
    %4297 = vmatpush1.msra.mxu0 %v4296
    %4298 = vmatprep.subr.mxu0 0.0
    %v4299 = vand.u32 %v1366, 4294901760
    %4300 = vmatpush1.msra.mxu0 %v4299
    %4301 = vmatprep.subr.mxu0 0.0
    %v4302 = vand.u32 %v1367, 4294901760
    %4303 = vmatpush1.msra.mxu0 %v4302
    %4304 = vmatprep.subr.mxu0 0.0
    %v4305 = vand.u32 %v1368, 4294901760
    %4306 = vmatpush1.msra.mxu0 %v4305
    %4307 = vmatprep.subr.mxu0 0.0
    %v4308 = vand.u32 %v1369, 4294901760
    %4309 = vmatpush1.msra.mxu0 %v4308
    %4310 = vmatprep.subr.mxu0 0.0
    %v4311 = vand.u32 %v1370, 4294901760
    %4312 = vmatpush1.msra.mxu0 %v4311
    %4313 = vmatprep.subr.mxu0 0.0
    %v4314 = vand.u32 %v1371, 4294901760
    %4315 = vmatpush1.msra.mxu0 %v4314
    %4316 = vmatprep.subr.mxu0 0.0
    %v4317 = vand.u32 %v1372, 4294901760
    %4318 = vmatpush1.msra.mxu0 %v4317
    %4319 = vmatprep.subr.mxu0 0.0
    %v4320 = vand.u32 %v1373, 4294901760
    %4321 = vmatpush1.msra.mxu0 %v4320
    %4322 = vmatprep.subr.mxu0 0.0
    %v4323 = vand.u32 %v1374, 4294901760
    %4324 = vmatpush1.msra.mxu0 %v4323
    %4325 = vmatprep.subr.mxu0 0.0
    %v4326 = vand.u32 %v1375, 4294901760
    %4327 = vmatpush1.msra.mxu0 %v4326
    %4328 = vmatprep.subr.mxu0 0.0
    %v4329 = vand.u32 %v1376, 4294901760
    %4330 = vmatpush1.msra.mxu0 %v4329
    %4331 = vmatprep.subr.mxu0 0.0
    %v4332 = vand.u32 %v1377, 4294901760
    %4333 = vmatpush1.msra.mxu0 %v4332
    %4334 = vmatprep.subr.mxu0 0.0
    %v4335 = vand.u32 %v1378, 4294901760
    %4336 = vmatpush1.msra.mxu0 %v4335
    %4337 = vmatprep.subr.mxu0 0.0
    %v4338 = vand.u32 %v1379, 4294901760
    %4339 = vmatpush1.msra.mxu0 %v4338
    %4340 = vmatprep.subr.mxu0 0.0
    %v4341 = vand.u32 %v1380, 4294901760
    %4342 = vmatpush1.msra.mxu0 %v4341
    %4343 = vmatprep.subr.mxu0 0.0
    %4344 = vmatpush1.msra.mxu0 0.0
    %4345 = vmatprep.subr.mxu0 0.0
    %4346 = vmatpush1.msra.mxu0 0.0
    %4347 = vmatprep.subr.mxu0 0.0
    %4348 = vmatpush1.msra.mxu0 0.0
    %4349 = vmatprep.subr.mxu0 0.0
    %4350 = vmatpush1.msra.mxu0 0.0
    %4351 = vmatprep.subr.mxu0 0.0
    %4352 = vmatpush1.msra.mxu0 0.0
    %4353 = vmatprep.subr.mxu0 0.0
    %4354 = vmatpush1.msra.mxu0 0.0
    %4355 = vmatprep.subr.mxu0 0.0
    %4356 = vmatpush1.msra.mxu0 0.0
    %4357 = vmatprep.subr.mxu0 0.0
    %4358 = vmatpush1.msra.mxu0 0.0
    %4359 = vmatprep.subr.mxu0 0.0
    %4360 = vmatpush1.msra.mxu0 0.0
    %4361 = vmatprep.subr.mxu0 0.0
    %4362 = vmatpush1.msra.mxu0 0.0
    %4363 = vmatprep.subr.mxu0 0.0
    %4364 = vmatpush1.msra.mxu0 0.0
    %4365 = vmatprep.subr.mxu0 0.0
    %4366 = vmatpush1.msra.mxu0 0.0
    %4367 = vmatprep.subr.mxu0 0.0
    %4368 = vmatpush1.msra.mxu0 0.0
    %4369 = vmatprep.subr.mxu0 0.0
    %4370 = vmatpush1.msra.mxu0 0.0
    %4371 = vmatprep.subr.mxu0 0.0
    %4372 = vmatpush1.msra.mxu0 0.0
    %4373 = vmatprep.subr.mxu0 0.0
    %4374 = vmatpush1.msra.mxu0 0.0
    %4375 = vmatprep.mubr.f32.mxu0 0.0
    %v4376 = vand.u32 %v3946, 4294901760
    %v4377 = vsub.f32 %v3946, %v4376
    %v4378 = vand.u32 %v4377, 4294901760
    %4379 = vmatmul.mubr.f32.gmra.mrb[0].mxu0 %v4378
    %v4380 = vpop.f32.mrb[0].mxu0
    %v4381 = vadd.f32 %v4292, %v4380
    %v4382 = vpop.f32.mrb[0].mxu0
    %4383 = vdwg.mxu0
    %4384 = vmatprep.subr.mxu0 0.0
    %v4385 = vand.u32 %v1365, 4294901760
    %v4386 = vsub.f32 %v1365, %v4385
    %v4387 = vand.u32 %v4386, 4294901760
    %4388 = vmatpush1.msra.mxu0 %v4387
    %4389 = vmatprep.subr.mxu0 0.0
    %v4390 = vand.u32 %v1366, 4294901760
    %v4391 = vsub.f32 %v1366, %v4390
    %v4392 = vand.u32 %v4391, 4294901760
    %4393 = vmatpush1.msra.mxu0 %v4392
    %4394 = vmatprep.subr.mxu0 0.0
    %v4395 = vand.u32 %v1367, 4294901760
    %v4396 = vsub.f32 %v1367, %v4395
    %v4397 = vand.u32 %v4396, 4294901760
    %4398 = vmatpush1.msra.mxu0 %v4397
    %4399 = vmatprep.subr.mxu0 0.0
    %v4400 = vand.u32 %v1368, 4294901760
    %v4401 = vsub.f32 %v1368, %v4400
    %v4402 = vand.u32 %v4401, 4294901760
    %4403 = vmatpush1.msra.mxu0 %v4402
    %4404 = vmatprep.subr.mxu0 0.0
    %v4405 = vand.u32 %v1369, 4294901760
    %v4406 = vsub.f32 %v1369, %v4405
    %v4407 = vand.u32 %v4406, 4294901760
    %4408 = vmatpush1.msra.mxu0 %v4407
    %4409 = vmatprep.subr.mxu0 0.0
    %v4410 = vand.u32 %v1370, 4294901760
    %v4411 = vsub.f32 %v1370, %v4410
    %v4412 = vand.u32 %v4411, 4294901760
    %4413 = vmatpush1.msra.mxu0 %v4412
    %4414 = vmatprep.subr.mxu0 0.0
    %v4415 = vand.u32 %v1371, 4294901760
    %v4416 = vsub.f32 %v1371, %v4415
    %v4417 = vand.u32 %v4416, 4294901760
    %4418 = vmatpush1.msra.mxu0 %v4417
    %4419 = vmatprep.subr.mxu0 0.0
    %v4420 = vand.u32 %v1372, 4294901760
    %v4421 = vsub.f32 %v1372, %v4420
    %v4422 = vand.u32 %v4421, 4294901760
    %4423 = vmatpush1.msra.mxu0 %v4422
    %4424 = vmatprep.subr.mxu0 0.0
    %v4425 = vand.u32 %v1373, 4294901760
    %v4426 = vsub.f32 %v1373, %v4425
    %v4427 = vand.u32 %v4426, 4294901760
    %4428 = vmatpush1.msra.mxu0 %v4427
    %4429 = vmatprep.subr.mxu0 0.0
    %v4430 = vand.u32 %v1374, 4294901760
    %v4431 = vsub.f32 %v1374, %v4430
    %v4432 = vand.u32 %v4431, 4294901760
    %4433 = vmatpush1.msra.mxu0 %v4432
    %4434 = vmatprep.subr.mxu0 0.0
    %v4435 = vand.u32 %v1375, 4294901760
    %v4436 = vsub.f32 %v1375, %v4435
    %v4437 = vand.u32 %v4436, 4294901760
    %4438 = vmatpush1.msra.mxu0 %v4437
    %4439 = vmatprep.subr.mxu0 0.0
    %v4440 = vand.u32 %v1376, 4294901760
    %v4441 = vsub.f32 %v1376, %v4440
    %v4442 = vand.u32 %v4441, 4294901760
    %4443 = vmatpush1.msra.mxu0 %v4442
    %4444 = vmatprep.subr.mxu0 0.0
    %v4445 = vand.u32 %v1377, 4294901760
    %v4446 = vsub.f32 %v1377, %v4445
    %v4447 = vand.u32 %v4446, 4294901760
    %4448 = vmatpush1.msra.mxu0 %v4447
    %4449 = vmatprep.subr.mxu0 0.0
    %v4450 = vand.u32 %v1378, 4294901760
    %v4451 = vsub.f32 %v1378, %v4450
    %v4452 = vand.u32 %v4451, 4294901760
    %4453 = vmatpush1.msra.mxu0 %v4452
    %4454 = vmatprep.subr.mxu0 0.0
    %v4455 = vand.u32 %v1379, 4294901760
    %v4456 = vsub.f32 %v1379, %v4455
    %v4457 = vand.u32 %v4456, 4294901760
    %4458 = vmatpush1.msra.mxu0 %v4457
    %4459 = vmatprep.subr.mxu0 0.0
    %v4460 = vand.u32 %v1380, 4294901760
    %v4461 = vsub.f32 %v1380, %v4460
    %v4462 = vand.u32 %v4461, 4294901760
    %4463 = vmatpush1.msra.mxu0 %v4462
    %4464 = vmatprep.subr.mxu0 0.0
    %4465 = vmatpush1.msra.mxu0 0.0
    %4466 = vmatprep.subr.mxu0 0.0
    %4467 = vmatpush1.msra.mxu0 0.0
    %4468 = vmatprep.subr.mxu0 0.0
    %4469 = vmatpush1.msra.mxu0 0.0
    %4470 = vmatprep.subr.mxu0 0.0
    %4471 = vmatpush1.msra.mxu0 0.0
    %4472 = vmatprep.subr.mxu0 0.0
    %4473 = vmatpush1.msra.mxu0 0.0
    %4474 = vmatprep.subr.mxu0 0.0
    %4475 = vmatpush1.msra.mxu0 0.0
    %4476 = vmatprep.subr.mxu0 0.0
    %4477 = vmatpush1.msra.mxu0 0.0
    %4478 = vmatprep.subr.mxu0 0.0
    %4479 = vmatpush1.msra.mxu0 0.0
    %4480 = vmatprep.subr.mxu0 0.0
    %4481 = vmatpush1.msra.mxu0 0.0
    %4482 = vmatprep.subr.mxu0 0.0
    %4483 = vmatpush1.msra.mxu0 0.0
    %4484 = vmatprep.subr.mxu0 0.0
    %4485 = vmatpush1.msra.mxu0 0.0
    %4486 = vmatprep.subr.mxu0 0.0
    %4487 = vmatpush1.msra.mxu0 0.0
    %4488 = vmatprep.subr.mxu0 0.0
    %4489 = vmatpush1.msra.mxu0 0.0
    %4490 = vmatprep.subr.mxu0 0.0
    %4491 = vmatpush1.msra.mxu0 0.0
    %4492 = vmatprep.subr.mxu0 0.0
    %4493 = vmatpush1.msra.mxu0 0.0
    %4494 = vmatprep.subr.mxu0 0.0
    %4495 = vmatpush1.msra.mxu0 0.0
    %4496 = vmatprep.mubr.f32.mxu0 0.0
    %v4497 = vand.u32 %v3946, 4294901760
    %4498 = vmatmul.mubr.f32.gmra.mrb[0].mxu0 %v4497
    %v4499 = vpop.f32.mrb[0].mxu0
    %v4500 = vadd.f32 %v4381, %v4499
    %v4501 = vpop.f32.mrb[0].mxu0
    %4502 = vdwg.mxu0
    %4503 = vmatprep.subr.mxu0 0.0
    %v4504 = vand.u32 %v1365, 4294901760
    %4505 = vmatpush1.msra.mxu0 %v4504
    %4506 = vmatprep.subr.mxu0 0.0
    %v4507 = vand.u32 %v1366, 4294901760
    %4508 = vmatpush1.msra.mxu0 %v4507
    %4509 = vmatprep.subr.mxu0 0.0
    %v4510 = vand.u32 %v1367, 4294901760
    %4511 = vmatpush1.msra.mxu0 %v4510
    %4512 = vmatprep.subr.mxu0 0.0
    %v4513 = vand.u32 %v1368, 4294901760
    %4514 = vmatpush1.msra.mxu0 %v4513
    %4515 = vmatprep.subr.mxu0 0.0
    %v4516 = vand.u32 %v1369, 4294901760
    %4517 = vmatpush1.msra.mxu0 %v4516
    %4518 = vmatprep.subr.mxu0 0.0
    %v4519 = vand.u32 %v1370, 4294901760
    %4520 = vmatpush1.msra.mxu0 %v4519
    %4521 = vmatprep.subr.mxu0 0.0
    %v4522 = vand.u32 %v1371, 4294901760
    %4523 = vmatpush1.msra.mxu0 %v4522
    %4524 = vmatprep.subr.mxu0 0.0
    %v4525 = vand.u32 %v1372, 4294901760
    %4526 = vmatpush1.msra.mxu0 %v4525
    %4527 = vmatprep.subr.mxu0 0.0
    %v4528 = vand.u32 %v1373, 4294901760
    %4529 = vmatpush1.msra.mxu0 %v4528
    %4530 = vmatprep.subr.mxu0 0.0
    %v4531 = vand.u32 %v1374, 4294901760
    %4532 = vmatpush1.msra.mxu0 %v4531
    %4533 = vmatprep.subr.mxu0 0.0
    %v4534 = vand.u32 %v1375, 4294901760
    %4535 = vmatpush1.msra.mxu0 %v4534
    %4536 = vmatprep.subr.mxu0 0.0
    %v4537 = vand.u32 %v1376, 4294901760
    %4538 = vmatpush1.msra.mxu0 %v4537
    %4539 = vmatprep.subr.mxu0 0.0
    %v4540 = vand.u32 %v1377, 4294901760
    %4541 = vmatpush1.msra.mxu0 %v4540
    %4542 = vmatprep.subr.mxu0 0.0
    %v4543 = vand.u32 %v1378, 4294901760
    %4544 = vmatpush1.msra.mxu0 %v4543
    %4545 = vmatprep.subr.mxu0 0.0
    %v4546 = vand.u32 %v1379, 4294901760
    %4547 = vmatpush1.msra.mxu0 %v4546
    %4548 = vmatprep.subr.mxu0 0.0
    %v4549 = vand.u32 %v1380, 4294901760
    %4550 = vmatpush1.msra.mxu0 %v4549
    %4551 = vmatprep.subr.mxu0 0.0
    %4552 = vmatpush1.msra.mxu0 0.0
    %4553 = vmatprep.subr.mxu0 0.0
    %4554 = vmatpush1.msra.mxu0 0.0
    %4555 = vmatprep.subr.mxu0 0.0
    %4556 = vmatpush1.msra.mxu0 0.0
    %4557 = vmatprep.subr.mxu0 0.0
    %4558 = vmatpush1.msra.mxu0 0.0
    %4559 = vmatprep.subr.mxu0 0.0
    %4560 = vmatpush1.msra.mxu0 0.0
    %4561 = vmatprep.subr.mxu0 0.0
    %4562 = vmatpush1.msra.mxu0 0.0
    %4563 = vmatprep.subr.mxu0 0.0
    %4564 = vmatpush1.msra.mxu0 0.0
    %4565 = vmatprep.subr.mxu0 0.0
    %4566 = vmatpush1.msra.mxu0 0.0
    %4567 = vmatprep.subr.mxu0 0.0
    %4568 = vmatpush1.msra.mxu0 0.0
    %4569 = vmatprep.subr.mxu0 0.0
    %4570 = vmatpush1.msra.mxu0 0.0
    %4571 = vmatprep.subr.mxu0 0.0
    %4572 = vmatpush1.msra.mxu0 0.0
    %4573 = vmatprep.subr.mxu0 0.0
    %4574 = vmatpush1.msra.mxu0 0.0
    %4575 = vmatprep.subr.mxu0 0.0
    %4576 = vmatpush1.msra.mxu0 0.0
    %4577 = vmatprep.subr.mxu0 0.0
    %4578 = vmatpush1.msra.mxu0 0.0
    %4579 = vmatprep.subr.mxu0 0.0
    %4580 = vmatpush1.msra.mxu0 0.0
    %4581 = vmatprep.subr.mxu0 0.0
    %4582 = vmatpush1.msra.mxu0 0.0
    %4583 = vmatprep.mubr.f32.mxu0 0.0
    %v4584 = vand.u32 %v3946, 4294901760
    %4585 = vmatmul.mubr.f32.gmra.mrb[0].mxu0 %v4584
    %v4586 = vpop.f32.mrb[0].mxu0
    %v4587 = vadd.f32 %v4500, %v4586
    %v4588 = vpop.f32.mrb[0].mxu0
    %4589 = vdwg.mxu0
    %v4590 = vadd.f32 %v3948, %v4587
    %v4591 = vtanh.pop %v4590
    %s4592 = scalar_lea.vmem [#allocation2], 40
    %v4593 = vld [vmem:[%s4592] sm:$0xff]
    %4594 = vmatprep.subr.mxu0 0.0
    %v4595 = vand.u32 %v1365, 4294901760
    %4596 = vmatpush1.msra.mxu0 %v4595
    %4597 = vmatprep.subr.mxu0 0.0
    %v4598 = vand.u32 %v1366, 4294901760
    %4599 = vmatpush1.msra.mxu0 %v4598
    %4600 = vmatprep.subr.mxu0 0.0
    %v4601 = vand.u32 %v1367, 4294901760
    %4602 = vmatpush1.msra.mxu0 %v4601
    %4603 = vmatprep.subr.mxu0 0.0
    %v4604 = vand.u32 %v1368, 4294901760
    %4605 = vmatpush1.msra.mxu0 %v4604
    %4606 = vmatprep.subr.mxu0 0.0
    %v4607 = vand.u32 %v1369, 4294901760
    %4608 = vmatpush1.msra.mxu0 %v4607
    %4609 = vmatprep.subr.mxu0 0.0
    %v4610 = vand.u32 %v1370, 4294901760
    %4611 = vmatpush1.msra.mxu0 %v4610
    %4612 = vmatprep.subr.mxu0 0.0
    %v4613 = vand.u32 %v1371, 4294901760
    %4614 = vmatpush1.msra.mxu0 %v4613
    %4615 = vmatprep.subr.mxu0 0.0
    %v4616 = vand.u32 %v1372, 4294901760
    %4617 = vmatpush1.msra.mxu0 %v4616
    %4618 = vmatprep.subr.mxu0 0.0
    %v4619 = vand.u32 %v1373, 4294901760
    %4620 = vmatpush1.msra.mxu0 %v4619
    %4621 = vmatprep.subr.mxu0 0.0
    %v4622 = vand.u32 %v1374, 4294901760
    %4623 = vmatpush1.msra.mxu0 %v4622
    %4624 = vmatprep.subr.mxu0 0.0
    %v4625 = vand.u32 %v1375, 4294901760
    %4626 = vmatpush1.msra.mxu0 %v4625
    %4627 = vmatprep.subr.mxu0 0.0
    %v4628 = vand.u32 %v1376, 4294901760
    %4629 = vmatpush1.msra.mxu0 %v4628
    %4630 = vmatprep.subr.mxu0 0.0
    %v4631 = vand.u32 %v1377, 4294901760
    %4632 = vmatpush1.msra.mxu0 %v4631
    %4633 = vmatprep.subr.mxu0 0.0
    %v4634 = vand.u32 %v1378, 4294901760
    %4635 = vmatpush1.msra.mxu0 %v4634
    %4636 = vmatprep.subr.mxu0 0.0
    %v4637 = vand.u32 %v1379, 4294901760
    %4638 = vmatpush1.msra.mxu0 %v4637
    %4639 = vmatprep.subr.mxu0 0.0
    %v4640 = vand.u32 %v1380, 4294901760
    %4641 = vmatpush1.msra.mxu0 %v4640
    %4642 = vmatprep.subr.mxu0 0.0
    %4643 = vmatpush1.msra.mxu0 0.0
    %4644 = vmatprep.subr.mxu0 0.0
    %4645 = vmatpush1.msra.mxu0 0.0
    %4646 = vmatprep.subr.mxu0 0.0
    %4647 = vmatpush1.msra.mxu0 0.0
    %4648 = vmatprep.subr.mxu0 0.0
    %4649 = vmatpush1.msra.mxu0 0.0
    %4650 = vmatprep.subr.mxu0 0.0
    %4651 = vmatpush1.msra.mxu0 0.0
    %4652 = vmatprep.subr.mxu0 0.0
    %4653 = vmatpush1.msra.mxu0 0.0
    %4654 = vmatprep.subr.mxu0 0.0
    %4655 = vmatpush1.msra.mxu0 0.0
    %4656 = vmatprep.subr.mxu0 0.0
    %4657 = vmatpush1.msra.mxu0 0.0
    %4658 = vmatprep.subr.mxu0 0.0
    %4659 = vmatpush1.msra.mxu0 0.0
    %4660 = vmatprep.subr.mxu0 0.0
    %4661 = vmatpush1.msra.mxu0 0.0
    %4662 = vmatprep.subr.mxu0 0.0
    %4663 = vmatpush1.msra.mxu0 0.0
    %4664 = vmatprep.subr.mxu0 0.0
    %4665 = vmatpush1.msra.mxu0 0.0
    %4666 = vmatprep.subr.mxu0 0.0
    %4667 = vmatpush1.msra.mxu0 0.0
    %4668 = vmatprep.subr.mxu0 0.0
    %4669 = vmatpush1.msra.mxu0 0.0
    %4670 = vmatprep.subr.mxu0 0.0
    %4671 = vmatpush1.msra.mxu0 0.0
    %4672 = vmatprep.subr.mxu0 0.0
    %4673 = vmatpush1.msra.mxu0 0.0
    %4674 = vmatprep.mubr.f32.mxu0 0.0
    %v4675 = vand.u32 %v4591, 4294901760
    %v4676 = vsub.f32 %v4591, %v4675
    %v4677 = vand.u32 %v4676, 4294901760
    %v4678 = vsub.f32 %v4676, %v4677
    %v4679 = vand.u32 %v4678, 4294901760
    %4680 = vmatmul.mubr.f32.gmra.mrb[0].mxu0 %v4679
    %v4681 = vpop.f32.mrb[0].mxu0
    %v4682 = vadd.f32 0.0, %v4681
    %v4683 = vpop.f32.mrb[0].mxu0
    %4684 = vdwg.mxu0
    %4685 = vmatprep.subr.mxu0 0.0
    %v4686 = vand.u32 %v1365, 4294901760
    %v4687 = vsub.f32 %v1365, %v4686
    %v4688 = vand.u32 %v4687, 4294901760
    %v4689 = vsub.f32 %v4687, %v4688
    %v4690 = vand.u32 %v4689, 4294901760
    %4691 = vmatpush1.msra.mxu0 %v4690
    %4692 = vmatprep.subr.mxu0 0.0
    %v4693 = vand.u32 %v1366, 4294901760
    %v4694 = vsub.f32 %v1366, %v4693
    %v4695 = vand.u32 %v4694, 4294901760
    %v4696 = vsub.f32 %v4694, %v4695
    %v4697 = vand.u32 %v4696, 4294901760
    %4698 = vmatpush1.msra.mxu0 %v4697
    %4699 = vmatprep.subr.mxu0 0.0
    %v4700 = vand.u32 %v1367, 4294901760
    %v4701 = vsub.f32 %v1367, %v4700
    %v4702 = vand.u32 %v4701, 4294901760
    %v4703 = vsub.f32 %v4701, %v4702
    %v4704 = vand.u32 %v4703, 4294901760
    %4705 = vmatpush1.msra.mxu0 %v4704
    %4706 = vmatprep.subr.mxu0 0.0
    %v4707 = vand.u32 %v1368, 4294901760
    %v4708 = vsub.f32 %v1368, %v4707
    %v4709 = vand.u32 %v4708, 4294901760
    %v4710 = vsub.f32 %v4708, %v4709
    %v4711 = vand.u32 %v4710, 4294901760
    %4712 = vmatpush1.msra.mxu0 %v4711
    %4713 = vmatprep.subr.mxu0 0.0
    %v4714 = vand.u32 %v1369, 4294901760
    %v4715 = vsub.f32 %v1369, %v4714
    %v4716 = vand.u32 %v4715, 4294901760
    %v4717 = vsub.f32 %v4715, %v4716
    %v4718 = vand.u32 %v4717, 4294901760
    %4719 = vmatpush1.msra.mxu0 %v4718
    %4720 = vmatprep.subr.mxu0 0.0
    %v4721 = vand.u32 %v1370, 4294901760
    %v4722 = vsub.f32 %v1370, %v4721
    %v4723 = vand.u32 %v4722, 4294901760
    %v4724 = vsub.f32 %v4722, %v4723
    %v4725 = vand.u32 %v4724, 4294901760
    %4726 = vmatpush1.msra.mxu0 %v4725
    %4727 = vmatprep.subr.mxu0 0.0
    %v4728 = vand.u32 %v1371, 4294901760
    %v4729 = vsub.f32 %v1371, %v4728
    %v4730 = vand.u32 %v4729, 4294901760
    %v4731 = vsub.f32 %v4729, %v4730
    %v4732 = vand.u32 %v4731, 4294901760
    %4733 = vmatpush1.msra.mxu0 %v4732
    %4734 = vmatprep.subr.mxu0 0.0
    %v4735 = vand.u32 %v1372, 4294901760
    %v4736 = vsub.f32 %v1372, %v4735
    %v4737 = vand.u32 %v4736, 4294901760
    %v4738 = vsub.f32 %v4736, %v4737
    %v4739 = vand.u32 %v4738, 4294901760
    %4740 = vmatpush1.msra.mxu0 %v4739
    %4741 = vmatprep.subr.mxu0 0.0
    %v4742 = vand.u32 %v1373, 4294901760
    %v4743 = vsub.f32 %v1373, %v4742
    %v4744 = vand.u32 %v4743, 4294901760
    %v4745 = vsub.f32 %v4743, %v4744
    %v4746 = vand.u32 %v4745, 4294901760
    %4747 = vmatpush1.msra.mxu0 %v4746
    %4748 = vmatprep.subr.mxu0 0.0
    %v4749 = vand.u32 %v1374, 4294901760
    %v4750 = vsub.f32 %v1374, %v4749
    %v4751 = vand.u32 %v4750, 4294901760
    %v4752 = vsub.f32 %v4750, %v4751
    %v4753 = vand.u32 %v4752, 4294901760
    %4754 = vmatpush1.msra.mxu0 %v4753
    %4755 = vmatprep.subr.mxu0 0.0
    %v4756 = vand.u32 %v1375, 4294901760
    %v4757 = vsub.f32 %v1375, %v4756
    %v4758 = vand.u32 %v4757, 4294901760
    %v4759 = vsub.f32 %v4757, %v4758
    %v4760 = vand.u32 %v4759, 4294901760
    %4761 = vmatpush1.msra.mxu0 %v4760
    %4762 = vmatprep.subr.mxu0 0.0
    %v4763 = vand.u32 %v1376, 4294901760
    %v4764 = vsub.f32 %v1376, %v4763
    %v4765 = vand.u32 %v4764, 4294901760
    %v4766 = vsub.f32 %v4764, %v4765
    %v4767 = vand.u32 %v4766, 4294901760
    %4768 = vmatpush1.msra.mxu0 %v4767
    %4769 = vmatprep.subr.mxu0 0.0
    %v4770 = vand.u32 %v1377, 4294901760
    %v4771 = vsub.f32 %v1377, %v4770
    %v4772 = vand.u32 %v4771, 4294901760
    %v4773 = vsub.f32 %v4771, %v4772
    %v4774 = vand.u32 %v4773, 4294901760
    %4775 = vmatpush1.msra.mxu0 %v4774
    %4776 = vmatprep.subr.mxu0 0.0
    %v4777 = vand.u32 %v1378, 4294901760
    %v4778 = vsub.f32 %v1378, %v4777
    %v4779 = vand.u32 %v4778, 4294901760
    %v4780 = vsub.f32 %v4778, %v4779
    %v4781 = vand.u32 %v4780, 4294901760
    %4782 = vmatpush1.msra.mxu0 %v4781
    %4783 = vmatprep.subr.mxu0 0.0
    %v4784 = vand.u32 %v1379, 4294901760
    %v4785 = vsub.f32 %v1379, %v4784
    %v4786 = vand.u32 %v4785, 4294901760
    %v4787 = vsub.f32 %v4785, %v4786
    %v4788 = vand.u32 %v4787, 4294901760
    %4789 = vmatpush1.msra.mxu0 %v4788
    %4790 = vmatprep.subr.mxu0 0.0
    %v4791 = vand.u32 %v1380, 4294901760
    %v4792 = vsub.f32 %v1380, %v4791
    %v4793 = vand.u32 %v4792, 4294901760
    %v4794 = vsub.f32 %v4792, %v4793
    %v4795 = vand.u32 %v4794, 4294901760
    %4796 = vmatpush1.msra.mxu0 %v4795
    %4797 = vmatprep.subr.mxu0 0.0
    %4798 = vmatpush1.msra.mxu0 0.0
    %4799 = vmatprep.subr.mxu0 0.0
    %4800 = vmatpush1.msra.mxu0 0.0
    %4801 = vmatprep.subr.mxu0 0.0
    %4802 = vmatpush1.msra.mxu0 0.0
    %4803 = vmatprep.subr.mxu0 0.0
    %4804 = vmatpush1.msra.mxu0 0.0
    %4805 = vmatprep.subr.mxu0 0.0
    %4806 = vmatpush1.msra.mxu0 0.0
    %4807 = vmatprep.subr.mxu0 0.0
    %4808 = vmatpush1.msra.mxu0 0.0
    %4809 = vmatprep.subr.mxu0 0.0
    %4810 = vmatpush1.msra.mxu0 0.0
    %4811 = vmatprep.subr.mxu0 0.0
    %4812 = vmatpush1.msra.mxu0 0.0
    %4813 = vmatprep.subr.mxu0 0.0
    %4814 = vmatpush1.msra.mxu0 0.0
    %4815 = vmatprep.subr.mxu0 0.0
    %4816 = vmatpush1.msra.mxu0 0.0
    %4817 = vmatprep.subr.mxu0 0.0
    %4818 = vmatpush1.msra.mxu0 0.0
    %4819 = vmatprep.subr.mxu0 0.0
    %4820 = vmatpush1.msra.mxu0 0.0
    %4821 = vmatprep.subr.mxu0 0.0
    %4822 = vmatpush1.msra.mxu0 0.0
    %4823 = vmatprep.subr.mxu0 0.0
    %4824 = vmatpush1.msra.mxu0 0.0
    %4825 = vmatprep.subr.mxu0 0.0
    %4826 = vmatpush1.msra.mxu0 0.0
    %4827 = vmatprep.subr.mxu0 0.0
    %4828 = vmatpush1.msra.mxu0 0.0
    %4829 = vmatprep.mubr.f32.mxu0 0.0
    %v4830 = vand.u32 %v4591, 4294901760
    %4831 = vmatmul.mubr.f32.gmra.mrb[0].mxu0 %v4830
    %v4832 = vpop.f32.mrb[0].mxu0
    %v4833 = vadd.f32 %v4682, %v4832
    %v4834 = vpop.f32.mrb[0].mxu0
    %4835 = vdwg.mxu0
    %4836 = vmatprep.subr.mxu0 0.0
    %v4837 = vand.u32 %v1365, 4294901760
    %v4838 = vsub.f32 %v1365, %v4837
    %4839 = vmatpush1.msra.mxu0 %v4838
    %4840 = vmatprep.subr.mxu0 0.0
    %v4841 = vand.u32 %v1366, 4294901760
    %v4842 = vsub.f32 %v1366, %v4841
    %4843 = vmatpush1.msra.mxu0 %v4842
    %4844 = vmatprep.subr.mxu0 0.0
    %v4845 = vand.u32 %v1367, 4294901760
    %v4846 = vsub.f32 %v1367, %v4845
    %4847 = vmatpush1.msra.mxu0 %v4846
    %4848 = vmatprep.subr.mxu0 0.0
    %v4849 = vand.u32 %v1368, 4294901760
    %v4850 = vsub.f32 %v1368, %v4849
    %4851 = vmatpush1.msra.mxu0 %v4850
    %4852 = vmatprep.subr.mxu0 0.0
    %v4853 = vand.u32 %v1369, 4294901760
    %v4854 = vsub.f32 %v1369, %v4853
    %4855 = vmatpush1.msra.mxu0 %v4854
    %4856 = vmatprep.subr.mxu0 0.0
    %v4857 = vand.u32 %v1370, 4294901760
    %v4858 = vsub.f32 %v1370, %v4857
    %4859 = vmatpush1.msra.mxu0 %v4858
    %4860 = vmatprep.subr.mxu0 0.0
    %v4861 = vand.u32 %v1371, 4294901760
    %v4862 = vsub.f32 %v1371, %v4861
    %4863 = vmatpush1.msra.mxu0 %v4862
    %4864 = vmatprep.subr.mxu0 0.0
    %v4865 = vand.u32 %v1372, 4294901760
    %v4866 = vsub.f32 %v1372, %v4865
    %4867 = vmatpush1.msra.mxu0 %v4866
    %4868 = vmatprep.subr.mxu0 0.0
    %v4869 = vand.u32 %v1373, 4294901760
    %v4870 = vsub.f32 %v1373, %v4869
    %4871 = vmatpush1.msra.mxu0 %v4870
    %4872 = vmatprep.subr.mxu0 0.0
    %v4873 = vand.u32 %v1374, 4294901760
    %v4874 = vsub.f32 %v1374, %v4873
    %4875 = vmatpush1.msra.mxu0 %v4874
    %4876 = vmatprep.subr.mxu0 0.0
    %v4877 = vand.u32 %v1375, 4294901760
    %v4878 = vsub.f32 %v1375, %v4877
    %4879 = vmatpush1.msra.mxu0 %v4878
    %4880 = vmatprep.subr.mxu0 0.0
    %v4881 = vand.u32 %v1376, 4294901760
    %v4882 = vsub.f32 %v1376, %v4881
    %4883 = vmatpush1.msra.mxu0 %v4882
    %4884 = vmatprep.subr.mxu0 0.0
    %v4885 = vand.u32 %v1377, 4294901760
    %v4886 = vsub.f32 %v1377, %v4885
    %4887 = vmatpush1.msra.mxu0 %v4886
    %4888 = vmatprep.subr.mxu0 0.0
    %v4889 = vand.u32 %v1378, 4294901760
    %v4890 = vsub.f32 %v1378, %v4889
    %4891 = vmatpush1.msra.mxu0 %v4890
    %4892 = vmatprep.subr.mxu0 0.0
    %v4893 = vand.u32 %v1379, 4294901760
    %v4894 = vsub.f32 %v1379, %v4893
    %4895 = vmatpush1.msra.mxu0 %v4894
    %4896 = vmatprep.subr.mxu0 0.0
    %v4897 = vand.u32 %v1380, 4294901760
    %v4898 = vsub.f32 %v1380, %v4897
    %4899 = vmatpush1.msra.mxu0 %v4898
    %4900 = vmatprep.subr.mxu0 0.0
    %4901 = vmatpush1.msra.mxu0 0.0
    %4902 = vmatprep.subr.mxu0 0.0
    %4903 = vmatpush1.msra.mxu0 0.0
    %4904 = vmatprep.subr.mxu0 0.0
    %4905 = vmatpush1.msra.mxu0 0.0
    %4906 = vmatprep.subr.mxu0 0.0
    %4907 = vmatpush1.msra.mxu0 0.0
    %4908 = vmatprep.subr.mxu0 0.0
    %4909 = vmatpush1.msra.mxu0 0.0
    %4910 = vmatprep.subr.mxu0 0.0
    %4911 = vmatpush1.msra.mxu0 0.0
    %4912 = vmatprep.subr.mxu0 0.0
    %4913 = vmatpush1.msra.mxu0 0.0
    %4914 = vmatprep.subr.mxu0 0.0
    %4915 = vmatpush1.msra.mxu0 0.0
    %4916 = vmatprep.subr.mxu0 0.0
    %4917 = vmatpush1.msra.mxu0 0.0
    %4918 = vmatprep.subr.mxu0 0.0
    %4919 = vmatpush1.msra.mxu0 0.0
    %4920 = vmatprep.subr.mxu0 0.0
    %4921 = vmatpush1.msra.mxu0 0.0
    %4922 = vmatprep.subr.mxu0 0.0
    %4923 = vmatpush1.msra.mxu0 0.0
    %4924 = vmatprep.subr.mxu0 0.0
    %4925 = vmatpush1.msra.mxu0 0.0
    %4926 = vmatprep.subr.mxu0 0.0
    %4927 = vmatpush1.msra.mxu0 0.0
    %4928 = vmatprep.subr.mxu0 0.0
    %4929 = vmatpush1.msra.mxu0 0.0
    %4930 = vmatprep.subr.mxu0 0.0
    %4931 = vmatpush1.msra.mxu0 0.0
    %4932 = vmatprep.mubr.f32.mxu0 0.0
    %v4933 = vand.u32 %v4591, 4294901760
    %v4934 = vsub.f32 %v4591, %v4933
    %4935 = vmatmul.mubr.f32.gmra.mrb[0].mxu0 %v4934
    %v4936 = vpop.f32.mrb[0].mxu0
    %v4937 = vadd.f32 %v4833, %v4936
    %v4938 = vpop.f32.mrb[0].mxu0
    %4939 = vdwg.mxu0
    %4940 = vmatprep.subr.mxu0 0.0
    %v4941 = vand.u32 %v1365, 4294901760
    %4942 = vmatpush1.msra.mxu0 %v4941
    %4943 = vmatprep.subr.mxu0 0.0
    %v4944 = vand.u32 %v1366, 4294901760
    %4945 = vmatpush1.msra.mxu0 %v4944
    %4946 = vmatprep.subr.mxu0 0.0
    %v4947 = vand.u32 %v1367, 4294901760
    %4948 = vmatpush1.msra.mxu0 %v4947
    %4949 = vmatprep.subr.mxu0 0.0
    %v4950 = vand.u32 %v1368, 4294901760
    %4951 = vmatpush1.msra.mxu0 %v4950
    %4952 = vmatprep.subr.mxu0 0.0
    %v4953 = vand.u32 %v1369, 4294901760
    %4954 = vmatpush1.msra.mxu0 %v4953
    %4955 = vmatprep.subr.mxu0 0.0
    %v4956 = vand.u32 %v1370, 4294901760
    %4957 = vmatpush1.msra.mxu0 %v4956
    %4958 = vmatprep.subr.mxu0 0.0
    %v4959 = vand.u32 %v1371, 4294901760
    %4960 = vmatpush1.msra.mxu0 %v4959
    %4961 = vmatprep.subr.mxu0 0.0
    %v4962 = vand.u32 %v1372, 4294901760
    %4963 = vmatpush1.msra.mxu0 %v4962
    %4964 = vmatprep.subr.mxu0 0.0
    %v4965 = vand.u32 %v1373, 4294901760
    %4966 = vmatpush1.msra.mxu0 %v4965
    %4967 = vmatprep.subr.mxu0 0.0
    %v4968 = vand.u32 %v1374, 4294901760
    %4969 = vmatpush1.msra.mxu0 %v4968
    %4970 = vmatprep.subr.mxu0 0.0
    %v4971 = vand.u32 %v1375, 4294901760
    %4972 = vmatpush1.msra.mxu0 %v4971
    %4973 = vmatprep.subr.mxu0 0.0
    %v4974 = vand.u32 %v1376, 4294901760
    %4975 = vmatpush1.msra.mxu0 %v4974
    %4976 = vmatprep.subr.mxu0 0.0
    %v4977 = vand.u32 %v1377, 4294901760
    %4978 = vmatpush1.msra.mxu0 %v4977
    %4979 = vmatprep.subr.mxu0 0.0
    %v4980 = vand.u32 %v1378, 4294901760
    %4981 = vmatpush1.msra.mxu0 %v4980
    %4982 = vmatprep.subr.mxu0 0.0
    %v4983 = vand.u32 %v1379, 4294901760
    %4984 = vmatpush1.msra.mxu0 %v4983
    %4985 = vmatprep.subr.mxu0 0.0
    %v4986 = vand.u32 %v1380, 4294901760
    %4987 = vmatpush1.msra.mxu0 %v4986
    %4988 = vmatprep.subr.mxu0 0.0
    %4989 = vmatpush1.msra.mxu0 0.0
    %4990 = vmatprep.subr.mxu0 0.0
    %4991 = vmatpush1.msra.mxu0 0.0
    %4992 = vmatprep.subr.mxu0 0.0
    %4993 = vmatpush1.msra.mxu0 0.0
    %4994 = vmatprep.subr.mxu0 0.0
    %4995 = vmatpush1.msra.mxu0 0.0
    %4996 = vmatprep.subr.mxu0 0.0
    %4997 = vmatpush1.msra.mxu0 0.0
    %4998 = vmatprep.subr.mxu0 0.0
    %4999 = vmatpush1.msra.mxu0 0.0
    %5000 = vmatprep.subr.mxu0 0.0
    %5001 = vmatpush1.msra.mxu0 0.0
    %5002 = vmatprep.subr.mxu0 0.0
    %5003 = vmatpush1.msra.mxu0 0.0
    %5004 = vmatprep.subr.mxu0 0.0
    %5005 = vmatpush1.msra.mxu0 0.0
    %5006 = vmatprep.subr.mxu0 0.0
    %5007 = vmatpush1.msra.mxu0 0.0
    %5008 = vmatprep.subr.mxu0 0.0
    %5009 = vmatpush1.msra.mxu0 0.0
    %5010 = vmatprep.subr.mxu0 0.0
    %5011 = vmatpush1.msra.mxu0 0.0
    %5012 = vmatprep.subr.mxu0 0.0
    %5013 = vmatpush1.msra.mxu0 0.0
    %5014 = vmatprep.subr.mxu0 0.0
    %5015 = vmatpush1.msra.mxu0 0.0
    %5016 = vmatprep.subr.mxu0 0.0
    %5017 = vmatpush1.msra.mxu0 0.0
    %5018 = vmatprep.subr.mxu0 0.0
    %5019 = vmatpush1.msra.mxu0 0.0
    %5020 = vmatprep.mubr.f32.mxu0 0.0
    %v5021 = vand.u32 %v4591, 4294901760
    %v5022 = vsub.f32 %v4591, %v5021
    %v5023 = vand.u32 %v5022, 4294901760
    %5024 = vmatmul.mubr.f32.gmra.mrb[0].mxu0 %v5023
    %v5025 = vpop.f32.mrb[0].mxu0
    %v5026 = vadd.f32 %v4937, %v5025
    %v5027 = vpop.f32.mrb[0].mxu0
    %5028 = vdwg.mxu0
    %5029 = vmatprep.subr.mxu0 0.0
    %v5030 = vand.u32 %v1365, 4294901760
    %v5031 = vsub.f32 %v1365, %v5030
    %v5032 = vand.u32 %v5031, 4294901760
    %5033 = vmatpush1.msra.mxu0 %v5032
    %5034 = vmatprep.subr.mxu0 0.0
    %v5035 = vand.u32 %v1366, 4294901760
    %v5036 = vsub.f32 %v1366, %v5035
    %v5037 = vand.u32 %v5036, 4294901760
    %5038 = vmatpush1.msra.mxu0 %v5037
    %5039 = vmatprep.subr.mxu0 0.0
    %v5040 = vand.u32 %v1367, 4294901760
    %v5041 = vsub.f32 %v1367, %v5040
    %v5042 = vand.u32 %v5041, 4294901760
    %5043 = vmatpush1.msra.mxu0 %v5042
    %5044 = vmatprep.subr.mxu0 0.0
    %v5045 = vand.u32 %v1368, 4294901760
    %v5046 = vsub.f32 %v1368, %v5045
    %v5047 = vand.u32 %v5046, 4294901760
    %5048 = vmatpush1.msra.mxu0 %v5047
    %5049 = vmatprep.subr.mxu0 0.0
    %v5050 = vand.u32 %v1369, 4294901760
    %v5051 = vsub.f32 %v1369, %v5050
    %v5052 = vand.u32 %v5051, 4294901760
    %5053 = vmatpush1.msra.mxu0 %v5052
    %5054 = vmatprep.subr.mxu0 0.0
    %v5055 = vand.u32 %v1370, 4294901760
    %v5056 = vsub.f32 %v1370, %v5055
    %v5057 = vand.u32 %v5056, 4294901760
    %5058 = vmatpush1.msra.mxu0 %v5057
    %5059 = vmatprep.subr.mxu0 0.0
    %v5060 = vand.u32 %v1371, 4294901760
    %v5061 = vsub.f32 %v1371, %v5060
    %v5062 = vand.u32 %v5061, 4294901760
    %5063 = vmatpush1.msra.mxu0 %v5062
    %5064 = vmatprep.subr.mxu0 0.0
    %v5065 = vand.u32 %v1372, 4294901760
    %v5066 = vsub.f32 %v1372, %v5065
    %v5067 = vand.u32 %v5066, 4294901760
    %5068 = vmatpush1.msra.mxu0 %v5067
    %5069 = vmatprep.subr.mxu0 0.0
    %v5070 = vand.u32 %v1373, 4294901760
    %v5071 = vsub.f32 %v1373, %v5070
    %v5072 = vand.u32 %v5071, 4294901760
    %5073 = vmatpush1.msra.mxu0 %v5072
    %5074 = vmatprep.subr.mxu0 0.0
    %v5075 = vand.u32 %v1374, 4294901760
    %v5076 = vsub.f32 %v1374, %v5075
    %v5077 = vand.u32 %v5076, 4294901760
    %5078 = vmatpush1.msra.mxu0 %v5077
    %5079 = vmatprep.subr.mxu0 0.0
    %v5080 = vand.u32 %v1375, 4294901760
    %v5081 = vsub.f32 %v1375, %v5080
    %v5082 = vand.u32 %v5081, 4294901760
    %5083 = vmatpush1.msra.mxu0 %v5082
    %5084 = vmatprep.subr.mxu0 0.0
    %v5085 = vand.u32 %v1376, 4294901760
    %v5086 = vsub.f32 %v1376, %v5085
    %v5087 = vand.u32 %v5086, 4294901760
    %5088 = vmatpush1.msra.mxu0 %v5087
    %5089 = vmatprep.subr.mxu0 0.0
    %v5090 = vand.u32 %v1377, 4294901760
    %v5091 = vsub.f32 %v1377, %v5090
    %v5092 = vand.u32 %v5091, 4294901760
    %5093 = vmatpush1.msra.mxu0 %v5092
    %5094 = vmatprep.subr.mxu0 0.0
    %v5095 = vand.u32 %v1378, 4294901760
    %v5096 = vsub.f32 %v1378, %v5095
    %v5097 = vand.u32 %v5096, 4294901760
    %5098 = vmatpush1.msra.mxu0 %v5097
    %5099 = vmatprep.subr.mxu0 0.0
    %v5100 = vand.u32 %v1379, 4294901760
    %v5101 = vsub.f32 %v1379, %v5100
    %v5102 = vand.u32 %v5101, 4294901760
    %5103 = vmatpush1.msra.mxu0 %v5102
    %5104 = vmatprep.subr.mxu0 0.0
    %v5105 = vand.u32 %v1380, 4294901760
    %v5106 = vsub.f32 %v1380, %v5105
    %v5107 = vand.u32 %v5106, 4294901760
    %5108 = vmatpush1.msra.mxu0 %v5107
    %5109 = vmatprep.subr.mxu0 0.0
    %5110 = vmatpush1.msra.mxu0 0.0
    %5111 = vmatprep.subr.mxu0 0.0
    %5112 = vmatpush1.msra.mxu0 0.0
    %5113 = vmatprep.subr.mxu0 0.0
    %5114 = vmatpush1.msra.mxu0 0.0
    %5115 = vmatprep.subr.mxu0 0.0
    %5116 = vmatpush1.msra.mxu0 0.0
    %5117 = vmatprep.subr.mxu0 0.0
    %5118 = vmatpush1.msra.mxu0 0.0
    %5119 = vmatprep.subr.mxu0 0.0
    %5120 = vmatpush1.msra.mxu0 0.0
    %5121 = vmatprep.subr.mxu0 0.0
    %5122 = vmatpush1.msra.mxu0 0.0
    %5123 = vmatprep.subr.mxu0 0.0
    %5124 = vmatpush1.msra.mxu0 0.0
    %5125 = vmatprep.subr.mxu0 0.0
    %5126 = vmatpush1.msra.mxu0 0.0
    %5127 = vmatprep.subr.mxu0 0.0
    %5128 = vmatpush1.msra.mxu0 0.0
    %5129 = vmatprep.subr.mxu0 0.0
    %5130 = vmatpush1.msra.mxu0 0.0
    %5131 = vmatprep.subr.mxu0 0.0
    %5132 = vmatpush1.msra.mxu0 0.0
    %5133 = vmatprep.subr.mxu0 0.0
    %5134 = vmatpush1.msra.mxu0 0.0
    %5135 = vmatprep.subr.mxu0 0.0
    %5136 = vmatpush1.msra.mxu0 0.0
    %5137 = vmatprep.subr.mxu0 0.0
    %5138 = vmatpush1.msra.mxu0 0.0
    %5139 = vmatprep.subr.mxu0 0.0
    %5140 = vmatpush1.msra.mxu0 0.0
    %5141 = vmatprep.mubr.f32.mxu0 0.0
    %v5142 = vand.u32 %v4591, 4294901760
    %5143 = vmatmul.mubr.f32.gmra.mrb[0].mxu0 %v5142
    %v5144 = vpop.f32.mrb[0].mxu0
    %v5145 = vadd.f32 %v5026, %v5144
    %v5146 = vpop.f32.mrb[0].mxu0
    %5147 = vdwg.mxu0
    %5148 = vmatprep.subr.mxu0 0.0
    %v5149 = vand.u32 %v1365, 4294901760
    %5150 = vmatpush1.msra.mxu0 %v5149
    %5151 = vmatprep.subr.mxu0 0.0
    %v5152 = vand.u32 %v1366, 4294901760
    %5153 = vmatpush1.msra.mxu0 %v5152
    %5154 = vmatprep.subr.mxu0 0.0
    %v5155 = vand.u32 %v1367, 4294901760
    %5156 = vmatpush1.msra.mxu0 %v5155
    %5157 = vmatprep.subr.mxu0 0.0
    %v5158 = vand.u32 %v1368, 4294901760
    %5159 = vmatpush1.msra.mxu0 %v5158
    %5160 = vmatprep.subr.mxu0 0.0
    %v5161 = vand.u32 %v1369, 4294901760
    %5162 = vmatpush1.msra.mxu0 %v5161
    %5163 = vmatprep.subr.mxu0 0.0
    %v5164 = vand.u32 %v1370, 4294901760
    %5165 = vmatpush1.msra.mxu0 %v5164
    %5166 = vmatprep.subr.mxu0 0.0
    %v5167 = vand.u32 %v1371, 4294901760
    %5168 = vmatpush1.msra.mxu0 %v5167
    %5169 = vmatprep.subr.mxu0 0.0
    %v5170 = vand.u32 %v1372, 4294901760
    %5171 = vmatpush1.msra.mxu0 %v5170
    %5172 = vmatprep.subr.mxu0 0.0
    %v5173 = vand.u32 %v1373, 4294901760
    %5174 = vmatpush1.msra.mxu0 %v5173
    %5175 = vmatprep.subr.mxu0 0.0
    %v5176 = vand.u32 %v1374, 4294901760
    %5177 = vmatpush1.msra.mxu0 %v5176
    %5178 = vmatprep.subr.mxu0 0.0
    %v5179 = vand.u32 %v1375, 4294901760
    %5180 = vmatpush1.msra.mxu0 %v5179
    %5181 = vmatprep.subr.mxu0 0.0
    %v5182 = vand.u32 %v1376, 4294901760
    %5183 = vmatpush1.msra.mxu0 %v5182
    %5184 = vmatprep.subr.mxu0 0.0
    %v5185 = vand.u32 %v1377, 4294901760
    %5186 = vmatpush1.msra.mxu0 %v5185
    %5187 = vmatprep.subr.mxu0 0.0
    %v5188 = vand.u32 %v1378, 4294901760
    %5189 = vmatpush1.msra.mxu0 %v5188
    %5190 = vmatprep.subr.mxu0 0.0
    %v5191 = vand.u32 %v1379, 4294901760
    %5192 = vmatpush1.msra.mxu0 %v5191
    %5193 = vmatprep.subr.mxu0 0.0
    %v5194 = vand.u32 %v1380, 4294901760
    %5195 = vmatpush1.msra.mxu0 %v5194
    %5196 = vmatprep.subr.mxu0 0.0
    %5197 = vmatpush1.msra.mxu0 0.0
    %5198 = vmatprep.subr.mxu0 0.0
    %5199 = vmatpush1.msra.mxu0 0.0
    %5200 = vmatprep.subr.mxu0 0.0
    %5201 = vmatpush1.msra.mxu0 0.0
    %5202 = vmatprep.subr.mxu0 0.0
    %5203 = vmatpush1.msra.mxu0 0.0
    %5204 = vmatprep.subr.mxu0 0.0
    %5205 = vmatpush1.msra.mxu0 0.0
    %5206 = vmatprep.subr.mxu0 0.0
    %5207 = vmatpush1.msra.mxu0 0.0
    %5208 = vmatprep.subr.mxu0 0.0
    %5209 = vmatpush1.msra.mxu0 0.0
    %5210 = vmatprep.subr.mxu0 0.0
    %5211 = vmatpush1.msra.mxu0 0.0
    %5212 = vmatprep.subr.mxu0 0.0
    %5213 = vmatpush1.msra.mxu0 0.0
    %5214 = vmatprep.subr.mxu0 0.0
    %5215 = vmatpush1.msra.mxu0 0.0
    %5216 = vmatprep.subr.mxu0 0.0
    %5217 = vmatpush1.msra.mxu0 0.0
    %5218 = vmatprep.subr.mxu0 0.0
    %5219 = vmatpush1.msra.mxu0 0.0
    %5220 = vmatprep.subr.mxu0 0.0
    %5221 = vmatpush1.msra.mxu0 0.0
    %5222 = vmatprep.subr.mxu0 0.0
    %5223 = vmatpush1.msra.mxu0 0.0
    %5224 = vmatprep.subr.mxu0 0.0
    %5225 = vmatpush1.msra.mxu0 0.0
    %5226 = vmatprep.subr.mxu0 0.0
    %5227 = vmatpush1.msra.mxu0 0.0
    %5228 = vmatprep.mubr.f32.mxu0 0.0
    %v5229 = vand.u32 %v4591, 4294901760
    %5230 = vmatmul.mubr.f32.gmra.mrb[0].mxu0 %v5229
    %v5231 = vpop.f32.mrb[0].mxu0
    %v5232 = vadd.f32 %v5145, %v5231
    %v5233 = vpop.f32.mrb[0].mxu0
    %5234 = vdwg.mxu0
    %v5235 = vadd.f32 %v4593, %v5232
    %v5236 = vtanh.pop %v5235
    %s5237 = scalar_lea.vmem [#allocation2], 48
    %v5238 = vld [vmem:[%s5237] sm:$0xff]
    %5239 = vmatprep.subr.mxu0 0.0
    %v5240 = vand.u32 %v1365, 4294901760
    %5241 = vmatpush1.msra.mxu0 %v5240
    %5242 = vmatprep.subr.mxu0 0.0
    %v5243 = vand.u32 %v1366, 4294901760
    %5244 = vmatpush1.msra.mxu0 %v5243
    %5245 = vmatprep.subr.mxu0 0.0
    %v5246 = vand.u32 %v1367, 4294901760
    %5247 = vmatpush1.msra.mxu0 %v5246
    %5248 = vmatprep.subr.mxu0 0.0
    %v5249 = vand.u32 %v1368, 4294901760
    %5250 = vmatpush1.msra.mxu0 %v5249
    %5251 = vmatprep.subr.mxu0 0.0
    %v5252 = vand.u32 %v1369, 4294901760
    %5253 = vmatpush1.msra.mxu0 %v5252
    %5254 = vmatprep.subr.mxu0 0.0
    %v5255 = vand.u32 %v1370, 4294901760
    %5256 = vmatpush1.msra.mxu0 %v5255
    %5257 = vmatprep.subr.mxu0 0.0
    %v5258 = vand.u32 %v1371, 4294901760
    %5259 = vmatpush1.msra.mxu0 %v5258
    %5260 = vmatprep.subr.mxu0 0.0
    %v5261 = vand.u32 %v1372, 4294901760
    %5262 = vmatpush1.msra.mxu0 %v5261
    %5263 = vmatprep.subr.mxu0 0.0
    %v5264 = vand.u32 %v1373, 4294901760
    %5265 = vmatpush1.msra.mxu0 %v5264
    %5266 = vmatprep.subr.mxu0 0.0
    %v5267 = vand.u32 %v1374, 4294901760
    %5268 = vmatpush1.msra.mxu0 %v5267
    %5269 = vmatprep.subr.mxu0 0.0
    %v5270 = vand.u32 %v1375, 4294901760
    %5271 = vmatpush1.msra.mxu0 %v5270
    %5272 = vmatprep.subr.mxu0 0.0
    %v5273 = vand.u32 %v1376, 4294901760
    %5274 = vmatpush1.msra.mxu0 %v5273
    %5275 = vmatprep.subr.mxu0 0.0
    %v5276 = vand.u32 %v1377, 4294901760
    %5277 = vmatpush1.msra.mxu0 %v5276
    %5278 = vmatprep.subr.mxu0 0.0
    %v5279 = vand.u32 %v1378, 4294901760
    %5280 = vmatpush1.msra.mxu0 %v5279
    %5281 = vmatprep.subr.mxu0 0.0
    %v5282 = vand.u32 %v1379, 4294901760
    %5283 = vmatpush1.msra.mxu0 %v5282
    %5284 = vmatprep.subr.mxu0 0.0
    %v5285 = vand.u32 %v1380, 4294901760
    %5286 = vmatpush1.msra.mxu0 %v5285
    %5287 = vmatprep.subr.mxu0 0.0
    %5288 = vmatpush1.msra.mxu0 0.0
    %5289 = vmatprep.subr.mxu0 0.0
    %5290 = vmatpush1.msra.mxu0 0.0
    %5291 = vmatprep.subr.mxu0 0.0
    %5292 = vmatpush1.msra.mxu0 0.0
    %5293 = vmatprep.subr.mxu0 0.0
    %5294 = vmatpush1.msra.mxu0 0.0
    %5295 = vmatprep.subr.mxu0 0.0
    %5296 = vmatpush1.msra.mxu0 0.0
    %5297 = vmatprep.subr.mxu0 0.0
    %5298 = vmatpush1.msra.mxu0 0.0
    %5299 = vmatprep.subr.mxu0 0.0
    %5300 = vmatpush1.msra.mxu0 0.0
    %5301 = vmatprep.subr.mxu0 0.0
    %5302 = vmatpush1.msra.mxu0 0.0
    %5303 = vmatprep.subr.mxu0 0.0
    %5304 = vmatpush1.msra.mxu0 0.0
    %5305 = vmatprep.subr.mxu0 0.0
    %5306 = vmatpush1.msra.mxu0 0.0
    %5307 = vmatprep.subr.mxu0 0.0
    %5308 = vmatpush1.msra.mxu0 0.0
    %5309 = vmatprep.subr.mxu0 0.0
    %5310 = vmatpush1.msra.mxu0 0.0
    %5311 = vmatprep.subr.mxu0 0.0
    %5312 = vmatpush1.msra.mxu0 0.0
    %5313 = vmatprep.subr.mxu0 0.0
    %5314 = vmatpush1.msra.mxu0 0.0
    %5315 = vmatprep.subr.mxu0 0.0
    %5316 = vmatpush1.msra.mxu0 0.0
    %5317 = vmatprep.subr.mxu0 0.0
    %5318 = vmatpush1.msra.mxu0 0.0
    %5319 = vmatprep.mubr.f32.mxu0 0.0
    %v5320 = vand.u32 %v5236, 4294901760
    %v5321 = vsub.f32 %v5236, %v5320
    %v5322 = vand.u32 %v5321, 4294901760
    %v5323 = vsub.f32 %v5321, %v5322
    %v5324 = vand.u32 %v5323, 4294901760
    %5325 = vmatmul.mubr.f32.gmra.mrb[0].mxu0 %v5324
    %v5326 = vpop.f32.mrb[0].mxu0
    %v5327 = vadd.f32 0.0, %v5326
    %v5328 = vpop.f32.mrb[0].mxu0
    %5329 = vdwg.mxu0
    %5330 = vmatprep.subr.mxu0 0.0
    %v5331 = vand.u32 %v1365, 4294901760
    %v5332 = vsub.f32 %v1365, %v5331
    %v5333 = vand.u32 %v5332, 4294901760
    %v5334 = vsub.f32 %v5332, %v5333
    %v5335 = vand.u32 %v5334, 4294901760
    %5336 = vmatpush1.msra.mxu0 %v5335
    %5337 = vmatprep.subr.mxu0 0.0
    %v5338 = vand.u32 %v1366, 4294901760
    %v5339 = vsub.f32 %v1366, %v5338
    %v5340 = vand.u32 %v5339, 4294901760
    %v5341 = vsub.f32 %v5339, %v5340
    %v5342 = vand.u32 %v5341, 4294901760
    %5343 = vmatpush1.msra.mxu0 %v5342
    %5344 = vmatprep.subr.mxu0 0.0
    %v5345 = vand.u32 %v1367, 4294901760
    %v5346 = vsub.f32 %v1367, %v5345
    %v5347 = vand.u32 %v5346, 4294901760
    %v5348 = vsub.f32 %v5346, %v5347
    %v5349 = vand.u32 %v5348, 4294901760
    %5350 = vmatpush1.msra.mxu0 %v5349
    %5351 = vmatprep.subr.mxu0 0.0
    %v5352 = vand.u32 %v1368, 4294901760
    %v5353 = vsub.f32 %v1368, %v5352
    %v5354 = vand.u32 %v5353, 4294901760
    %v5355 = vsub.f32 %v5353, %v5354
    %v5356 = vand.u32 %v5355, 4294901760
    %5357 = vmatpush1.msra.mxu0 %v5356
    %5358 = vmatprep.subr.mxu0 0.0
    %v5359 = vand.u32 %v1369, 4294901760
    %v5360 = vsub.f32 %v1369, %v5359
    %v5361 = vand.u32 %v5360, 4294901760
    %v5362 = vsub.f32 %v5360, %v5361
    %v5363 = vand.u32 %v5362, 4294901760
    %5364 = vmatpush1.msra.mxu0 %v5363
    %5365 = vmatprep.subr.mxu0 0.0
    %v5366 = vand.u32 %v1370, 4294901760
    %v5367 = vsub.f32 %v1370, %v5366
    %v5368 = vand.u32 %v5367, 4294901760
    %v5369 = vsub.f32 %v5367, %v5368
    %v5370 = vand.u32 %v5369, 4294901760
    %5371 = vmatpush1.msra.mxu0 %v5370
    %5372 = vmatprep.subr.mxu0 0.0
    %v5373 = vand.u32 %v1371, 4294901760
    %v5374 = vsub.f32 %v1371, %v5373
    %v5375 = vand.u32 %v5374, 4294901760
    %v5376 = vsub.f32 %v5374, %v5375
    %v5377 = vand.u32 %v5376, 4294901760
    %5378 = vmatpush1.msra.mxu0 %v5377
    %5379 = vmatprep.subr.mxu0 0.0
    %v5380 = vand.u32 %v1372, 4294901760
    %v5381 = vsub.f32 %v1372, %v5380
    %v5382 = vand.u32 %v5381, 4294901760
    %v5383 = vsub.f32 %v5381, %v5382
    %v5384 = vand.u32 %v5383, 4294901760
    %5385 = vmatpush1.msra.mxu0 %v5384
    %5386 = vmatprep.subr.mxu0 0.0
    %v5387 = vand.u32 %v1373, 4294901760
    %v5388 = vsub.f32 %v1373, %v5387
    %v5389 = vand.u32 %v5388, 4294901760
    %v5390 = vsub.f32 %v5388, %v5389
    %v5391 = vand.u32 %v5390, 4294901760
    %5392 = vmatpush1.msra.mxu0 %v5391
    %5393 = vmatprep.subr.mxu0 0.0
    %v5394 = vand.u32 %v1374, 4294901760
    %v5395 = vsub.f32 %v1374, %v5394
    %v5396 = vand.u32 %v5395, 4294901760
    %v5397 = vsub.f32 %v5395, %v5396
    %v5398 = vand.u32 %v5397, 4294901760
    %5399 = vmatpush1.msra.mxu0 %v5398
    %5400 = vmatprep.subr.mxu0 0.0
    %v5401 = vand.u32 %v1375, 4294901760
    %v5402 = vsub.f32 %v1375, %v5401
    %v5403 = vand.u32 %v5402, 4294901760
    %v5404 = vsub.f32 %v5402, %v5403
    %v5405 = vand.u32 %v5404, 4294901760
    %5406 = vmatpush1.msra.mxu0 %v5405
    %5407 = vmatprep.subr.mxu0 0.0
    %v5408 = vand.u32 %v1376, 4294901760
    %v5409 = vsub.f32 %v1376, %v5408
    %v5410 = vand.u32 %v5409, 4294901760
    %v5411 = vsub.f32 %v5409, %v5410
    %v5412 = vand.u32 %v5411, 4294901760
    %5413 = vmatpush1.msra.mxu0 %v5412
    %5414 = vmatprep.subr.mxu0 0.0
    %v5415 = vand.u32 %v1377, 4294901760
    %v5416 = vsub.f32 %v1377, %v5415
    %v5417 = vand.u32 %v5416, 4294901760
    %v5418 = vsub.f32 %v5416, %v5417
    %v5419 = vand.u32 %v5418, 4294901760
    %5420 = vmatpush1.msra.mxu0 %v5419
    %5421 = vmatprep.subr.mxu0 0.0
    %v5422 = vand.u32 %v1378, 4294901760
    %v5423 = vsub.f32 %v1378, %v5422
    %v5424 = vand.u32 %v5423, 4294901760
    %v5425 = vsub.f32 %v5423, %v5424
    %v5426 = vand.u32 %v5425, 4294901760
    %5427 = vmatpush1.msra.mxu0 %v5426
    %5428 = vmatprep.subr.mxu0 0.0
    %v5429 = vand.u32 %v1379, 4294901760
    %v5430 = vsub.f32 %v1379, %v5429
    %v5431 = vand.u32 %v5430, 4294901760
    %v5432 = vsub.f32 %v5430, %v5431
    %v5433 = vand.u32 %v5432, 4294901760
    %5434 = vmatpush1.msra.mxu0 %v5433
    %5435 = vmatprep.subr.mxu0 0.0
    %v5436 = vand.u32 %v1380, 4294901760
    %v5437 = vsub.f32 %v1380, %v5436
    %v5438 = vand.u32 %v5437, 4294901760
    %v5439 = vsub.f32 %v5437, %v5438
    %v5440 = vand.u32 %v5439, 4294901760
    %5441 = vmatpush1.msra.mxu0 %v5440
    %5442 = vmatprep.subr.mxu0 0.0
    %5443 = vmatpush1.msra.mxu0 0.0
    %5444 = vmatprep.subr.mxu0 0.0
    %5445 = vmatpush1.msra.mxu0 0.0
    %5446 = vmatprep.subr.mxu0 0.0
    %5447 = vmatpush1.msra.mxu0 0.0
    %5448 = vmatprep.subr.mxu0 0.0
    %5449 = vmatpush1.msra.mxu0 0.0
    %5450 = vmatprep.subr.mxu0 0.0
    %5451 = vmatpush1.msra.mxu0 0.0
    %5452 = vmatprep.subr.mxu0 0.0
    %5453 = vmatpush1.msra.mxu0 0.0
    %5454 = vmatprep.subr.mxu0 0.0
    %5455 = vmatpush1.msra.mxu0 0.0
    %5456 = vmatprep.subr.mxu0 0.0
    %5457 = vmatpush1.msra.mxu0 0.0
    %5458 = vmatprep.subr.mxu0 0.0
    %5459 = vmatpush1.msra.mxu0 0.0
    %5460 = vmatprep.subr.mxu0 0.0
    %5461 = vmatpush1.msra.mxu0 0.0
    %5462 = vmatprep.subr.mxu0 0.0
    %5463 = vmatpush1.msra.mxu0 0.0
    %5464 = vmatprep.subr.mxu0 0.0
    %5465 = vmatpush1.msra.mxu0 0.0
    %5466 = vmatprep.subr.mxu0 0.0
    %5467 = vmatpush1.msra.mxu0 0.0
    %5468 = vmatprep.subr.mxu0 0.0
    %5469 = vmatpush1.msra.mxu0 0.0
    %5470 = vmatprep.subr.mxu0 0.0
    %5471 = vmatpush1.msra.mxu0 0.0
    %5472 = vmatprep.subr.mxu0 0.0
    %5473 = vmatpush1.msra.mxu0 0.0
    %5474 = vmatprep.mubr.f32.mxu0 0.0
    %v5475 = vand.u32 %v5236, 4294901760
    %5476 = vmatmul.mubr.f32.gmra.mrb[0].mxu0 %v5475
    %v5477 = vpop.f32.mrb[0].mxu0
    %v5478 = vadd.f32 %v5327, %v5477
    %v5479 = vpop.f32.mrb[0].mxu0
    %5480 = vdwg.mxu0
    %5481 = vmatprep.subr.mxu0 0.0
    %v5482 = vand.u32 %v1365, 4294901760
    %v5483 = vsub.f32 %v1365, %v5482
    %5484 = vmatpush1.msra.mxu0 %v5483
    %5485 = vmatprep.subr.mxu0 0.0
    %v5486 = vand.u32 %v1366, 4294901760
    %v5487 = vsub.f32 %v1366, %v5486
    %5488 = vmatpush1.msra.mxu0 %v5487
    %5489 = vmatprep.subr.mxu0 0.0
    %v5490 = vand.u32 %v1367, 4294901760
    %v5491 = vsub.f32 %v1367, %v5490
    %5492 = vmatpush1.msra.mxu0 %v5491
    %5493 = vmatprep.subr.mxu0 0.0
    %v5494 = vand.u32 %v1368, 4294901760
    %v5495 = vsub.f32 %v1368, %v5494
    %5496 = vmatpush1.msra.mxu0 %v5495
    %5497 = vmatprep.subr.mxu0 0.0
    %v5498 = vand.u32 %v1369, 4294901760
    %v5499 = vsub.f32 %v1369, %v5498
    %5500 = vmatpush1.msra.mxu0 %v5499
    %5501 = vmatprep.subr.mxu0 0.0
    %v5502 = vand.u32 %v1370, 4294901760
    %v5503 = vsub.f32 %v1370, %v5502
    %5504 = vmatpush1.msra.mxu0 %v5503
    %5505 = vmatprep.subr.mxu0 0.0
    %v5506 = vand.u32 %v1371, 4294901760
    %v5507 = vsub.f32 %v1371, %v5506
    %5508 = vmatpush1.msra.mxu0 %v5507
    %5509 = vmatprep.subr.mxu0 0.0
    %v5510 = vand.u32 %v1372, 4294901760
    %v5511 = vsub.f32 %v1372, %v5510
    %5512 = vmatpush1.msra.mxu0 %v5511
    %5513 = vmatprep.subr.mxu0 0.0
    %v5514 = vand.u32 %v1373, 4294901760
    %v5515 = vsub.f32 %v1373, %v5514
    %5516 = vmatpush1.msra.mxu0 %v5515
    %5517 = vmatprep.subr.mxu0 0.0
    %v5518 = vand.u32 %v1374, 4294901760
    %v5519 = vsub.f32 %v1374, %v5518
    %5520 = vmatpush1.msra.mxu0 %v5519
    %5521 = vmatprep.subr.mxu0 0.0
    %v5522 = vand.u32 %v1375, 4294901760
    %v5523 = vsub.f32 %v1375, %v5522
    %5524 = vmatpush1.msra.mxu0 %v5523
    %5525 = vmatprep.subr.mxu0 0.0
    %v5526 = vand.u32 %v1376, 4294901760
    %v5527 = vsub.f32 %v1376, %v5526
    %5528 = vmatpush1.msra.mxu0 %v5527
    %5529 = vmatprep.subr.mxu0 0.0
    %v5530 = vand.u32 %v1377, 4294901760
    %v5531 = vsub.f32 %v1377, %v5530
    %5532 = vmatpush1.msra.mxu0 %v5531
    %5533 = vmatprep.subr.mxu0 0.0
    %v5534 = vand.u32 %v1378, 4294901760
    %v5535 = vsub.f32 %v1378, %v5534
    %5536 = vmatpush1.msra.mxu0 %v5535
    %5537 = vmatprep.subr.mxu0 0.0
    %v5538 = vand.u32 %v1379, 4294901760
    %v5539 = vsub.f32 %v1379, %v5538
    %5540 = vmatpush1.msra.mxu0 %v5539
    %5541 = vmatprep.subr.mxu0 0.0
    %v5542 = vand.u32 %v1380, 4294901760
    %v5543 = vsub.f32 %v1380, %v5542
    %5544 = vmatpush1.msra.mxu0 %v5543
    %5545 = vmatprep.subr.mxu0 0.0
    %5546 = vmatpush1.msra.mxu0 0.0
    %5547 = vmatprep.subr.mxu0 0.0
    %5548 = vmatpush1.msra.mxu0 0.0
    %5549 = vmatprep.subr.mxu0 0.0
    %5550 = vmatpush1.msra.mxu0 0.0
    %5551 = vmatprep.subr.mxu0 0.0
    %5552 = vmatpush1.msra.mxu0 0.0
    %5553 = vmatprep.subr.mxu0 0.0
    %5554 = vmatpush1.msra.mxu0 0.0
    %5555 = vmatprep.subr.mxu0 0.0
    %5556 = vmatpush1.msra.mxu0 0.0
    %5557 = vmatprep.subr.mxu0 0.0
    %5558 = vmatpush1.msra.mxu0 0.0
    %5559 = vmatprep.subr.mxu0 0.0
    %5560 = vmatpush1.msra.mxu0 0.0
    %5561 = vmatprep.subr.mxu0 0.0
    %5562 = vmatpush1.msra.mxu0 0.0
    %5563 = vmatprep.subr.mxu0 0.0
    %5564 = vmatpush1.msra.mxu0 0.0
    %5565 = vmatprep.subr.mxu0 0.0
    %5566 = vmatpush1.msra.mxu0 0.0
    %5567 = vmatprep.subr.mxu0 0.0
    %5568 = vmatpush1.msra.mxu0 0.0
    %5569 = vmatprep.subr.mxu0 0.0
    %5570 = vmatpush1.msra.mxu0 0.0
    %5571 = vmatprep.subr.mxu0 0.0
    %5572 = vmatpush1.msra.mxu0 0.0
    %5573 = vmatprep.subr.mxu0 0.0
    %5574 = vmatpush1.msra.mxu0 0.0
    %5575 = vmatprep.subr.mxu0 0.0
    %5576 = vmatpush1.msra.mxu0 0.0
    %5577 = vmatprep.mubr.f32.mxu0 0.0
    %v5578 = vand.u32 %v5236, 4294901760
    %v5579 = vsub.f32 %v5236, %v5578
    %5580 = vmatmul.mubr.f32.gmra.mrb[0].mxu0 %v5579
    %v5581 = vpop.f32.mrb[0].mxu0
    %v5582 = vadd.f32 %v5478, %v5581
    %v5583 = vpop.f32.mrb[0].mxu0
    %5584 = vdwg.mxu0
    %5585 = vmatprep.subr.mxu0 0.0
    %v5586 = vand.u32 %v1365, 4294901760
    %5587 = vmatpush1.msra.mxu0 %v5586
    %5588 = vmatprep.subr.mxu0 0.0
    %v5589 = vand.u32 %v1366, 4294901760
    %5590 = vmatpush1.msra.mxu0 %v5589
    %5591 = vmatprep.subr.mxu0 0.0
    %v5592 = vand.u32 %v1367, 4294901760
    %5593 = vmatpush1.msra.mxu0 %v5592
    %5594 = vmatprep.subr.mxu0 0.0
    %v5595 = vand.u32 %v1368, 4294901760
    %5596 = vmatpush1.msra.mxu0 %v5595
    %5597 = vmatprep.subr.mxu0 0.0
    %v5598 = vand.u32 %v1369, 4294901760
    %5599 = vmatpush1.msra.mxu0 %v5598
    %5600 = vmatprep.subr.mxu0 0.0
    %v5601 = vand.u32 %v1370, 4294901760
    %5602 = vmatpush1.msra.mxu0 %v5601
    %5603 = vmatprep.subr.mxu0 0.0
    %v5604 = vand.u32 %v1371, 4294901760
    %5605 = vmatpush1.msra.mxu0 %v5604
    %5606 = vmatprep.subr.mxu0 0.0
    %v5607 = vand.u32 %v1372, 4294901760
    %5608 = vmatpush1.msra.mxu0 %v5607
    %5609 = vmatprep.subr.mxu0 0.0
    %v5610 = vand.u32 %v1373, 4294901760
    %5611 = vmatpush1.msra.mxu0 %v5610
    %5612 = vmatprep.subr.mxu0 0.0
    %v5613 = vand.u32 %v1374, 4294901760
    %5614 = vmatpush1.msra.mxu0 %v5613
    %5615 = vmatprep.subr.mxu0 0.0
    %v5616 = vand.u32 %v1375, 4294901760
    %5617 = vmatpush1.msra.mxu0 %v5616
    %5618 = vmatprep.subr.mxu0 0.0
    %v5619 = vand.u32 %v1376, 4294901760
    %5620 = vmatpush1.msra.mxu0 %v5619
    %5621 = vmatprep.subr.mxu0 0.0
    %v5622 = vand.u32 %v1377, 4294901760
    %5623 = vmatpush1.msra.mxu0 %v5622
    %5624 = vmatprep.subr.mxu0 0.0
    %v5625 = vand.u32 %v1378, 4294901760
    %5626 = vmatpush1.msra.mxu0 %v5625
    %5627 = vmatprep.subr.mxu0 0.0
    %v5628 = vand.u32 %v1379, 4294901760
    %5629 = vmatpush1.msra.mxu0 %v5628
    %5630 = vmatprep.subr.mxu0 0.0
    %v5631 = vand.u32 %v1380, 4294901760
    %5632 = vmatpush1.msra.mxu0 %v5631
    %5633 = vmatprep.subr.mxu0 0.0
    %5634 = vmatpush1.msra.mxu0 0.0
    %5635 = vmatprep.subr.mxu0 0.0
    %5636 = vmatpush1.msra.mxu0 0.0
    %5637 = vmatprep.subr.mxu0 0.0
    %5638 = vmatpush1.msra.mxu0 0.0
    %5639 = vmatprep.subr.mxu0 0.0
    %5640 = vmatpush1.msra.mxu0 0.0
    %5641 = vmatprep.subr.mxu0 0.0
    %5642 = vmatpush1.msra.mxu0 0.0
    %5643 = vmatprep.subr.mxu0 0.0
    %5644 = vmatpush1.msra.mxu0 0.0
    %5645 = vmatprep.subr.mxu0 0.0
    %5646 = vmatpush1.msra.mxu0 0.0
    %5647 = vmatprep.subr.mxu0 0.0
    %5648 = vmatpush1.msra.mxu0 0.0
    %5649 = vmatprep.subr.mxu0 0.0
    %5650 = vmatpush1.msra.mxu0 0.0
    %5651 = vmatprep.subr.mxu0 0.0
    %5652 = vmatpush1.msra.mxu0 0.0
    %5653 = vmatprep.subr.mxu0 0.0
    %5654 = vmatpush1.msra.mxu0 0.0
    %5655 = vmatprep.subr.mxu0 0.0
    %5656 = vmatpush1.msra.mxu0 0.0
    %5657 = vmatprep.subr.mxu0 0.0
    %5658 = vmatpush1.msra.mxu0 0.0
    %5659 = vmatprep.subr.mxu0 0.0
    %5660 = vmatpush1.msra.mxu0 0.0
    %5661 = vmatprep.subr.mxu0 0.0
    %5662 = vmatpush1.msra.mxu0 0.0
    %5663 = vmatprep.subr.mxu0 0.0
    %5664 = vmatpush1.msra.mxu0 0.0
    %5665 = vmatprep.mubr.f32.mxu0 0.0
    %v5666 = vand.u32 %v5236, 4294901760
    %v5667 = vsub.f32 %v5236, %v5666
    %v5668 = vand.u32 %v5667, 4294901760
    %5669 = vmatmul.mubr.f32.gmra.mrb[0].mxu0 %v5668
    %v5670 = vpop.f32.mrb[0].mxu0
    %v5671 = vadd.f32 %v5582, %v5670
    %v5672 = vpop.f32.mrb[0].mxu0
    %5673 = vdwg.mxu0
    %5674 = vmatprep.subr.mxu0 0.0
    %v5675 = vand.u32 %v1365, 4294901760
    %v5676 = vsub.f32 %v1365, %v5675
    %v5677 = vand.u32 %v5676, 4294901760
    %5678 = vmatpush1.msra.mxu0 %v5677
    %5679 = vmatprep.subr.mxu0 0.0
    %v5680 = vand.u32 %v1366, 4294901760
    %v5681 = vsub.f32 %v1366, %v5680
    %v5682 = vand.u32 %v5681, 4294901760
    %5683 = vmatpush1.msra.mxu0 %v5682
    %5684 = vmatprep.subr.mxu0 0.0
    %v5685 = vand.u32 %v1367, 4294901760
    %v5686 = vsub.f32 %v1367, %v5685
    %v5687 = vand.u32 %v5686, 4294901760
    %5688 = vmatpush1.msra.mxu0 %v5687
    %5689 = vmatprep.subr.mxu0 0.0
    %v5690 = vand.u32 %v1368, 4294901760
    %v5691 = vsub.f32 %v1368, %v5690
    %v5692 = vand.u32 %v5691, 4294901760
    %5693 = vmatpush1.msra.mxu0 %v5692
    %5694 = vmatprep.subr.mxu0 0.0
    %v5695 = vand.u32 %v1369, 4294901760
    %v5696 = vsub.f32 %v1369, %v5695
    %v5697 = vand.u32 %v5696, 4294901760
    %5698 = vmatpush1.msra.mxu0 %v5697
    %5699 = vmatprep.subr.mxu0 0.0
    %v5700 = vand.u32 %v1370, 4294901760
    %v5701 = vsub.f32 %v1370, %v5700
    %v5702 = vand.u32 %v5701, 4294901760
    %5703 = vmatpush1.msra.mxu0 %v5702
    %5704 = vmatprep.subr.mxu0 0.0
    %v5705 = vand.u32 %v1371, 4294901760
    %v5706 = vsub.f32 %v1371, %v5705
    %v5707 = vand.u32 %v5706, 4294901760
    %5708 = vmatpush1.msra.mxu0 %v5707
    %5709 = vmatprep.subr.mxu0 0.0
    %v5710 = vand.u32 %v1372, 4294901760
    %v5711 = vsub.f32 %v1372, %v5710
    %v5712 = vand.u32 %v5711, 4294901760
    %5713 = vmatpush1.msra.mxu0 %v5712
    %5714 = vmatprep.subr.mxu0 0.0
    %v5715 = vand.u32 %v1373, 4294901760
    %v5716 = vsub.f32 %v1373, %v5715
    %v5717 = vand.u32 %v5716, 4294901760
    %5718 = vmatpush1.msra.mxu0 %v5717
    %5719 = vmatprep.subr.mxu0 0.0
    %v5720 = vand.u32 %v1374, 4294901760
    %v5721 = vsub.f32 %v1374, %v5720
    %v5722 = vand.u32 %v5721, 4294901760
    %5723 = vmatpush1.msra.mxu0 %v5722
    %5724 = vmatprep.subr.mxu0 0.0
    %v5725 = vand.u32 %v1375, 4294901760
    %v5726 = vsub.f32 %v1375, %v5725
    %v5727 = vand.u32 %v5726, 4294901760
    %5728 = vmatpush1.msra.mxu0 %v5727
    %5729 = vmatprep.subr.mxu0 0.0
    %v5730 = vand.u32 %v1376, 4294901760
    %v5731 = vsub.f32 %v1376, %v5730
    %v5732 = vand.u32 %v5731, 4294901760
    %5733 = vmatpush1.msra.mxu0 %v5732
    %5734 = vmatprep.subr.mxu0 0.0
    %v5735 = vand.u32 %v1377, 4294901760
    %v5736 = vsub.f32 %v1377, %v5735
    %v5737 = vand.u32 %v5736, 4294901760
    %5738 = vmatpush1.msra.mxu0 %v5737
    %5739 = vmatprep.subr.mxu0 0.0
    %v5740 = vand.u32 %v1378, 4294901760
    %v5741 = vsub.f32 %v1378, %v5740
    %v5742 = vand.u32 %v5741, 4294901760
    %5743 = vmatpush1.msra.mxu0 %v5742
    %5744 = vmatprep.subr.mxu0 0.0
    %v5745 = vand.u32 %v1379, 4294901760
    %v5746 = vsub.f32 %v1379, %v5745
    %v5747 = vand.u32 %v5746, 4294901760
    %5748 = vmatpush1.msra.mxu0 %v5747
    %5749 = vmatprep.subr.mxu0 0.0
    %v5750 = vand.u32 %v1380, 4294901760
    %v5751 = vsub.f32 %v1380, %v5750
    %v5752 = vand.u32 %v5751, 4294901760
    %5753 = vmatpush1.msra.mxu0 %v5752
    %5754 = vmatprep.subr.mxu0 0.0
    %5755 = vmatpush1.msra.mxu0 0.0
    %5756 = vmatprep.subr.mxu0 0.0
    %5757 = vmatpush1.msra.mxu0 0.0
    %5758 = vmatprep.subr.mxu0 0.0
    %5759 = vmatpush1.msra.mxu0 0.0
    %5760 = vmatprep.subr.mxu0 0.0
    %5761 = vmatpush1.msra.mxu0 0.0
    %5762 = vmatprep.subr.mxu0 0.0
    %5763 = vmatpush1.msra.mxu0 0.0
    %5764 = vmatprep.subr.mxu0 0.0
    %5765 = vmatpush1.msra.mxu0 0.0
    %5766 = vmatprep.subr.mxu0 0.0
    %5767 = vmatpush1.msra.mxu0 0.0
    %5768 = vmatprep.subr.mxu0 0.0
    %5769 = vmatpush1.msra.mxu0 0.0
    %5770 = vmatprep.subr.mxu0 0.0
    %5771 = vmatpush1.msra.mxu0 0.0
    %5772 = vmatprep.subr.mxu0 0.0
    %5773 = vmatpush1.msra.mxu0 0.0
    %5774 = vmatprep.subr.mxu0 0.0
    %5775 = vmatpush1.msra.mxu0 0.0
    %5776 = vmatprep.subr.mxu0 0.0
    %5777 = vmatpush1.msra.mxu0 0.0
    %5778 = vmatprep.subr.mxu0 0.0
    %5779 = vmatpush1.msra.mxu0 0.0
    %5780 = vmatprep.subr.mxu0 0.0
    %5781 = vmatpush1.msra.mxu0 0.0
    %5782 = vmatprep.subr.mxu0 0.0
    %5783 = vmatpush1.msra.mxu0 0.0
    %5784 = vmatprep.subr.mxu0 0.0
    %5785 = vmatpush1.msra.mxu0 0.0
    %5786 = vmatprep.mubr.f32.mxu0 0.0
    %v5787 = vand.u32 %v5236, 4294901760
    %5788 = vmatmul.mubr.f32.gmra.mrb[0].mxu0 %v5787
    %v5789 = vpop.f32.mrb[0].mxu0
    %v5790 = vadd.f32 %v5671, %v5789
    %v5791 = vpop.f32.mrb[0].mxu0
    %5792 = vdwg.mxu0
    %5793 = vmatprep.subr.mxu0 0.0
    %v5794 = vand.u32 %v1365, 4294901760
    %5795 = vmatpush1.msra.mxu0 %v5794
    %5796 = vmatprep.subr.mxu0 0.0
    %v5797 = vand.u32 %v1366, 4294901760
    %5798 = vmatpush1.msra.mxu0 %v5797
    %5799 = vmatprep.subr.mxu0 0.0
    %v5800 = vand.u32 %v1367, 4294901760
    %5801 = vmatpush1.msra.mxu0 %v5800
    %5802 = vmatprep.subr.mxu0 0.0
    %v5803 = vand.u32 %v1368, 4294901760
    %5804 = vmatpush1.msra.mxu0 %v5803
    %5805 = vmatprep.subr.mxu0 0.0
    %v5806 = vand.u32 %v1369, 4294901760
    %5807 = vmatpush1.msra.mxu0 %v5806
    %5808 = vmatprep.subr.mxu0 0.0
    %v5809 = vand.u32 %v1370, 4294901760
    %5810 = vmatpush1.msra.mxu0 %v5809
    %5811 = vmatprep.subr.mxu0 0.0
    %v5812 = vand.u32 %v1371, 4294901760
    %5813 = vmatpush1.msra.mxu0 %v5812
    %5814 = vmatprep.subr.mxu0 0.0
    %v5815 = vand.u32 %v1372, 4294901760
    %5816 = vmatpush1.msra.mxu0 %v5815
    %5817 = vmatprep.subr.mxu0 0.0
    %v5818 = vand.u32 %v1373, 4294901760
    %5819 = vmatpush1.msra.mxu0 %v5818
    %5820 = vmatprep.subr.mxu0 0.0
    %v5821 = vand.u32 %v1374, 4294901760
    %5822 = vmatpush1.msra.mxu0 %v5821
    %5823 = vmatprep.subr.mxu0 0.0
    %v5824 = vand.u32 %v1375, 4294901760
    %5825 = vmatpush1.msra.mxu0 %v5824
    %5826 = vmatprep.subr.mxu0 0.0
    %v5827 = vand.u32 %v1376, 4294901760
    %5828 = vmatpush1.msra.mxu0 %v5827
    %5829 = vmatprep.subr.mxu0 0.0
    %v5830 = vand.u32 %v1377, 4294901760
    %5831 = vmatpush1.msra.mxu0 %v5830
    %5832 = vmatprep.subr.mxu0 0.0
    %v5833 = vand.u32 %v1378, 4294901760
    %5834 = vmatpush1.msra.mxu0 %v5833
    %5835 = vmatprep.subr.mxu0 0.0
    %v5836 = vand.u32 %v1379, 4294901760
    %5837 = vmatpush1.msra.mxu0 %v5836
    %5838 = vmatprep.subr.mxu0 0.0
    %v5839 = vand.u32 %v1380, 4294901760
    %5840 = vmatpush1.msra.mxu0 %v5839
    %5841 = vmatprep.subr.mxu0 0.0
    %5842 = vmatpush1.msra.mxu0 0.0
    %5843 = vmatprep.subr.mxu0 0.0
    %5844 = vmatpush1.msra.mxu0 0.0
    %5845 = vmatprep.subr.mxu0 0.0
    %5846 = vmatpush1.msra.mxu0 0.0
    %5847 = vmatprep.subr.mxu0 0.0
    %5848 = vmatpush1.msra.mxu0 0.0
    %5849 = vmatprep.subr.mxu0 0.0
    %5850 = vmatpush1.msra.mxu0 0.0
    %5851 = vmatprep.subr.mxu0 0.0
    %5852 = vmatpush1.msra.mxu0 0.0
    %5853 = vmatprep.subr.mxu0 0.0
    %5854 = vmatpush1.msra.mxu0 0.0
    %5855 = vmatprep.subr.mxu0 0.0
    %5856 = vmatpush1.msra.mxu0 0.0
    %5857 = vmatprep.subr.mxu0 0.0
    %5858 = vmatpush1.msra.mxu0 0.0
    %5859 = vmatprep.subr.mxu0 0.0
    %5860 = vmatpush1.msra.mxu0 0.0
    %5861 = vmatprep.subr.mxu0 0.0
    %5862 = vmatpush1.msra.mxu0 0.0
    %5863 = vmatprep.subr.mxu0 0.0
    %5864 = vmatpush1.msra.mxu0 0.0
    %5865 = vmatprep.subr.mxu0 0.0
    %5866 = vmatpush1.msra.mxu0 0.0
    %5867 = vmatprep.subr.mxu0 0.0
    %5868 = vmatpush1.msra.mxu0 0.0
    %5869 = vmatprep.subr.mxu0 0.0
    %5870 = vmatpush1.msra.mxu0 0.0
    %5871 = vmatprep.subr.mxu0 0.0
    %5872 = vmatpush1.msra.mxu0 0.0
    %5873 = vmatprep.mubr.f32.mxu0 0.0
    %v5874 = vand.u32 %v5236, 4294901760
    %5875 = vmatmul.mubr.f32.gmra.mrb[0].mxu0 %v5874
    %v5876 = vpop.f32.mrb[0].mxu0
    %v5877 = vadd.f32 %v5790, %v5876
    %v5878 = vpop.f32.mrb[0].mxu0
    %5879 = vdwg.mxu0
    %v5880 = vadd.f32 %v5238, %v5877
    %v5881 = vtanh.pop %v5880
    %s5882 = scalar_lea.vmem [#allocation2], 56
    %v5883 = vld [vmem:[%s5882] sm:$0xff]
    %5884 = vmatprep.subr.mxu0 0.0
    %v5885 = vand.u32 %v1365, 4294901760
    %5886 = vmatpush1.msra.mxu0 %v5885
    %5887 = vmatprep.subr.mxu0 0.0
    %v5888 = vand.u32 %v1366, 4294901760
    %5889 = vmatpush1.msra.mxu0 %v5888
    %5890 = vmatprep.subr.mxu0 0.0
    %v5891 = vand.u32 %v1367, 4294901760
    %5892 = vmatpush1.msra.mxu0 %v5891
    %5893 = vmatprep.subr.mxu0 0.0
    %v5894 = vand.u32 %v1368, 4294901760
    %5895 = vmatpush1.msra.mxu0 %v5894
    %5896 = vmatprep.subr.mxu0 0.0
    %v5897 = vand.u32 %v1369, 4294901760
    %5898 = vmatpush1.msra.mxu0 %v5897
    %5899 = vmatprep.subr.mxu0 0.0
    %v5900 = vand.u32 %v1370, 4294901760
    %5901 = vmatpush1.msra.mxu0 %v5900
    %5902 = vmatprep.subr.mxu0 0.0
    %v5903 = vand.u32 %v1371, 4294901760
    %5904 = vmatpush1.msra.mxu0 %v5903
    %5905 = vmatprep.subr.mxu0 0.0
    %v5906 = vand.u32 %v1372, 4294901760
    %5907 = vmatpush1.msra.mxu0 %v5906
    %5908 = vmatprep.subr.mxu0 0.0
    %v5909 = vand.u32 %v1373, 4294901760
    %5910 = vmatpush1.msra.mxu0 %v5909
    %5911 = vmatprep.subr.mxu0 0.0
    %v5912 = vand.u32 %v1374, 4294901760
    %5913 = vmatpush1.msra.mxu0 %v5912
    %5914 = vmatprep.subr.mxu0 0.0
    %v5915 = vand.u32 %v1375, 4294901760
    %5916 = vmatpush1.msra.mxu0 %v5915
    %5917 = vmatprep.subr.mxu0 0.0
    %v5918 = vand.u32 %v1376, 4294901760
    %5919 = vmatpush1.msra.mxu0 %v5918
    %5920 = vmatprep.subr.mxu0 0.0
    %v5921 = vand.u32 %v1377, 4294901760
    %5922 = vmatpush1.msra.mxu0 %v5921
    %5923 = vmatprep.subr.mxu0 0.0
    %v5924 = vand.u32 %v1378, 4294901760
    %5925 = vmatpush1.msra.mxu0 %v5924
    %5926 = vmatprep.subr.mxu0 0.0
    %v5927 = vand.u32 %v1379, 4294901760
    %5928 = vmatpush1.msra.mxu0 %v5927
    %5929 = vmatprep.subr.mxu0 0.0
    %v5930 = vand.u32 %v1380, 4294901760
    %5931 = vmatpush1.msra.mxu0 %v5930
    %5932 = vmatprep.subr.mxu0 0.0
    %5933 = vmatpush1.msra.mxu0 0.0
    %5934 = vmatprep.subr.mxu0 0.0
    %5935 = vmatpush1.msra.mxu0 0.0
    %5936 = vmatprep.subr.mxu0 0.0
    %5937 = vmatpush1.msra.mxu0 0.0
    %5938 = vmatprep.subr.mxu0 0.0
    %5939 = vmatpush1.msra.mxu0 0.0
    %5940 = vmatprep.subr.mxu0 0.0
    %5941 = vmatpush1.msra.mxu0 0.0
    %5942 = vmatprep.subr.mxu0 0.0
    %5943 = vmatpush1.msra.mxu0 0.0
    %5944 = vmatprep.subr.mxu0 0.0
    %5945 = vmatpush1.msra.mxu0 0.0
    %5946 = vmatprep.subr.mxu0 0.0
    %5947 = vmatpush1.msra.mxu0 0.0
    %5948 = vmatprep.subr.mxu0 0.0
    %5949 = vmatpush1.msra.mxu0 0.0
    %5950 = vmatprep.subr.mxu0 0.0
    %5951 = vmatpush1.msra.mxu0 0.0
    %5952 = vmatprep.subr.mxu0 0.0
    %5953 = vmatpush1.msra.mxu0 0.0
    %5954 = vmatprep.subr.mxu0 0.0
    %5955 = vmatpush1.msra.mxu0 0.0
    %5956 = vmatprep.subr.mxu0 0.0
    %5957 = vmatpush1.msra.mxu0 0.0
    %5958 = vmatprep.subr.mxu0 0.0
    %5959 = vmatpush1.msra.mxu0 0.0
    %5960 = vmatprep.subr.mxu0 0.0
    %5961 = vmatpush1.msra.mxu0 0.0
    %5962 = vmatprep.subr.mxu0 0.0
    %5963 = vmatpush1.msra.mxu0 0.0
    %5964 = vmatprep.mubr.f32.mxu0 0.0
    %v5965 = vand.u32 %v5881, 4294901760
    %v5966 = vsub.f32 %v5881, %v5965
    %v5967 = vand.u32 %v5966, 4294901760
    %v5968 = vsub.f32 %v5966, %v5967
    %v5969 = vand.u32 %v5968, 4294901760
    %5970 = vmatmul.mubr.f32.gmra.mrb[0].mxu0 %v5969
    %v5971 = vpop.f32.mrb[0].mxu0
    %v5972 = vadd.f32 0.0, %v5971
    %v5973 = vpop.f32.mrb[0].mxu0
    %5974 = vdwg.mxu0
    %5975 = vmatprep.subr.mxu0 0.0
    %v5976 = vand.u32 %v1365, 4294901760
    %v5977 = vsub.f32 %v1365, %v5976
    %v5978 = vand.u32 %v5977, 4294901760
    %v5979 = vsub.f32 %v5977, %v5978
    %v5980 = vand.u32 %v5979, 4294901760
    %5981 = vmatpush1.msra.mxu0 %v5980
    %5982 = vmatprep.subr.mxu0 0.0
    %v5983 = vand.u32 %v1366, 4294901760
    %v5984 = vsub.f32 %v1366, %v5983
    %v5985 = vand.u32 %v5984, 4294901760
    %v5986 = vsub.f32 %v5984, %v5985
    %v5987 = vand.u32 %v5986, 4294901760
    %5988 = vmatpush1.msra.mxu0 %v5987
    %5989 = vmatprep.subr.mxu0 0.0
    %v5990 = vand.u32 %v1367, 4294901760
    %v5991 = vsub.f32 %v1367, %v5990
    %v5992 = vand.u32 %v5991, 4294901760
    %v5993 = vsub.f32 %v5991, %v5992
    %v5994 = vand.u32 %v5993, 4294901760
    %5995 = vmatpush1.msra.mxu0 %v5994
    %5996 = vmatprep.subr.mxu0 0.0
    %v5997 = vand.u32 %v1368, 4294901760
    %v5998 = vsub.f32 %v1368, %v5997
    %v5999 = vand.u32 %v5998, 4294901760
    %v6000 = vsub.f32 %v5998, %v5999
    %v6001 = vand.u32 %v6000, 4294901760
    %6002 = vmatpush1.msra.mxu0 %v6001
    %6003 = vmatprep.subr.mxu0 0.0
    %v6004 = vand.u32 %v1369, 4294901760
    %v6005 = vsub.f32 %v1369, %v6004
    %v6006 = vand.u32 %v6005, 4294901760
    %v6007 = vsub.f32 %v6005, %v6006
    %v6008 = vand.u32 %v6007, 4294901760
    %6009 = vmatpush1.msra.mxu0 %v6008
    %6010 = vmatprep.subr.mxu0 0.0
    %v6011 = vand.u32 %v1370, 4294901760
    %v6012 = vsub.f32 %v1370, %v6011
    %v6013 = vand.u32 %v6012, 4294901760
    %v6014 = vsub.f32 %v6012, %v6013
    %v6015 = vand.u32 %v6014, 4294901760
    %6016 = vmatpush1.msra.mxu0 %v6015
    %6017 = vmatprep.subr.mxu0 0.0
    %v6018 = vand.u32 %v1371, 4294901760
    %v6019 = vsub.f32 %v1371, %v6018
    %v6020 = vand.u32 %v6019, 4294901760
    %v6021 = vsub.f32 %v6019, %v6020
    %v6022 = vand.u32 %v6021, 4294901760
    %6023 = vmatpush1.msra.mxu0 %v6022
    %6024 = vmatprep.subr.mxu0 0.0
    %v6025 = vand.u32 %v1372, 4294901760
    %v6026 = vsub.f32 %v1372, %v6025
    %v6027 = vand.u32 %v6026, 4294901760
    %v6028 = vsub.f32 %v6026, %v6027
    %v6029 = vand.u32 %v6028, 4294901760
    %6030 = vmatpush1.msra.mxu0 %v6029
    %6031 = vmatprep.subr.mxu0 0.0
    %v6032 = vand.u32 %v1373, 4294901760
    %v6033 = vsub.f32 %v1373, %v6032
    %v6034 = vand.u32 %v6033, 4294901760
    %v6035 = vsub.f32 %v6033, %v6034
    %v6036 = vand.u32 %v6035, 4294901760
    %6037 = vmatpush1.msra.mxu0 %v6036
    %6038 = vmatprep.subr.mxu0 0.0
    %v6039 = vand.u32 %v1374, 4294901760
    %v6040 = vsub.f32 %v1374, %v6039
    %v6041 = vand.u32 %v6040, 4294901760
    %v6042 = vsub.f32 %v6040, %v6041
    %v6043 = vand.u32 %v6042, 4294901760
    %6044 = vmatpush1.msra.mxu0 %v6043
    %6045 = vmatprep.subr.mxu0 0.0
    %v6046 = vand.u32 %v1375, 4294901760
    %v6047 = vsub.f32 %v1375, %v6046
    %v6048 = vand.u32 %v6047, 4294901760
    %v6049 = vsub.f32 %v6047, %v6048
    %v6050 = vand.u32 %v6049, 4294901760
    %6051 = vmatpush1.msra.mxu0 %v6050
    %6052 = vmatprep.subr.mxu0 0.0
    %v6053 = vand.u32 %v1376, 4294901760
    %v6054 = vsub.f32 %v1376, %v6053
    %v6055 = vand.u32 %v6054, 4294901760
    %v6056 = vsub.f32 %v6054, %v6055
    %v6057 = vand.u32 %v6056, 4294901760
    %6058 = vmatpush1.msra.mxu0 %v6057
    %6059 = vmatprep.subr.mxu0 0.0
    %v6060 = vand.u32 %v1377, 4294901760
    %v6061 = vsub.f32 %v1377, %v6060
    %v6062 = vand.u32 %v6061, 4294901760
    %v6063 = vsub.f32 %v6061, %v6062
    %v6064 = vand.u32 %v6063, 4294901760
    %6065 = vmatpush1.msra.mxu0 %v6064
    %6066 = vmatprep.subr.mxu0 0.0
    %v6067 = vand.u32 %v1378, 4294901760
    %v6068 = vsub.f32 %v1378, %v6067
    %v6069 = vand.u32 %v6068, 4294901760
    %v6070 = vsub.f32 %v6068, %v6069
    %v6071 = vand.u32 %v6070, 4294901760
    %6072 = vmatpush1.msra.mxu0 %v6071
    %6073 = vmatprep.subr.mxu0 0.0
    %v6074 = vand.u32 %v1379, 4294901760
    %v6075 = vsub.f32 %v1379, %v6074
    %v6076 = vand.u32 %v6075, 4294901760
    %v6077 = vsub.f32 %v6075, %v6076
    %v6078 = vand.u32 %v6077, 4294901760
    %6079 = vmatpush1.msra.mxu0 %v6078
    %6080 = vmatprep.subr.mxu0 0.0
    %v6081 = vand.u32 %v1380, 4294901760
    %v6082 = vsub.f32 %v1380, %v6081
    %v6083 = vand.u32 %v6082, 4294901760
    %v6084 = vsub.f32 %v6082, %v6083
    %v6085 = vand.u32 %v6084, 4294901760
    %6086 = vmatpush1.msra.mxu0 %v6085
    %6087 = vmatprep.subr.mxu0 0.0
    %6088 = vmatpush1.msra.mxu0 0.0
    %6089 = vmatprep.subr.mxu0 0.0
    %6090 = vmatpush1.msra.mxu0 0.0
    %6091 = vmatprep.subr.mxu0 0.0
    %6092 = vmatpush1.msra.mxu0 0.0
    %6093 = vmatprep.subr.mxu0 0.0
    %6094 = vmatpush1.msra.mxu0 0.0
    %6095 = vmatprep.subr.mxu0 0.0
    %6096 = vmatpush1.msra.mxu0 0.0
    %6097 = vmatprep.subr.mxu0 0.0
    %6098 = vmatpush1.msra.mxu0 0.0
    %6099 = vmatprep.subr.mxu0 0.0
    %6100 = vmatpush1.msra.mxu0 0.0
    %6101 = vmatprep.subr.mxu0 0.0
    %6102 = vmatpush1.msra.mxu0 0.0
    %6103 = vmatprep.subr.mxu0 0.0
    %6104 = vmatpush1.msra.mxu0 0.0
    %6105 = vmatprep.subr.mxu0 0.0
    %6106 = vmatpush1.msra.mxu0 0.0
    %6107 = vmatprep.subr.mxu0 0.0
    %6108 = vmatpush1.msra.mxu0 0.0
    %6109 = vmatprep.subr.mxu0 0.0
    %6110 = vmatpush1.msra.mxu0 0.0
    %6111 = vmatprep.subr.mxu0 0.0
    %6112 = vmatpush1.msra.mxu0 0.0
    %6113 = vmatprep.subr.mxu0 0.0
    %6114 = vmatpush1.msra.mxu0 0.0
    %6115 = vmatprep.subr.mxu0 0.0
    %6116 = vmatpush1.msra.mxu0 0.0
    %6117 = vmatprep.subr.mxu0 0.0
    %6118 = vmatpush1.msra.mxu0 0.0
    %6119 = vmatprep.mubr.f32.mxu0 0.0
    %v6120 = vand.u32 %v5881, 4294901760
    %6121 = vmatmul.mubr.f32.gmra.mrb[0].mxu0 %v6120
    %v6122 = vpop.f32.mrb[0].mxu0
    %v6123 = vadd.f32 %v5972, %v6122
    %v6124 = vpop.f32.mrb[0].mxu0
    %6125 = vdwg.mxu0
    %6126 = vmatprep.subr.mxu0 0.0
    %v6127 = vand.u32 %v1365, 4294901760
    %v6128 = vsub.f32 %v1365, %v6127
    %6129 = vmatpush1.msra.mxu0 %v6128
    %6130 = vmatprep.subr.mxu0 0.0
    %v6131 = vand.u32 %v1366, 4294901760
    %v6132 = vsub.f32 %v1366, %v6131
    %6133 = vmatpush1.msra.mxu0 %v6132
    %6134 = vmatprep.subr.mxu0 0.0
    %v6135 = vand.u32 %v1367, 4294901760
    %v6136 = vsub.f32 %v1367, %v6135
    %6137 = vmatpush1.msra.mxu0 %v6136
    %6138 = vmatprep.subr.mxu0 0.0
    %v6139 = vand.u32 %v1368, 4294901760
    %v6140 = vsub.f32 %v1368, %v6139
    %6141 = vmatpush1.msra.mxu0 %v6140
    %6142 = vmatprep.subr.mxu0 0.0
    %v6143 = vand.u32 %v1369, 4294901760
    %v6144 = vsub.f32 %v1369, %v6143
    %6145 = vmatpush1.msra.mxu0 %v6144
    %6146 = vmatprep.subr.mxu0 0.0
    %v6147 = vand.u32 %v1370, 4294901760
    %v6148 = vsub.f32 %v1370, %v6147
    %6149 = vmatpush1.msra.mxu0 %v6148
    %6150 = vmatprep.subr.mxu0 0.0
    %v6151 = vand.u32 %v1371, 4294901760
    %v6152 = vsub.f32 %v1371, %v6151
    %6153 = vmatpush1.msra.mxu0 %v6152
    %6154 = vmatprep.subr.mxu0 0.0
    %v6155 = vand.u32 %v1372, 4294901760
    %v6156 = vsub.f32 %v1372, %v6155
    %6157 = vmatpush1.msra.mxu0 %v6156
    %6158 = vmatprep.subr.mxu0 0.0
    %v6159 = vand.u32 %v1373, 4294901760
    %v6160 = vsub.f32 %v1373, %v6159
    %6161 = vmatpush1.msra.mxu0 %v6160
    %6162 = vmatprep.subr.mxu0 0.0
    %v6163 = vand.u32 %v1374, 4294901760
    %v6164 = vsub.f32 %v1374, %v6163
    %6165 = vmatpush1.msra.mxu0 %v6164
    %6166 = vmatprep.subr.mxu0 0.0
    %v6167 = vand.u32 %v1375, 4294901760
    %v6168 = vsub.f32 %v1375, %v6167
    %6169 = vmatpush1.msra.mxu0 %v6168
    %6170 = vmatprep.subr.mxu0 0.0
    %v6171 = vand.u32 %v1376, 4294901760
    %v6172 = vsub.f32 %v1376, %v6171
    %6173 = vmatpush1.msra.mxu0 %v6172
    %6174 = vmatprep.subr.mxu0 0.0
    %v6175 = vand.u32 %v1377, 4294901760
    %v6176 = vsub.f32 %v1377, %v6175
    %6177 = vmatpush1.msra.mxu0 %v6176
    %6178 = vmatprep.subr.mxu0 0.0
    %v6179 = vand.u32 %v1378, 4294901760
    %v6180 = vsub.f32 %v1378, %v6179
    %6181 = vmatpush1.msra.mxu0 %v6180
    %6182 = vmatprep.subr.mxu0 0.0
    %v6183 = vand.u32 %v1379, 4294901760
    %v6184 = vsub.f32 %v1379, %v6183
    %6185 = vmatpush1.msra.mxu0 %v6184
    %6186 = vmatprep.subr.mxu0 0.0
    %v6187 = vand.u32 %v1380, 4294901760
    %v6188 = vsub.f32 %v1380, %v6187
    %6189 = vmatpush1.msra.mxu0 %v6188
    %6190 = vmatprep.subr.mxu0 0.0
    %6191 = vmatpush1.msra.mxu0 0.0
    %6192 = vmatprep.subr.mxu0 0.0
    %6193 = vmatpush1.msra.mxu0 0.0
    %6194 = vmatprep.subr.mxu0 0.0
    %6195 = vmatpush1.msra.mxu0 0.0
    %6196 = vmatprep.subr.mxu0 0.0
    %6197 = vmatpush1.msra.mxu0 0.0
    %6198 = vmatprep.subr.mxu0 0.0
    %6199 = vmatpush1.msra.mxu0 0.0
    %6200 = vmatprep.subr.mxu0 0.0
    %6201 = vmatpush1.msra.mxu0 0.0
    %6202 = vmatprep.subr.mxu0 0.0
    %6203 = vmatpush1.msra.mxu0 0.0
    %6204 = vmatprep.subr.mxu0 0.0
    %6205 = vmatpush1.msra.mxu0 0.0
    %6206 = vmatprep.subr.mxu0 0.0
    %6207 = vmatpush1.msra.mxu0 0.0
    %6208 = vmatprep.subr.mxu0 0.0
    %6209 = vmatpush1.msra.mxu0 0.0
    %6210 = vmatprep.subr.mxu0 0.0
    %6211 = vmatpush1.msra.mxu0 0.0
    %6212 = vmatprep.subr.mxu0 0.0
    %6213 = vmatpush1.msra.mxu0 0.0
    %6214 = vmatprep.subr.mxu0 0.0
    %6215 = vmatpush1.msra.mxu0 0.0
    %6216 = vmatprep.subr.mxu0 0.0
    %6217 = vmatpush1.msra.mxu0 0.0
    %6218 = vmatprep.subr.mxu0 0.0
    %6219 = vmatpush1.msra.mxu0 0.0
    %6220 = vmatprep.subr.mxu0 0.0
    %6221 = vmatpush1.msra.mxu0 0.0
    %6222 = vmatprep.mubr.f32.mxu0 0.0
    %v6223 = vand.u32 %v5881, 4294901760
    %v6224 = vsub.f32 %v5881, %v6223
    %6225 = vmatmul.mubr.f32.gmra.mrb[0].mxu0 %v6224
    %v6226 = vpop.f32.mrb[0].mxu0
    %v6227 = vadd.f32 %v6123, %v6226
    %v6228 = vpop.f32.mrb[0].mxu0
    %6229 = vdwg.mxu0
    %6230 = vmatprep.subr.mxu0 0.0
    %v6231 = vand.u32 %v1365, 4294901760
    %6232 = vmatpush1.msra.mxu0 %v6231
    %6233 = vmatprep.subr.mxu0 0.0
    %v6234 = vand.u32 %v1366, 4294901760
    %6235 = vmatpush1.msra.mxu0 %v6234
    %6236 = vmatprep.subr.mxu0 0.0
    %v6237 = vand.u32 %v1367, 4294901760
    %6238 = vmatpush1.msra.mxu0 %v6237
    %6239 = vmatprep.subr.mxu0 0.0
    %v6240 = vand.u32 %v1368, 4294901760
    %6241 = vmatpush1.msra.mxu0 %v6240
    %6242 = vmatprep.subr.mxu0 0.0
    %v6243 = vand.u32 %v1369, 4294901760
    %6244 = vmatpush1.msra.mxu0 %v6243
    %6245 = vmatprep.subr.mxu0 0.0
    %v6246 = vand.u32 %v1370, 4294901760
    %6247 = vmatpush1.msra.mxu0 %v6246
    %6248 = vmatprep.subr.mxu0 0.0
    %v6249 = vand.u32 %v1371, 4294901760
    %6250 = vmatpush1.msra.mxu0 %v6249
    %6251 = vmatprep.subr.mxu0 0.0
    %v6252 = vand.u32 %v1372, 4294901760
    %6253 = vmatpush1.msra.mxu0 %v6252
    %6254 = vmatprep.subr.mxu0 0.0
    %v6255 = vand.u32 %v1373, 4294901760
    %6256 = vmatpush1.msra.mxu0 %v6255
    %6257 = vmatprep.subr.mxu0 0.0
    %v6258 = vand.u32 %v1374, 4294901760
    %6259 = vmatpush1.msra.mxu0 %v6258
    %6260 = vmatprep.subr.mxu0 0.0
    %v6261 = vand.u32 %v1375, 4294901760
    %6262 = vmatpush1.msra.mxu0 %v6261
    %6263 = vmatprep.subr.mxu0 0.0
    %v6264 = vand.u32 %v1376, 4294901760
    %6265 = vmatpush1.msra.mxu0 %v6264
    %6266 = vmatprep.subr.mxu0 0.0
    %v6267 = vand.u32 %v1377, 4294901760
    %6268 = vmatpush1.msra.mxu0 %v6267
    %6269 = vmatprep.subr.mxu0 0.0
    %v6270 = vand.u32 %v1378, 4294901760
    %6271 = vmatpush1.msra.mxu0 %v6270
    %6272 = vmatprep.subr.mxu0 0.0
    %v6273 = vand.u32 %v1379, 4294901760
    %6274 = vmatpush1.msra.mxu0 %v6273
    %6275 = vmatprep.subr.mxu0 0.0
    %v6276 = vand.u32 %v1380, 4294901760
    %6277 = vmatpush1.msra.mxu0 %v6276
    %6278 = vmatprep.subr.mxu0 0.0
    %6279 = vmatpush1.msra.mxu0 0.0
    %6280 = vmatprep.subr.mxu0 0.0
    %6281 = vmatpush1.msra.mxu0 0.0
    %6282 = vmatprep.subr.mxu0 0.0
    %6283 = vmatpush1.msra.mxu0 0.0
    %6284 = vmatprep.subr.mxu0 0.0
    %6285 = vmatpush1.msra.mxu0 0.0
    %6286 = vmatprep.subr.mxu0 0.0
    %6287 = vmatpush1.msra.mxu0 0.0
    %6288 = vmatprep.subr.mxu0 0.0
    %6289 = vmatpush1.msra.mxu0 0.0
    %6290 = vmatprep.subr.mxu0 0.0
    %6291 = vmatpush1.msra.mxu0 0.0
    %6292 = vmatprep.subr.mxu0 0.0
    %6293 = vmatpush1.msra.mxu0 0.0
    %6294 = vmatprep.subr.mxu0 0.0
    %6295 = vmatpush1.msra.mxu0 0.0
    %6296 = vmatprep.subr.mxu0 0.0
    %6297 = vmatpush1.msra.mxu0 0.0
    %6298 = vmatprep.subr.mxu0 0.0
    %6299 = vmatpush1.msra.mxu0 0.0
    %6300 = vmatprep.subr.mxu0 0.0
    %6301 = vmatpush1.msra.mxu0 0.0
    %6302 = vmatprep.subr.mxu0 0.0
    %6303 = vmatpush1.msra.mxu0 0.0
    %6304 = vmatprep.subr.mxu0 0.0
    %6305 = vmatpush1.msra.mxu0 0.0
    %6306 = vmatprep.subr.mxu0 0.0
    %6307 = vmatpush1.msra.mxu0 0.0
    %6308 = vmatprep.subr.mxu0 0.0
    %6309 = vmatpush1.msra.mxu0 0.0
    %6310 = vmatprep.mubr.f32.mxu0 0.0
    %v6311 = vand.u32 %v5881, 4294901760
    %v6312 = vsub.f32 %v5881, %v6311
    %v6313 = vand.u32 %v6312, 4294901760
    %6314 = vmatmul.mubr.f32.gmra.mrb[0].mxu0 %v6313
    %v6315 = vpop.f32.mrb[0].mxu0
    %v6316 = vadd.f32 %v6227, %v6315
    %v6317 = vpop.f32.mrb[0].mxu0
    %6318 = vdwg.mxu0
    %6319 = vmatprep.subr.mxu0 0.0
    %v6320 = vand.u32 %v1365, 4294901760
    %v6321 = vsub.f32 %v1365, %v6320
    %v6322 = vand.u32 %v6321, 4294901760
    %6323 = vmatpush1.msra.mxu0 %v6322
    %6324 = vmatprep.subr.mxu0 0.0
    %v6325 = vand.u32 %v1366, 4294901760
    %v6326 = vsub.f32 %v1366, %v6325
    %v6327 = vand.u32 %v6326, 4294901760
    %6328 = vmatpush1.msra.mxu0 %v6327
    %6329 = vmatprep.subr.mxu0 0.0
    %v6330 = vand.u32 %v1367, 4294901760
    %v6331 = vsub.f32 %v1367, %v6330
    %v6332 = vand.u32 %v6331, 4294901760
    %6333 = vmatpush1.msra.mxu0 %v6332
    %6334 = vmatprep.subr.mxu0 0.0
    %v6335 = vand.u32 %v1368, 4294901760
    %v6336 = vsub.f32 %v1368, %v6335
    %v6337 = vand.u32 %v6336, 4294901760
    %6338 = vmatpush1.msra.mxu0 %v6337
    %6339 = vmatprep.subr.mxu0 0.0
    %v6340 = vand.u32 %v1369, 4294901760
    %v6341 = vsub.f32 %v1369, %v6340
    %v6342 = vand.u32 %v6341, 4294901760
    %6343 = vmatpush1.msra.mxu0 %v6342
    %6344 = vmatprep.subr.mxu0 0.0
    %v6345 = vand.u32 %v1370, 4294901760
    %v6346 = vsub.f32 %v1370, %v6345
    %v6347 = vand.u32 %v6346, 4294901760
    %6348 = vmatpush1.msra.mxu0 %v6347
    %6349 = vmatprep.subr.mxu0 0.0
    %v6350 = vand.u32 %v1371, 4294901760
    %v6351 = vsub.f32 %v1371, %v6350
    %v6352 = vand.u32 %v6351, 4294901760
    %6353 = vmatpush1.msra.mxu0 %v6352
    %6354 = vmatprep.subr.mxu0 0.0
    %v6355 = vand.u32 %v1372, 4294901760
    %v6356 = vsub.f32 %v1372, %v6355
    %v6357 = vand.u32 %v6356, 4294901760
    %6358 = vmatpush1.msra.mxu0 %v6357
    %6359 = vmatprep.subr.mxu0 0.0
    %v6360 = vand.u32 %v1373, 4294901760
    %v6361 = vsub.f32 %v1373, %v6360
    %v6362 = vand.u32 %v6361, 4294901760
    %6363 = vmatpush1.msra.mxu0 %v6362
    %6364 = vmatprep.subr.mxu0 0.0
    %v6365 = vand.u32 %v1374, 4294901760
    %v6366 = vsub.f32 %v1374, %v6365
    %v6367 = vand.u32 %v6366, 4294901760
    %6368 = vmatpush1.msra.mxu0 %v6367
    %6369 = vmatprep.subr.mxu0 0.0
    %v6370 = vand.u32 %v1375, 4294901760
    %v6371 = vsub.f32 %v1375, %v6370
    %v6372 = vand.u32 %v6371, 4294901760
    %6373 = vmatpush1.msra.mxu0 %v6372
    %6374 = vmatprep.subr.mxu0 0.0
    %v6375 = vand.u32 %v1376, 4294901760
    %v6376 = vsub.f32 %v1376, %v6375
    %v6377 = vand.u32 %v6376, 4294901760
    %6378 = vmatpush1.msra.mxu0 %v6377
    %6379 = vmatprep.subr.mxu0 0.0
    %v6380 = vand.u32 %v1377, 4294901760
    %v6381 = vsub.f32 %v1377, %v6380
    %v6382 = vand.u32 %v6381, 4294901760
    %6383 = vmatpush1.msra.mxu0 %v6382
    %6384 = vmatprep.subr.mxu0 0.0
    %v6385 = vand.u32 %v1378, 4294901760
    %v6386 = vsub.f32 %v1378, %v6385
    %v6387 = vand.u32 %v6386, 4294901760
    %6388 = vmatpush1.msra.mxu0 %v6387
    %6389 = vmatprep.subr.mxu0 0.0
    %v6390 = vand.u32 %v1379, 4294901760
    %v6391 = vsub.f32 %v1379, %v6390
    %v6392 = vand.u32 %v6391, 4294901760
    %6393 = vmatpush1.msra.mxu0 %v6392
    %6394 = vmatprep.subr.mxu0 0.0
    %v6395 = vand.u32 %v1380, 4294901760
    %v6396 = vsub.f32 %v1380, %v6395
    %v6397 = vand.u32 %v6396, 4294901760
    %6398 = vmatpush1.msra.mxu0 %v6397
    %6399 = vmatprep.subr.mxu0 0.0
    %6400 = vmatpush1.msra.mxu0 0.0
    %6401 = vmatprep.subr.mxu0 0.0
    %6402 = vmatpush1.msra.mxu0 0.0
    %6403 = vmatprep.subr.mxu0 0.0
    %6404 = vmatpush1.msra.mxu0 0.0
    %6405 = vmatprep.subr.mxu0 0.0
    %6406 = vmatpush1.msra.mxu0 0.0
    %6407 = vmatprep.subr.mxu0 0.0
    %6408 = vmatpush1.msra.mxu0 0.0
    %6409 = vmatprep.subr.mxu0 0.0
    %6410 = vmatpush1.msra.mxu0 0.0
    %6411 = vmatprep.subr.mxu0 0.0
    %6412 = vmatpush1.msra.mxu0 0.0
    %6413 = vmatprep.subr.mxu0 0.0
    %6414 = vmatpush1.msra.mxu0 0.0
    %6415 = vmatprep.subr.mxu0 0.0
    %6416 = vmatpush1.msra.mxu0 0.0
    %6417 = vmatprep.subr.mxu0 0.0
    %6418 = vmatpush1.msra.mxu0 0.0
    %6419 = vmatprep.subr.mxu0 0.0
    %6420 = vmatpush1.msra.mxu0 0.0
    %6421 = vmatprep.subr.mxu0 0.0
    %6422 = vmatpush1.msra.mxu0 0.0
    %6423 = vmatprep.subr.mxu0 0.0
    %6424 = vmatpush1.msra.mxu0 0.0
    %6425 = vmatprep.subr.mxu0 0.0
    %6426 = vmatpush1.msra.mxu0 0.0
    %6427 = vmatprep.subr.mxu0 0.0
    %6428 = vmatpush1.msra.mxu0 0.0
    %6429 = vmatprep.subr.mxu0 0.0
    %6430 = vmatpush1.msra.mxu0 0.0
    %6431 = vmatprep.mubr.f32.mxu0 0.0
    %v6432 = vand.u32 %v5881, 4294901760
    %6433 = vmatmul.mubr.f32.gmra.mrb[0].mxu0 %v6432
    %v6434 = vpop.f32.mrb[0].mxu0
    %v6435 = vadd.f32 %v6316, %v6434
    %v6436 = vpop.f32.mrb[0].mxu0
    %6437 = vdwg.mxu0
    %6438 = vmatprep.subr.mxu0 0.0
    %v6439 = vand.u32 %v1365, 4294901760
    %6440 = vmatpush1.msra.mxu0 %v6439
    %6441 = vmatprep.subr.mxu0 0.0
    %v6442 = vand.u32 %v1366, 4294901760
    %6443 = vmatpush1.msra.mxu0 %v6442
    %6444 = vmatprep.subr.mxu0 0.0
    %v6445 = vand.u32 %v1367, 4294901760
    %6446 = vmatpush1.msra.mxu0 %v6445
    %6447 = vmatprep.subr.mxu0 0.0
    %v6448 = vand.u32 %v1368, 4294901760
    %6449 = vmatpush1.msra.mxu0 %v6448
    %6450 = vmatprep.subr.mxu0 0.0
    %v6451 = vand.u32 %v1369, 4294901760
    %6452 = vmatpush1.msra.mxu0 %v6451
    %6453 = vmatprep.subr.mxu0 0.0
    %v6454 = vand.u32 %v1370, 4294901760
    %6455 = vmatpush1.msra.mxu0 %v6454
    %6456 = vmatprep.subr.mxu0 0.0
    %v6457 = vand.u32 %v1371, 4294901760
    %6458 = vmatpush1.msra.mxu0 %v6457
    %6459 = vmatprep.subr.mxu0 0.0
    %v6460 = vand.u32 %v1372, 4294901760
    %6461 = vmatpush1.msra.mxu0 %v6460
    %6462 = vmatprep.subr.mxu0 0.0
    %v6463 = vand.u32 %v1373, 4294901760
    %6464 = vmatpush1.msra.mxu0 %v6463
    %6465 = vmatprep.subr.mxu0 0.0
    %v6466 = vand.u32 %v1374, 4294901760
    %6467 = vmatpush1.msra.mxu0 %v6466
    %6468 = vmatprep.subr.mxu0 0.0
    %v6469 = vand.u32 %v1375, 4294901760
    %6470 = vmatpush1.msra.mxu0 %v6469
    %6471 = vmatprep.subr.mxu0 0.0
    %v6472 = vand.u32 %v1376, 4294901760
    %6473 = vmatpush1.msra.mxu0 %v6472
    %6474 = vmatprep.subr.mxu0 0.0
    %v6475 = vand.u32 %v1377, 4294901760
    %6476 = vmatpush1.msra.mxu0 %v6475
    %6477 = vmatprep.subr.mxu0 0.0
    %v6478 = vand.u32 %v1378, 4294901760
    %6479 = vmatpush1.msra.mxu0 %v6478
    %6480 = vmatprep.subr.mxu0 0.0
    %v6481 = vand.u32 %v1379, 4294901760
    %6482 = vmatpush1.msra.mxu0 %v6481
    %6483 = vmatprep.subr.mxu0 0.0
    %v6484 = vand.u32 %v1380, 4294901760
    %6485 = vmatpush1.msra.mxu0 %v6484
    %6486 = vmatprep.subr.mxu0 0.0
    %6487 = vmatpush1.msra.mxu0 0.0
    %6488 = vmatprep.subr.mxu0 0.0
    %6489 = vmatpush1.msra.mxu0 0.0
    %6490 = vmatprep.subr.mxu0 0.0
    %6491 = vmatpush1.msra.mxu0 0.0
    %6492 = vmatprep.subr.mxu0 0.0
    %6493 = vmatpush1.msra.mxu0 0.0
    %6494 = vmatprep.subr.mxu0 0.0
    %6495 = vmatpush1.msra.mxu0 0.0
    %6496 = vmatprep.subr.mxu0 0.0
    %6497 = vmatpush1.msra.mxu0 0.0
    %6498 = vmatprep.subr.mxu0 0.0
    %6499 = vmatpush1.msra.mxu0 0.0
    %6500 = vmatprep.subr.mxu0 0.0
    %6501 = vmatpush1.msra.mxu0 0.0
    %6502 = vmatprep.subr.mxu0 0.0
    %6503 = vmatpush1.msra.mxu0 0.0
    %6504 = vmatprep.subr.mxu0 0.0
    %6505 = vmatpush1.msra.mxu0 0.0
    %6506 = vmatprep.subr.mxu0 0.0
    %6507 = vmatpush1.msra.mxu0 0.0
    %6508 = vmatprep.subr.mxu0 0.0
    %6509 = vmatpush1.msra.mxu0 0.0
    %6510 = vmatprep.subr.mxu0 0.0
    %6511 = vmatpush1.msra.mxu0 0.0
    %6512 = vmatprep.subr.mxu0 0.0
    %6513 = vmatpush1.msra.mxu0 0.0
    %6514 = vmatprep.subr.mxu0 0.0
    %6515 = vmatpush1.msra.mxu0 0.0
    %6516 = vmatprep.subr.mxu0 0.0
    %6517 = vmatpush1.msra.mxu0 0.0
    %6518 = vmatprep.mubr.f32.mxu0 0.0
    %v6519 = vand.u32 %v5881, 4294901760
    %6520 = vmatmul.mubr.f32.gmra.mrb[0].mxu0 %v6519
    %v6521 = vpop.f32.mrb[0].mxu0
    %v6522 = vadd.f32 %v6435, %v6521
    %v6523 = vpop.f32.mrb[0].mxu0
    %6524 = vdwg.mxu0
    %v6525 = vadd.f32 %v5883, %v6522
    %v6526 = vtanh.pop %v6525
    %s6527 = scalar_lea.vmem [#allocation2], 64
    %v6528 = vld [vmem:[%s6527] sm:$0xff]
    %6529 = vmatprep.subr.mxu0 0.0
    %v6530 = vand.u32 %v1365, 4294901760
    %6531 = vmatpush1.msra.mxu0 %v6530
    %6532 = vmatprep.subr.mxu0 0.0
    %v6533 = vand.u32 %v1366, 4294901760
    %6534 = vmatpush1.msra.mxu0 %v6533
    %6535 = vmatprep.subr.mxu0 0.0
    %v6536 = vand.u32 %v1367, 4294901760
    %6537 = vmatpush1.msra.mxu0 %v6536
    %6538 = vmatprep.subr.mxu0 0.0
    %v6539 = vand.u32 %v1368, 4294901760
    %6540 = vmatpush1.msra.mxu0 %v6539
    %6541 = vmatprep.subr.mxu0 0.0
    %v6542 = vand.u32 %v1369, 4294901760
    %6543 = vmatpush1.msra.mxu0 %v6542
    %6544 = vmatprep.subr.mxu0 0.0
    %v6545 = vand.u32 %v1370, 4294901760
    %6546 = vmatpush1.msra.mxu0 %v6545
    %6547 = vmatprep.subr.mxu0 0.0
    %v6548 = vand.u32 %v1371, 4294901760
    %6549 = vmatpush1.msra.mxu0 %v6548
    %6550 = vmatprep.subr.mxu0 0.0
    %v6551 = vand.u32 %v1372, 4294901760
    %6552 = vmatpush1.msra.mxu0 %v6551
    %6553 = vmatprep.subr.mxu0 0.0
    %v6554 = vand.u32 %v1373, 4294901760
    %6555 = vmatpush1.msra.mxu0 %v6554
    %6556 = vmatprep.subr.mxu0 0.0
    %v6557 = vand.u32 %v1374, 4294901760
    %6558 = vmatpush1.msra.mxu0 %v6557
    %6559 = vmatprep.subr.mxu0 0.0
    %v6560 = vand.u32 %v1375, 4294901760
    %6561 = vmatpush1.msra.mxu0 %v6560
    %6562 = vmatprep.subr.mxu0 0.0
    %v6563 = vand.u32 %v1376, 4294901760
    %6564 = vmatpush1.msra.mxu0 %v6563
    %6565 = vmatprep.subr.mxu0 0.0
    %v6566 = vand.u32 %v1377, 4294901760
    %6567 = vmatpush1.msra.mxu0 %v6566
    %6568 = vmatprep.subr.mxu0 0.0
    %v6569 = vand.u32 %v1378, 4294901760
    %6570 = vmatpush1.msra.mxu0 %v6569
    %6571 = vmatprep.subr.mxu0 0.0
    %v6572 = vand.u32 %v1379, 4294901760
    %6573 = vmatpush1.msra.mxu0 %v6572
    %6574 = vmatprep.subr.mxu0 0.0
    %v6575 = vand.u32 %v1380, 4294901760
    %6576 = vmatpush1.msra.mxu0 %v6575
    %6577 = vmatprep.subr.mxu0 0.0
    %6578 = vmatpush1.msra.mxu0 0.0
    %6579 = vmatprep.subr.mxu0 0.0
    %6580 = vmatpush1.msra.mxu0 0.0
    %6581 = vmatprep.subr.mxu0 0.0
    %6582 = vmatpush1.msra.mxu0 0.0
    %6583 = vmatprep.subr.mxu0 0.0
    %6584 = vmatpush1.msra.mxu0 0.0
    %6585 = vmatprep.subr.mxu0 0.0
    %6586 = vmatpush1.msra.mxu0 0.0
    %6587 = vmatprep.subr.mxu0 0.0
    %6588 = vmatpush1.msra.mxu0 0.0
    %6589 = vmatprep.subr.mxu0 0.0
    %6590 = vmatpush1.msra.mxu0 0.0
    %6591 = vmatprep.subr.mxu0 0.0
    %6592 = vmatpush1.msra.mxu0 0.0
    %6593 = vmatprep.subr.mxu0 0.0
    %6594 = vmatpush1.msra.mxu0 0.0
    %6595 = vmatprep.subr.mxu0 0.0
    %6596 = vmatpush1.msra.mxu0 0.0
    %6597 = vmatprep.subr.mxu0 0.0
    %6598 = vmatpush1.msra.mxu0 0.0
    %6599 = vmatprep.subr.mxu0 0.0
    %6600 = vmatpush1.msra.mxu0 0.0
    %6601 = vmatprep.subr.mxu0 0.0
    %6602 = vmatpush1.msra.mxu0 0.0
    %6603 = vmatprep.subr.mxu0 0.0
    %6604 = vmatpush1.msra.mxu0 0.0
    %6605 = vmatprep.subr.mxu0 0.0
    %6606 = vmatpush1.msra.mxu0 0.0
    %6607 = vmatprep.subr.mxu0 0.0
    %6608 = vmatpush1.msra.mxu0 0.0
    %6609 = vmatprep.mubr.f32.mxu0 0.0
    %v6610 = vand.u32 %v6526, 4294901760
    %v6611 = vsub.f32 %v6526, %v6610
    %v6612 = vand.u32 %v6611, 4294901760
    %v6613 = vsub.f32 %v6611, %v6612
    %v6614 = vand.u32 %v6613, 4294901760
    %6615 = vmatmul.mubr.f32.gmra.mrb[0].mxu0 %v6614
    %v6616 = vpop.f32.mrb[0].mxu0
    %v6617 = vadd.f32 0.0, %v6616
    %v6618 = vpop.f32.mrb[0].mxu0
    %6619 = vdwg.mxu0
    %6620 = vmatprep.subr.mxu0 0.0
    %v6621 = vand.u32 %v1365, 4294901760
    %v6622 = vsub.f32 %v1365, %v6621
    %v6623 = vand.u32 %v6622, 4294901760
    %v6624 = vsub.f32 %v6622, %v6623
    %v6625 = vand.u32 %v6624, 4294901760
    %6626 = vmatpush1.msra.mxu0 %v6625
    %6627 = vmatprep.subr.mxu0 0.0
    %v6628 = vand.u32 %v1366, 4294901760
    %v6629 = vsub.f32 %v1366, %v6628
    %v6630 = vand.u32 %v6629, 4294901760
    %v6631 = vsub.f32 %v6629, %v6630
    %v6632 = vand.u32 %v6631, 4294901760
    %6633 = vmatpush1.msra.mxu0 %v6632
    %6634 = vmatprep.subr.mxu0 0.0
    %v6635 = vand.u32 %v1367, 4294901760
    %v6636 = vsub.f32 %v1367, %v6635
    %v6637 = vand.u32 %v6636, 4294901760
    %v6638 = vsub.f32 %v6636, %v6637
    %v6639 = vand.u32 %v6638, 4294901760
    %6640 = vmatpush1.msra.mxu0 %v6639
    %6641 = vmatprep.subr.mxu0 0.0
    %v6642 = vand.u32 %v1368, 4294901760
    %v6643 = vsub.f32 %v1368, %v6642
    %v6644 = vand.u32 %v6643, 4294901760
    %v6645 = vsub.f32 %v6643, %v6644
    %v6646 = vand.u32 %v6645, 4294901760
    %6647 = vmatpush1.msra.mxu0 %v6646
    %6648 = vmatprep.subr.mxu0 0.0
    %v6649 = vand.u32 %v1369, 4294901760
    %v6650 = vsub.f32 %v1369, %v6649
    %v6651 = vand.u32 %v6650, 4294901760
    %v6652 = vsub.f32 %v6650, %v6651
    %v6653 = vand.u32 %v6652, 4294901760
    %6654 = vmatpush1.msra.mxu0 %v6653
    %6655 = vmatprep.subr.mxu0 0.0
    %v6656 = vand.u32 %v1370, 4294901760
    %v6657 = vsub.f32 %v1370, %v6656
    %v6658 = vand.u32 %v6657, 4294901760
    %v6659 = vsub.f32 %v6657, %v6658
    %v6660 = vand.u32 %v6659, 4294901760
    %6661 = vmatpush1.msra.mxu0 %v6660
    %6662 = vmatprep.subr.mxu0 0.0
    %v6663 = vand.u32 %v1371, 4294901760
    %v6664 = vsub.f32 %v1371, %v6663
    %v6665 = vand.u32 %v6664, 4294901760
    %v6666 = vsub.f32 %v6664, %v6665
    %v6667 = vand.u32 %v6666, 4294901760
    %6668 = vmatpush1.msra.mxu0 %v6667
    %6669 = vmatprep.subr.mxu0 0.0
    %v6670 = vand.u32 %v1372, 4294901760
    %v6671 = vsub.f32 %v1372, %v6670
    %v6672 = vand.u32 %v6671, 4294901760
    %v6673 = vsub.f32 %v6671, %v6672
    %v6674 = vand.u32 %v6673, 4294901760
    %6675 = vmatpush1.msra.mxu0 %v6674
    %6676 = vmatprep.subr.mxu0 0.0
    %v6677 = vand.u32 %v1373, 4294901760
    %v6678 = vsub.f32 %v1373, %v6677
    %v6679 = vand.u32 %v6678, 4294901760
    %v6680 = vsub.f32 %v6678, %v6679
    %v6681 = vand.u32 %v6680, 4294901760
    %6682 = vmatpush1.msra.mxu0 %v6681
    %6683 = vmatprep.subr.mxu0 0.0
    %v6684 = vand.u32 %v1374, 4294901760
    %v6685 = vsub.f32 %v1374, %v6684
    %v6686 = vand.u32 %v6685, 4294901760
    %v6687 = vsub.f32 %v6685, %v6686
    %v6688 = vand.u32 %v6687, 4294901760
    %6689 = vmatpush1.msra.mxu0 %v6688
    %6690 = vmatprep.subr.mxu0 0.0
    %v6691 = vand.u32 %v1375, 4294901760
    %v6692 = vsub.f32 %v1375, %v6691
    %v6693 = vand.u32 %v6692, 4294901760
    %v6694 = vsub.f32 %v6692, %v6693
    %v6695 = vand.u32 %v6694, 4294901760
    %6696 = vmatpush1.msra.mxu0 %v6695
    %6697 = vmatprep.subr.mxu0 0.0
    %v6698 = vand.u32 %v1376, 4294901760
    %v6699 = vsub.f32 %v1376, %v6698
    %v6700 = vand.u32 %v6699, 4294901760
    %v6701 = vsub.f32 %v6699, %v6700
    %v6702 = vand.u32 %v6701, 4294901760
    %6703 = vmatpush1.msra.mxu0 %v6702
    %6704 = vmatprep.subr.mxu0 0.0
    %v6705 = vand.u32 %v1377, 4294901760
    %v6706 = vsub.f32 %v1377, %v6705
    %v6707 = vand.u32 %v6706, 4294901760
    %v6708 = vsub.f32 %v6706, %v6707
    %v6709 = vand.u32 %v6708, 4294901760
    %6710 = vmatpush1.msra.mxu0 %v6709
    %6711 = vmatprep.subr.mxu0 0.0
    %v6712 = vand.u32 %v1378, 4294901760
    %v6713 = vsub.f32 %v1378, %v6712
    %v6714 = vand.u32 %v6713, 4294901760
    %v6715 = vsub.f32 %v6713, %v6714
    %v6716 = vand.u32 %v6715, 4294901760
    %6717 = vmatpush1.msra.mxu0 %v6716
    %6718 = vmatprep.subr.mxu0 0.0
    %v6719 = vand.u32 %v1379, 4294901760
    %v6720 = vsub.f32 %v1379, %v6719
    %v6721 = vand.u32 %v6720, 4294901760
    %v6722 = vsub.f32 %v6720, %v6721
    %v6723 = vand.u32 %v6722, 4294901760
    %6724 = vmatpush1.msra.mxu0 %v6723
    %6725 = vmatprep.subr.mxu0 0.0
    %v6726 = vand.u32 %v1380, 4294901760
    %v6727 = vsub.f32 %v1380, %v6726
    %v6728 = vand.u32 %v6727, 4294901760
    %v6729 = vsub.f32 %v6727, %v6728
    %v6730 = vand.u32 %v6729, 4294901760
    %6731 = vmatpush1.msra.mxu0 %v6730
    %6732 = vmatprep.subr.mxu0 0.0
    %6733 = vmatpush1.msra.mxu0 0.0
    %6734 = vmatprep.subr.mxu0 0.0
    %6735 = vmatpush1.msra.mxu0 0.0
    %6736 = vmatprep.subr.mxu0 0.0
    %6737 = vmatpush1.msra.mxu0 0.0
    %6738 = vmatprep.subr.mxu0 0.0
    %6739 = vmatpush1.msra.mxu0 0.0
    %6740 = vmatprep.subr.mxu0 0.0
    %6741 = vmatpush1.msra.mxu0 0.0
    %6742 = vmatprep.subr.mxu0 0.0
    %6743 = vmatpush1.msra.mxu0 0.0
    %6744 = vmatprep.subr.mxu0 0.0
    %6745 = vmatpush1.msra.mxu0 0.0
    %6746 = vmatprep.subr.mxu0 0.0
    %6747 = vmatpush1.msra.mxu0 0.0
    %6748 = vmatprep.subr.mxu0 0.0
    %6749 = vmatpush1.msra.mxu0 0.0
    %6750 = vmatprep.subr.mxu0 0.0
    %6751 = vmatpush1.msra.mxu0 0.0
    %6752 = vmatprep.subr.mxu0 0.0
    %6753 = vmatpush1.msra.mxu0 0.0
    %6754 = vmatprep.subr.mxu0 0.0
    %6755 = vmatpush1.msra.mxu0 0.0
    %6756 = vmatprep.subr.mxu0 0.0
    %6757 = vmatpush1.msra.mxu0 0.0
    %6758 = vmatprep.subr.mxu0 0.0
    %6759 = vmatpush1.msra.mxu0 0.0
    %6760 = vmatprep.subr.mxu0 0.0
    %6761 = vmatpush1.msra.mxu0 0.0
    %6762 = vmatprep.subr.mxu0 0.0
    %6763 = vmatpush1.msra.mxu0 0.0
    %6764 = vmatprep.mubr.f32.mxu0 0.0
    %v6765 = vand.u32 %v6526, 4294901760
    %6766 = vmatmul.mubr.f32.gmra.mrb[0].mxu0 %v6765
    %v6767 = vpop.f32.mrb[0].mxu0
    %v6768 = vadd.f32 %v6617, %v6767
    %v6769 = vpop.f32.mrb[0].mxu0
    %6770 = vdwg.mxu0
    %6771 = vmatprep.subr.mxu0 0.0
    %v6772 = vand.u32 %v1365, 4294901760
    %v6773 = vsub.f32 %v1365, %v6772
    %6774 = vmatpush1.msra.mxu0 %v6773
    %6775 = vmatprep.subr.mxu0 0.0
    %v6776 = vand.u32 %v1366, 4294901760
    %v6777 = vsub.f32 %v1366, %v6776
    %6778 = vmatpush1.msra.mxu0 %v6777
    %6779 = vmatprep.subr.mxu0 0.0
    %v6780 = vand.u32 %v1367, 4294901760
    %v6781 = vsub.f32 %v1367, %v6780
    %6782 = vmatpush1.msra.mxu0 %v6781
    %6783 = vmatprep.subr.mxu0 0.0
    %v6784 = vand.u32 %v1368, 4294901760
    %v6785 = vsub.f32 %v1368, %v6784
    %6786 = vmatpush1.msra.mxu0 %v6785
    %6787 = vmatprep.subr.mxu0 0.0
    %v6788 = vand.u32 %v1369, 4294901760
    %v6789 = vsub.f32 %v1369, %v6788
    %6790 = vmatpush1.msra.mxu0 %v6789
    %6791 = vmatprep.subr.mxu0 0.0
    %v6792 = vand.u32 %v1370, 4294901760
    %v6793 = vsub.f32 %v1370, %v6792
    %6794 = vmatpush1.msra.mxu0 %v6793
    %6795 = vmatprep.subr.mxu0 0.0
    %v6796 = vand.u32 %v1371, 4294901760
    %v6797 = vsub.f32 %v1371, %v6796
    %6798 = vmatpush1.msra.mxu0 %v6797
    %6799 = vmatprep.subr.mxu0 0.0
    %v6800 = vand.u32 %v1372, 4294901760
    %v6801 = vsub.f32 %v1372, %v6800
    %6802 = vmatpush1.msra.mxu0 %v6801
    %6803 = vmatprep.subr.mxu0 0.0
    %v6804 = vand.u32 %v1373, 4294901760
    %v6805 = vsub.f32 %v1373, %v6804
    %6806 = vmatpush1.msra.mxu0 %v6805
    %6807 = vmatprep.subr.mxu0 0.0
    %v6808 = vand.u32 %v1374, 4294901760
    %v6809 = vsub.f32 %v1374, %v6808
    %6810 = vmatpush1.msra.mxu0 %v6809
    %6811 = vmatprep.subr.mxu0 0.0
    %v6812 = vand.u32 %v1375, 4294901760
    %v6813 = vsub.f32 %v1375, %v6812
    %6814 = vmatpush1.msra.mxu0 %v6813
    %6815 = vmatprep.subr.mxu0 0.0
    %v6816 = vand.u32 %v1376, 4294901760
    %v6817 = vsub.f32 %v1376, %v6816
    %6818 = vmatpush1.msra.mxu0 %v6817
    %6819 = vmatprep.subr.mxu0 0.0
    %v6820 = vand.u32 %v1377, 4294901760
    %v6821 = vsub.f32 %v1377, %v6820
    %6822 = vmatpush1.msra.mxu0 %v6821
    %6823 = vmatprep.subr.mxu0 0.0
    %v6824 = vand.u32 %v1378, 4294901760
    %v6825 = vsub.f32 %v1378, %v6824
    %6826 = vmatpush1.msra.mxu0 %v6825
    %6827 = vmatprep.subr.mxu0 0.0
    %v6828 = vand.u32 %v1379, 4294901760
    %v6829 = vsub.f32 %v1379, %v6828
    %6830 = vmatpush1.msra.mxu0 %v6829
    %6831 = vmatprep.subr.mxu0 0.0
    %v6832 = vand.u32 %v1380, 4294901760
    %v6833 = vsub.f32 %v1380, %v6832
    %6834 = vmatpush1.msra.mxu0 %v6833
    %6835 = vmatprep.subr.mxu0 0.0
    %6836 = vmatpush1.msra.mxu0 0.0
    %6837 = vmatprep.subr.mxu0 0.0
    %6838 = vmatpush1.msra.mxu0 0.0
    %6839 = vmatprep.subr.mxu0 0.0
    %6840 = vmatpush1.msra.mxu0 0.0
    %6841 = vmatprep.subr.mxu0 0.0
    %6842 = vmatpush1.msra.mxu0 0.0
    %6843 = vmatprep.subr.mxu0 0.0
    %6844 = vmatpush1.msra.mxu0 0.0
    %6845 = vmatprep.subr.mxu0 0.0
    %6846 = vmatpush1.msra.mxu0 0.0
    %6847 = vmatprep.subr.mxu0 0.0
    %6848 = vmatpush1.msra.mxu0 0.0
    %6849 = vmatprep.subr.mxu0 0.0
    %6850 = vmatpush1.msra.mxu0 0.0
    %6851 = vmatprep.subr.mxu0 0.0
    %6852 = vmatpush1.msra.mxu0 0.0
    %6853 = vmatprep.subr.mxu0 0.0
    %6854 = vmatpush1.msra.mxu0 0.0
    %6855 = vmatprep.subr.mxu0 0.0
    %6856 = vmatpush1.msra.mxu0 0.0
    %6857 = vmatprep.subr.mxu0 0.0
    %6858 = vmatpush1.msra.mxu0 0.0
    %6859 = vmatprep.subr.mxu0 0.0
    %6860 = vmatpush1.msra.mxu0 0.0
    %6861 = vmatprep.subr.mxu0 0.0
    %6862 = vmatpush1.msra.mxu0 0.0
    %6863 = vmatprep.subr.mxu0 0.0
    %6864 = vmatpush1.msra.mxu0 0.0
    %6865 = vmatprep.subr.mxu0 0.0
    %6866 = vmatpush1.msra.mxu0 0.0
    %6867 = vmatprep.mubr.f32.mxu0 0.0
    %v6868 = vand.u32 %v6526, 4294901760
    %v6869 = vsub.f32 %v6526, %v6868
    %6870 = vmatmul.mubr.f32.gmra.mrb[0].mxu0 %v6869
    %v6871 = vpop.f32.mrb[0].mxu0
    %v6872 = vadd.f32 %v6768, %v6871
    %v6873 = vpop.f32.mrb[0].mxu0
    %6874 = vdwg.mxu0
    %6875 = vmatprep.subr.mxu0 0.0
    %v6876 = vand.u32 %v1365, 4294901760
    %6877 = vmatpush1.msra.mxu0 %v6876
    %6878 = vmatprep.subr.mxu0 0.0
    %v6879 = vand.u32 %v1366, 4294901760
    %6880 = vmatpush1.msra.mxu0 %v6879
    %6881 = vmatprep.subr.mxu0 0.0
    %v6882 = vand.u32 %v1367, 4294901760
    %6883 = vmatpush1.msra.mxu0 %v6882
    %6884 = vmatprep.subr.mxu0 0.0
    %v6885 = vand.u32 %v1368, 4294901760
    %6886 = vmatpush1.msra.mxu0 %v6885
    %6887 = vmatprep.subr.mxu0 0.0
    %v6888 = vand.u32 %v1369, 4294901760
    %6889 = vmatpush1.msra.mxu0 %v6888
    %6890 = vmatprep.subr.mxu0 0.0
    %v6891 = vand.u32 %v1370, 4294901760
    %6892 = vmatpush1.msra.mxu0 %v6891
    %6893 = vmatprep.subr.mxu0 0.0
    %v6894 = vand.u32 %v1371, 4294901760
    %6895 = vmatpush1.msra.mxu0 %v6894
    %6896 = vmatprep.subr.mxu0 0.0
    %v6897 = vand.u32 %v1372, 4294901760
    %6898 = vmatpush1.msra.mxu0 %v6897
    %6899 = vmatprep.subr.mxu0 0.0
    %v6900 = vand.u32 %v1373, 4294901760
    %6901 = vmatpush1.msra.mxu0 %v6900
    %6902 = vmatprep.subr.mxu0 0.0
    %v6903 = vand.u32 %v1374, 4294901760
    %6904 = vmatpush1.msra.mxu0 %v6903
    %6905 = vmatprep.subr.mxu0 0.0
    %v6906 = vand.u32 %v1375, 4294901760
    %6907 = vmatpush1.msra.mxu0 %v6906
    %6908 = vmatprep.subr.mxu0 0.0
    %v6909 = vand.u32 %v1376, 4294901760
    %6910 = vmatpush1.msra.mxu0 %v6909
    %6911 = vmatprep.subr.mxu0 0.0
    %v6912 = vand.u32 %v1377, 4294901760
    %6913 = vmatpush1.msra.mxu0 %v6912
    %6914 = vmatprep.subr.mxu0 0.0
    %v6915 = vand.u32 %v1378, 4294901760
    %6916 = vmatpush1.msra.mxu0 %v6915
    %6917 = vmatprep.subr.mxu0 0.0
    %v6918 = vand.u32 %v1379, 4294901760
    %6919 = vmatpush1.msra.mxu0 %v6918
    %6920 = vmatprep.subr.mxu0 0.0
    %v6921 = vand.u32 %v1380, 4294901760
    %6922 = vmatpush1.msra.mxu0 %v6921
    %6923 = vmatprep.subr.mxu0 0.0
    %6924 = vmatpush1.msra.mxu0 0.0
    %6925 = vmatprep.subr.mxu0 0.0
    %6926 = vmatpush1.msra.mxu0 0.0
    %6927 = vmatprep.subr.mxu0 0.0
    %6928 = vmatpush1.msra.mxu0 0.0
    %6929 = vmatprep.subr.mxu0 0.0
    %6930 = vmatpush1.msra.mxu0 0.0
    %6931 = vmatprep.subr.mxu0 0.0
    %6932 = vmatpush1.msra.mxu0 0.0
    %6933 = vmatprep.subr.mxu0 0.0
    %6934 = vmatpush1.msra.mxu0 0.0
    %6935 = vmatprep.subr.mxu0 0.0
    %6936 = vmatpush1.msra.mxu0 0.0
    %6937 = vmatprep.subr.mxu0 0.0
    %6938 = vmatpush1.msra.mxu0 0.0
    %6939 = vmatprep.subr.mxu0 0.0
    %6940 = vmatpush1.msra.mxu0 0.0
    %6941 = vmatprep.subr.mxu0 0.0
    %6942 = vmatpush1.msra.mxu0 0.0
    %6943 = vmatprep.subr.mxu0 0.0
    %6944 = vmatpush1.msra.mxu0 0.0
    %6945 = vmatprep.subr.mxu0 0.0
    %6946 = vmatpush1.msra.mxu0 0.0
    %6947 = vmatprep.subr.mxu0 0.0
    %6948 = vmatpush1.msra.mxu0 0.0
    %6949 = vmatprep.subr.mxu0 0.0
    %6950 = vmatpush1.msra.mxu0 0.0
    %6951 = vmatprep.subr.mxu0 0.0
    %6952 = vmatpush1.msra.mxu0 0.0
    %6953 = vmatprep.subr.mxu0 0.0
    %6954 = vmatpush1.msra.mxu0 0.0
    %6955 = vmatprep.mubr.f32.mxu0 0.0
    %v6956 = vand.u32 %v6526, 4294901760
    %v6957 = vsub.f32 %v6526, %v6956
    %v6958 = vand.u32 %v6957, 4294901760
    %6959 = vmatmul.mubr.f32.gmra.mrb[0].mxu0 %v6958
    %v6960 = vpop.f32.mrb[0].mxu0
    %v6961 = vadd.f32 %v6872, %v6960
    %v6962 = vpop.f32.mrb[0].mxu0
    %6963 = vdwg.mxu0
    %6964 = vmatprep.subr.mxu0 0.0
    %v6965 = vand.u32 %v1365, 4294901760
    %v6966 = vsub.f32 %v1365, %v6965
    %v6967 = vand.u32 %v6966, 4294901760
    %6968 = vmatpush1.msra.mxu0 %v6967
    %6969 = vmatprep.subr.mxu0 0.0
    %v6970 = vand.u32 %v1366, 4294901760
    %v6971 = vsub.f32 %v1366, %v6970
    %v6972 = vand.u32 %v6971, 4294901760
    %6973 = vmatpush1.msra.mxu0 %v6972
    %6974 = vmatprep.subr.mxu0 0.0
    %v6975 = vand.u32 %v1367, 4294901760
    %v6976 = vsub.f32 %v1367, %v6975
    %v6977 = vand.u32 %v6976, 4294901760
    %6978 = vmatpush1.msra.mxu0 %v6977
    %6979 = vmatprep.subr.mxu0 0.0
    %v6980 = vand.u32 %v1368, 4294901760
    %v6981 = vsub.f32 %v1368, %v6980
    %v6982 = vand.u32 %v6981, 4294901760
    %6983 = vmatpush1.msra.mxu0 %v6982
    %6984 = vmatprep.subr.mxu0 0.0
    %v6985 = vand.u32 %v1369, 4294901760
    %v6986 = vsub.f32 %v1369, %v6985
    %v6987 = vand.u32 %v6986, 4294901760
    %6988 = vmatpush1.msra.mxu0 %v6987
    %6989 = vmatprep.subr.mxu0 0.0
    %v6990 = vand.u32 %v1370, 4294901760
    %v6991 = vsub.f32 %v1370, %v6990
    %v6992 = vand.u32 %v6991, 4294901760
    %6993 = vmatpush1.msra.mxu0 %v6992
    %6994 = vmatprep.subr.mxu0 0.0
    %v6995 = vand.u32 %v1371, 4294901760
    %v6996 = vsub.f32 %v1371, %v6995
    %v6997 = vand.u32 %v6996, 4294901760
    %6998 = vmatpush1.msra.mxu0 %v6997
    %6999 = vmatprep.subr.mxu0 0.0
    %v7000 = vand.u32 %v1372, 4294901760
    %v7001 = vsub.f32 %v1372, %v7000
    %v7002 = vand.u32 %v7001, 4294901760
    %7003 = vmatpush1.msra.mxu0 %v7002
    %7004 = vmatprep.subr.mxu0 0.0
    %v7005 = vand.u32 %v1373, 4294901760
    %v7006 = vsub.f32 %v1373, %v7005
    %v7007 = vand.u32 %v7006, 4294901760
    %7008 = vmatpush1.msra.mxu0 %v7007
    %7009 = vmatprep.subr.mxu0 0.0
    %v7010 = vand.u32 %v1374, 4294901760
    %v7011 = vsub.f32 %v1374, %v7010
    %v7012 = vand.u32 %v7011, 4294901760
    %7013 = vmatpush1.msra.mxu0 %v7012
    %7014 = vmatprep.subr.mxu0 0.0
    %v7015 = vand.u32 %v1375, 4294901760
    %v7016 = vsub.f32 %v1375, %v7015
    %v7017 = vand.u32 %v7016, 4294901760
    %7018 = vmatpush1.msra.mxu0 %v7017
    %7019 = vmatprep.subr.mxu0 0.0
    %v7020 = vand.u32 %v1376, 4294901760
    %v7021 = vsub.f32 %v1376, %v7020
    %v7022 = vand.u32 %v7021, 4294901760
    %7023 = vmatpush1.msra.mxu0 %v7022
    %7024 = vmatprep.subr.mxu0 0.0
    %v7025 = vand.u32 %v1377, 4294901760
    %v7026 = vsub.f32 %v1377, %v7025
    %v7027 = vand.u32 %v7026, 4294901760
    %7028 = vmatpush1.msra.mxu0 %v7027
    %7029 = vmatprep.subr.mxu0 0.0
    %v7030 = vand.u32 %v1378, 4294901760
    %v7031 = vsub.f32 %v1378, %v7030
    %v7032 = vand.u32 %v7031, 4294901760
    %7033 = vmatpush1.msra.mxu0 %v7032
    %7034 = vmatprep.subr.mxu0 0.0
    %v7035 = vand.u32 %v1379, 4294901760
    %v7036 = vsub.f32 %v1379, %v7035
    %v7037 = vand.u32 %v7036, 4294901760
    %7038 = vmatpush1.msra.mxu0 %v7037
    %7039 = vmatprep.subr.mxu0 0.0
    %v7040 = vand.u32 %v1380, 4294901760
    %v7041 = vsub.f32 %v1380, %v7040
    %v7042 = vand.u32 %v7041, 4294901760
    %7043 = vmatpush1.msra.mxu0 %v7042
    %7044 = vmatprep.subr.mxu0 0.0
    %7045 = vmatpush1.msra.mxu0 0.0
    %7046 = vmatprep.subr.mxu0 0.0
    %7047 = vmatpush1.msra.mxu0 0.0
    %7048 = vmatprep.subr.mxu0 0.0
    %7049 = vmatpush1.msra.mxu0 0.0
    %7050 = vmatprep.subr.mxu0 0.0
    %7051 = vmatpush1.msra.mxu0 0.0
    %7052 = vmatprep.subr.mxu0 0.0
    %7053 = vmatpush1.msra.mxu0 0.0
    %7054 = vmatprep.subr.mxu0 0.0
    %7055 = vmatpush1.msra.mxu0 0.0
    %7056 = vmatprep.subr.mxu0 0.0
    %7057 = vmatpush1.msra.mxu0 0.0
    %7058 = vmatprep.subr.mxu0 0.0
    %7059 = vmatpush1.msra.mxu0 0.0
    %7060 = vmatprep.subr.mxu0 0.0
    %7061 = vmatpush1.msra.mxu0 0.0
    %7062 = vmatprep.subr.mxu0 0.0
    %7063 = vmatpush1.msra.mxu0 0.0
    %7064 = vmatprep.subr.mxu0 0.0
    %7065 = vmatpush1.msra.mxu0 0.0
    %7066 = vmatprep.subr.mxu0 0.0
    %7067 = vmatpush1.msra.mxu0 0.0
    %7068 = vmatprep.subr.mxu0 0.0
    %7069 = vmatpush1.msra.mxu0 0.0
    %7070 = vmatprep.subr.mxu0 0.0
    %7071 = vmatpush1.msra.mxu0 0.0
    %7072 = vmatprep.subr.mxu0 0.0
    %7073 = vmatpush1.msra.mxu0 0.0
    %7074 = vmatprep.subr.mxu0 0.0
    %7075 = vmatpush1.msra.mxu0 0.0
    %7076 = vmatprep.mubr.f32.mxu0 0.0
    %v7077 = vand.u32 %v6526, 4294901760
    %7078 = vmatmul.mubr.f32.gmra.mrb[0].mxu0 %v7077
    %v7079 = vpop.f32.mrb[0].mxu0
    %v7080 = vadd.f32 %v6961, %v7079
    %v7081 = vpop.f32.mrb[0].mxu0
    %7082 = vdwg.mxu0
    %7083 = vmatprep.subr.mxu0 0.0
    %v7084 = vand.u32 %v1365, 4294901760
    %7085 = vmatpush1.msra.mxu0 %v7084
    %7086 = vmatprep.subr.mxu0 0.0
    %v7087 = vand.u32 %v1366, 4294901760
    %7088 = vmatpush1.msra.mxu0 %v7087
    %7089 = vmatprep.subr.mxu0 0.0
    %v7090 = vand.u32 %v1367, 4294901760
    %7091 = vmatpush1.msra.mxu0 %v7090
    %7092 = vmatprep.subr.mxu0 0.0
    %v7093 = vand.u32 %v1368, 4294901760
    %7094 = vmatpush1.msra.mxu0 %v7093
    %7095 = vmatprep.subr.mxu0 0.0
    %v7096 = vand.u32 %v1369, 4294901760
    %7097 = vmatpush1.msra.mxu0 %v7096
    %7098 = vmatprep.subr.mxu0 0.0
    %v7099 = vand.u32 %v1370, 4294901760
    %7100 = vmatpush1.msra.mxu0 %v7099
    %7101 = vmatprep.subr.mxu0 0.0
    %v7102 = vand.u32 %v1371, 4294901760
    %7103 = vmatpush1.msra.mxu0 %v7102
    %7104 = vmatprep.subr.mxu0 0.0
    %v7105 = vand.u32 %v1372, 4294901760
    %7106 = vmatpush1.msra.mxu0 %v7105
    %7107 = vmatprep.subr.mxu0 0.0
    %v7108 = vand.u32 %v1373, 4294901760
    %7109 = vmatpush1.msra.mxu0 %v7108
    %7110 = vmatprep.subr.mxu0 0.0
    %v7111 = vand.u32 %v1374, 4294901760
    %7112 = vmatpush1.msra.mxu0 %v7111
    %7113 = vmatprep.subr.mxu0 0.0
    %v7114 = vand.u32 %v1375, 4294901760
    %7115 = vmatpush1.msra.mxu0 %v7114
    %7116 = vmatprep.subr.mxu0 0.0
    %v7117 = vand.u32 %v1376, 4294901760
    %7118 = vmatpush1.msra.mxu0 %v7117
    %7119 = vmatprep.subr.mxu0 0.0
    %v7120 = vand.u32 %v1377, 4294901760
    %7121 = vmatpush1.msra.mxu0 %v7120
    %7122 = vmatprep.subr.mxu0 0.0
    %v7123 = vand.u32 %v1378, 4294901760
    %7124 = vmatpush1.msra.mxu0 %v7123
    %7125 = vmatprep.subr.mxu0 0.0
    %v7126 = vand.u32 %v1379, 4294901760
    %7127 = vmatpush1.msra.mxu0 %v7126
    %7128 = vmatprep.subr.mxu0 0.0
    %v7129 = vand.u32 %v1380, 4294901760
    %7130 = vmatpush1.msra.mxu0 %v7129
    %7131 = vmatprep.subr.mxu0 0.0
    %7132 = vmatpush1.msra.mxu0 0.0
    %7133 = vmatprep.subr.mxu0 0.0
    %7134 = vmatpush1.msra.mxu0 0.0
    %7135 = vmatprep.subr.mxu0 0.0
    %7136 = vmatpush1.msra.mxu0 0.0
    %7137 = vmatprep.subr.mxu0 0.0
    %7138 = vmatpush1.msra.mxu0 0.0
    %7139 = vmatprep.subr.mxu0 0.0
    %7140 = vmatpush1.msra.mxu0 0.0
    %7141 = vmatprep.subr.mxu0 0.0
    %7142 = vmatpush1.msra.mxu0 0.0
    %7143 = vmatprep.subr.mxu0 0.0
    %7144 = vmatpush1.msra.mxu0 0.0
    %7145 = vmatprep.subr.mxu0 0.0
    %7146 = vmatpush1.msra.mxu0 0.0
    %7147 = vmatprep.subr.mxu0 0.0
    %7148 = vmatpush1.msra.mxu0 0.0
    %7149 = vmatprep.subr.mxu0 0.0
    %7150 = vmatpush1.msra.mxu0 0.0
    %7151 = vmatprep.subr.mxu0 0.0
    %7152 = vmatpush1.msra.mxu0 0.0
    %7153 = vmatprep.subr.mxu0 0.0
    %7154 = vmatpush1.msra.mxu0 0.0
    %7155 = vmatprep.subr.mxu0 0.0
    %7156 = vmatpush1.msra.mxu0 0.0
    %7157 = vmatprep.subr.mxu0 0.0
    %7158 = vmatpush1.msra.mxu0 0.0
    %7159 = vmatprep.subr.mxu0 0.0
    %7160 = vmatpush1.msra.mxu0 0.0
    %7161 = vmatprep.subr.mxu0 0.0
    %7162 = vmatpush1.msra.mxu0 0.0
    %7163 = vmatprep.mubr.f32.mxu0 0.0
    %v7164 = vand.u32 %v6526, 4294901760
    %7165 = vmatmul.mubr.f32.gmra.mrb[0].mxu0 %v7164
    %v7166 = vpop.f32.mrb[0].mxu0
    %v7167 = vadd.f32 %v7080, %v7166
    %v7168 = vpop.f32.mrb[0].mxu0
    %7169 = vdwg.mxu0
    %v7170 = vadd.f32 %v6528, %v7167
    %v7171 = vtanh.pop %v7170
    %s7172 = scalar_lea.vmem [#allocation2], 72
    %v7173 = vld [vmem:[%s7172] sm:$0xff]
    %7174 = vmatprep.subr.mxu0 0.0
    %v7175 = vand.u32 %v1365, 4294901760
    %7176 = vmatpush1.msra.mxu0 %v7175
    %7177 = vmatprep.subr.mxu0 0.0
    %v7178 = vand.u32 %v1366, 4294901760
    %7179 = vmatpush1.msra.mxu0 %v7178
    %7180 = vmatprep.subr.mxu0 0.0
    %v7181 = vand.u32 %v1367, 4294901760
    %7182 = vmatpush1.msra.mxu0 %v7181
    %7183 = vmatprep.subr.mxu0 0.0
    %v7184 = vand.u32 %v1368, 4294901760
    %7185 = vmatpush1.msra.mxu0 %v7184
    %7186 = vmatprep.subr.mxu0 0.0
    %v7187 = vand.u32 %v1369, 4294901760
    %7188 = vmatpush1.msra.mxu0 %v7187
    %7189 = vmatprep.subr.mxu0 0.0
    %v7190 = vand.u32 %v1370, 4294901760
    %7191 = vmatpush1.msra.mxu0 %v7190
    %7192 = vmatprep.subr.mxu0 0.0
    %v7193 = vand.u32 %v1371, 4294901760
    %7194 = vmatpush1.msra.mxu0 %v7193
    %7195 = vmatprep.subr.mxu0 0.0
    %v7196 = vand.u32 %v1372, 4294901760
    %7197 = vmatpush1.msra.mxu0 %v7196
    %7198 = vmatprep.subr.mxu0 0.0
    %v7199 = vand.u32 %v1373, 4294901760
    %7200 = vmatpush1.msra.mxu0 %v7199
    %7201 = vmatprep.subr.mxu0 0.0
    %v7202 = vand.u32 %v1374, 4294901760
    %7203 = vmatpush1.msra.mxu0 %v7202
    %7204 = vmatprep.subr.mxu0 0.0
    %v7205 = vand.u32 %v1375, 4294901760
    %7206 = vmatpush1.msra.mxu0 %v7205
    %7207 = vmatprep.subr.mxu0 0.0
    %v7208 = vand.u32 %v1376, 4294901760
    %7209 = vmatpush1.msra.mxu0 %v7208
    %7210 = vmatprep.subr.mxu0 0.0
    %v7211 = vand.u32 %v1377, 4294901760
    %7212 = vmatpush1.msra.mxu0 %v7211
    %7213 = vmatprep.subr.mxu0 0.0
    %v7214 = vand.u32 %v1378, 4294901760
    %7215 = vmatpush1.msra.mxu0 %v7214
    %7216 = vmatprep.subr.mxu0 0.0
    %v7217 = vand.u32 %v1379, 4294901760
    %7218 = vmatpush1.msra.mxu0 %v7217
    %7219 = vmatprep.subr.mxu0 0.0
    %v7220 = vand.u32 %v1380, 4294901760
    %7221 = vmatpush1.msra.mxu0 %v7220
    %7222 = vmatprep.subr.mxu0 0.0
    %7223 = vmatpush1.msra.mxu0 0.0
    %7224 = vmatprep.subr.mxu0 0.0
    %7225 = vmatpush1.msra.mxu0 0.0
    %7226 = vmatprep.subr.mxu0 0.0
    %7227 = vmatpush1.msra.mxu0 0.0
    %7228 = vmatprep.subr.mxu0 0.0
    %7229 = vmatpush1.msra.mxu0 0.0
    %7230 = vmatprep.subr.mxu0 0.0
    %7231 = vmatpush1.msra.mxu0 0.0
    %7232 = vmatprep.subr.mxu0 0.0
    %7233 = vmatpush1.msra.mxu0 0.0
    %7234 = vmatprep.subr.mxu0 0.0
    %7235 = vmatpush1.msra.mxu0 0.0
    %7236 = vmatprep.subr.mxu0 0.0
    %7237 = vmatpush1.msra.mxu0 0.0
    %7238 = vmatprep.subr.mxu0 0.0
    %7239 = vmatpush1.msra.mxu0 0.0
    %7240 = vmatprep.subr.mxu0 0.0
    %7241 = vmatpush1.msra.mxu0 0.0
    %7242 = vmatprep.subr.mxu0 0.0
    %7243 = vmatpush1.msra.mxu0 0.0
    %7244 = vmatprep.subr.mxu0 0.0
    %7245 = vmatpush1.msra.mxu0 0.0
    %7246 = vmatprep.subr.mxu0 0.0
    %7247 = vmatpush1.msra.mxu0 0.0
    %7248 = vmatprep.subr.mxu0 0.0
    %7249 = vmatpush1.msra.mxu0 0.0
    %7250 = vmatprep.subr.mxu0 0.0
    %7251 = vmatpush1.msra.mxu0 0.0
    %7252 = vmatprep.subr.mxu0 0.0
    %7253 = vmatpush1.msra.mxu0 0.0
    %7254 = vmatprep.mubr.f32.mxu0 0.0
    %v7255 = vand.u32 %v7171, 4294901760
    %v7256 = vsub.f32 %v7171, %v7255
    %v7257 = vand.u32 %v7256, 4294901760
    %v7258 = vsub.f32 %v7256, %v7257
    %v7259 = vand.u32 %v7258, 4294901760
    %7260 = vmatmul.mubr.f32.gmra.mrb[0].mxu0 %v7259
    %v7261 = vpop.f32.mrb[0].mxu0
    %v7262 = vadd.f32 0.0, %v7261
    %v7263 = vpop.f32.mrb[0].mxu0
    %7264 = vdwg.mxu0
    %7265 = vmatprep.subr.mxu0 0.0
    %v7266 = vand.u32 %v1365, 4294901760
    %v7267 = vsub.f32 %v1365, %v7266
    %v7268 = vand.u32 %v7267, 4294901760
    %v7269 = vsub.f32 %v7267, %v7268
    %v7270 = vand.u32 %v7269, 4294901760
    %7271 = vmatpush1.msra.mxu0 %v7270
    %7272 = vmatprep.subr.mxu0 0.0
    %v7273 = vand.u32 %v1366, 4294901760
    %v7274 = vsub.f32 %v1366, %v7273
    %v7275 = vand.u32 %v7274, 4294901760
    %v7276 = vsub.f32 %v7274, %v7275
    %v7277 = vand.u32 %v7276, 4294901760
    %7278 = vmatpush1.msra.mxu0 %v7277
    %7279 = vmatprep.subr.mxu0 0.0
    %v7280 = vand.u32 %v1367, 4294901760
    %v7281 = vsub.f32 %v1367, %v7280
    %v7282 = vand.u32 %v7281, 4294901760
    %v7283 = vsub.f32 %v7281, %v7282
    %v7284 = vand.u32 %v7283, 4294901760
    %7285 = vmatpush1.msra.mxu0 %v7284
    %7286 = vmatprep.subr.mxu0 0.0
    %v7287 = vand.u32 %v1368, 4294901760
    %v7288 = vsub.f32 %v1368, %v7287
    %v7289 = vand.u32 %v7288, 4294901760
    %v7290 = vsub.f32 %v7288, %v7289
    %v7291 = vand.u32 %v7290, 4294901760
    %7292 = vmatpush1.msra.mxu0 %v7291
    %7293 = vmatprep.subr.mxu0 0.0
    %v7294 = vand.u32 %v1369, 4294901760
    %v7295 = vsub.f32 %v1369, %v7294
    %v7296 = vand.u32 %v7295, 4294901760
    %v7297 = vsub.f32 %v7295, %v7296
    %v7298 = vand.u32 %v7297, 4294901760
    %7299 = vmatpush1.msra.mxu0 %v7298
    %7300 = vmatprep.subr.mxu0 0.0
    %v7301 = vand.u32 %v1370, 4294901760
    %v7302 = vsub.f32 %v1370, %v7301
    %v7303 = vand.u32 %v7302, 4294901760
    %v7304 = vsub.f32 %v7302, %v7303
    %v7305 = vand.u32 %v7304, 4294901760
    %7306 = vmatpush1.msra.mxu0 %v7305
    %7307 = vmatprep.subr.mxu0 0.0
    %v7308 = vand.u32 %v1371, 4294901760
    %v7309 = vsub.f32 %v1371, %v7308
    %v7310 = vand.u32 %v7309, 4294901760
    %v7311 = vsub.f32 %v7309, %v7310
    %v7312 = vand.u32 %v7311, 4294901760
    %7313 = vmatpush1.msra.mxu0 %v7312
    %7314 = vmatprep.subr.mxu0 0.0
    %v7315 = vand.u32 %v1372, 4294901760
    %v7316 = vsub.f32 %v1372, %v7315
    %v7317 = vand.u32 %v7316, 4294901760
    %v7318 = vsub.f32 %v7316, %v7317
    %v7319 = vand.u32 %v7318, 4294901760
    %7320 = vmatpush1.msra.mxu0 %v7319
    %7321 = vmatprep.subr.mxu0 0.0
    %v7322 = vand.u32 %v1373, 4294901760
    %v7323 = vsub.f32 %v1373, %v7322
    %v7324 = vand.u32 %v7323, 4294901760
    %v7325 = vsub.f32 %v7323, %v7324
    %v7326 = vand.u32 %v7325, 4294901760
    %7327 = vmatpush1.msra.mxu0 %v7326
    %7328 = vmatprep.subr.mxu0 0.0
    %v7329 = vand.u32 %v1374, 4294901760
    %v7330 = vsub.f32 %v1374, %v7329
    %v7331 = vand.u32 %v7330, 4294901760
    %v7332 = vsub.f32 %v7330, %v7331
    %v7333 = vand.u32 %v7332, 4294901760
    %7334 = vmatpush1.msra.mxu0 %v7333
    %7335 = vmatprep.subr.mxu0 0.0
    %v7336 = vand.u32 %v1375, 4294901760
    %v7337 = vsub.f32 %v1375, %v7336
    %v7338 = vand.u32 %v7337, 4294901760
    %v7339 = vsub.f32 %v7337, %v7338
    %v7340 = vand.u32 %v7339, 4294901760
    %7341 = vmatpush1.msra.mxu0 %v7340
    %7342 = vmatprep.subr.mxu0 0.0
    %v7343 = vand.u32 %v1376, 4294901760
    %v7344 = vsub.f32 %v1376, %v7343
    %v7345 = vand.u32 %v7344, 4294901760
    %v7346 = vsub.f32 %v7344, %v7345
    %v7347 = vand.u32 %v7346, 4294901760
    %7348 = vmatpush1.msra.mxu0 %v7347
    %7349 = vmatprep.subr.mxu0 0.0
    %v7350 = vand.u32 %v1377, 4294901760
    %v7351 = vsub.f32 %v1377, %v7350
    %v7352 = vand.u32 %v7351, 4294901760
    %v7353 = vsub.f32 %v7351, %v7352
    %v7354 = vand.u32 %v7353, 4294901760
    %7355 = vmatpush1.msra.mxu0 %v7354
    %7356 = vmatprep.subr.mxu0 0.0
    %v7357 = vand.u32 %v1378, 4294901760
    %v7358 = vsub.f32 %v1378, %v7357
    %v7359 = vand.u32 %v7358, 4294901760
    %v7360 = vsub.f32 %v7358, %v7359
    %v7361 = vand.u32 %v7360, 4294901760
    %7362 = vmatpush1.msra.mxu0 %v7361
    %7363 = vmatprep.subr.mxu0 0.0
    %v7364 = vand.u32 %v1379, 4294901760
    %v7365 = vsub.f32 %v1379, %v7364
    %v7366 = vand.u32 %v7365, 4294901760
    %v7367 = vsub.f32 %v7365, %v7366
    %v7368 = vand.u32 %v7367, 4294901760
    %7369 = vmatpush1.msra.mxu0 %v7368
    %7370 = vmatprep.subr.mxu0 0.0
    %v7371 = vand.u32 %v1380, 4294901760
    %v7372 = vsub.f32 %v1380, %v7371
    %v7373 = vand.u32 %v7372, 4294901760
    %v7374 = vsub.f32 %v7372, %v7373
    %v7375 = vand.u32 %v7374, 4294901760
    %7376 = vmatpush1.msra.mxu0 %v7375
    %7377 = vmatprep.subr.mxu0 0.0
    %7378 = vmatpush1.msra.mxu0 0.0
    %7379 = vmatprep.subr.mxu0 0.0
    %7380 = vmatpush1.msra.mxu0 0.0
    %7381 = vmatprep.subr.mxu0 0.0
    %7382 = vmatpush1.msra.mxu0 0.0
    %7383 = vmatprep.subr.mxu0 0.0
    %7384 = vmatpush1.msra.mxu0 0.0
    %7385 = vmatprep.subr.mxu0 0.0
    %7386 = vmatpush1.msra.mxu0 0.0
    %7387 = vmatprep.subr.mxu0 0.0
    %7388 = vmatpush1.msra.mxu0 0.0
    %7389 = vmatprep.subr.mxu0 0.0
    %7390 = vmatpush1.msra.mxu0 0.0
    %7391 = vmatprep.subr.mxu0 0.0
    %7392 = vmatpush1.msra.mxu0 0.0
    %7393 = vmatprep.subr.mxu0 0.0
    %7394 = vmatpush1.msra.mxu0 0.0
    %7395 = vmatprep.subr.mxu0 0.0
    %7396 = vmatpush1.msra.mxu0 0.0
    %7397 = vmatprep.subr.mxu0 0.0
    %7398 = vmatpush1.msra.mxu0 0.0
    %7399 = vmatprep.subr.mxu0 0.0
    %7400 = vmatpush1.msra.mxu0 0.0
    %7401 = vmatprep.subr.mxu0 0.0
    %7402 = vmatpush1.msra.mxu0 0.0
    %7403 = vmatprep.subr.mxu0 0.0
    %7404 = vmatpush1.msra.mxu0 0.0
    %7405 = vmatprep.subr.mxu0 0.0
    %7406 = vmatpush1.msra.mxu0 0.0
    %7407 = vmatprep.subr.mxu0 0.0
    %7408 = vmatpush1.msra.mxu0 0.0
    %7409 = vmatprep.mubr.f32.mxu0 0.0
    %v7410 = vand.u32 %v7171, 4294901760
    %7411 = vmatmul.mubr.f32.gmra.mrb[0].mxu0 %v7410
    %v7412 = vpop.f32.mrb[0].mxu0
    %v7413 = vadd.f32 %v7262, %v7412
    %v7414 = vpop.f32.mrb[0].mxu0
    %7415 = vdwg.mxu0
    %7416 = vmatprep.subr.mxu0 0.0
    %v7417 = vand.u32 %v1365, 4294901760
    %v7418 = vsub.f32 %v1365, %v7417
    %7419 = vmatpush1.msra.mxu0 %v7418
    %7420 = vmatprep.subr.mxu0 0.0
    %v7421 = vand.u32 %v1366, 4294901760
    %v7422 = vsub.f32 %v1366, %v7421
    %7423 = vmatpush1.msra.mxu0 %v7422
    %7424 = vmatprep.subr.mxu0 0.0
    %v7425 = vand.u32 %v1367, 4294901760
    %v7426 = vsub.f32 %v1367, %v7425
    %7427 = vmatpush1.msra.mxu0 %v7426
    %7428 = vmatprep.subr.mxu0 0.0
    %v7429 = vand.u32 %v1368, 4294901760
    %v7430 = vsub.f32 %v1368, %v7429
    %7431 = vmatpush1.msra.mxu0 %v7430
    %7432 = vmatprep.subr.mxu0 0.0
    %v7433 = vand.u32 %v1369, 4294901760
    %v7434 = vsub.f32 %v1369, %v7433
    %7435 = vmatpush1.msra.mxu0 %v7434
    %7436 = vmatprep.subr.mxu0 0.0
    %v7437 = vand.u32 %v1370, 4294901760
    %v7438 = vsub.f32 %v1370, %v7437
    %7439 = vmatpush1.msra.mxu0 %v7438
    %7440 = vmatprep.subr.mxu0 0.0
    %v7441 = vand.u32 %v1371, 4294901760
    %v7442 = vsub.f32 %v1371, %v7441
    %7443 = vmatpush1.msra.mxu0 %v7442
    %7444 = vmatprep.subr.mxu0 0.0
    %v7445 = vand.u32 %v1372, 4294901760
    %v7446 = vsub.f32 %v1372, %v7445
    %7447 = vmatpush1.msra.mxu0 %v7446
    %7448 = vmatprep.subr.mxu0 0.0
    %v7449 = vand.u32 %v1373, 4294901760
    %v7450 = vsub.f32 %v1373, %v7449
    %7451 = vmatpush1.msra.mxu0 %v7450
    %7452 = vmatprep.subr.mxu0 0.0
    %v7453 = vand.u32 %v1374, 4294901760
    %v7454 = vsub.f32 %v1374, %v7453
    %7455 = vmatpush1.msra.mxu0 %v7454
    %7456 = vmatprep.subr.mxu0 0.0
    %v7457 = vand.u32 %v1375, 4294901760
    %v7458 = vsub.f32 %v1375, %v7457
    %7459 = vmatpush1.msra.mxu0 %v7458
    %7460 = vmatprep.subr.mxu0 0.0
    %v7461 = vand.u32 %v1376, 4294901760
    %v7462 = vsub.f32 %v1376, %v7461
    %7463 = vmatpush1.msra.mxu0 %v7462
    %7464 = vmatprep.subr.mxu0 0.0
    %v7465 = vand.u32 %v1377, 4294901760
    %v7466 = vsub.f32 %v1377, %v7465
    %7467 = vmatpush1.msra.mxu0 %v7466
    %7468 = vmatprep.subr.mxu0 0.0
    %v7469 = vand.u32 %v1378, 4294901760
    %v7470 = vsub.f32 %v1378, %v7469
    %7471 = vmatpush1.msra.mxu0 %v7470
    %7472 = vmatprep.subr.mxu0 0.0
    %v7473 = vand.u32 %v1379, 4294901760
    %v7474 = vsub.f32 %v1379, %v7473
    %7475 = vmatpush1.msra.mxu0 %v7474
    %7476 = vmatprep.subr.mxu0 0.0
    %v7477 = vand.u32 %v1380, 4294901760
    %v7478 = vsub.f32 %v1380, %v7477
    %7479 = vmatpush1.msra.mxu0 %v7478
    %7480 = vmatprep.subr.mxu0 0.0
    %7481 = vmatpush1.msra.mxu0 0.0
    %7482 = vmatprep.subr.mxu0 0.0
    %7483 = vmatpush1.msra.mxu0 0.0
    %7484 = vmatprep.subr.mxu0 0.0
    %7485 = vmatpush1.msra.mxu0 0.0
    %7486 = vmatprep.subr.mxu0 0.0
    %7487 = vmatpush1.msra.mxu0 0.0
    %7488 = vmatprep.subr.mxu0 0.0
    %7489 = vmatpush1.msra.mxu0 0.0
    %7490 = vmatprep.subr.mxu0 0.0
    %7491 = vmatpush1.msra.mxu0 0.0
    %7492 = vmatprep.subr.mxu0 0.0
    %7493 = vmatpush1.msra.mxu0 0.0
    %7494 = vmatprep.subr.mxu0 0.0
    %7495 = vmatpush1.msra.mxu0 0.0
    %7496 = vmatprep.subr.mxu0 0.0
    %7497 = vmatpush1.msra.mxu0 0.0
    %7498 = vmatprep.subr.mxu0 0.0
    %7499 = vmatpush1.msra.mxu0 0.0
    %7500 = vmatprep.subr.mxu0 0.0
    %7501 = vmatpush1.msra.mxu0 0.0
    %7502 = vmatprep.subr.mxu0 0.0
    %7503 = vmatpush1.msra.mxu0 0.0
    %7504 = vmatprep.subr.mxu0 0.0
    %7505 = vmatpush1.msra.mxu0 0.0
    %7506 = vmatprep.subr.mxu0 0.0
    %7507 = vmatpush1.msra.mxu0 0.0
    %7508 = vmatprep.subr.mxu0 0.0
    %7509 = vmatpush1.msra.mxu0 0.0
    %7510 = vmatprep.subr.mxu0 0.0
    %7511 = vmatpush1.msra.mxu0 0.0
    %7512 = vmatprep.mubr.f32.mxu0 0.0
    %v7513 = vand.u32 %v7171, 4294901760
    %v7514 = vsub.f32 %v7171, %v7513
    %7515 = vmatmul.mubr.f32.gmra.mrb[0].mxu0 %v7514
    %v7516 = vpop.f32.mrb[0].mxu0
    %v7517 = vadd.f32 %v7413, %v7516
    %v7518 = vpop.f32.mrb[0].mxu0
    %7519 = vdwg.mxu0
    %7520 = vmatprep.subr.mxu0 0.0
    %v7521 = vand.u32 %v1365, 4294901760
    %7522 = vmatpush1.msra.mxu0 %v7521
    %7523 = vmatprep.subr.mxu0 0.0
    %v7524 = vand.u32 %v1366, 4294901760
    %7525 = vmatpush1.msra.mxu0 %v7524
    %7526 = vmatprep.subr.mxu0 0.0
    %v7527 = vand.u32 %v1367, 4294901760
    %7528 = vmatpush1.msra.mxu0 %v7527
    %7529 = vmatprep.subr.mxu0 0.0
    %v7530 = vand.u32 %v1368, 4294901760
    %7531 = vmatpush1.msra.mxu0 %v7530
    %7532 = vmatprep.subr.mxu0 0.0
    %v7533 = vand.u32 %v1369, 4294901760
    %7534 = vmatpush1.msra.mxu0 %v7533
    %7535 = vmatprep.subr.mxu0 0.0
    %v7536 = vand.u32 %v1370, 4294901760
    %7537 = vmatpush1.msra.mxu0 %v7536
    %7538 = vmatprep.subr.mxu0 0.0
    %v7539 = vand.u32 %v1371, 4294901760
    %7540 = vmatpush1.msra.mxu0 %v7539
    %7541 = vmatprep.subr.mxu0 0.0
    %v7542 = vand.u32 %v1372, 4294901760
    %7543 = vmatpush1.msra.mxu0 %v7542
    %7544 = vmatprep.subr.mxu0 0.0
    %v7545 = vand.u32 %v1373, 4294901760
    %7546 = vmatpush1.msra.mxu0 %v7545
    %7547 = vmatprep.subr.mxu0 0.0
    %v7548 = vand.u32 %v1374, 4294901760
    %7549 = vmatpush1.msra.mxu0 %v7548
    %7550 = vmatprep.subr.mxu0 0.0
    %v7551 = vand.u32 %v1375, 4294901760
    %7552 = vmatpush1.msra.mxu0 %v7551
    %7553 = vmatprep.subr.mxu0 0.0
    %v7554 = vand.u32 %v1376, 4294901760
    %7555 = vmatpush1.msra.mxu0 %v7554
    %7556 = vmatprep.subr.mxu0 0.0
    %v7557 = vand.u32 %v1377, 4294901760
    %7558 = vmatpush1.msra.mxu0 %v7557
    %7559 = vmatprep.subr.mxu0 0.0
    %v7560 = vand.u32 %v1378, 4294901760
    %7561 = vmatpush1.msra.mxu0 %v7560
    %7562 = vmatprep.subr.mxu0 0.0
    %v7563 = vand.u32 %v1379, 4294901760
    %7564 = vmatpush1.msra.mxu0 %v7563
    %7565 = vmatprep.subr.mxu0 0.0
    %v7566 = vand.u32 %v1380, 4294901760
    %7567 = vmatpush1.msra.mxu0 %v7566
    %7568 = vmatprep.subr.mxu0 0.0
    %7569 = vmatpush1.msra.mxu0 0.0
    %7570 = vmatprep.subr.mxu0 0.0
    %7571 = vmatpush1.msra.mxu0 0.0
    %7572 = vmatprep.subr.mxu0 0.0
    %7573 = vmatpush1.msra.mxu0 0.0
    %7574 = vmatprep.subr.mxu0 0.0
    %7575 = vmatpush1.msra.mxu0 0.0
    %7576 = vmatprep.subr.mxu0 0.0
    %7577 = vmatpush1.msra.mxu0 0.0
    %7578 = vmatprep.subr.mxu0 0.0
    %7579 = vmatpush1.msra.mxu0 0.0
    %7580 = vmatprep.subr.mxu0 0.0
    %7581 = vmatpush1.msra.mxu0 0.0
    %7582 = vmatprep.subr.mxu0 0.0
    %7583 = vmatpush1.msra.mxu0 0.0
    %7584 = vmatprep.subr.mxu0 0.0
    %7585 = vmatpush1.msra.mxu0 0.0
    %7586 = vmatprep.subr.mxu0 0.0
    %7587 = vmatpush1.msra.mxu0 0.0
    %7588 = vmatprep.subr.mxu0 0.0
    %7589 = vmatpush1.msra.mxu0 0.0
    %7590 = vmatprep.subr.mxu0 0.0
    %7591 = vmatpush1.msra.mxu0 0.0
    %7592 = vmatprep.subr.mxu0 0.0
    %7593 = vmatpush1.msra.mxu0 0.0
    %7594 = vmatprep.subr.mxu0 0.0
    %7595 = vmatpush1.msra.mxu0 0.0
    %7596 = vmatprep.subr.mxu0 0.0
    %7597 = vmatpush1.msra.mxu0 0.0
    %7598 = vmatprep.subr.mxu0 0.0
    %7599 = vmatpush1.msra.mxu0 0.0
    %7600 = vmatprep.mubr.f32.mxu0 0.0
    %v7601 = vand.u32 %v7171, 4294901760
    %v7602 = vsub.f32 %v7171, %v7601
    %v7603 = vand.u32 %v7602, 4294901760
    %7604 = vmatmul.mubr.f32.gmra.mrb[0].mxu0 %v7603
    %v7605 = vpop.f32.mrb[0].mxu0
    %v7606 = vadd.f32 %v7517, %v7605
    %v7607 = vpop.f32.mrb[0].mxu0
    %7608 = vdwg.mxu0
    %7609 = vmatprep.subr.mxu0 0.0
    %v7610 = vand.u32 %v1365, 4294901760
    %v7611 = vsub.f32 %v1365, %v7610
    %v7612 = vand.u32 %v7611, 4294901760
    %7613 = vmatpush1.msra.mxu0 %v7612
    %7614 = vmatprep.subr.mxu0 0.0
    %v7615 = vand.u32 %v1366, 4294901760
    %v7616 = vsub.f32 %v1366, %v7615
    %v7617 = vand.u32 %v7616, 4294901760
    %7618 = vmatpush1.msra.mxu0 %v7617
    %7619 = vmatprep.subr.mxu0 0.0
    %v7620 = vand.u32 %v1367, 4294901760
    %v7621 = vsub.f32 %v1367, %v7620
    %v7622 = vand.u32 %v7621, 4294901760
    %7623 = vmatpush1.msra.mxu0 %v7622
    %7624 = vmatprep.subr.mxu0 0.0
    %v7625 = vand.u32 %v1368, 4294901760
    %v7626 = vsub.f32 %v1368, %v7625
    %v7627 = vand.u32 %v7626, 4294901760
    %7628 = vmatpush1.msra.mxu0 %v7627
    %7629 = vmatprep.subr.mxu0 0.0
    %v7630 = vand.u32 %v1369, 4294901760
    %v7631 = vsub.f32 %v1369, %v7630
    %v7632 = vand.u32 %v7631, 4294901760
    %7633 = vmatpush1.msra.mxu0 %v7632
    %7634 = vmatprep.subr.mxu0 0.0
    %v7635 = vand.u32 %v1370, 4294901760
    %v7636 = vsub.f32 %v1370, %v7635
    %v7637 = vand.u32 %v7636, 4294901760
    %7638 = vmatpush1.msra.mxu0 %v7637
    %7639 = vmatprep.subr.mxu0 0.0
    %v7640 = vand.u32 %v1371, 4294901760
    %v7641 = vsub.f32 %v1371, %v7640
    %v7642 = vand.u32 %v7641, 4294901760
    %7643 = vmatpush1.msra.mxu0 %v7642
    %7644 = vmatprep.subr.mxu0 0.0
    %v7645 = vand.u32 %v1372, 4294901760
    %v7646 = vsub.f32 %v1372, %v7645
    %v7647 = vand.u32 %v7646, 4294901760
    %7648 = vmatpush1.msra.mxu0 %v7647
    %7649 = vmatprep.subr.mxu0 0.0
    %v7650 = vand.u32 %v1373, 4294901760
    %v7651 = vsub.f32 %v1373, %v7650
    %v7652 = vand.u32 %v7651, 4294901760
    %7653 = vmatpush1.msra.mxu0 %v7652
    %7654 = vmatprep.subr.mxu0 0.0
    %v7655 = vand.u32 %v1374, 4294901760
    %v7656 = vsub.f32 %v1374, %v7655
    %v7657 = vand.u32 %v7656, 4294901760
    %7658 = vmatpush1.msra.mxu0 %v7657
    %7659 = vmatprep.subr.mxu0 0.0
    %v7660 = vand.u32 %v1375, 4294901760
    %v7661 = vsub.f32 %v1375, %v7660
    %v7662 = vand.u32 %v7661, 4294901760
    %7663 = vmatpush1.msra.mxu0 %v7662
    %7664 = vmatprep.subr.mxu0 0.0
    %v7665 = vand.u32 %v1376, 4294901760
    %v7666 = vsub.f32 %v1376, %v7665
    %v7667 = vand.u32 %v7666, 4294901760
    %7668 = vmatpush1.msra.mxu0 %v7667
    %7669 = vmatprep.subr.mxu0 0.0
    %v7670 = vand.u32 %v1377, 4294901760
    %v7671 = vsub.f32 %v1377, %v7670
    %v7672 = vand.u32 %v7671, 4294901760
    %7673 = vmatpush1.msra.mxu0 %v7672
    %7674 = vmatprep.subr.mxu0 0.0
    %v7675 = vand.u32 %v1378, 4294901760
    %v7676 = vsub.f32 %v1378, %v7675
    %v7677 = vand.u32 %v7676, 4294901760
    %7678 = vmatpush1.msra.mxu0 %v7677
    %7679 = vmatprep.subr.mxu0 0.0
    %v7680 = vand.u32 %v1379, 4294901760
    %v7681 = vsub.f32 %v1379, %v7680
    %v7682 = vand.u32 %v7681, 4294901760
    %7683 = vmatpush1.msra.mxu0 %v7682
    %7684 = vmatprep.subr.mxu0 0.0
    %v7685 = vand.u32 %v1380, 4294901760
    %v7686 = vsub.f32 %v1380, %v7685
    %v7687 = vand.u32 %v7686, 4294901760
    %7688 = vmatpush1.msra.mxu0 %v7687
    %7689 = vmatprep.subr.mxu0 0.0
    %7690 = vmatpush1.msra.mxu0 0.0
    %7691 = vmatprep.subr.mxu0 0.0
    %7692 = vmatpush1.msra.mxu0 0.0
    %7693 = vmatprep.subr.mxu0 0.0
    %7694 = vmatpush1.msra.mxu0 0.0
    %7695 = vmatprep.subr.mxu0 0.0
    %7696 = vmatpush1.msra.mxu0 0.0
    %7697 = vmatprep.subr.mxu0 0.0
    %7698 = vmatpush1.msra.mxu0 0.0
    %7699 = vmatprep.subr.mxu0 0.0
    %7700 = vmatpush1.msra.mxu0 0.0
    %7701 = vmatprep.subr.mxu0 0.0
    %7702 = vmatpush1.msra.mxu0 0.0
    %7703 = vmatprep.subr.mxu0 0.0
    %7704 = vmatpush1.msra.mxu0 0.0
    %7705 = vmatprep.subr.mxu0 0.0
    %7706 = vmatpush1.msra.mxu0 0.0
    %7707 = vmatprep.subr.mxu0 0.0
    %7708 = vmatpush1.msra.mxu0 0.0
    %7709 = vmatprep.subr.mxu0 0.0
    %7710 = vmatpush1.msra.mxu0 0.0
    %7711 = vmatprep.subr.mxu0 0.0
    %7712 = vmatpush1.msra.mxu0 0.0
    %7713 = vmatprep.subr.mxu0 0.0
    %7714 = vmatpush1.msra.mxu0 0.0
    %7715 = vmatprep.subr.mxu0 0.0
    %7716 = vmatpush1.msra.mxu0 0.0
    %7717 = vmatprep.subr.mxu0 0.0
    %7718 = vmatpush1.msra.mxu0 0.0
    %7719 = vmatprep.subr.mxu0 0.0
    %7720 = vmatpush1.msra.mxu0 0.0
    %7721 = vmatprep.mubr.f32.mxu0 0.0
    %v7722 = vand.u32 %v7171, 4294901760
    %7723 = vmatmul.mubr.f32.gmra.mrb[0].mxu0 %v7722
    %v7724 = vpop.f32.mrb[0].mxu0
    %v7725 = vadd.f32 %v7606, %v7724
    %v7726 = vpop.f32.mrb[0].mxu0
    %7727 = vdwg.mxu0
    %7728 = vmatprep.subr.mxu0 0.0
    %v7729 = vand.u32 %v1365, 4294901760
    %7730 = vmatpush1.msra.mxu0 %v7729
    %7731 = vmatprep.subr.mxu0 0.0
    %v7732 = vand.u32 %v1366, 4294901760
    %7733 = vmatpush1.msra.mxu0 %v7732
    %7734 = vmatprep.subr.mxu0 0.0
    %v7735 = vand.u32 %v1367, 4294901760
    %7736 = vmatpush1.msra.mxu0 %v7735
    %7737 = vmatprep.subr.mxu0 0.0
    %v7738 = vand.u32 %v1368, 4294901760
    %7739 = vmatpush1.msra.mxu0 %v7738
    %7740 = vmatprep.subr.mxu0 0.0
    %v7741 = vand.u32 %v1369, 4294901760
    %7742 = vmatpush1.msra.mxu0 %v7741
    %7743 = vmatprep.subr.mxu0 0.0
    %v7744 = vand.u32 %v1370, 4294901760
    %7745 = vmatpush1.msra.mxu0 %v7744
    %7746 = vmatprep.subr.mxu0 0.0
    %v7747 = vand.u32 %v1371, 4294901760
    %7748 = vmatpush1.msra.mxu0 %v7747
    %7749 = vmatprep.subr.mxu0 0.0
    %v7750 = vand.u32 %v1372, 4294901760
    %7751 = vmatpush1.msra.mxu0 %v7750
    %7752 = vmatprep.subr.mxu0 0.0
    %v7753 = vand.u32 %v1373, 4294901760
    %7754 = vmatpush1.msra.mxu0 %v7753
    %7755 = vmatprep.subr.mxu0 0.0
    %v7756 = vand.u32 %v1374, 4294901760
    %7757 = vmatpush1.msra.mxu0 %v7756
    %7758 = vmatprep.subr.mxu0 0.0
    %v7759 = vand.u32 %v1375, 4294901760
    %7760 = vmatpush1.msra.mxu0 %v7759
    %7761 = vmatprep.subr.mxu0 0.0
    %v7762 = vand.u32 %v1376, 4294901760
    %7763 = vmatpush1.msra.mxu0 %v7762
    %7764 = vmatprep.subr.mxu0 0.0
    %v7765 = vand.u32 %v1377, 4294901760
    %7766 = vmatpush1.msra.mxu0 %v7765
    %7767 = vmatprep.subr.mxu0 0.0
    %v7768 = vand.u32 %v1378, 4294901760
    %7769 = vmatpush1.msra.mxu0 %v7768
    %7770 = vmatprep.subr.mxu0 0.0
    %v7771 = vand.u32 %v1379, 4294901760
    %7772 = vmatpush1.msra.mxu0 %v7771
    %7773 = vmatprep.subr.mxu0 0.0
    %v7774 = vand.u32 %v1380, 4294901760
    %7775 = vmatpush1.msra.mxu0 %v7774
    %7776 = vmatprep.subr.mxu0 0.0
    %7777 = vmatpush1.msra.mxu0 0.0
    %7778 = vmatprep.subr.mxu0 0.0
    %7779 = vmatpush1.msra.mxu0 0.0
    %7780 = vmatprep.subr.mxu0 0.0
    %7781 = vmatpush1.msra.mxu0 0.0
    %7782 = vmatprep.subr.mxu0 0.0
    %7783 = vmatpush1.msra.mxu0 0.0
    %7784 = vmatprep.subr.mxu0 0.0
    %7785 = vmatpush1.msra.mxu0 0.0
    %7786 = vmatprep.subr.mxu0 0.0
    %7787 = vmatpush1.msra.mxu0 0.0
    %7788 = vmatprep.subr.mxu0 0.0
    %7789 = vmatpush1.msra.mxu0 0.0
    %7790 = vmatprep.subr.mxu0 0.0
    %7791 = vmatpush1.msra.mxu0 0.0
    %7792 = vmatprep.subr.mxu0 0.0
    %7793 = vmatpush1.msra.mxu0 0.0
    %7794 = vmatprep.subr.mxu0 0.0
    %7795 = vmatpush1.msra.mxu0 0.0
    %7796 = vmatprep.subr.mxu0 0.0
    %7797 = vmatpush1.msra.mxu0 0.0
    %7798 = vmatprep.subr.mxu0 0.0
    %7799 = vmatpush1.msra.mxu0 0.0
    %7800 = vmatprep.subr.mxu0 0.0
    %7801 = vmatpush1.msra.mxu0 0.0
    %7802 = vmatprep.subr.mxu0 0.0
    %7803 = vmatpush1.msra.mxu0 0.0
    %7804 = vmatprep.subr.mxu0 0.0
    %7805 = vmatpush1.msra.mxu0 0.0
    %7806 = vmatprep.subr.mxu0 0.0
    %7807 = vmatpush1.msra.mxu0 0.0
    %7808 = vmatprep.mubr.f32.mxu0 0.0
    %v7809 = vand.u32 %v7171, 4294901760
    %7810 = vmatmul.mubr.f32.gmra.mrb[0].mxu0 %v7809
    %v7811 = vpop.f32.mrb[0].mxu0
    %v7812 = vadd.f32 %v7725, %v7811
    %v7813 = vpop.f32.mrb[0].mxu0
    %7814 = vdwg.mxu0
    %v7815 = vadd.f32 %v7173, %v7812
    %v7816 = vtanh.pop %v7815
    %s7817 = scalar_lea.vmem [#allocation2], 80
    %v7818 = vld [vmem:[%s7817] sm:$0xff]
    %7819 = vmatprep.subr.mxu0 0.0
    %v7820 = vand.u32 %v1365, 4294901760
    %7821 = vmatpush1.msra.mxu0 %v7820
    %7822 = vmatprep.subr.mxu0 0.0
    %v7823 = vand.u32 %v1366, 4294901760
    %7824 = vmatpush1.msra.mxu0 %v7823
    %7825 = vmatprep.subr.mxu0 0.0
    %v7826 = vand.u32 %v1367, 4294901760
    %7827 = vmatpush1.msra.mxu0 %v7826
    %7828 = vmatprep.subr.mxu0 0.0
    %v7829 = vand.u32 %v1368, 4294901760
    %7830 = vmatpush1.msra.mxu0 %v7829
    %7831 = vmatprep.subr.mxu0 0.0
    %v7832 = vand.u32 %v1369, 4294901760
    %7833 = vmatpush1.msra.mxu0 %v7832
    %7834 = vmatprep.subr.mxu0 0.0
    %v7835 = vand.u32 %v1370, 4294901760
    %7836 = vmatpush1.msra.mxu0 %v7835
    %7837 = vmatprep.subr.mxu0 0.0
    %v7838 = vand.u32 %v1371, 4294901760
    %7839 = vmatpush1.msra.mxu0 %v7838
    %7840 = vmatprep.subr.mxu0 0.0
    %v7841 = vand.u32 %v1372, 4294901760
    %7842 = vmatpush1.msra.mxu0 %v7841
    %7843 = vmatprep.subr.mxu0 0.0
    %v7844 = vand.u32 %v1373, 4294901760
    %7845 = vmatpush1.msra.mxu0 %v7844
    %7846 = vmatprep.subr.mxu0 0.0
    %v7847 = vand.u32 %v1374, 4294901760
    %7848 = vmatpush1.msra.mxu0 %v7847
    %7849 = vmatprep.subr.mxu0 0.0
    %v7850 = vand.u32 %v1375, 4294901760
    %7851 = vmatpush1.msra.mxu0 %v7850
    %7852 = vmatprep.subr.mxu0 0.0
    %v7853 = vand.u32 %v1376, 4294901760
    %7854 = vmatpush1.msra.mxu0 %v7853
    %7855 = vmatprep.subr.mxu0 0.0
    %v7856 = vand.u32 %v1377, 4294901760
    %7857 = vmatpush1.msra.mxu0 %v7856
    %7858 = vmatprep.subr.mxu0 0.0
    %v7859 = vand.u32 %v1378, 4294901760
    %7860 = vmatpush1.msra.mxu0 %v7859
    %7861 = vmatprep.subr.mxu0 0.0
    %v7862 = vand.u32 %v1379, 4294901760
    %7863 = vmatpush1.msra.mxu0 %v7862
    %7864 = vmatprep.subr.mxu0 0.0
    %v7865 = vand.u32 %v1380, 4294901760
    %7866 = vmatpush1.msra.mxu0 %v7865
    %7867 = vmatprep.subr.mxu0 0.0
    %7868 = vmatpush1.msra.mxu0 0.0
    %7869 = vmatprep.subr.mxu0 0.0
    %7870 = vmatpush1.msra.mxu0 0.0
    %7871 = vmatprep.subr.mxu0 0.0
    %7872 = vmatpush1.msra.mxu0 0.0
    %7873 = vmatprep.subr.mxu0 0.0
    %7874 = vmatpush1.msra.mxu0 0.0
    %7875 = vmatprep.subr.mxu0 0.0
    %7876 = vmatpush1.msra.mxu0 0.0
    %7877 = vmatprep.subr.mxu0 0.0
    %7878 = vmatpush1.msra.mxu0 0.0
    %7879 = vmatprep.subr.mxu0 0.0
    %7880 = vmatpush1.msra.mxu0 0.0
    %7881 = vmatprep.subr.mxu0 0.0
    %7882 = vmatpush1.msra.mxu0 0.0
    %7883 = vmatprep.subr.mxu0 0.0
    %7884 = vmatpush1.msra.mxu0 0.0
    %7885 = vmatprep.subr.mxu0 0.0
    %7886 = vmatpush1.msra.mxu0 0.0
    %7887 = vmatprep.subr.mxu0 0.0
    %7888 = vmatpush1.msra.mxu0 0.0
    %7889 = vmatprep.subr.mxu0 0.0
    %7890 = vmatpush1.msra.mxu0 0.0
    %7891 = vmatprep.subr.mxu0 0.0
    %7892 = vmatpush1.msra.mxu0 0.0
    %7893 = vmatprep.subr.mxu0 0.0
    %7894 = vmatpush1.msra.mxu0 0.0
    %7895 = vmatprep.subr.mxu0 0.0
    %7896 = vmatpush1.msra.mxu0 0.0
    %7897 = vmatprep.subr.mxu0 0.0
    %7898 = vmatpush1.msra.mxu0 0.0
    %7899 = vmatprep.mubr.f32.mxu0 0.0
    %v7900 = vand.u32 %v7816, 4294901760
    %v7901 = vsub.f32 %v7816, %v7900
    %v7902 = vand.u32 %v7901, 4294901760
    %v7903 = vsub.f32 %v7901, %v7902
    %v7904 = vand.u32 %v7903, 4294901760
    %7905 = vmatmul.mubr.f32.gmra.mrb[0].mxu0 %v7904
    %v7906 = vpop.f32.mrb[0].mxu0
    %v7907 = vadd.f32 0.0, %v7906
    %v7908 = vpop.f32.mrb[0].mxu0
    %7909 = vdwg.mxu0
    %7910 = vmatprep.subr.mxu0 0.0
    %v7911 = vand.u32 %v1365, 4294901760
    %v7912 = vsub.f32 %v1365, %v7911
    %v7913 = vand.u32 %v7912, 4294901760
    %v7914 = vsub.f32 %v7912, %v7913
    %v7915 = vand.u32 %v7914, 4294901760
    %7916 = vmatpush1.msra.mxu0 %v7915
    %7917 = vmatprep.subr.mxu0 0.0
    %v7918 = vand.u32 %v1366, 4294901760
    %v7919 = vsub.f32 %v1366, %v7918
    %v7920 = vand.u32 %v7919, 4294901760
    %v7921 = vsub.f32 %v7919, %v7920
    %v7922 = vand.u32 %v7921, 4294901760
    %7923 = vmatpush1.msra.mxu0 %v7922
    %7924 = vmatprep.subr.mxu0 0.0
    %v7925 = vand.u32 %v1367, 4294901760
    %v7926 = vsub.f32 %v1367, %v7925
    %v7927 = vand.u32 %v7926, 4294901760
    %v7928 = vsub.f32 %v7926, %v7927
    %v7929 = vand.u32 %v7928, 4294901760
    %7930 = vmatpush1.msra.mxu0 %v7929
    %7931 = vmatprep.subr.mxu0 0.0
    %v7932 = vand.u32 %v1368, 4294901760
    %v7933 = vsub.f32 %v1368, %v7932
    %v7934 = vand.u32 %v7933, 4294901760
    %v7935 = vsub.f32 %v7933, %v7934
    %v7936 = vand.u32 %v7935, 4294901760
    %7937 = vmatpush1.msra.mxu0 %v7936
    %7938 = vmatprep.subr.mxu0 0.0
    %v7939 = vand.u32 %v1369, 4294901760
    %v7940 = vsub.f32 %v1369, %v7939
    %v7941 = vand.u32 %v7940, 4294901760
    %v7942 = vsub.f32 %v7940, %v7941
    %v7943 = vand.u32 %v7942, 4294901760
    %7944 = vmatpush1.msra.mxu0 %v7943
    %7945 = vmatprep.subr.mxu0 0.0
    %v7946 = vand.u32 %v1370, 4294901760
    %v7947 = vsub.f32 %v1370, %v7946
    %v7948 = vand.u32 %v7947, 4294901760
    %v7949 = vsub.f32 %v7947, %v7948
    %v7950 = vand.u32 %v7949, 4294901760
    %7951 = vmatpush1.msra.mxu0 %v7950
    %7952 = vmatprep.subr.mxu0 0.0
    %v7953 = vand.u32 %v1371, 4294901760
    %v7954 = vsub.f32 %v1371, %v7953
    %v7955 = vand.u32 %v7954, 4294901760
    %v7956 = vsub.f32 %v7954, %v7955
    %v7957 = vand.u32 %v7956, 4294901760
    %7958 = vmatpush1.msra.mxu0 %v7957
    %7959 = vmatprep.subr.mxu0 0.0
    %v7960 = vand.u32 %v1372, 4294901760
    %v7961 = vsub.f32 %v1372, %v7960
    %v7962 = vand.u32 %v7961, 4294901760
    %v7963 = vsub.f32 %v7961, %v7962
    %v7964 = vand.u32 %v7963, 4294901760
    %7965 = vmatpush1.msra.mxu0 %v7964
    %7966 = vmatprep.subr.mxu0 0.0
    %v7967 = vand.u32 %v1373, 4294901760
    %v7968 = vsub.f32 %v1373, %v7967
    %v7969 = vand.u32 %v7968, 4294901760
    %v7970 = vsub.f32 %v7968, %v7969
    %v7971 = vand.u32 %v7970, 4294901760
    %7972 = vmatpush1.msra.mxu0 %v7971
    %7973 = vmatprep.subr.mxu0 0.0
    %v7974 = vand.u32 %v1374, 4294901760
    %v7975 = vsub.f32 %v1374, %v7974
    %v7976 = vand.u32 %v7975, 4294901760
    %v7977 = vsub.f32 %v7975, %v7976
    %v7978 = vand.u32 %v7977, 4294901760
    %7979 = vmatpush1.msra.mxu0 %v7978
    %7980 = vmatprep.subr.mxu0 0.0
    %v7981 = vand.u32 %v1375, 4294901760
    %v7982 = vsub.f32 %v1375, %v7981
    %v7983 = vand.u32 %v7982, 4294901760
    %v7984 = vsub.f32 %v7982, %v7983
    %v7985 = vand.u32 %v7984, 4294901760
    %7986 = vmatpush1.msra.mxu0 %v7985
    %7987 = vmatprep.subr.mxu0 0.0
    %v7988 = vand.u32 %v1376, 4294901760
    %v7989 = vsub.f32 %v1376, %v7988
    %v7990 = vand.u32 %v7989, 4294901760
    %v7991 = vsub.f32 %v7989, %v7990
    %v7992 = vand.u32 %v7991, 4294901760
    %7993 = vmatpush1.msra.mxu0 %v7992
    %7994 = vmatprep.subr.mxu0 0.0
    %v7995 = vand.u32 %v1377, 4294901760
    %v7996 = vsub.f32 %v1377, %v7995
    %v7997 = vand.u32 %v7996, 4294901760
    %v7998 = vsub.f32 %v7996, %v7997
    %v7999 = vand.u32 %v7998, 4294901760
    %8000 = vmatpush1.msra.mxu0 %v7999
    %8001 = vmatprep.subr.mxu0 0.0
    %v8002 = vand.u32 %v1378, 4294901760
    %v8003 = vsub.f32 %v1378, %v8002
    %v8004 = vand.u32 %v8003, 4294901760
    %v8005 = vsub.f32 %v8003, %v8004
    %v8006 = vand.u32 %v8005, 4294901760
    %8007 = vmatpush1.msra.mxu0 %v8006
    %8008 = vmatprep.subr.mxu0 0.0
    %v8009 = vand.u32 %v1379, 4294901760
    %v8010 = vsub.f32 %v1379, %v8009
    %v8011 = vand.u32 %v8010, 4294901760
    %v8012 = vsub.f32 %v8010, %v8011
    %v8013 = vand.u32 %v8012, 4294901760
    %8014 = vmatpush1.msra.mxu0 %v8013
    %8015 = vmatprep.subr.mxu0 0.0
    %v8016 = vand.u32 %v1380, 4294901760
    %v8017 = vsub.f32 %v1380, %v8016
    %v8018 = vand.u32 %v8017, 4294901760
    %v8019 = vsub.f32 %v8017, %v8018
    %v8020 = vand.u32 %v8019, 4294901760
    %8021 = vmatpush1.msra.mxu0 %v8020
    %8022 = vmatprep.subr.mxu0 0.0
    %8023 = vmatpush1.msra.mxu0 0.0
    %8024 = vmatprep.subr.mxu0 0.0
    %8025 = vmatpush1.msra.mxu0 0.0
    %8026 = vmatprep.subr.mxu0 0.0
    %8027 = vmatpush1.msra.mxu0 0.0
    %8028 = vmatprep.subr.mxu0 0.0
    %8029 = vmatpush1.msra.mxu0 0.0
    %8030 = vmatprep.subr.mxu0 0.0
    %8031 = vmatpush1.msra.mxu0 0.0
    %8032 = vmatprep.subr.mxu0 0.0
    %8033 = vmatpush1.msra.mxu0 0.0
    %8034 = vmatprep.subr.mxu0 0.0
    %8035 = vmatpush1.msra.mxu0 0.0
    %8036 = vmatprep.subr.mxu0 0.0
    %8037 = vmatpush1.msra.mxu0 0.0
    %8038 = vmatprep.subr.mxu0 0.0
    %8039 = vmatpush1.msra.mxu0 0.0
    %8040 = vmatprep.subr.mxu0 0.0
    %8041 = vmatpush1.msra.mxu0 0.0
    %8042 = vmatprep.subr.mxu0 0.0
    %8043 = vmatpush1.msra.mxu0 0.0
    %8044 = vmatprep.subr.mxu0 0.0
    %8045 = vmatpush1.msra.mxu0 0.0
    %8046 = vmatprep.subr.mxu0 0.0
    %8047 = vmatpush1.msra.mxu0 0.0
    %8048 = vmatprep.subr.mxu0 0.0
    %8049 = vmatpush1.msra.mxu0 0.0
    %8050 = vmatprep.subr.mxu0 0.0
    %8051 = vmatpush1.msra.mxu0 0.0
    %8052 = vmatprep.subr.mxu0 0.0
    %8053 = vmatpush1.msra.mxu0 0.0
    %8054 = vmatprep.mubr.f32.mxu0 0.0
    %v8055 = vand.u32 %v7816, 4294901760
    %8056 = vmatmul.mubr.f32.gmra.mrb[0].mxu0 %v8055
    %v8057 = vpop.f32.mrb[0].mxu0
    %v8058 = vadd.f32 %v7907, %v8057
    %v8059 = vpop.f32.mrb[0].mxu0
    %8060 = vdwg.mxu0
    %8061 = vmatprep.subr.mxu0 0.0
    %v8062 = vand.u32 %v1365, 4294901760
    %v8063 = vsub.f32 %v1365, %v8062
    %8064 = vmatpush1.msra.mxu0 %v8063
    %8065 = vmatprep.subr.mxu0 0.0
    %v8066 = vand.u32 %v1366, 4294901760
    %v8067 = vsub.f32 %v1366, %v8066
    %8068 = vmatpush1.msra.mxu0 %v8067
    %8069 = vmatprep.subr.mxu0 0.0
    %v8070 = vand.u32 %v1367, 4294901760
    %v8071 = vsub.f32 %v1367, %v8070
    %8072 = vmatpush1.msra.mxu0 %v8071
    %8073 = vmatprep.subr.mxu0 0.0
    %v8074 = vand.u32 %v1368, 4294901760
    %v8075 = vsub.f32 %v1368, %v8074
    %8076 = vmatpush1.msra.mxu0 %v8075
    %8077 = vmatprep.subr.mxu0 0.0
    %v8078 = vand.u32 %v1369, 4294901760
    %v8079 = vsub.f32 %v1369, %v8078
    %8080 = vmatpush1.msra.mxu0 %v8079
    %8081 = vmatprep.subr.mxu0 0.0
    %v8082 = vand.u32 %v1370, 4294901760
    %v8083 = vsub.f32 %v1370, %v8082
    %8084 = vmatpush1.msra.mxu0 %v8083
    %8085 = vmatprep.subr.mxu0 0.0
    %v8086 = vand.u32 %v1371, 4294901760
    %v8087 = vsub.f32 %v1371, %v8086
    %8088 = vmatpush1.msra.mxu0 %v8087
    %8089 = vmatprep.subr.mxu0 0.0
    %v8090 = vand.u32 %v1372, 4294901760
    %v8091 = vsub.f32 %v1372, %v8090
    %8092 = vmatpush1.msra.mxu0 %v8091
    %8093 = vmatprep.subr.mxu0 0.0
    %v8094 = vand.u32 %v1373, 4294901760
    %v8095 = vsub.f32 %v1373, %v8094
    %8096 = vmatpush1.msra.mxu0 %v8095
    %8097 = vmatprep.subr.mxu0 0.0
    %v8098 = vand.u32 %v1374, 4294901760
    %v8099 = vsub.f32 %v1374, %v8098
    %8100 = vmatpush1.msra.mxu0 %v8099
    %8101 = vmatprep.subr.mxu0 0.0
    %v8102 = vand.u32 %v1375, 4294901760
    %v8103 = vsub.f32 %v1375, %v8102
    %8104 = vmatpush1.msra.mxu0 %v8103
    %8105 = vmatprep.subr.mxu0 0.0
    %v8106 = vand.u32 %v1376, 4294901760
    %v8107 = vsub.f32 %v1376, %v8106
    %8108 = vmatpush1.msra.mxu0 %v8107
    %8109 = vmatprep.subr.mxu0 0.0
    %v8110 = vand.u32 %v1377, 4294901760
    %v8111 = vsub.f32 %v1377, %v8110
    %8112 = vmatpush1.msra.mxu0 %v8111
    %8113 = vmatprep.subr.mxu0 0.0
    %v8114 = vand.u32 %v1378, 4294901760
    %v8115 = vsub.f32 %v1378, %v8114
    %8116 = vmatpush1.msra.mxu0 %v8115
    %8117 = vmatprep.subr.mxu0 0.0
    %v8118 = vand.u32 %v1379, 4294901760
    %v8119 = vsub.f32 %v1379, %v8118
    %8120 = vmatpush1.msra.mxu0 %v8119
    %8121 = vmatprep.subr.mxu0 0.0
    %v8122 = vand.u32 %v1380, 4294901760
    %v8123 = vsub.f32 %v1380, %v8122
    %8124 = vmatpush1.msra.mxu0 %v8123
    %8125 = vmatprep.subr.mxu0 0.0
    %8126 = vmatpush1.msra.mxu0 0.0
    %8127 = vmatprep.subr.mxu0 0.0
    %8128 = vmatpush1.msra.mxu0 0.0
    %8129 = vmatprep.subr.mxu0 0.0
    %8130 = vmatpush1.msra.mxu0 0.0
    %8131 = vmatprep.subr.mxu0 0.0
    %8132 = vmatpush1.msra.mxu0 0.0
    %8133 = vmatprep.subr.mxu0 0.0
    %8134 = vmatpush1.msra.mxu0 0.0
    %8135 = vmatprep.subr.mxu0 0.0
    %8136 = vmatpush1.msra.mxu0 0.0
    %8137 = vmatprep.subr.mxu0 0.0
    %8138 = vmatpush1.msra.mxu0 0.0
    %8139 = vmatprep.subr.mxu0 0.0
    %8140 = vmatpush1.msra.mxu0 0.0
    %8141 = vmatprep.subr.mxu0 0.0
    %8142 = vmatpush1.msra.mxu0 0.0
    %8143 = vmatprep.subr.mxu0 0.0
    %8144 = vmatpush1.msra.mxu0 0.0
    %8145 = vmatprep.subr.mxu0 0.0
    %8146 = vmatpush1.msra.mxu0 0.0
    %8147 = vmatprep.subr.mxu0 0.0
    %8148 = vmatpush1.msra.mxu0 0.0
    %8149 = vmatprep.subr.mxu0 0.0
    %8150 = vmatpush1.msra.mxu0 0.0
    %8151 = vmatprep.subr.mxu0 0.0
    %8152 = vmatpush1.msra.mxu0 0.0
    %8153 = vmatprep.subr.mxu0 0.0
    %8154 = vmatpush1.msra.mxu0 0.0
    %8155 = vmatprep.subr.mxu0 0.0
    %8156 = vmatpush1.msra.mxu0 0.0
    %8157 = vmatprep.mubr.f32.mxu0 0.0
    %v8158 = vand.u32 %v7816, 4294901760
    %v8159 = vsub.f32 %v7816, %v8158
    %8160 = vmatmul.mubr.f32.gmra.mrb[0].mxu0 %v8159
    %v8161 = vpop.f32.mrb[0].mxu0
    %v8162 = vadd.f32 %v8058, %v8161
    %v8163 = vpop.f32.mrb[0].mxu0
    %8164 = vdwg.mxu0
    %8165 = vmatprep.subr.mxu0 0.0
    %v8166 = vand.u32 %v1365, 4294901760
    %8167 = vmatpush1.msra.mxu0 %v8166
    %8168 = vmatprep.subr.mxu0 0.0
    %v8169 = vand.u32 %v1366, 4294901760
    %8170 = vmatpush1.msra.mxu0 %v8169
    %8171 = vmatprep.subr.mxu0 0.0
    %v8172 = vand.u32 %v1367, 4294901760
    %8173 = vmatpush1.msra.mxu0 %v8172
    %8174 = vmatprep.subr.mxu0 0.0
    %v8175 = vand.u32 %v1368, 4294901760
    %8176 = vmatpush1.msra.mxu0 %v8175
    %8177 = vmatprep.subr.mxu0 0.0
    %v8178 = vand.u32 %v1369, 4294901760
    %8179 = vmatpush1.msra.mxu0 %v8178
    %8180 = vmatprep.subr.mxu0 0.0
    %v8181 = vand.u32 %v1370, 4294901760
    %8182 = vmatpush1.msra.mxu0 %v8181
    %8183 = vmatprep.subr.mxu0 0.0
    %v8184 = vand.u32 %v1371, 4294901760
    %8185 = vmatpush1.msra.mxu0 %v8184
    %8186 = vmatprep.subr.mxu0 0.0
    %v8187 = vand.u32 %v1372, 4294901760
    %8188 = vmatpush1.msra.mxu0 %v8187
    %8189 = vmatprep.subr.mxu0 0.0
    %v8190 = vand.u32 %v1373, 4294901760
    %8191 = vmatpush1.msra.mxu0 %v8190
    %8192 = vmatprep.subr.mxu0 0.0
    %v8193 = vand.u32 %v1374, 4294901760
    %8194 = vmatpush1.msra.mxu0 %v8193
    %8195 = vmatprep.subr.mxu0 0.0
    %v8196 = vand.u32 %v1375, 4294901760
    %8197 = vmatpush1.msra.mxu0 %v8196
    %8198 = vmatprep.subr.mxu0 0.0
    %v8199 = vand.u32 %v1376, 4294901760
    %8200 = vmatpush1.msra.mxu0 %v8199
    %8201 = vmatprep.subr.mxu0 0.0
    %v8202 = vand.u32 %v1377, 4294901760
    %8203 = vmatpush1.msra.mxu0 %v8202
    %8204 = vmatprep.subr.mxu0 0.0
    %v8205 = vand.u32 %v1378, 4294901760
    %8206 = vmatpush1.msra.mxu0 %v8205
    %8207 = vmatprep.subr.mxu0 0.0
    %v8208 = vand.u32 %v1379, 4294901760
    %8209 = vmatpush1.msra.mxu0 %v8208
    %8210 = vmatprep.subr.mxu0 0.0
    %v8211 = vand.u32 %v1380, 4294901760
    %8212 = vmatpush1.msra.mxu0 %v8211
    %8213 = vmatprep.subr.mxu0 0.0
    %8214 = vmatpush1.msra.mxu0 0.0
    %8215 = vmatprep.subr.mxu0 0.0
    %8216 = vmatpush1.msra.mxu0 0.0
    %8217 = vmatprep.subr.mxu0 0.0
    %8218 = vmatpush1.msra.mxu0 0.0
    %8219 = vmatprep.subr.mxu0 0.0
    %8220 = vmatpush1.msra.mxu0 0.0
    %8221 = vmatprep.subr.mxu0 0.0
    %8222 = vmatpush1.msra.mxu0 0.0
    %8223 = vmatprep.subr.mxu0 0.0
    %8224 = vmatpush1.msra.mxu0 0.0
    %8225 = vmatprep.subr.mxu0 0.0
    %8226 = vmatpush1.msra.mxu0 0.0
    %8227 = vmatprep.subr.mxu0 0.0
    %8228 = vmatpush1.msra.mxu0 0.0
    %8229 = vmatprep.subr.mxu0 0.0
    %8230 = vmatpush1.msra.mxu0 0.0
    %8231 = vmatprep.subr.mxu0 0.0
    %8232 = vmatpush1.msra.mxu0 0.0
    %8233 = vmatprep.subr.mxu0 0.0
    %8234 = vmatpush1.msra.mxu0 0.0
    %8235 = vmatprep.subr.mxu0 0.0
    %8236 = vmatpush1.msra.mxu0 0.0
    %8237 = vmatprep.subr.mxu0 0.0
    %8238 = vmatpush1.msra.mxu0 0.0
    %8239 = vmatprep.subr.mxu0 0.0
    %8240 = vmatpush1.msra.mxu0 0.0
    %8241 = vmatprep.subr.mxu0 0.0
    %8242 = vmatpush1.msra.mxu0 0.0
    %8243 = vmatprep.subr.mxu0 0.0
    %8244 = vmatpush1.msra.mxu0 0.0
    %8245 = vmatprep.mubr.f32.mxu0 0.0
    %v8246 = vand.u32 %v7816, 4294901760
    %v8247 = vsub.f32 %v7816, %v8246
    %v8248 = vand.u32 %v8247, 4294901760
    %8249 = vmatmul.mubr.f32.gmra.mrb[0].mxu0 %v8248
    %v8250 = vpop.f32.mrb[0].mxu0
    %v8251 = vadd.f32 %v8162, %v8250
    %v8252 = vpop.f32.mrb[0].mxu0
    %8253 = vdwg.mxu0
    %8254 = vmatprep.subr.mxu0 0.0
    %v8255 = vand.u32 %v1365, 4294901760
    %v8256 = vsub.f32 %v1365, %v8255
    %v8257 = vand.u32 %v8256, 4294901760
    %8258 = vmatpush1.msra.mxu0 %v8257
    %8259 = vmatprep.subr.mxu0 0.0
    %v8260 = vand.u32 %v1366, 4294901760
    %v8261 = vsub.f32 %v1366, %v8260
    %v8262 = vand.u32 %v8261, 4294901760
    %8263 = vmatpush1.msra.mxu0 %v8262
    %8264 = vmatprep.subr.mxu0 0.0
    %v8265 = vand.u32 %v1367, 4294901760
    %v8266 = vsub.f32 %v1367, %v8265
    %v8267 = vand.u32 %v8266, 4294901760
    %8268 = vmatpush1.msra.mxu0 %v8267
    %8269 = vmatprep.subr.mxu0 0.0
    %v8270 = vand.u32 %v1368, 4294901760
    %v8271 = vsub.f32 %v1368, %v8270
    %v8272 = vand.u32 %v8271, 4294901760
    %8273 = vmatpush1.msra.mxu0 %v8272
    %8274 = vmatprep.subr.mxu0 0.0
    %v8275 = vand.u32 %v1369, 4294901760
    %v8276 = vsub.f32 %v1369, %v8275
    %v8277 = vand.u32 %v8276, 4294901760
    %8278 = vmatpush1.msra.mxu0 %v8277
    %8279 = vmatprep.subr.mxu0 0.0
    %v8280 = vand.u32 %v1370, 4294901760
    %v8281 = vsub.f32 %v1370, %v8280
    %v8282 = vand.u32 %v8281, 4294901760
    %8283 = vmatpush1.msra.mxu0 %v8282
    %8284 = vmatprep.subr.mxu0 0.0
    %v8285 = vand.u32 %v1371, 4294901760
    %v8286 = vsub.f32 %v1371, %v8285
    %v8287 = vand.u32 %v8286, 4294901760
    %8288 = vmatpush1.msra.mxu0 %v8287
    %8289 = vmatprep.subr.mxu0 0.0
    %v8290 = vand.u32 %v1372, 4294901760
    %v8291 = vsub.f32 %v1372, %v8290
    %v8292 = vand.u32 %v8291, 4294901760
    %8293 = vmatpush1.msra.mxu0 %v8292
    %8294 = vmatprep.subr.mxu0 0.0
    %v8295 = vand.u32 %v1373, 4294901760
    %v8296 = vsub.f32 %v1373, %v8295
    %v8297 = vand.u32 %v8296, 4294901760
    %8298 = vmatpush1.msra.mxu0 %v8297
    %8299 = vmatprep.subr.mxu0 0.0
    %v8300 = vand.u32 %v1374, 4294901760
    %v8301 = vsub.f32 %v1374, %v8300
    %v8302 = vand.u32 %v8301, 4294901760
    %8303 = vmatpush1.msra.mxu0 %v8302
    %8304 = vmatprep.subr.mxu0 0.0
    %v8305 = vand.u32 %v1375, 4294901760
    %v8306 = vsub.f32 %v1375, %v8305
    %v8307 = vand.u32 %v8306, 4294901760
    %8308 = vmatpush1.msra.mxu0 %v8307
    %8309 = vmatprep.subr.mxu0 0.0
    %v8310 = vand.u32 %v1376, 4294901760
    %v8311 = vsub.f32 %v1376, %v8310
    %v8312 = vand.u32 %v8311, 4294901760
    %8313 = vmatpush1.msra.mxu0 %v8312
    %8314 = vmatprep.subr.mxu0 0.0
    %v8315 = vand.u32 %v1377, 4294901760
    %v8316 = vsub.f32 %v1377, %v8315
    %v8317 = vand.u32 %v8316, 4294901760
    %8318 = vmatpush1.msra.mxu0 %v8317
    %8319 = vmatprep.subr.mxu0 0.0
    %v8320 = vand.u32 %v1378, 4294901760
    %v8321 = vsub.f32 %v1378, %v8320
    %v8322 = vand.u32 %v8321, 4294901760
    %8323 = vmatpush1.msra.mxu0 %v8322
    %8324 = vmatprep.subr.mxu0 0.0
    %v8325 = vand.u32 %v1379, 4294901760
    %v8326 = vsub.f32 %v1379, %v8325
    %v8327 = vand.u32 %v8326, 4294901760
    %8328 = vmatpush1.msra.mxu0 %v8327
    %8329 = vmatprep.subr.mxu0 0.0
    %v8330 = vand.u32 %v1380, 4294901760
    %v8331 = vsub.f32 %v1380, %v8330
    %v8332 = vand.u32 %v8331, 4294901760
    %8333 = vmatpush1.msra.mxu0 %v8332
    %8334 = vmatprep.subr.mxu0 0.0
    %8335 = vmatpush1.msra.mxu0 0.0
    %8336 = vmatprep.subr.mxu0 0.0
    %8337 = vmatpush1.msra.mxu0 0.0
    %8338 = vmatprep.subr.mxu0 0.0
    %8339 = vmatpush1.msra.mxu0 0.0
    %8340 = vmatprep.subr.mxu0 0.0
    %8341 = vmatpush1.msra.mxu0 0.0
    %8342 = vmatprep.subr.mxu0 0.0
    %8343 = vmatpush1.msra.mxu0 0.0
    %8344 = vmatprep.subr.mxu0 0.0
    %8345 = vmatpush1.msra.mxu0 0.0
    %8346 = vmatprep.subr.mxu0 0.0
    %8347 = vmatpush1.msra.mxu0 0.0
    %8348 = vmatprep.subr.mxu0 0.0
    %8349 = vmatpush1.msra.mxu0 0.0
    %8350 = vmatprep.subr.mxu0 0.0
    %8351 = vmatpush1.msra.mxu0 0.0
    %8352 = vmatprep.subr.mxu0 0.0
    %8353 = vmatpush1.msra.mxu0 0.0
    %8354 = vmatprep.subr.mxu0 0.0
    %8355 = vmatpush1.msra.mxu0 0.0
    %8356 = vmatprep.subr.mxu0 0.0
    %8357 = vmatpush1.msra.mxu0 0.0
    %8358 = vmatprep.subr.mxu0 0.0
    %8359 = vmatpush1.msra.mxu0 0.0
    %8360 = vmatprep.subr.mxu0 0.0
    %8361 = vmatpush1.msra.mxu0 0.0
    %8362 = vmatprep.subr.mxu0 0.0
    %8363 = vmatpush1.msra.mxu0 0.0
    %8364 = vmatprep.subr.mxu0 0.0
    %8365 = vmatpush1.msra.mxu0 0.0
    %8366 = vmatprep.mubr.f32.mxu0 0.0
    %v8367 = vand.u32 %v7816, 4294901760
    %8368 = vmatmul.mubr.f32.gmra.mrb[0].mxu0 %v8367
    %v8369 = vpop.f32.mrb[0].mxu0
    %v8370 = vadd.f32 %v8251, %v8369
    %v8371 = vpop.f32.mrb[0].mxu0
    %8372 = vdwg.mxu0
    %8373 = vmatprep.subr.mxu0 0.0
    %v8374 = vand.u32 %v1365, 4294901760
    %8375 = vmatpush1.msra.mxu0 %v8374
    %8376 = vmatprep.subr.mxu0 0.0
    %v8377 = vand.u32 %v1366, 4294901760
    %8378 = vmatpush1.msra.mxu0 %v8377
    %8379 = vmatprep.subr.mxu0 0.0
    %v8380 = vand.u32 %v1367, 4294901760
    %8381 = vmatpush1.msra.mxu0 %v8380
    %8382 = vmatprep.subr.mxu0 0.0
    %v8383 = vand.u32 %v1368, 4294901760
    %8384 = vmatpush1.msra.mxu0 %v8383
    %8385 = vmatprep.subr.mxu0 0.0
    %v8386 = vand.u32 %v1369, 4294901760
    %8387 = vmatpush1.msra.mxu0 %v8386
    %8388 = vmatprep.subr.mxu0 0.0
    %v8389 = vand.u32 %v1370, 4294901760
    %8390 = vmatpush1.msra.mxu0 %v8389
    %8391 = vmatprep.subr.mxu0 0.0
    %v8392 = vand.u32 %v1371, 4294901760
    %8393 = vmatpush1.msra.mxu0 %v8392
    %8394 = vmatprep.subr.mxu0 0.0
    %v8395 = vand.u32 %v1372, 4294901760
    %8396 = vmatpush1.msra.mxu0 %v8395
    %8397 = vmatprep.subr.mxu0 0.0
    %v8398 = vand.u32 %v1373, 4294901760
    %8399 = vmatpush1.msra.mxu0 %v8398
    %8400 = vmatprep.subr.mxu0 0.0
    %v8401 = vand.u32 %v1374, 4294901760
    %8402 = vmatpush1.msra.mxu0 %v8401
    %8403 = vmatprep.subr.mxu0 0.0
    %v8404 = vand.u32 %v1375, 4294901760
    %8405 = vmatpush1.msra.mxu0 %v8404
    %8406 = vmatprep.subr.mxu0 0.0
    %v8407 = vand.u32 %v1376, 4294901760
    %8408 = vmatpush1.msra.mxu0 %v8407
    %8409 = vmatprep.subr.mxu0 0.0
    %v8410 = vand.u32 %v1377, 4294901760
    %8411 = vmatpush1.msra.mxu0 %v8410
    %8412 = vmatprep.subr.mxu0 0.0
    %v8413 = vand.u32 %v1378, 4294901760
    %8414 = vmatpush1.msra.mxu0 %v8413
    %8415 = vmatprep.subr.mxu0 0.0
    %v8416 = vand.u32 %v1379, 4294901760
    %8417 = vmatpush1.msra.mxu0 %v8416
    %8418 = vmatprep.subr.mxu0 0.0
    %v8419 = vand.u32 %v1380, 4294901760
    %8420 = vmatpush1.msra.mxu0 %v8419
    %8421 = vmatprep.subr.mxu0 0.0
    %8422 = vmatpush1.msra.mxu0 0.0
    %8423 = vmatprep.subr.mxu0 0.0
    %8424 = vmatpush1.msra.mxu0 0.0
    %8425 = vmatprep.subr.mxu0 0.0
    %8426 = vmatpush1.msra.mxu0 0.0
    %8427 = vmatprep.subr.mxu0 0.0
    %8428 = vmatpush1.msra.mxu0 0.0
    %8429 = vmatprep.subr.mxu0 0.0
    %8430 = vmatpush1.msra.mxu0 0.0
    %8431 = vmatprep.subr.mxu0 0.0
    %8432 = vmatpush1.msra.mxu0 0.0
    %8433 = vmatprep.subr.mxu0 0.0
    %8434 = vmatpush1.msra.mxu0 0.0
    %8435 = vmatprep.subr.mxu0 0.0
    %8436 = vmatpush1.msra.mxu0 0.0
    %8437 = vmatprep.subr.mxu0 0.0
    %8438 = vmatpush1.msra.mxu0 0.0
    %8439 = vmatprep.subr.mxu0 0.0
    %8440 = vmatpush1.msra.mxu0 0.0
    %8441 = vmatprep.subr.mxu0 0.0
    %8442 = vmatpush1.msra.mxu0 0.0
    %8443 = vmatprep.subr.mxu0 0.0
    %8444 = vmatpush1.msra.mxu0 0.0
    %8445 = vmatprep.subr.mxu0 0.0
    %8446 = vmatpush1.msra.mxu0 0.0
    %8447 = vmatprep.subr.mxu0 0.0
    %8448 = vmatpush1.msra.mxu0 0.0
    %8449 = vmatprep.subr.mxu0 0.0
    %8450 = vmatpush1.msra.mxu0 0.0
    %8451 = vmatprep.subr.mxu0 0.0
    %8452 = vmatpush1.msra.mxu0 0.0
    %8453 = vmatprep.mubr.f32.mxu0 0.0
    %v8454 = vand.u32 %v7816, 4294901760
    %8455 = vmatmul.mubr.f32.gmra.mrb[0].mxu0 %v8454
    %v8456 = vpop.f32.mrb[0].mxu0
    %v8457 = vadd.f32 %v8370, %v8456
    %v8458 = vpop.f32.mrb[0].mxu0
    %8459 = vdwg.mxu0
    %v8460 = vadd.f32 %v7818, %v8457
    %v8461 = vtanh.pop %v8460
    %s8462 = scalar_lea.vmem [#allocation2], 88
    %v8463 = vld [vmem:[%s8462] sm:$0xff]
    %8464 = vmatprep.subr.mxu0 0.0
    %v8465 = vand.u32 %v1365, 4294901760
    %8466 = vmatpush1.msra.mxu0 %v8465
    %8467 = vmatprep.subr.mxu0 0.0
    %v8468 = vand.u32 %v1366, 4294901760
    %8469 = vmatpush1.msra.mxu0 %v8468
    %8470 = vmatprep.subr.mxu0 0.0
    %v8471 = vand.u32 %v1367, 4294901760
    %8472 = vmatpush1.msra.mxu0 %v8471
    %8473 = vmatprep.subr.mxu0 0.0
    %v8474 = vand.u32 %v1368, 4294901760
    %8475 = vmatpush1.msra.mxu0 %v8474
    %8476 = vmatprep.subr.mxu0 0.0
    %v8477 = vand.u32 %v1369, 4294901760
    %8478 = vmatpush1.msra.mxu0 %v8477
    %8479 = vmatprep.subr.mxu0 0.0
    %v8480 = vand.u32 %v1370, 4294901760
    %8481 = vmatpush1.msra.mxu0 %v8480
    %8482 = vmatprep.subr.mxu0 0.0
    %v8483 = vand.u32 %v1371, 4294901760
    %8484 = vmatpush1.msra.mxu0 %v8483
    %8485 = vmatprep.subr.mxu0 0.0
    %v8486 = vand.u32 %v1372, 4294901760
    %8487 = vmatpush1.msra.mxu0 %v8486
    %8488 = vmatprep.subr.mxu0 0.0
    %v8489 = vand.u32 %v1373, 4294901760
    %8490 = vmatpush1.msra.mxu0 %v8489
    %8491 = vmatprep.subr.mxu0 0.0
    %v8492 = vand.u32 %v1374, 4294901760
    %8493 = vmatpush1.msra.mxu0 %v8492
    %8494 = vmatprep.subr.mxu0 0.0
    %v8495 = vand.u32 %v1375, 4294901760
    %8496 = vmatpush1.msra.mxu0 %v8495
    %8497 = vmatprep.subr.mxu0 0.0
    %v8498 = vand.u32 %v1376, 4294901760
    %8499 = vmatpush1.msra.mxu0 %v8498
    %8500 = vmatprep.subr.mxu0 0.0
    %v8501 = vand.u32 %v1377, 4294901760
    %8502 = vmatpush1.msra.mxu0 %v8501
    %8503 = vmatprep.subr.mxu0 0.0
    %v8504 = vand.u32 %v1378, 4294901760
    %8505 = vmatpush1.msra.mxu0 %v8504
    %8506 = vmatprep.subr.mxu0 0.0
    %v8507 = vand.u32 %v1379, 4294901760
    %8508 = vmatpush1.msra.mxu0 %v8507
    %8509 = vmatprep.subr.mxu0 0.0
    %v8510 = vand.u32 %v1380, 4294901760
    %8511 = vmatpush1.msra.mxu0 %v8510
    %8512 = vmatprep.subr.mxu0 0.0
    %8513 = vmatpush1.msra.mxu0 0.0
    %8514 = vmatprep.subr.mxu0 0.0
    %8515 = vmatpush1.msra.mxu0 0.0
    %8516 = vmatprep.subr.mxu0 0.0
    %8517 = vmatpush1.msra.mxu0 0.0
    %8518 = vmatprep.subr.mxu0 0.0
    %8519 = vmatpush1.msra.mxu0 0.0
    %8520 = vmatprep.subr.mxu0 0.0
    %8521 = vmatpush1.msra.mxu0 0.0
    %8522 = vmatprep.subr.mxu0 0.0
    %8523 = vmatpush1.msra.mxu0 0.0
    %8524 = vmatprep.subr.mxu0 0.0
    %8525 = vmatpush1.msra.mxu0 0.0
    %8526 = vmatprep.subr.mxu0 0.0
    %8527 = vmatpush1.msra.mxu0 0.0
    %8528 = vmatprep.subr.mxu0 0.0
    %8529 = vmatpush1.msra.mxu0 0.0
    %8530 = vmatprep.subr.mxu0 0.0
    %8531 = vmatpush1.msra.mxu0 0.0
    %8532 = vmatprep.subr.mxu0 0.0
    %8533 = vmatpush1.msra.mxu0 0.0
    %8534 = vmatprep.subr.mxu0 0.0
    %8535 = vmatpush1.msra.mxu0 0.0
    %8536 = vmatprep.subr.mxu0 0.0
    %8537 = vmatpush1.msra.mxu0 0.0
    %8538 = vmatprep.subr.mxu0 0.0
    %8539 = vmatpush1.msra.mxu0 0.0
    %8540 = vmatprep.subr.mxu0 0.0
    %8541 = vmatpush1.msra.mxu0 0.0
    %8542 = vmatprep.subr.mxu0 0.0
    %8543 = vmatpush1.msra.mxu0 0.0
    %8544 = vmatprep.mubr.f32.mxu0 0.0
    %v8545 = vand.u32 %v8461, 4294901760
    %v8546 = vsub.f32 %v8461, %v8545
    %v8547 = vand.u32 %v8546, 4294901760
    %v8548 = vsub.f32 %v8546, %v8547
    %v8549 = vand.u32 %v8548, 4294901760
    %8550 = vmatmul.mubr.f32.gmra.mrb[0].mxu0 %v8549
    %v8551 = vpop.f32.mrb[0].mxu0
    %v8552 = vadd.f32 0.0, %v8551
    %v8553 = vpop.f32.mrb[0].mxu0
    %8554 = vdwg.mxu0
    %8555 = vmatprep.subr.mxu0 0.0
    %v8556 = vand.u32 %v1365, 4294901760
    %v8557 = vsub.f32 %v1365, %v8556
    %v8558 = vand.u32 %v8557, 4294901760
    %v8559 = vsub.f32 %v8557, %v8558
    %v8560 = vand.u32 %v8559, 4294901760
    %8561 = vmatpush1.msra.mxu0 %v8560
    %8562 = vmatprep.subr.mxu0 0.0
    %v8563 = vand.u32 %v1366, 4294901760
    %v8564 = vsub.f32 %v1366, %v8563
    %v8565 = vand.u32 %v8564, 4294901760
    %v8566 = vsub.f32 %v8564, %v8565
    %v8567 = vand.u32 %v8566, 4294901760
    %8568 = vmatpush1.msra.mxu0 %v8567
    %8569 = vmatprep.subr.mxu0 0.0
    %v8570 = vand.u32 %v1367, 4294901760
    %v8571 = vsub.f32 %v1367, %v8570
    %v8572 = vand.u32 %v8571, 4294901760
    %v8573 = vsub.f32 %v8571, %v8572
    %v8574 = vand.u32 %v8573, 4294901760
    %8575 = vmatpush1.msra.mxu0 %v8574
    %8576 = vmatprep.subr.mxu0 0.0
    %v8577 = vand.u32 %v1368, 4294901760
    %v8578 = vsub.f32 %v1368, %v8577
    %v8579 = vand.u32 %v8578, 4294901760
    %v8580 = vsub.f32 %v8578, %v8579
    %v8581 = vand.u32 %v8580, 4294901760
    %8582 = vmatpush1.msra.mxu0 %v8581
    %8583 = vmatprep.subr.mxu0 0.0
    %v8584 = vand.u32 %v1369, 4294901760
    %v8585 = vsub.f32 %v1369, %v8584
    %v8586 = vand.u32 %v8585, 4294901760
    %v8587 = vsub.f32 %v8585, %v8586
    %v8588 = vand.u32 %v8587, 4294901760
    %8589 = vmatpush1.msra.mxu0 %v8588
    %8590 = vmatprep.subr.mxu0 0.0
    %v8591 = vand.u32 %v1370, 4294901760
    %v8592 = vsub.f32 %v1370, %v8591
    %v8593 = vand.u32 %v8592, 4294901760
    %v8594 = vsub.f32 %v8592, %v8593
    %v8595 = vand.u32 %v8594, 4294901760
    %8596 = vmatpush1.msra.mxu0 %v8595
    %8597 = vmatprep.subr.mxu0 0.0
    %v8598 = vand.u32 %v1371, 4294901760
    %v8599 = vsub.f32 %v1371, %v8598
    %v8600 = vand.u32 %v8599, 4294901760
    %v8601 = vsub.f32 %v8599, %v8600
    %v8602 = vand.u32 %v8601, 4294901760
    %8603 = vmatpush1.msra.mxu0 %v8602
    %8604 = vmatprep.subr.mxu0 0.0
    %v8605 = vand.u32 %v1372, 4294901760
    %v8606 = vsub.f32 %v1372, %v8605
    %v8607 = vand.u32 %v8606, 4294901760
    %v8608 = vsub.f32 %v8606, %v8607
    %v8609 = vand.u32 %v8608, 4294901760
    %8610 = vmatpush1.msra.mxu0 %v8609
    %8611 = vmatprep.subr.mxu0 0.0
    %v8612 = vand.u32 %v1373, 4294901760
    %v8613 = vsub.f32 %v1373, %v8612
    %v8614 = vand.u32 %v8613, 4294901760
    %v8615 = vsub.f32 %v8613, %v8614
    %v8616 = vand.u32 %v8615, 4294901760
    %8617 = vmatpush1.msra.mxu0 %v8616
    %8618 = vmatprep.subr.mxu0 0.0
    %v8619 = vand.u32 %v1374, 4294901760
    %v8620 = vsub.f32 %v1374, %v8619
    %v8621 = vand.u32 %v8620, 4294901760
    %v8622 = vsub.f32 %v8620, %v8621
    %v8623 = vand.u32 %v8622, 4294901760
    %8624 = vmatpush1.msra.mxu0 %v8623
    %8625 = vmatprep.subr.mxu0 0.0
    %v8626 = vand.u32 %v1375, 4294901760
    %v8627 = vsub.f32 %v1375, %v8626
    %v8628 = vand.u32 %v8627, 4294901760
    %v8629 = vsub.f32 %v8627, %v8628
    %v8630 = vand.u32 %v8629, 4294901760
    %8631 = vmatpush1.msra.mxu0 %v8630
    %8632 = vmatprep.subr.mxu0 0.0
    %v8633 = vand.u32 %v1376, 4294901760
    %v8634 = vsub.f32 %v1376, %v8633
    %v8635 = vand.u32 %v8634, 4294901760
    %v8636 = vsub.f32 %v8634, %v8635
    %v8637 = vand.u32 %v8636, 4294901760
    %8638 = vmatpush1.msra.mxu0 %v8637
    %8639 = vmatprep.subr.mxu0 0.0
    %v8640 = vand.u32 %v1377, 4294901760
    %v8641 = vsub.f32 %v1377, %v8640
    %v8642 = vand.u32 %v8641, 4294901760
    %v8643 = vsub.f32 %v8641, %v8642
    %v8644 = vand.u32 %v8643, 4294901760
    %8645 = vmatpush1.msra.mxu0 %v8644
    %8646 = vmatprep.subr.mxu0 0.0
    %v8647 = vand.u32 %v1378, 4294901760
    %v8648 = vsub.f32 %v1378, %v8647
    %v8649 = vand.u32 %v8648, 4294901760
    %v8650 = vsub.f32 %v8648, %v8649
    %v8651 = vand.u32 %v8650, 4294901760
    %8652 = vmatpush1.msra.mxu0 %v8651
    %8653 = vmatprep.subr.mxu0 0.0
    %v8654 = vand.u32 %v1379, 4294901760
    %v8655 = vsub.f32 %v1379, %v8654
    %v8656 = vand.u32 %v8655, 4294901760
    %v8657 = vsub.f32 %v8655, %v8656
    %v8658 = vand.u32 %v8657, 4294901760
    %8659 = vmatpush1.msra.mxu0 %v8658
    %8660 = vmatprep.subr.mxu0 0.0
    %v8661 = vand.u32 %v1380, 4294901760
    %v8662 = vsub.f32 %v1380, %v8661
    %v8663 = vand.u32 %v8662, 4294901760
    %v8664 = vsub.f32 %v8662, %v8663
    %v8665 = vand.u32 %v8664, 4294901760
    %8666 = vmatpush1.msra.mxu0 %v8665
    %8667 = vmatprep.subr.mxu0 0.0
    %8668 = vmatpush1.msra.mxu0 0.0
    %8669 = vmatprep.subr.mxu0 0.0
    %8670 = vmatpush1.msra.mxu0 0.0
    %8671 = vmatprep.subr.mxu0 0.0
    %8672 = vmatpush1.msra.mxu0 0.0
    %8673 = vmatprep.subr.mxu0 0.0
    %8674 = vmatpush1.msra.mxu0 0.0
    %8675 = vmatprep.subr.mxu0 0.0
    %8676 = vmatpush1.msra.mxu0 0.0
    %8677 = vmatprep.subr.mxu0 0.0
    %8678 = vmatpush1.msra.mxu0 0.0
    %8679 = vmatprep.subr.mxu0 0.0
    %8680 = vmatpush1.msra.mxu0 0.0
    %8681 = vmatprep.subr.mxu0 0.0
    %8682 = vmatpush1.msra.mxu0 0.0
    %8683 = vmatprep.subr.mxu0 0.0
    %8684 = vmatpush1.msra.mxu0 0.0
    %8685 = vmatprep.subr.mxu0 0.0
    %8686 = vmatpush1.msra.mxu0 0.0
    %8687 = vmatprep.subr.mxu0 0.0
    %8688 = vmatpush1.msra.mxu0 0.0
    %8689 = vmatprep.subr.mxu0 0.0
    %8690 = vmatpush1.msra.mxu0 0.0
    %8691 = vmatprep.subr.mxu0 0.0
    %8692 = vmatpush1.msra.mxu0 0.0
    %8693 = vmatprep.subr.mxu0 0.0
    %8694 = vmatpush1.msra.mxu0 0.0
    %8695 = vmatprep.subr.mxu0 0.0
    %8696 = vmatpush1.msra.mxu0 0.0
    %8697 = vmatprep.subr.mxu0 0.0
    %8698 = vmatpush1.msra.mxu0 0.0
    %8699 = vmatprep.mubr.f32.mxu0 0.0
    %v8700 = vand.u32 %v8461, 4294901760
    %8701 = vmatmul.mubr.f32.gmra.mrb[0].mxu0 %v8700
    %v8702 = vpop.f32.mrb[0].mxu0
    %v8703 = vadd.f32 %v8552, %v8702
    %v8704 = vpop.f32.mrb[0].mxu0
    %8705 = vdwg.mxu0
    %8706 = vmatprep.subr.mxu0 0.0
    %v8707 = vand.u32 %v1365, 4294901760
    %v8708 = vsub.f32 %v1365, %v8707
    %8709 = vmatpush1.msra.mxu0 %v8708
    %8710 = vmatprep.subr.mxu0 0.0
    %v8711 = vand.u32 %v1366, 4294901760
    %v8712 = vsub.f32 %v1366, %v8711
    %8713 = vmatpush1.msra.mxu0 %v8712
    %8714 = vmatprep.subr.mxu0 0.0
    %v8715 = vand.u32 %v1367, 4294901760
    %v8716 = vsub.f32 %v1367, %v8715
    %8717 = vmatpush1.msra.mxu0 %v8716
    %8718 = vmatprep.subr.mxu0 0.0
    %v8719 = vand.u32 %v1368, 4294901760
    %v8720 = vsub.f32 %v1368, %v8719
    %8721 = vmatpush1.msra.mxu0 %v8720
    %8722 = vmatprep.subr.mxu0 0.0
    %v8723 = vand.u32 %v1369, 4294901760
    %v8724 = vsub.f32 %v1369, %v8723
    %8725 = vmatpush1.msra.mxu0 %v8724
    %8726 = vmatprep.subr.mxu0 0.0
    %v8727 = vand.u32 %v1370, 4294901760
    %v8728 = vsub.f32 %v1370, %v8727
    %8729 = vmatpush1.msra.mxu0 %v8728
    %8730 = vmatprep.subr.mxu0 0.0
    %v8731 = vand.u32 %v1371, 4294901760
    %v8732 = vsub.f32 %v1371, %v8731
    %8733 = vmatpush1.msra.mxu0 %v8732
    %8734 = vmatprep.subr.mxu0 0.0
    %v8735 = vand.u32 %v1372, 4294901760
    %v8736 = vsub.f32 %v1372, %v8735
    %8737 = vmatpush1.msra.mxu0 %v8736
    %8738 = vmatprep.subr.mxu0 0.0
    %v8739 = vand.u32 %v1373, 4294901760
    %v8740 = vsub.f32 %v1373, %v8739
    %8741 = vmatpush1.msra.mxu0 %v8740
    %8742 = vmatprep.subr.mxu0 0.0
    %v8743 = vand.u32 %v1374, 4294901760
    %v8744 = vsub.f32 %v1374, %v8743
    %8745 = vmatpush1.msra.mxu0 %v8744
    %8746 = vmatprep.subr.mxu0 0.0
    %v8747 = vand.u32 %v1375, 4294901760
    %v8748 = vsub.f32 %v1375, %v8747
    %8749 = vmatpush1.msra.mxu0 %v8748
    %8750 = vmatprep.subr.mxu0 0.0
    %v8751 = vand.u32 %v1376, 4294901760
    %v8752 = vsub.f32 %v1376, %v8751
    %8753 = vmatpush1.msra.mxu0 %v8752
    %8754 = vmatprep.subr.mxu0 0.0
    %v8755 = vand.u32 %v1377, 4294901760
    %v8756 = vsub.f32 %v1377, %v8755
    %8757 = vmatpush1.msra.mxu0 %v8756
    %8758 = vmatprep.subr.mxu0 0.0
    %v8759 = vand.u32 %v1378, 4294901760
    %v8760 = vsub.f32 %v1378, %v8759
    %8761 = vmatpush1.msra.mxu0 %v8760
    %8762 = vmatprep.subr.mxu0 0.0
    %v8763 = vand.u32 %v1379, 4294901760
    %v8764 = vsub.f32 %v1379, %v8763
    %8765 = vmatpush1.msra.mxu0 %v8764
    %8766 = vmatprep.subr.mxu0 0.0
    %v8767 = vand.u32 %v1380, 4294901760
    %v8768 = vsub.f32 %v1380, %v8767
    %8769 = vmatpush1.msra.mxu0 %v8768
    %8770 = vmatprep.subr.mxu0 0.0
    %8771 = vmatpush1.msra.mxu0 0.0
    %8772 = vmatprep.subr.mxu0 0.0
    %8773 = vmatpush1.msra.mxu0 0.0
    %8774 = vmatprep.subr.mxu0 0.0
    %8775 = vmatpush1.msra.mxu0 0.0
    %8776 = vmatprep.subr.mxu0 0.0
    %8777 = vmatpush1.msra.mxu0 0.0
    %8778 = vmatprep.subr.mxu0 0.0
    %8779 = vmatpush1.msra.mxu0 0.0
    %8780 = vmatprep.subr.mxu0 0.0
    %8781 = vmatpush1.msra.mxu0 0.0
    %8782 = vmatprep.subr.mxu0 0.0
    %8783 = vmatpush1.msra.mxu0 0.0
    %8784 = vmatprep.subr.mxu0 0.0
    %8785 = vmatpush1.msra.mxu0 0.0
    %8786 = vmatprep.subr.mxu0 0.0
    %8787 = vmatpush1.msra.mxu0 0.0
    %8788 = vmatprep.subr.mxu0 0.0
    %8789 = vmatpush1.msra.mxu0 0.0
    %8790 = vmatprep.subr.mxu0 0.0
    %8791 = vmatpush1.msra.mxu0 0.0
    %8792 = vmatprep.subr.mxu0 0.0
    %8793 = vmatpush1.msra.mxu0 0.0
    %8794 = vmatprep.subr.mxu0 0.0
    %8795 = vmatpush1.msra.mxu0 0.0
    %8796 = vmatprep.subr.mxu0 0.0
    %8797 = vmatpush1.msra.mxu0 0.0
    %8798 = vmatprep.subr.mxu0 0.0
    %8799 = vmatpush1.msra.mxu0 0.0
    %8800 = vmatprep.subr.mxu0 0.0
    %8801 = vmatpush1.msra.mxu0 0.0
    %8802 = vmatprep.mubr.f32.mxu0 0.0
    %v8803 = vand.u32 %v8461, 4294901760
    %v8804 = vsub.f32 %v8461, %v8803
    %8805 = vmatmul.mubr.f32.gmra.mrb[0].mxu0 %v8804
    %v8806 = vpop.f32.mrb[0].mxu0
    %v8807 = vadd.f32 %v8703, %v8806
    %v8808 = vpop.f32.mrb[0].mxu0
    %8809 = vdwg.mxu0
    %8810 = vmatprep.subr.mxu0 0.0
    %v8811 = vand.u32 %v1365, 4294901760
    %8812 = vmatpush1.msra.mxu0 %v8811
    %8813 = vmatprep.subr.mxu0 0.0
    %v8814 = vand.u32 %v1366, 4294901760
    %8815 = vmatpush1.msra.mxu0 %v8814
    %8816 = vmatprep.subr.mxu0 0.0
    %v8817 = vand.u32 %v1367, 4294901760
    %8818 = vmatpush1.msra.mxu0 %v8817
    %8819 = vmatprep.subr.mxu0 0.0
    %v8820 = vand.u32 %v1368, 4294901760
    %8821 = vmatpush1.msra.mxu0 %v8820
    %8822 = vmatprep.subr.mxu0 0.0
    %v8823 = vand.u32 %v1369, 4294901760
    %8824 = vmatpush1.msra.mxu0 %v8823
    %8825 = vmatprep.subr.mxu0 0.0
    %v8826 = vand.u32 %v1370, 4294901760
    %8827 = vmatpush1.msra.mxu0 %v8826
    %8828 = vmatprep.subr.mxu0 0.0
    %v8829 = vand.u32 %v1371, 4294901760
    %8830 = vmatpush1.msra.mxu0 %v8829
    %8831 = vmatprep.subr.mxu0 0.0
    %v8832 = vand.u32 %v1372, 4294901760
    %8833 = vmatpush1.msra.mxu0 %v8832
    %8834 = vmatprep.subr.mxu0 0.0
    %v8835 = vand.u32 %v1373, 4294901760
    %8836 = vmatpush1.msra.mxu0 %v8835
    %8837 = vmatprep.subr.mxu0 0.0
    %v8838 = vand.u32 %v1374, 4294901760
    %8839 = vmatpush1.msra.mxu0 %v8838
    %8840 = vmatprep.subr.mxu0 0.0
    %v8841 = vand.u32 %v1375, 4294901760
    %8842 = vmatpush1.msra.mxu0 %v8841
    %8843 = vmatprep.subr.mxu0 0.0
    %v8844 = vand.u32 %v1376, 4294901760
    %8845 = vmatpush1.msra.mxu0 %v8844
    %8846 = vmatprep.subr.mxu0 0.0
    %v8847 = vand.u32 %v1377, 4294901760
    %8848 = vmatpush1.msra.mxu0 %v8847
    %8849 = vmatprep.subr.mxu0 0.0
    %v8850 = vand.u32 %v1378, 4294901760
    %8851 = vmatpush1.msra.mxu0 %v8850
    %8852 = vmatprep.subr.mxu0 0.0
    %v8853 = vand.u32 %v1379, 4294901760
    %8854 = vmatpush1.msra.mxu0 %v8853
    %8855 = vmatprep.subr.mxu0 0.0
    %v8856 = vand.u32 %v1380, 4294901760
    %8857 = vmatpush1.msra.mxu0 %v8856
    %8858 = vmatprep.subr.mxu0 0.0
    %8859 = vmatpush1.msra.mxu0 0.0
    %8860 = vmatprep.subr.mxu0 0.0
    %8861 = vmatpush1.msra.mxu0 0.0
    %8862 = vmatprep.subr.mxu0 0.0
    %8863 = vmatpush1.msra.mxu0 0.0
    %8864 = vmatprep.subr.mxu0 0.0
    %8865 = vmatpush1.msra.mxu0 0.0
    %8866 = vmatprep.subr.mxu0 0.0
    %8867 = vmatpush1.msra.mxu0 0.0
    %8868 = vmatprep.subr.mxu0 0.0
    %8869 = vmatpush1.msra.mxu0 0.0
    %8870 = vmatprep.subr.mxu0 0.0
    %8871 = vmatpush1.msra.mxu0 0.0
    %8872 = vmatprep.subr.mxu0 0.0
    %8873 = vmatpush1.msra.mxu0 0.0
    %8874 = vmatprep.subr.mxu0 0.0
    %8875 = vmatpush1.msra.mxu0 0.0
    %8876 = vmatprep.subr.mxu0 0.0
    %8877 = vmatpush1.msra.mxu0 0.0
    %8878 = vmatprep.subr.mxu0 0.0
    %8879 = vmatpush1.msra.mxu0 0.0
    %8880 = vmatprep.subr.mxu0 0.0
    %8881 = vmatpush1.msra.mxu0 0.0
    %8882 = vmatprep.subr.mxu0 0.0
    %8883 = vmatpush1.msra.mxu0 0.0
    %8884 = vmatprep.subr.mxu0 0.0
    %8885 = vmatpush1.msra.mxu0 0.0
    %8886 = vmatprep.subr.mxu0 0.0
    %8887 = vmatpush1.msra.mxu0 0.0
    %8888 = vmatprep.subr.mxu0 0.0
    %8889 = vmatpush1.msra.mxu0 0.0
    %8890 = vmatprep.mubr.f32.mxu0 0.0
    %v8891 = vand.u32 %v8461, 4294901760
    %v8892 = vsub.f32 %v8461, %v8891
    %v8893 = vand.u32 %v8892, 4294901760
    %8894 = vmatmul.mubr.f32.gmra.mrb[0].mxu0 %v8893
    %v8895 = vpop.f32.mrb[0].mxu0
    %v8896 = vadd.f32 %v8807, %v8895
    %v8897 = vpop.f32.mrb[0].mxu0
    %8898 = vdwg.mxu0
    %8899 = vmatprep.subr.mxu0 0.0
    %v8900 = vand.u32 %v1365, 4294901760
    %v8901 = vsub.f32 %v1365, %v8900
    %v8902 = vand.u32 %v8901, 4294901760
    %8903 = vmatpush1.msra.mxu0 %v8902
    %8904 = vmatprep.subr.mxu0 0.0
    %v8905 = vand.u32 %v1366, 4294901760
    %v8906 = vsub.f32 %v1366, %v8905
    %v8907 = vand.u32 %v8906, 4294901760
    %8908 = vmatpush1.msra.mxu0 %v8907
    %8909 = vmatprep.subr.mxu0 0.0
    %v8910 = vand.u32 %v1367, 4294901760
    %v8911 = vsub.f32 %v1367, %v8910
    %v8912 = vand.u32 %v8911, 4294901760
    %8913 = vmatpush1.msra.mxu0 %v8912
    %8914 = vmatprep.subr.mxu0 0.0
    %v8915 = vand.u32 %v1368, 4294901760
    %v8916 = vsub.f32 %v1368, %v8915
    %v8917 = vand.u32 %v8916, 4294901760
    %8918 = vmatpush1.msra.mxu0 %v8917
    %8919 = vmatprep.subr.mxu0 0.0
    %v8920 = vand.u32 %v1369, 4294901760
    %v8921 = vsub.f32 %v1369, %v8920
    %v8922 = vand.u32 %v8921, 4294901760
    %8923 = vmatpush1.msra.mxu0 %v8922
    %8924 = vmatprep.subr.mxu0 0.0
    %v8925 = vand.u32 %v1370, 4294901760
    %v8926 = vsub.f32 %v1370, %v8925
    %v8927 = vand.u32 %v8926, 4294901760
    %8928 = vmatpush1.msra.mxu0 %v8927
    %8929 = vmatprep.subr.mxu0 0.0
    %v8930 = vand.u32 %v1371, 4294901760
    %v8931 = vsub.f32 %v1371, %v8930
    %v8932 = vand.u32 %v8931, 4294901760
    %8933 = vmatpush1.msra.mxu0 %v8932
    %8934 = vmatprep.subr.mxu0 0.0
    %v8935 = vand.u32 %v1372, 4294901760
    %v8936 = vsub.f32 %v1372, %v8935
    %v8937 = vand.u32 %v8936, 4294901760
    %8938 = vmatpush1.msra.mxu0 %v8937
    %8939 = vmatprep.subr.mxu0 0.0
    %v8940 = vand.u32 %v1373, 4294901760
    %v8941 = vsub.f32 %v1373, %v8940
    %v8942 = vand.u32 %v8941, 4294901760
    %8943 = vmatpush1.msra.mxu0 %v8942
    %8944 = vmatprep.subr.mxu0 0.0
    %v8945 = vand.u32 %v1374, 4294901760
    %v8946 = vsub.f32 %v1374, %v8945
    %v8947 = vand.u32 %v8946, 4294901760
    %8948 = vmatpush1.msra.mxu0 %v8947
    %8949 = vmatprep.subr.mxu0 0.0
    %v8950 = vand.u32 %v1375, 4294901760
    %v8951 = vsub.f32 %v1375, %v8950
    %v8952 = vand.u32 %v8951, 4294901760
    %8953 = vmatpush1.msra.mxu0 %v8952
    %8954 = vmatprep.subr.mxu0 0.0
    %v8955 = vand.u32 %v1376, 4294901760
    %v8956 = vsub.f32 %v1376, %v8955
    %v8957 = vand.u32 %v8956, 4294901760
    %8958 = vmatpush1.msra.mxu0 %v8957
    %8959 = vmatprep.subr.mxu0 0.0
    %v8960 = vand.u32 %v1377, 4294901760
    %v8961 = vsub.f32 %v1377, %v8960
    %v8962 = vand.u32 %v8961, 4294901760
    %8963 = vmatpush1.msra.mxu0 %v8962
    %8964 = vmatprep.subr.mxu0 0.0
    %v8965 = vand.u32 %v1378, 4294901760
    %v8966 = vsub.f32 %v1378, %v8965
    %v8967 = vand.u32 %v8966, 4294901760
    %8968 = vmatpush1.msra.mxu0 %v8967
    %8969 = vmatprep.subr.mxu0 0.0
    %v8970 = vand.u32 %v1379, 4294901760
    %v8971 = vsub.f32 %v1379, %v8970
    %v8972 = vand.u32 %v8971, 4294901760
    %8973 = vmatpush1.msra.mxu0 %v8972
    %8974 = vmatprep.subr.mxu0 0.0
    %v8975 = vand.u32 %v1380, 4294901760
    %v8976 = vsub.f32 %v1380, %v8975
    %v8977 = vand.u32 %v8976, 4294901760
    %8978 = vmatpush1.msra.mxu0 %v8977
    %8979 = vmatprep.subr.mxu0 0.0
    %8980 = vmatpush1.msra.mxu0 0.0
    %8981 = vmatprep.subr.mxu0 0.0
    %8982 = vmatpush1.msra.mxu0 0.0
    %8983 = vmatprep.subr.mxu0 0.0
    %8984 = vmatpush1.msra.mxu0 0.0
    %8985 = vmatprep.subr.mxu0 0.0
    %8986 = vmatpush1.msra.mxu0 0.0
    %8987 = vmatprep.subr.mxu0 0.0
    %8988 = vmatpush1.msra.mxu0 0.0
    %8989 = vmatprep.subr.mxu0 0.0
    %8990 = vmatpush1.msra.mxu0 0.0
    %8991 = vmatprep.subr.mxu0 0.0
    %8992 = vmatpush1.msra.mxu0 0.0
    %8993 = vmatprep.subr.mxu0 0.0
    %8994 = vmatpush1.msra.mxu0 0.0
    %8995 = vmatprep.subr.mxu0 0.0
    %8996 = vmatpush1.msra.mxu0 0.0
    %8997 = vmatprep.subr.mxu0 0.0
    %8998 = vmatpush1.msra.mxu0 0.0
    %8999 = vmatprep.subr.mxu0 0.0
    %9000 = vmatpush1.msra.mxu0 0.0
    %9001 = vmatprep.subr.mxu0 0.0
    %9002 = vmatpush1.msra.mxu0 0.0
    %9003 = vmatprep.subr.mxu0 0.0
    %9004 = vmatpush1.msra.mxu0 0.0
    %9005 = vmatprep.subr.mxu0 0.0
    %9006 = vmatpush1.msra.mxu0 0.0
    %9007 = vmatprep.subr.mxu0 0.0
    %9008 = vmatpush1.msra.mxu0 0.0
    %9009 = vmatprep.subr.mxu0 0.0
    %9010 = vmatpush1.msra.mxu0 0.0
    %9011 = vmatprep.mubr.f32.mxu0 0.0
    %v9012 = vand.u32 %v8461, 4294901760
    %9013 = vmatmul.mubr.f32.gmra.mrb[0].mxu0 %v9012
    %v9014 = vpop.f32.mrb[0].mxu0
    %v9015 = vadd.f32 %v8896, %v9014
    %v9016 = vpop.f32.mrb[0].mxu0
    %9017 = vdwg.mxu0
    %9018 = vmatprep.subr.mxu0 0.0
    %v9019 = vand.u32 %v1365, 4294901760
    %9020 = vmatpush1.msra.mxu0 %v9019
    %9021 = vmatprep.subr.mxu0 0.0
    %v9022 = vand.u32 %v1366, 4294901760
    %9023 = vmatpush1.msra.mxu0 %v9022
    %9024 = vmatprep.subr.mxu0 0.0
    %v9025 = vand.u32 %v1367, 4294901760
    %9026 = vmatpush1.msra.mxu0 %v9025
    %9027 = vmatprep.subr.mxu0 0.0
    %v9028 = vand.u32 %v1368, 4294901760
    %9029 = vmatpush1.msra.mxu0 %v9028
    %9030 = vmatprep.subr.mxu0 0.0
    %v9031 = vand.u32 %v1369, 4294901760
    %9032 = vmatpush1.msra.mxu0 %v9031
    %9033 = vmatprep.subr.mxu0 0.0
    %v9034 = vand.u32 %v1370, 4294901760
    %9035 = vmatpush1.msra.mxu0 %v9034
    %9036 = vmatprep.subr.mxu0 0.0
    %v9037 = vand.u32 %v1371, 4294901760
    %9038 = vmatpush1.msra.mxu0 %v9037
    %9039 = vmatprep.subr.mxu0 0.0
    %v9040 = vand.u32 %v1372, 4294901760
    %9041 = vmatpush1.msra.mxu0 %v9040
    %9042 = vmatprep.subr.mxu0 0.0
    %v9043 = vand.u32 %v1373, 4294901760
    %9044 = vmatpush1.msra.mxu0 %v9043
    %9045 = vmatprep.subr.mxu0 0.0
    %v9046 = vand.u32 %v1374, 4294901760
    %9047 = vmatpush1.msra.mxu0 %v9046
    %9048 = vmatprep.subr.mxu0 0.0
    %v9049 = vand.u32 %v1375, 4294901760
    %9050 = vmatpush1.msra.mxu0 %v9049
    %9051 = vmatprep.subr.mxu0 0.0
    %v9052 = vand.u32 %v1376, 4294901760
    %9053 = vmatpush1.msra.mxu0 %v9052
    %9054 = vmatprep.subr.mxu0 0.0
    %v9055 = vand.u32 %v1377, 4294901760
    %9056 = vmatpush1.msra.mxu0 %v9055
    %9057 = vmatprep.subr.mxu0 0.0
    %v9058 = vand.u32 %v1378, 4294901760
    %9059 = vmatpush1.msra.mxu0 %v9058
    %9060 = vmatprep.subr.mxu0 0.0
    %v9061 = vand.u32 %v1379, 4294901760
    %9062 = vmatpush1.msra.mxu0 %v9061
    %9063 = vmatprep.subr.mxu0 0.0
    %v9064 = vand.u32 %v1380, 4294901760
    %9065 = vmatpush1.msra.mxu0 %v9064
    %9066 = vmatprep.subr.mxu0 0.0
    %9067 = vmatpush1.msra.mxu0 0.0
    %9068 = vmatprep.subr.mxu0 0.0
    %9069 = vmatpush1.msra.mxu0 0.0
    %9070 = vmatprep.subr.mxu0 0.0
    %9071 = vmatpush1.msra.mxu0 0.0
    %9072 = vmatprep.subr.mxu0 0.0
    %9073 = vmatpush1.msra.mxu0 0.0
    %9074 = vmatprep.subr.mxu0 0.0
    %9075 = vmatpush1.msra.mxu0 0.0
    %9076 = vmatprep.subr.mxu0 0.0
    %9077 = vmatpush1.msra.mxu0 0.0
    %9078 = vmatprep.subr.mxu0 0.0
    %9079 = vmatpush1.msra.mxu0 0.0
    %9080 = vmatprep.subr.mxu0 0.0
    %9081 = vmatpush1.msra.mxu0 0.0
    %9082 = vmatprep.subr.mxu0 0.0
    %9083 = vmatpush1.msra.mxu0 0.0
    %9084 = vmatprep.subr.mxu0 0.0
    %9085 = vmatpush1.msra.mxu0 0.0
    %9086 = vmatprep.subr.mxu0 0.0
    %9087 = vmatpush1.msra.mxu0 0.0
    %9088 = vmatprep.subr.mxu0 0.0
    %9089 = vmatpush1.msra.mxu0 0.0
    %9090 = vmatprep.subr.mxu0 0.0
    %9091 = vmatpush1.msra.mxu0 0.0
    %9092 = vmatprep.subr.mxu0 0.0
    %9093 = vmatpush1.msra.mxu0 0.0
    %9094 = vmatprep.subr.mxu0 0.0
    %9095 = vmatpush1.msra.mxu0 0.0
    %9096 = vmatprep.subr.mxu0 0.0
    %9097 = vmatpush1.msra.mxu0 0.0
    %9098 = vmatprep.mubr.f32.mxu0 0.0
    %v9099 = vand.u32 %v8461, 4294901760
    %9100 = vmatmul.mubr.f32.gmra.mrb[0].mxu0 %v9099
    %v9101 = vpop.f32.mrb[0].mxu0
    %v9102 = vadd.f32 %v9015, %v9101
    %v9103 = vpop.f32.mrb[0].mxu0
    %9104 = vdwg.mxu0
    %v9105 = vadd.f32 %v8463, %v9102
    %v9106 = vtanh.pop %v9105
    %s9107 = scalar_lea.vmem [#allocation2], 96
    %v9108 = vld [vmem:[%s9107] sm:$0xff]
    %9109 = vmatprep.subr.mxu0 0.0
    %v9110 = vand.u32 %v1365, 4294901760
    %9111 = vmatpush1.msra.mxu0 %v9110
    %9112 = vmatprep.subr.mxu0 0.0
    %v9113 = vand.u32 %v1366, 4294901760
    %9114 = vmatpush1.msra.mxu0 %v9113
    %9115 = vmatprep.subr.mxu0 0.0
    %v9116 = vand.u32 %v1367, 4294901760
    %9117 = vmatpush1.msra.mxu0 %v9116
    %9118 = vmatprep.subr.mxu0 0.0
    %v9119 = vand.u32 %v1368, 4294901760
    %9120 = vmatpush1.msra.mxu0 %v9119
    %9121 = vmatprep.subr.mxu0 0.0
    %v9122 = vand.u32 %v1369, 4294901760
    %9123 = vmatpush1.msra.mxu0 %v9122
    %9124 = vmatprep.subr.mxu0 0.0
    %v9125 = vand.u32 %v1370, 4294901760
    %9126 = vmatpush1.msra.mxu0 %v9125
    %9127 = vmatprep.subr.mxu0 0.0
    %v9128 = vand.u32 %v1371, 4294901760
    %9129 = vmatpush1.msra.mxu0 %v9128
    %9130 = vmatprep.subr.mxu0 0.0
    %v9131 = vand.u32 %v1372, 4294901760
    %9132 = vmatpush1.msra.mxu0 %v9131
    %9133 = vmatprep.subr.mxu0 0.0
    %v9134 = vand.u32 %v1373, 4294901760
    %9135 = vmatpush1.msra.mxu0 %v9134
    %9136 = vmatprep.subr.mxu0 0.0
    %v9137 = vand.u32 %v1374, 4294901760
    %9138 = vmatpush1.msra.mxu0 %v9137
    %9139 = vmatprep.subr.mxu0 0.0
    %v9140 = vand.u32 %v1375, 4294901760
    %9141 = vmatpush1.msra.mxu0 %v9140
    %9142 = vmatprep.subr.mxu0 0.0
    %v9143 = vand.u32 %v1376, 4294901760
    %9144 = vmatpush1.msra.mxu0 %v9143
    %9145 = vmatprep.subr.mxu0 0.0
    %v9146 = vand.u32 %v1377, 4294901760
    %9147 = vmatpush1.msra.mxu0 %v9146
    %9148 = vmatprep.subr.mxu0 0.0
    %v9149 = vand.u32 %v1378, 4294901760
    %9150 = vmatpush1.msra.mxu0 %v9149
    %9151 = vmatprep.subr.mxu0 0.0
    %v9152 = vand.u32 %v1379, 4294901760
    %9153 = vmatpush1.msra.mxu0 %v9152
    %9154 = vmatprep.subr.mxu0 0.0
    %v9155 = vand.u32 %v1380, 4294901760
    %9156 = vmatpush1.msra.mxu0 %v9155
    %9157 = vmatprep.subr.mxu0 0.0
    %9158 = vmatpush1.msra.mxu0 0.0
    %9159 = vmatprep.subr.mxu0 0.0
    %9160 = vmatpush1.msra.mxu0 0.0
    %9161 = vmatprep.subr.mxu0 0.0
    %9162 = vmatpush1.msra.mxu0 0.0
    %9163 = vmatprep.subr.mxu0 0.0
    %9164 = vmatpush1.msra.mxu0 0.0
    %9165 = vmatprep.subr.mxu0 0.0
    %9166 = vmatpush1.msra.mxu0 0.0
    %9167 = vmatprep.subr.mxu0 0.0
    %9168 = vmatpush1.msra.mxu0 0.0
    %9169 = vmatprep.subr.mxu0 0.0
    %9170 = vmatpush1.msra.mxu0 0.0
    %9171 = vmatprep.subr.mxu0 0.0
    %9172 = vmatpush1.msra.mxu0 0.0
    %9173 = vmatprep.subr.mxu0 0.0
    %9174 = vmatpush1.msra.mxu0 0.0
    %9175 = vmatprep.subr.mxu0 0.0
    %9176 = vmatpush1.msra.mxu0 0.0
    %9177 = vmatprep.subr.mxu0 0.0
    %9178 = vmatpush1.msra.mxu0 0.0
    %9179 = vmatprep.subr.mxu0 0.0
    %9180 = vmatpush1.msra.mxu0 0.0
    %9181 = vmatprep.subr.mxu0 0.0
    %9182 = vmatpush1.msra.mxu0 0.0
    %9183 = vmatprep.subr.mxu0 0.0
    %9184 = vmatpush1.msra.mxu0 0.0
    %9185 = vmatprep.subr.mxu0 0.0
    %9186 = vmatpush1.msra.mxu0 0.0
    %9187 = vmatprep.subr.mxu0 0.0
    %9188 = vmatpush1.msra.mxu0 0.0
    %9189 = vmatprep.mubr.f32.mxu0 0.0
    %v9190 = vand.u32 %v9106, 4294901760
    %v9191 = vsub.f32 %v9106, %v9190
    %v9192 = vand.u32 %v9191, 4294901760
    %v9193 = vsub.f32 %v9191, %v9192
    %v9194 = vand.u32 %v9193, 4294901760
    %9195 = vmatmul.mubr.f32.gmra.mrb[0].mxu0 %v9194
    %v9196 = vpop.f32.mrb[0].mxu0
    %v9197 = vadd.f32 0.0, %v9196
    %v9198 = vpop.f32.mrb[0].mxu0
    %9199 = vdwg.mxu0
    %9200 = vmatprep.subr.mxu0 0.0
    %v9201 = vand.u32 %v1365, 4294901760
    %v9202 = vsub.f32 %v1365, %v9201
    %v9203 = vand.u32 %v9202, 4294901760
    %v9204 = vsub.f32 %v9202, %v9203
    %v9205 = vand.u32 %v9204, 4294901760
    %9206 = vmatpush1.msra.mxu0 %v9205
    %9207 = vmatprep.subr.mxu0 0.0
    %v9208 = vand.u32 %v1366, 4294901760
    %v9209 = vsub.f32 %v1366, %v9208
    %v9210 = vand.u32 %v9209, 4294901760
    %v9211 = vsub.f32 %v9209, %v9210
    %v9212 = vand.u32 %v9211, 4294901760
    %9213 = vmatpush1.msra.mxu0 %v9212
    %9214 = vmatprep.subr.mxu0 0.0
    %v9215 = vand.u32 %v1367, 4294901760
    %v9216 = vsub.f32 %v1367, %v9215
    %v9217 = vand.u32 %v9216, 4294901760
    %v9218 = vsub.f32 %v9216, %v9217
    %v9219 = vand.u32 %v9218, 4294901760
    %9220 = vmatpush1.msra.mxu0 %v9219
    %9221 = vmatprep.subr.mxu0 0.0
    %v9222 = vand.u32 %v1368, 4294901760
    %v9223 = vsub.f32 %v1368, %v9222
    %v9224 = vand.u32 %v9223, 4294901760
    %v9225 = vsub.f32 %v9223, %v9224
    %v9226 = vand.u32 %v9225, 4294901760
    %9227 = vmatpush1.msra.mxu0 %v9226
    %9228 = vmatprep.subr.mxu0 0.0
    %v9229 = vand.u32 %v1369, 4294901760
    %v9230 = vsub.f32 %v1369, %v9229
    %v9231 = vand.u32 %v9230, 4294901760
    %v9232 = vsub.f32 %v9230, %v9231
    %v9233 = vand.u32 %v9232, 4294901760
    %9234 = vmatpush1.msra.mxu0 %v9233
    %9235 = vmatprep.subr.mxu0 0.0
    %v9236 = vand.u32 %v1370, 4294901760
    %v9237 = vsub.f32 %v1370, %v9236
    %v9238 = vand.u32 %v9237, 4294901760
    %v9239 = vsub.f32 %v9237, %v9238
    %v9240 = vand.u32 %v9239, 4294901760
    %9241 = vmatpush1.msra.mxu0 %v9240
    %9242 = vmatprep.subr.mxu0 0.0
    %v9243 = vand.u32 %v1371, 4294901760
    %v9244 = vsub.f32 %v1371, %v9243
    %v9245 = vand.u32 %v9244, 4294901760
    %v9246 = vsub.f32 %v9244, %v9245
    %v9247 = vand.u32 %v9246, 4294901760
    %9248 = vmatpush1.msra.mxu0 %v9247
    %9249 = vmatprep.subr.mxu0 0.0
    %v9250 = vand.u32 %v1372, 4294901760
    %v9251 = vsub.f32 %v1372, %v9250
    %v9252 = vand.u32 %v9251, 4294901760
    %v9253 = vsub.f32 %v9251, %v9252
    %v9254 = vand.u32 %v9253, 4294901760
    %9255 = vmatpush1.msra.mxu0 %v9254
    %9256 = vmatprep.subr.mxu0 0.0
    %v9257 = vand.u32 %v1373, 4294901760
    %v9258 = vsub.f32 %v1373, %v9257
    %v9259 = vand.u32 %v9258, 4294901760
    %v9260 = vsub.f32 %v9258, %v9259
    %v9261 = vand.u32 %v9260, 4294901760
    %9262 = vmatpush1.msra.mxu0 %v9261
    %9263 = vmatprep.subr.mxu0 0.0
    %v9264 = vand.u32 %v1374, 4294901760
    %v9265 = vsub.f32 %v1374, %v9264
    %v9266 = vand.u32 %v9265, 4294901760
    %v9267 = vsub.f32 %v9265, %v9266
    %v9268 = vand.u32 %v9267, 4294901760
    %9269 = vmatpush1.msra.mxu0 %v9268
    %9270 = vmatprep.subr.mxu0 0.0
    %v9271 = vand.u32 %v1375, 4294901760
    %v9272 = vsub.f32 %v1375, %v9271
    %v9273 = vand.u32 %v9272, 4294901760
    %v9274 = vsub.f32 %v9272, %v9273
    %v9275 = vand.u32 %v9274, 4294901760
    %9276 = vmatpush1.msra.mxu0 %v9275
    %9277 = vmatprep.subr.mxu0 0.0
    %v9278 = vand.u32 %v1376, 4294901760
    %v9279 = vsub.f32 %v1376, %v9278
    %v9280 = vand.u32 %v9279, 4294901760
    %v9281 = vsub.f32 %v9279, %v9280
    %v9282 = vand.u32 %v9281, 4294901760
    %9283 = vmatpush1.msra.mxu0 %v9282
    %9284 = vmatprep.subr.mxu0 0.0
    %v9285 = vand.u32 %v1377, 4294901760
    %v9286 = vsub.f32 %v1377, %v9285
    %v9287 = vand.u32 %v9286, 4294901760
    %v9288 = vsub.f32 %v9286, %v9287
    %v9289 = vand.u32 %v9288, 4294901760
    %9290 = vmatpush1.msra.mxu0 %v9289
    %9291 = vmatprep.subr.mxu0 0.0
    %v9292 = vand.u32 %v1378, 4294901760
    %v9293 = vsub.f32 %v1378, %v9292
    %v9294 = vand.u32 %v9293, 4294901760
    %v9295 = vsub.f32 %v9293, %v9294
    %v9296 = vand.u32 %v9295, 4294901760
    %9297 = vmatpush1.msra.mxu0 %v9296
    %9298 = vmatprep.subr.mxu0 0.0
    %v9299 = vand.u32 %v1379, 4294901760
    %v9300 = vsub.f32 %v1379, %v9299
    %v9301 = vand.u32 %v9300, 4294901760
    %v9302 = vsub.f32 %v9300, %v9301
    %v9303 = vand.u32 %v9302, 4294901760
    %9304 = vmatpush1.msra.mxu0 %v9303
    %9305 = vmatprep.subr.mxu0 0.0
    %v9306 = vand.u32 %v1380, 4294901760
    %v9307 = vsub.f32 %v1380, %v9306
    %v9308 = vand.u32 %v9307, 4294901760
    %v9309 = vsub.f32 %v9307, %v9308
    %v9310 = vand.u32 %v9309, 4294901760
    %9311 = vmatpush1.msra.mxu0 %v9310
    %9312 = vmatprep.subr.mxu0 0.0
    %9313 = vmatpush1.msra.mxu0 0.0
    %9314 = vmatprep.subr.mxu0 0.0
    %9315 = vmatpush1.msra.mxu0 0.0
    %9316 = vmatprep.subr.mxu0 0.0
    %9317 = vmatpush1.msra.mxu0 0.0
    %9318 = vmatprep.subr.mxu0 0.0
    %9319 = vmatpush1.msra.mxu0 0.0
    %9320 = vmatprep.subr.mxu0 0.0
    %9321 = vmatpush1.msra.mxu0 0.0
    %9322 = vmatprep.subr.mxu0 0.0
    %9323 = vmatpush1.msra.mxu0 0.0
    %9324 = vmatprep.subr.mxu0 0.0
    %9325 = vmatpush1.msra.mxu0 0.0
    %9326 = vmatprep.subr.mxu0 0.0
    %9327 = vmatpush1.msra.mxu0 0.0
    %9328 = vmatprep.subr.mxu0 0.0
    %9329 = vmatpush1.msra.mxu0 0.0
    %9330 = vmatprep.subr.mxu0 0.0
    %9331 = vmatpush1.msra.mxu0 0.0
    %9332 = vmatprep.subr.mxu0 0.0
    %9333 = vmatpush1.msra.mxu0 0.0
    %9334 = vmatprep.subr.mxu0 0.0
    %9335 = vmatpush1.msra.mxu0 0.0
    %9336 = vmatprep.subr.mxu0 0.0
    %9337 = vmatpush1.msra.mxu0 0.0
    %9338 = vmatprep.subr.mxu0 0.0
    %9339 = vmatpush1.msra.mxu0 0.0
    %9340 = vmatprep.subr.mxu0 0.0
    %9341 = vmatpush1.msra.mxu0 0.0
    %9342 = vmatprep.subr.mxu0 0.0
    %9343 = vmatpush1.msra.mxu0 0.0
    %9344 = vmatprep.mubr.f32.mxu0 0.0
    %v9345 = vand.u32 %v9106, 4294901760
    %9346 = vmatmul.mubr.f32.gmra.mrb[0].mxu0 %v9345
    %v9347 = vpop.f32.mrb[0].mxu0
    %v9348 = vadd.f32 %v9197, %v9347
    %v9349 = vpop.f32.mrb[0].mxu0
    %9350 = vdwg.mxu0
    %9351 = vmatprep.subr.mxu0 0.0
    %v9352 = vand.u32 %v1365, 4294901760
    %v9353 = vsub.f32 %v1365, %v9352
    %9354 = vmatpush1.msra.mxu0 %v9353
    %9355 = vmatprep.subr.mxu0 0.0
    %v9356 = vand.u32 %v1366, 4294901760
    %v9357 = vsub.f32 %v1366, %v9356
    %9358 = vmatpush1.msra.mxu0 %v9357
    %9359 = vmatprep.subr.mxu0 0.0
    %v9360 = vand.u32 %v1367, 4294901760
    %v9361 = vsub.f32 %v1367, %v9360
    %9362 = vmatpush1.msra.mxu0 %v9361
    %9363 = vmatprep.subr.mxu0 0.0
    %v9364 = vand.u32 %v1368, 4294901760
    %v9365 = vsub.f32 %v1368, %v9364
    %9366 = vmatpush1.msra.mxu0 %v9365
    %9367 = vmatprep.subr.mxu0 0.0
    %v9368 = vand.u32 %v1369, 4294901760
    %v9369 = vsub.f32 %v1369, %v9368
    %9370 = vmatpush1.msra.mxu0 %v9369
    %9371 = vmatprep.subr.mxu0 0.0
    %v9372 = vand.u32 %v1370, 4294901760
    %v9373 = vsub.f32 %v1370, %v9372
    %9374 = vmatpush1.msra.mxu0 %v9373
    %9375 = vmatprep.subr.mxu0 0.0
    %v9376 = vand.u32 %v1371, 4294901760
    %v9377 = vsub.f32 %v1371, %v9376
    %9378 = vmatpush1.msra.mxu0 %v9377
    %9379 = vmatprep.subr.mxu0 0.0
    %v9380 = vand.u32 %v1372, 4294901760
    %v9381 = vsub.f32 %v1372, %v9380
    %9382 = vmatpush1.msra.mxu0 %v9381
    %9383 = vmatprep.subr.mxu0 0.0
    %v9384 = vand.u32 %v1373, 4294901760
    %v9385 = vsub.f32 %v1373, %v9384
    %9386 = vmatpush1.msra.mxu0 %v9385
    %9387 = vmatprep.subr.mxu0 0.0
    %v9388 = vand.u32 %v1374, 4294901760
    %v9389 = vsub.f32 %v1374, %v9388
    %9390 = vmatpush1.msra.mxu0 %v9389
    %9391 = vmatprep.subr.mxu0 0.0
    %v9392 = vand.u32 %v1375, 4294901760
    %v9393 = vsub.f32 %v1375, %v9392
    %9394 = vmatpush1.msra.mxu0 %v9393
    %9395 = vmatprep.subr.mxu0 0.0
    %v9396 = vand.u32 %v1376, 4294901760
    %v9397 = vsub.f32 %v1376, %v9396
    %9398 = vmatpush1.msra.mxu0 %v9397
    %9399 = vmatprep.subr.mxu0 0.0
    %v9400 = vand.u32 %v1377, 4294901760
    %v9401 = vsub.f32 %v1377, %v9400
    %9402 = vmatpush1.msra.mxu0 %v9401
    %9403 = vmatprep.subr.mxu0 0.0
    %v9404 = vand.u32 %v1378, 4294901760
    %v9405 = vsub.f32 %v1378, %v9404
    %9406 = vmatpush1.msra.mxu0 %v9405
    %9407 = vmatprep.subr.mxu0 0.0
    %v9408 = vand.u32 %v1379, 4294901760
    %v9409 = vsub.f32 %v1379, %v9408
    %9410 = vmatpush1.msra.mxu0 %v9409
    %9411 = vmatprep.subr.mxu0 0.0
    %v9412 = vand.u32 %v1380, 4294901760
    %v9413 = vsub.f32 %v1380, %v9412
    %9414 = vmatpush1.msra.mxu0 %v9413
    %9415 = vmatprep.subr.mxu0 0.0
    %9416 = vmatpush1.msra.mxu0 0.0
    %9417 = vmatprep.subr.mxu0 0.0
    %9418 = vmatpush1.msra.mxu0 0.0
    %9419 = vmatprep.subr.mxu0 0.0
    %9420 = vmatpush1.msra.mxu0 0.0
    %9421 = vmatprep.subr.mxu0 0.0
    %9422 = vmatpush1.msra.mxu0 0.0
    %9423 = vmatprep.subr.mxu0 0.0
    %9424 = vmatpush1.msra.mxu0 0.0
    %9425 = vmatprep.subr.mxu0 0.0
    %9426 = vmatpush1.msra.mxu0 0.0
    %9427 = vmatprep.subr.mxu0 0.0
    %9428 = vmatpush1.msra.mxu0 0.0
    %9429 = vmatprep.subr.mxu0 0.0
    %9430 = vmatpush1.msra.mxu0 0.0
    %9431 = vmatprep.subr.mxu0 0.0
    %9432 = vmatpush1.msra.mxu0 0.0
    %9433 = vmatprep.subr.mxu0 0.0
    %9434 = vmatpush1.msra.mxu0 0.0
    %9435 = vmatprep.subr.mxu0 0.0
    %9436 = vmatpush1.msra.mxu0 0.0
    %9437 = vmatprep.subr.mxu0 0.0
    %9438 = vmatpush1.msra.mxu0 0.0
    %9439 = vmatprep.subr.mxu0 0.0
    %9440 = vmatpush1.msra.mxu0 0.0
    %9441 = vmatprep.subr.mxu0 0.0
    %9442 = vmatpush1.msra.mxu0 0.0
    %9443 = vmatprep.subr.mxu0 0.0
    %9444 = vmatpush1.msra.mxu0 0.0
    %9445 = vmatprep.subr.mxu0 0.0
    %9446 = vmatpush1.msra.mxu0 0.0
    %9447 = vmatprep.mubr.f32.mxu0 0.0
    %v9448 = vand.u32 %v9106, 4294901760
    %v9449 = vsub.f32 %v9106, %v9448
    %9450 = vmatmul.mubr.f32.gmra.mrb[0].mxu0 %v9449
    %v9451 = vpop.f32.mrb[0].mxu0
    %v9452 = vadd.f32 %v9348, %v9451
    %v9453 = vpop.f32.mrb[0].mxu0
    %9454 = vdwg.mxu0
    %9455 = vmatprep.subr.mxu0 0.0
    %v9456 = vand.u32 %v1365, 4294901760
    %9457 = vmatpush1.msra.mxu0 %v9456
    %9458 = vmatprep.subr.mxu0 0.0
    %v9459 = vand.u32 %v1366, 4294901760
    %9460 = vmatpush1.msra.mxu0 %v9459
    %9461 = vmatprep.subr.mxu0 0.0
    %v9462 = vand.u32 %v1367, 4294901760
    %9463 = vmatpush1.msra.mxu0 %v9462
    %9464 = vmatprep.subr.mxu0 0.0
    %v9465 = vand.u32 %v1368, 4294901760
    %9466 = vmatpush1.msra.mxu0 %v9465
    %9467 = vmatprep.subr.mxu0 0.0
    %v9468 = vand.u32 %v1369, 4294901760
    %9469 = vmatpush1.msra.mxu0 %v9468
    %9470 = vmatprep.subr.mxu0 0.0
    %v9471 = vand.u32 %v1370, 4294901760
    %9472 = vmatpush1.msra.mxu0 %v9471
    %9473 = vmatprep.subr.mxu0 0.0
    %v9474 = vand.u32 %v1371, 4294901760
    %9475 = vmatpush1.msra.mxu0 %v9474
    %9476 = vmatprep.subr.mxu0 0.0
    %v9477 = vand.u32 %v1372, 4294901760
    %9478 = vmatpush1.msra.mxu0 %v9477
    %9479 = vmatprep.subr.mxu0 0.0
    %v9480 = vand.u32 %v1373, 4294901760
    %9481 = vmatpush1.msra.mxu0 %v9480
    %9482 = vmatprep.subr.mxu0 0.0
    %v9483 = vand.u32 %v1374, 4294901760
    %9484 = vmatpush1.msra.mxu0 %v9483
    %9485 = vmatprep.subr.mxu0 0.0
    %v9486 = vand.u32 %v1375, 4294901760
    %9487 = vmatpush1.msra.mxu0 %v9486
    %9488 = vmatprep.subr.mxu0 0.0
    %v9489 = vand.u32 %v1376, 4294901760
    %9490 = vmatpush1.msra.mxu0 %v9489
    %9491 = vmatprep.subr.mxu0 0.0
    %v9492 = vand.u32 %v1377, 4294901760
    %9493 = vmatpush1.msra.mxu0 %v9492
    %9494 = vmatprep.subr.mxu0 0.0
    %v9495 = vand.u32 %v1378, 4294901760
    %9496 = vmatpush1.msra.mxu0 %v9495
    %9497 = vmatprep.subr.mxu0 0.0
    %v9498 = vand.u32 %v1379, 4294901760
    %9499 = vmatpush1.msra.mxu0 %v9498
    %9500 = vmatprep.subr.mxu0 0.0
    %v9501 = vand.u32 %v1380, 4294901760
    %9502 = vmatpush1.msra.mxu0 %v9501
    %9503 = vmatprep.subr.mxu0 0.0
    %9504 = vmatpush1.msra.mxu0 0.0
    %9505 = vmatprep.subr.mxu0 0.0
    %9506 = vmatpush1.msra.mxu0 0.0
    %9507 = vmatprep.subr.mxu0 0.0
    %9508 = vmatpush1.msra.mxu0 0.0
    %9509 = vmatprep.subr.mxu0 0.0
    %9510 = vmatpush1.msra.mxu0 0.0
    %9511 = vmatprep.subr.mxu0 0.0
    %9512 = vmatpush1.msra.mxu0 0.0
    %9513 = vmatprep.subr.mxu0 0.0
    %9514 = vmatpush1.msra.mxu0 0.0
    %9515 = vmatprep.subr.mxu0 0.0
    %9516 = vmatpush1.msra.mxu0 0.0
    %9517 = vmatprep.subr.mxu0 0.0
    %9518 = vmatpush1.msra.mxu0 0.0
    %9519 = vmatprep.subr.mxu0 0.0
    %9520 = vmatpush1.msra.mxu0 0.0
    %9521 = vmatprep.subr.mxu0 0.0
    %9522 = vmatpush1.msra.mxu0 0.0
    %9523 = vmatprep.subr.mxu0 0.0
    %9524 = vmatpush1.msra.mxu0 0.0
    %9525 = vmatprep.subr.mxu0 0.0
    %9526 = vmatpush1.msra.mxu0 0.0
    %9527 = vmatprep.subr.mxu0 0.0
    %9528 = vmatpush1.msra.mxu0 0.0
    %9529 = vmatprep.subr.mxu0 0.0
    %9530 = vmatpush1.msra.mxu0 0.0
    %9531 = vmatprep.subr.mxu0 0.0
    %9532 = vmatpush1.msra.mxu0 0.0
    %9533 = vmatprep.subr.mxu0 0.0
    %9534 = vmatpush1.msra.mxu0 0.0
    %9535 = vmatprep.mubr.f32.mxu0 0.0
    %v9536 = vand.u32 %v9106, 4294901760
    %v9537 = vsub.f32 %v9106, %v9536
    %v9538 = vand.u32 %v9537, 4294901760
    %9539 = vmatmul.mubr.f32.gmra.mrb[0].mxu0 %v9538
    %v9540 = vpop.f32.mrb[0].mxu0
    %v9541 = vadd.f32 %v9452, %v9540
    %v9542 = vpop.f32.mrb[0].mxu0
    %9543 = vdwg.mxu0
    %9544 = vmatprep.subr.mxu0 0.0
    %v9545 = vand.u32 %v1365, 4294901760
    %v9546 = vsub.f32 %v1365, %v9545
    %v9547 = vand.u32 %v9546, 4294901760
    %9548 = vmatpush1.msra.mxu0 %v9547
    %9549 = vmatprep.subr.mxu0 0.0
    %v9550 = vand.u32 %v1366, 4294901760
    %v9551 = vsub.f32 %v1366, %v9550
    %v9552 = vand.u32 %v9551, 4294901760
    %9553 = vmatpush1.msra.mxu0 %v9552
    %9554 = vmatprep.subr.mxu0 0.0
    %v9555 = vand.u32 %v1367, 4294901760
    %v9556 = vsub.f32 %v1367, %v9555
    %v9557 = vand.u32 %v9556, 4294901760
    %9558 = vmatpush1.msra.mxu0 %v9557
    %9559 = vmatprep.subr.mxu0 0.0
    %v9560 = vand.u32 %v1368, 4294901760
    %v9561 = vsub.f32 %v1368, %v9560
    %v9562 = vand.u32 %v9561, 4294901760
    %9563 = vmatpush1.msra.mxu0 %v9562
    %9564 = vmatprep.subr.mxu0 0.0
    %v9565 = vand.u32 %v1369, 4294901760
    %v9566 = vsub.f32 %v1369, %v9565
    %v9567 = vand.u32 %v9566, 4294901760
    %9568 = vmatpush1.msra.mxu0 %v9567
    %9569 = vmatprep.subr.mxu0 0.0
    %v9570 = vand.u32 %v1370, 4294901760
    %v9571 = vsub.f32 %v1370, %v9570
    %v9572 = vand.u32 %v9571, 4294901760
    %9573 = vmatpush1.msra.mxu0 %v9572
    %9574 = vmatprep.subr.mxu0 0.0
    %v9575 = vand.u32 %v1371, 4294901760
    %v9576 = vsub.f32 %v1371, %v9575
    %v9577 = vand.u32 %v9576, 4294901760
    %9578 = vmatpush1.msra.mxu0 %v9577
    %9579 = vmatprep.subr.mxu0 0.0
    %v9580 = vand.u32 %v1372, 4294901760
    %v9581 = vsub.f32 %v1372, %v9580
    %v9582 = vand.u32 %v9581, 4294901760
    %9583 = vmatpush1.msra.mxu0 %v9582
    %9584 = vmatprep.subr.mxu0 0.0
    %v9585 = vand.u32 %v1373, 4294901760
    %v9586 = vsub.f32 %v1373, %v9585
    %v9587 = vand.u32 %v9586, 4294901760
    %9588 = vmatpush1.msra.mxu0 %v9587
    %9589 = vmatprep.subr.mxu0 0.0
    %v9590 = vand.u32 %v1374, 4294901760
    %v9591 = vsub.f32 %v1374, %v9590
    %v9592 = vand.u32 %v9591, 4294901760
    %9593 = vmatpush1.msra.mxu0 %v9592
    %9594 = vmatprep.subr.mxu0 0.0
    %v9595 = vand.u32 %v1375, 4294901760
    %v9596 = vsub.f32 %v1375, %v9595
    %v9597 = vand.u32 %v9596, 4294901760
    %9598 = vmatpush1.msra.mxu0 %v9597
    %9599 = vmatprep.subr.mxu0 0.0
    %v9600 = vand.u32 %v1376, 4294901760
    %v9601 = vsub.f32 %v1376, %v9600
    %v9602 = vand.u32 %v9601, 4294901760
    %9603 = vmatpush1.msra.mxu0 %v9602
    %9604 = vmatprep.subr.mxu0 0.0
    %v9605 = vand.u32 %v1377, 4294901760
    %v9606 = vsub.f32 %v1377, %v9605
    %v9607 = vand.u32 %v9606, 4294901760
    %9608 = vmatpush1.msra.mxu0 %v9607
    %9609 = vmatprep.subr.mxu0 0.0
    %v9610 = vand.u32 %v1378, 4294901760
    %v9611 = vsub.f32 %v1378, %v9610
    %v9612 = vand.u32 %v9611, 4294901760
    %9613 = vmatpush1.msra.mxu0 %v9612
    %9614 = vmatprep.subr.mxu0 0.0
    %v9615 = vand.u32 %v1379, 4294901760
    %v9616 = vsub.f32 %v1379, %v9615
    %v9617 = vand.u32 %v9616, 4294901760
    %9618 = vmatpush1.msra.mxu0 %v9617
    %9619 = vmatprep.subr.mxu0 0.0
    %v9620 = vand.u32 %v1380, 4294901760
    %v9621 = vsub.f32 %v1380, %v9620
    %v9622 = vand.u32 %v9621, 4294901760
    %9623 = vmatpush1.msra.mxu0 %v9622
    %9624 = vmatprep.subr.mxu0 0.0
    %9625 = vmatpush1.msra.mxu0 0.0
    %9626 = vmatprep.subr.mxu0 0.0
    %9627 = vmatpush1.msra.mxu0 0.0
    %9628 = vmatprep.subr.mxu0 0.0
    %9629 = vmatpush1.msra.mxu0 0.0
    %9630 = vmatprep.subr.mxu0 0.0
    %9631 = vmatpush1.msra.mxu0 0.0
    %9632 = vmatprep.subr.mxu0 0.0
    %9633 = vmatpush1.msra.mxu0 0.0
    %9634 = vmatprep.subr.mxu0 0.0
    %9635 = vmatpush1.msra.mxu0 0.0
    %9636 = vmatprep.subr.mxu0 0.0
    %9637 = vmatpush1.msra.mxu0 0.0
    %9638 = vmatprep.subr.mxu0 0.0
    %9639 = vmatpush1.msra.mxu0 0.0
    %9640 = vmatprep.subr.mxu0 0.0
    %9641 = vmatpush1.msra.mxu0 0.0
    %9642 = vmatprep.subr.mxu0 0.0
    %9643 = vmatpush1.msra.mxu0 0.0
    %9644 = vmatprep.subr.mxu0 0.0
    %9645 = vmatpush1.msra.mxu0 0.0
    %9646 = vmatprep.subr.mxu0 0.0
    %9647 = vmatpush1.msra.mxu0 0.0
    %9648 = vmatprep.subr.mxu0 0.0
    %9649 = vmatpush1.msra.mxu0 0.0
    %9650 = vmatprep.subr.mxu0 0.0
    %9651 = vmatpush1.msra.mxu0 0.0
    %9652 = vmatprep.subr.mxu0 0.0
    %9653 = vmatpush1.msra.mxu0 0.0
    %9654 = vmatprep.subr.mxu0 0.0
    %9655 = vmatpush1.msra.mxu0 0.0
    %9656 = vmatprep.mubr.f32.mxu0 0.0
    %v9657 = vand.u32 %v9106, 4294901760
    %9658 = vmatmul.mubr.f32.gmra.mrb[0].mxu0 %v9657
    %v9659 = vpop.f32.mrb[0].mxu0
    %v9660 = vadd.f32 %v9541, %v9659
    %v9661 = vpop.f32.mrb[0].mxu0
    %9662 = vdwg.mxu0
    %9663 = vmatprep.subr.mxu0 0.0
    %v9664 = vand.u32 %v1365, 4294901760
    %9665 = vmatpush1.msra.mxu0 %v9664
    %9666 = vmatprep.subr.mxu0 0.0
    %v9667 = vand.u32 %v1366, 4294901760
    %9668 = vmatpush1.msra.mxu0 %v9667
    %9669 = vmatprep.subr.mxu0 0.0
    %v9670 = vand.u32 %v1367, 4294901760
    %9671 = vmatpush1.msra.mxu0 %v9670
    %9672 = vmatprep.subr.mxu0 0.0
    %v9673 = vand.u32 %v1368, 4294901760
    %9674 = vmatpush1.msra.mxu0 %v9673
    %9675 = vmatprep.subr.mxu0 0.0
    %v9676 = vand.u32 %v1369, 4294901760
    %9677 = vmatpush1.msra.mxu0 %v9676
    %9678 = vmatprep.subr.mxu0 0.0
    %v9679 = vand.u32 %v1370, 4294901760
    %9680 = vmatpush1.msra.mxu0 %v9679
    %9681 = vmatprep.subr.mxu0 0.0
    %v9682 = vand.u32 %v1371, 4294901760
    %9683 = vmatpush1.msra.mxu0 %v9682
    %9684 = vmatprep.subr.mxu0 0.0
    %v9685 = vand.u32 %v1372, 4294901760
    %9686 = vmatpush1.msra.mxu0 %v9685
    %9687 = vmatprep.subr.mxu0 0.0
    %v9688 = vand.u32 %v1373, 4294901760
    %9689 = vmatpush1.msra.mxu0 %v9688
    %9690 = vmatprep.subr.mxu0 0.0
    %v9691 = vand.u32 %v1374, 4294901760
    %9692 = vmatpush1.msra.mxu0 %v9691
    %9693 = vmatprep.subr.mxu0 0.0
    %v9694 = vand.u32 %v1375, 4294901760
    %9695 = vmatpush1.msra.mxu0 %v9694
    %9696 = vmatprep.subr.mxu0 0.0
    %v9697 = vand.u32 %v1376, 4294901760
    %9698 = vmatpush1.msra.mxu0 %v9697
    %9699 = vmatprep.subr.mxu0 0.0
    %v9700 = vand.u32 %v1377, 4294901760
    %9701 = vmatpush1.msra.mxu0 %v9700
    %9702 = vmatprep.subr.mxu0 0.0
    %v9703 = vand.u32 %v1378, 4294901760
    %9704 = vmatpush1.msra.mxu0 %v9703
    %9705 = vmatprep.subr.mxu0 0.0
    %v9706 = vand.u32 %v1379, 4294901760
    %9707 = vmatpush1.msra.mxu0 %v9706
    %9708 = vmatprep.subr.mxu0 0.0
    %v9709 = vand.u32 %v1380, 4294901760
    %9710 = vmatpush1.msra.mxu0 %v9709
    %9711 = vmatprep.subr.mxu0 0.0
    %9712 = vmatpush1.msra.mxu0 0.0
    %9713 = vmatprep.subr.mxu0 0.0
    %9714 = vmatpush1.msra.mxu0 0.0
    %9715 = vmatprep.subr.mxu0 0.0
    %9716 = vmatpush1.msra.mxu0 0.0
    %9717 = vmatprep.subr.mxu0 0.0
    %9718 = vmatpush1.msra.mxu0 0.0
    %9719 = vmatprep.subr.mxu0 0.0
    %9720 = vmatpush1.msra.mxu0 0.0
    %9721 = vmatprep.subr.mxu0 0.0
    %9722 = vmatpush1.msra.mxu0 0.0
    %9723 = vmatprep.subr.mxu0 0.0
    %9724 = vmatpush1.msra.mxu0 0.0
    %9725 = vmatprep.subr.mxu0 0.0
    %9726 = vmatpush1.msra.mxu0 0.0
    %9727 = vmatprep.subr.mxu0 0.0
    %9728 = vmatpush1.msra.mxu0 0.0
    %9729 = vmatprep.subr.mxu0 0.0
    %9730 = vmatpush1.msra.mxu0 0.0
    %9731 = vmatprep.subr.mxu0 0.0
    %9732 = vmatpush1.msra.mxu0 0.0
    %9733 = vmatprep.subr.mxu0 0.0
    %9734 = vmatpush1.msra.mxu0 0.0
    %9735 = vmatprep.subr.mxu0 0.0
    %9736 = vmatpush1.msra.mxu0 0.0
    %9737 = vmatprep.subr.mxu0 0.0
    %9738 = vmatpush1.msra.mxu0 0.0
    %9739 = vmatprep.subr.mxu0 0.0
    %9740 = vmatpush1.msra.mxu0 0.0
    %9741 = vmatprep.subr.mxu0 0.0
    %9742 = vmatpush1.msra.mxu0 0.0
    %9743 = vmatprep.mubr.f32.mxu0 0.0
    %v9744 = vand.u32 %v9106, 4294901760
    %9745 = vmatmul.mubr.f32.gmra.mrb[0].mxu0 %v9744
    %v9746 = vpop.f32.mrb[0].mxu0
    %v9747 = vadd.f32 %v9660, %v9746
    %v9748 = vpop.f32.mrb[0].mxu0
    %9749 = vdwg.mxu0
    %v9750 = vadd.f32 %v9108, %v9747
    %v9751 = vtanh.pop %v9750
    %s9752 = scalar_lea.vmem [#allocation2], 104
    %v9753 = vld [vmem:[%s9752] sm:$0xff]
    %9754 = vmatprep.subr.mxu0 0.0
    %v9755 = vand.u32 %v1365, 4294901760
    %9756 = vmatpush1.msra.mxu0 %v9755
    %9757 = vmatprep.subr.mxu0 0.0
    %v9758 = vand.u32 %v1366, 4294901760
    %9759 = vmatpush1.msra.mxu0 %v9758
    %9760 = vmatprep.subr.mxu0 0.0
    %v9761 = vand.u32 %v1367, 4294901760
    %9762 = vmatpush1.msra.mxu0 %v9761
    %9763 = vmatprep.subr.mxu0 0.0
    %v9764 = vand.u32 %v1368, 4294901760
    %9765 = vmatpush1.msra.mxu0 %v9764
    %9766 = vmatprep.subr.mxu0 0.0
    %v9767 = vand.u32 %v1369, 4294901760
    %9768 = vmatpush1.msra.mxu0 %v9767
    %9769 = vmatprep.subr.mxu0 0.0
    %v9770 = vand.u32 %v1370, 4294901760
    %9771 = vmatpush1.msra.mxu0 %v9770
    %9772 = vmatprep.subr.mxu0 0.0
    %v9773 = vand.u32 %v1371, 4294901760
    %9774 = vmatpush1.msra.mxu0 %v9773
    %9775 = vmatprep.subr.mxu0 0.0
    %v9776 = vand.u32 %v1372, 4294901760
    %9777 = vmatpush1.msra.mxu0 %v9776
    %9778 = vmatprep.subr.mxu0 0.0
    %v9779 = vand.u32 %v1373, 4294901760
    %9780 = vmatpush1.msra.mxu0 %v9779
    %9781 = vmatprep.subr.mxu0 0.0
    %v9782 = vand.u32 %v1374, 4294901760
    %9783 = vmatpush1.msra.mxu0 %v9782
    %9784 = vmatprep.subr.mxu0 0.0
    %v9785 = vand.u32 %v1375, 4294901760
    %9786 = vmatpush1.msra.mxu0 %v9785
    %9787 = vmatprep.subr.mxu0 0.0
    %v9788 = vand.u32 %v1376, 4294901760
    %9789 = vmatpush1.msra.mxu0 %v9788
    %9790 = vmatprep.subr.mxu0 0.0
    %v9791 = vand.u32 %v1377, 4294901760
    %9792 = vmatpush1.msra.mxu0 %v9791
    %9793 = vmatprep.subr.mxu0 0.0
    %v9794 = vand.u32 %v1378, 4294901760
    %9795 = vmatpush1.msra.mxu0 %v9794
    %9796 = vmatprep.subr.mxu0 0.0
    %v9797 = vand.u32 %v1379, 4294901760
    %9798 = vmatpush1.msra.mxu0 %v9797
    %9799 = vmatprep.subr.mxu0 0.0
    %v9800 = vand.u32 %v1380, 4294901760
    %9801 = vmatpush1.msra.mxu0 %v9800
    %9802 = vmatprep.subr.mxu0 0.0
    %9803 = vmatpush1.msra.mxu0 0.0
    %9804 = vmatprep.subr.mxu0 0.0
    %9805 = vmatpush1.msra.mxu0 0.0
    %9806 = vmatprep.subr.mxu0 0.0
    %9807 = vmatpush1.msra.mxu0 0.0
    %9808 = vmatprep.subr.mxu0 0.0
    %9809 = vmatpush1.msra.mxu0 0.0
    %9810 = vmatprep.subr.mxu0 0.0
    %9811 = vmatpush1.msra.mxu0 0.0
    %9812 = vmatprep.subr.mxu0 0.0
    %9813 = vmatpush1.msra.mxu0 0.0
    %9814 = vmatprep.subr.mxu0 0.0
    %9815 = vmatpush1.msra.mxu0 0.0
    %9816 = vmatprep.subr.mxu0 0.0
    %9817 = vmatpush1.msra.mxu0 0.0
    %9818 = vmatprep.subr.mxu0 0.0
    %9819 = vmatpush1.msra.mxu0 0.0
    %9820 = vmatprep.subr.mxu0 0.0
    %9821 = vmatpush1.msra.mxu0 0.0
    %9822 = vmatprep.subr.mxu0 0.0
    %9823 = vmatpush1.msra.mxu0 0.0
    %9824 = vmatprep.subr.mxu0 0.0
    %9825 = vmatpush1.msra.mxu0 0.0
    %9826 = vmatprep.subr.mxu0 0.0
    %9827 = vmatpush1.msra.mxu0 0.0
    %9828 = vmatprep.subr.mxu0 0.0
    %9829 = vmatpush1.msra.mxu0 0.0
    %9830 = vmatprep.subr.mxu0 0.0
    %9831 = vmatpush1.msra.mxu0 0.0
    %9832 = vmatprep.subr.mxu0 0.0
    %9833 = vmatpush1.msra.mxu0 0.0
    %9834 = vmatprep.mubr.f32.mxu0 0.0
    %v9835 = vand.u32 %v9751, 4294901760
    %v9836 = vsub.f32 %v9751, %v9835
    %v9837 = vand.u32 %v9836, 4294901760
    %v9838 = vsub.f32 %v9836, %v9837
    %v9839 = vand.u32 %v9838, 4294901760
    %9840 = vmatmul.mubr.f32.gmra.mrb[0].mxu0 %v9839
    %v9841 = vpop.f32.mrb[0].mxu0
    %v9842 = vadd.f32 0.0, %v9841
    %v9843 = vpop.f32.mrb[0].mxu0
    %9844 = vdwg.mxu0
    %9845 = vmatprep.subr.mxu0 0.0
    %v9846 = vand.u32 %v1365, 4294901760
    %v9847 = vsub.f32 %v1365, %v9846
    %v9848 = vand.u32 %v9847, 4294901760
    %v9849 = vsub.f32 %v9847, %v9848
    %v9850 = vand.u32 %v9849, 4294901760
    %9851 = vmatpush1.msra.mxu0 %v9850
    %9852 = vmatprep.subr.mxu0 0.0
    %v9853 = vand.u32 %v1366, 4294901760
    %v9854 = vsub.f32 %v1366, %v9853
    %v9855 = vand.u32 %v9854, 4294901760
    %v9856 = vsub.f32 %v9854, %v9855
    %v9857 = vand.u32 %v9856, 4294901760
    %9858 = vmatpush1.msra.mxu0 %v9857
    %9859 = vmatprep.subr.mxu0 0.0
    %v9860 = vand.u32 %v1367, 4294901760
    %v9861 = vsub.f32 %v1367, %v9860
    %v9862 = vand.u32 %v9861, 4294901760
    %v9863 = vsub.f32 %v9861, %v9862
    %v9864 = vand.u32 %v9863, 4294901760
    %9865 = vmatpush1.msra.mxu0 %v9864
    %9866 = vmatprep.subr.mxu0 0.0
    %v9867 = vand.u32 %v1368, 4294901760
    %v9868 = vsub.f32 %v1368, %v9867
    %v9869 = vand.u32 %v9868, 4294901760
    %v9870 = vsub.f32 %v9868, %v9869
    %v9871 = vand.u32 %v9870, 4294901760
    %9872 = vmatpush1.msra.mxu0 %v9871
    %9873 = vmatprep.subr.mxu0 0.0
    %v9874 = vand.u32 %v1369, 4294901760
    %v9875 = vsub.f32 %v1369, %v9874
    %v9876 = vand.u32 %v9875, 4294901760
    %v9877 = vsub.f32 %v9875, %v9876
    %v9878 = vand.u32 %v9877, 4294901760
    %9879 = vmatpush1.msra.mxu0 %v9878
    %9880 = vmatprep.subr.mxu0 0.0
    %v9881 = vand.u32 %v1370, 4294901760
    %v9882 = vsub.f32 %v1370, %v9881
    %v9883 = vand.u32 %v9882, 4294901760
    %v9884 = vsub.f32 %v9882, %v9883
    %v9885 = vand.u32 %v9884, 4294901760
    %9886 = vmatpush1.msra.mxu0 %v9885
    %9887 = vmatprep.subr.mxu0 0.0
    %v9888 = vand.u32 %v1371, 4294901760
    %v9889 = vsub.f32 %v1371, %v9888
    %v9890 = vand.u32 %v9889, 4294901760
    %v9891 = vsub.f32 %v9889, %v9890
    %v9892 = vand.u32 %v9891, 4294901760
    %9893 = vmatpush1.msra.mxu0 %v9892
    %9894 = vmatprep.subr.mxu0 0.0
    %v9895 = vand.u32 %v1372, 4294901760
    %v9896 = vsub.f32 %v1372, %v9895
    %v9897 = vand.u32 %v9896, 4294901760
    %v9898 = vsub.f32 %v9896, %v9897
    %v9899 = vand.u32 %v9898, 4294901760
    %9900 = vmatpush1.msra.mxu0 %v9899
    %9901 = vmatprep.subr.mxu0 0.0
    %v9902 = vand.u32 %v1373, 4294901760
    %v9903 = vsub.f32 %v1373, %v9902
    %v9904 = vand.u32 %v9903, 4294901760
    %v9905 = vsub.f32 %v9903, %v9904
    %v9906 = vand.u32 %v9905, 4294901760
    %9907 = vmatpush1.msra.mxu0 %v9906
    %9908 = vmatprep.subr.mxu0 0.0
    %v9909 = vand.u32 %v1374, 4294901760
    %v9910 = vsub.f32 %v1374, %v9909
    %v9911 = vand.u32 %v9910, 4294901760
    %v9912 = vsub.f32 %v9910, %v9911
    %v9913 = vand.u32 %v9912, 4294901760
    %9914 = vmatpush1.msra.mxu0 %v9913
    %9915 = vmatprep.subr.mxu0 0.0
    %v9916 = vand.u32 %v1375, 4294901760
    %v9917 = vsub.f32 %v1375, %v9916
    %v9918 = vand.u32 %v9917, 4294901760
    %v9919 = vsub.f32 %v9917, %v9918
    %v9920 = vand.u32 %v9919, 4294901760
    %9921 = vmatpush1.msra.mxu0 %v9920
    %9922 = vmatprep.subr.mxu0 0.0
    %v9923 = vand.u32 %v1376, 4294901760
    %v9924 = vsub.f32 %v1376, %v9923
    %v9925 = vand.u32 %v9924, 4294901760
    %v9926 = vsub.f32 %v9924, %v9925
    %v9927 = vand.u32 %v9926, 4294901760
    %9928 = vmatpush1.msra.mxu0 %v9927
    %9929 = vmatprep.subr.mxu0 0.0
    %v9930 = vand.u32 %v1377, 4294901760
    %v9931 = vsub.f32 %v1377, %v9930
    %v9932 = vand.u32 %v9931, 4294901760
    %v9933 = vsub.f32 %v9931, %v9932
    %v9934 = vand.u32 %v9933, 4294901760
    %9935 = vmatpush1.msra.mxu0 %v9934
    %9936 = vmatprep.subr.mxu0 0.0
    %v9937 = vand.u32 %v1378, 4294901760
    %v9938 = vsub.f32 %v1378, %v9937
    %v9939 = vand.u32 %v9938, 4294901760
    %v9940 = vsub.f32 %v9938, %v9939
    %v9941 = vand.u32 %v9940, 4294901760
    %9942 = vmatpush1.msra.mxu0 %v9941
    %9943 = vmatprep.subr.mxu0 0.0
    %v9944 = vand.u32 %v1379, 4294901760
    %v9945 = vsub.f32 %v1379, %v9944
    %v9946 = vand.u32 %v9945, 4294901760
    %v9947 = vsub.f32 %v9945, %v9946
    %v9948 = vand.u32 %v9947, 4294901760
    %9949 = vmatpush1.msra.mxu0 %v9948
    %9950 = vmatprep.subr.mxu0 0.0
    %v9951 = vand.u32 %v1380, 4294901760
    %v9952 = vsub.f32 %v1380, %v9951
    %v9953 = vand.u32 %v9952, 4294901760
    %v9954 = vsub.f32 %v9952, %v9953
    %v9955 = vand.u32 %v9954, 4294901760
    %9956 = vmatpush1.msra.mxu0 %v9955
    %9957 = vmatprep.subr.mxu0 0.0
    %9958 = vmatpush1.msra.mxu0 0.0
    %9959 = vmatprep.subr.mxu0 0.0
    %9960 = vmatpush1.msra.mxu0 0.0
    %9961 = vmatprep.subr.mxu0 0.0
    %9962 = vmatpush1.msra.mxu0 0.0
    %9963 = vmatprep.subr.mxu0 0.0
    %9964 = vmatpush1.msra.mxu0 0.0
    %9965 = vmatprep.subr.mxu0 0.0
    %9966 = vmatpush1.msra.mxu0 0.0
    %9967 = vmatprep.subr.mxu0 0.0
    %9968 = vmatpush1.msra.mxu0 0.0
    %9969 = vmatprep.subr.mxu0 0.0
    %9970 = vmatpush1.msra.mxu0 0.0
    %9971 = vmatprep.subr.mxu0 0.0
    %9972 = vmatpush1.msra.mxu0 0.0
    %9973 = vmatprep.subr.mxu0 0.0
    %9974 = vmatpush1.msra.mxu0 0.0
    %9975 = vmatprep.subr.mxu0 0.0
    %9976 = vmatpush1.msra.mxu0 0.0
    %9977 = vmatprep.subr.mxu0 0.0
    %9978 = vmatpush1.msra.mxu0 0.0
    %9979 = vmatprep.subr.mxu0 0.0
    %9980 = vmatpush1.msra.mxu0 0.0
    %9981 = vmatprep.subr.mxu0 0.0
    %9982 = vmatpush1.msra.mxu0 0.0
    %9983 = vmatprep.subr.mxu0 0.0
    %9984 = vmatpush1.msra.mxu0 0.0
    %9985 = vmatprep.subr.mxu0 0.0
    %9986 = vmatpush1.msra.mxu0 0.0
    %9987 = vmatprep.subr.mxu0 0.0
    %9988 = vmatpush1.msra.mxu0 0.0
    %9989 = vmatprep.mubr.f32.mxu0 0.0
    %v9990 = vand.u32 %v9751, 4294901760
    %9991 = vmatmul.mubr.f32.gmra.mrb[0].mxu0 %v9990
    %v9992 = vpop.f32.mrb[0].mxu0
    %v9993 = vadd.f32 %v9842, %v9992
    %v9994 = vpop.f32.mrb[0].mxu0
    %9995 = vdwg.mxu0
    %9996 = vmatprep.subr.mxu0 0.0
    %v9997 = vand.u32 %v1365, 4294901760
    %v9998 = vsub.f32 %v1365, %v9997
    %9999 = vmatpush1.msra.mxu0 %v9998
    %10000 = vmatprep.subr.mxu0 0.0
    %v10001 = vand.u32 %v1366, 4294901760
    %v10002 = vsub.f32 %v1366, %v10001
    %10003 = vmatpush1.msra.mxu0 %v10002
    %10004 = vmatprep.subr.mxu0 0.0
    %v10005 = vand.u32 %v1367, 4294901760
    %v10006 = vsub.f32 %v1367, %v10005
    %10007 = vmatpush1.msra.mxu0 %v10006
    %10008 = vmatprep.subr.mxu0 0.0
    %v10009 = vand.u32 %v1368, 4294901760
    %v10010 = vsub.f32 %v1368, %v10009
    %10011 = vmatpush1.msra.mxu0 %v10010
    %10012 = vmatprep.subr.mxu0 0.0
    %v10013 = vand.u32 %v1369, 4294901760
    %v10014 = vsub.f32 %v1369, %v10013
    %10015 = vmatpush1.msra.mxu0 %v10014
    %10016 = vmatprep.subr.mxu0 0.0
    %v10017 = vand.u32 %v1370, 4294901760
    %v10018 = vsub.f32 %v1370, %v10017
    %10019 = vmatpush1.msra.mxu0 %v10018
    %10020 = vmatprep.subr.mxu0 0.0
    %v10021 = vand.u32 %v1371, 4294901760
    %v10022 = vsub.f32 %v1371, %v10021
    %10023 = vmatpush1.msra.mxu0 %v10022
    %10024 = vmatprep.subr.mxu0 0.0
    %v10025 = vand.u32 %v1372, 4294901760
    %v10026 = vsub.f32 %v1372, %v10025
    %10027 = vmatpush1.msra.mxu0 %v10026
    %10028 = vmatprep.subr.mxu0 0.0
    %v10029 = vand.u32 %v1373, 4294901760
    %v10030 = vsub.f32 %v1373, %v10029
    %10031 = vmatpush1.msra.mxu0 %v10030
    %10032 = vmatprep.subr.mxu0 0.0
    %v10033 = vand.u32 %v1374, 4294901760
    %v10034 = vsub.f32 %v1374, %v10033
    %10035 = vmatpush1.msra.mxu0 %v10034
    %10036 = vmatprep.subr.mxu0 0.0
    %v10037 = vand.u32 %v1375, 4294901760
    %v10038 = vsub.f32 %v1375, %v10037
    %10039 = vmatpush1.msra.mxu0 %v10038
    %10040 = vmatprep.subr.mxu0 0.0
    %v10041 = vand.u32 %v1376, 4294901760
    %v10042 = vsub.f32 %v1376, %v10041
    %10043 = vmatpush1.msra.mxu0 %v10042
    %10044 = vmatprep.subr.mxu0 0.0
    %v10045 = vand.u32 %v1377, 4294901760
    %v10046 = vsub.f32 %v1377, %v10045
    %10047 = vmatpush1.msra.mxu0 %v10046
    %10048 = vmatprep.subr.mxu0 0.0
    %v10049 = vand.u32 %v1378, 4294901760
    %v10050 = vsub.f32 %v1378, %v10049
    %10051 = vmatpush1.msra.mxu0 %v10050
    %10052 = vmatprep.subr.mxu0 0.0
    %v10053 = vand.u32 %v1379, 4294901760
    %v10054 = vsub.f32 %v1379, %v10053
    %10055 = vmatpush1.msra.mxu0 %v10054
    %10056 = vmatprep.subr.mxu0 0.0
    %v10057 = vand.u32 %v1380, 4294901760
    %v10058 = vsub.f32 %v1380, %v10057
    %10059 = vmatpush1.msra.mxu0 %v10058
    %10060 = vmatprep.subr.mxu0 0.0
    %10061 = vmatpush1.msra.mxu0 0.0
    %10062 = vmatprep.subr.mxu0 0.0
    %10063 = vmatpush1.msra.mxu0 0.0
    %10064 = vmatprep.subr.mxu0 0.0
    %10065 = vmatpush1.msra.mxu0 0.0
    %10066 = vmatprep.subr.mxu0 0.0
    %10067 = vmatpush1.msra.mxu0 0.0
    %10068 = vmatprep.subr.mxu0 0.0
    %10069 = vmatpush1.msra.mxu0 0.0
    %10070 = vmatprep.subr.mxu0 0.0
    %10071 = vmatpush1.msra.mxu0 0.0
    %10072 = vmatprep.subr.mxu0 0.0
    %10073 = vmatpush1.msra.mxu0 0.0
    %10074 = vmatprep.subr.mxu0 0.0
    %10075 = vmatpush1.msra.mxu0 0.0
    %10076 = vmatprep.subr.mxu0 0.0
    %10077 = vmatpush1.msra.mxu0 0.0
    %10078 = vmatprep.subr.mxu0 0.0
    %10079 = vmatpush1.msra.mxu0 0.0
    %10080 = vmatprep.subr.mxu0 0.0
    %10081 = vmatpush1.msra.mxu0 0.0
    %10082 = vmatprep.subr.mxu0 0.0
    %10083 = vmatpush1.msra.mxu0 0.0
    %10084 = vmatprep.subr.mxu0 0.0
    %10085 = vmatpush1.msra.mxu0 0.0
    %10086 = vmatprep.subr.mxu0 0.0
    %10087 = vmatpush1.msra.mxu0 0.0
    %10088 = vmatprep.subr.mxu0 0.0
    %10089 = vmatpush1.msra.mxu0 0.0
    %10090 = vmatprep.subr.mxu0 0.0
    %10091 = vmatpush1.msra.mxu0 0.0
    %10092 = vmatprep.mubr.f32.mxu0 0.0
    %v10093 = vand.u32 %v9751, 4294901760
    %v10094 = vsub.f32 %v9751, %v10093
    %10095 = vmatmul.mubr.f32.gmra.mrb[0].mxu0 %v10094
    %v10096 = vpop.f32.mrb[0].mxu0
    %v10097 = vadd.f32 %v9993, %v10096
    %v10098 = vpop.f32.mrb[0].mxu0
    %10099 = vdwg.mxu0
    %10100 = vmatprep.subr.mxu0 0.0
    %v10101 = vand.u32 %v1365, 4294901760
    %10102 = vmatpush1.msra.mxu0 %v10101
    %10103 = vmatprep.subr.mxu0 0.0
    %v10104 = vand.u32 %v1366, 4294901760
    %10105 = vmatpush1.msra.mxu0 %v10104
    %10106 = vmatprep.subr.mxu0 0.0
    %v10107 = vand.u32 %v1367, 4294901760
    %10108 = vmatpush1.msra.mxu0 %v10107
    %10109 = vmatprep.subr.mxu0 0.0
    %v10110 = vand.u32 %v1368, 4294901760
    %10111 = vmatpush1.msra.mxu0 %v10110
    %10112 = vmatprep.subr.mxu0 0.0
    %v10113 = vand.u32 %v1369, 4294901760
    %10114 = vmatpush1.msra.mxu0 %v10113
    %10115 = vmatprep.subr.mxu0 0.0
    %v10116 = vand.u32 %v1370, 4294901760
    %10117 = vmatpush1.msra.mxu0 %v10116
    %10118 = vmatprep.subr.mxu0 0.0
    %v10119 = vand.u32 %v1371, 4294901760
    %10120 = vmatpush1.msra.mxu0 %v10119
    %10121 = vmatprep.subr.mxu0 0.0
    %v10122 = vand.u32 %v1372, 4294901760
    %10123 = vmatpush1.msra.mxu0 %v10122
    %10124 = vmatprep.subr.mxu0 0.0
    %v10125 = vand.u32 %v1373, 4294901760
    %10126 = vmatpush1.msra.mxu0 %v10125
    %10127 = vmatprep.subr.mxu0 0.0
    %v10128 = vand.u32 %v1374, 4294901760
    %10129 = vmatpush1.msra.mxu0 %v10128
    %10130 = vmatprep.subr.mxu0 0.0
    %v10131 = vand.u32 %v1375, 4294901760
    %10132 = vmatpush1.msra.mxu0 %v10131
    %10133 = vmatprep.subr.mxu0 0.0
    %v10134 = vand.u32 %v1376, 4294901760
    %10135 = vmatpush1.msra.mxu0 %v10134
    %10136 = vmatprep.subr.mxu0 0.0
    %v10137 = vand.u32 %v1377, 4294901760
    %10138 = vmatpush1.msra.mxu0 %v10137
    %10139 = vmatprep.subr.mxu0 0.0
    %v10140 = vand.u32 %v1378, 4294901760
    %10141 = vmatpush1.msra.mxu0 %v10140
    %10142 = vmatprep.subr.mxu0 0.0
    %v10143 = vand.u32 %v1379, 4294901760
    %10144 = vmatpush1.msra.mxu0 %v10143
    %10145 = vmatprep.subr.mxu0 0.0
    %v10146 = vand.u32 %v1380, 4294901760
    %10147 = vmatpush1.msra.mxu0 %v10146
    %10148 = vmatprep.subr.mxu0 0.0
    %10149 = vmatpush1.msra.mxu0 0.0
    %10150 = vmatprep.subr.mxu0 0.0
    %10151 = vmatpush1.msra.mxu0 0.0
    %10152 = vmatprep.subr.mxu0 0.0
    %10153 = vmatpush1.msra.mxu0 0.0
    %10154 = vmatprep.subr.mxu0 0.0
    %10155 = vmatpush1.msra.mxu0 0.0
    %10156 = vmatprep.subr.mxu0 0.0
    %10157 = vmatpush1.msra.mxu0 0.0
    %10158 = vmatprep.subr.mxu0 0.0
    %10159 = vmatpush1.msra.mxu0 0.0
    %10160 = vmatprep.subr.mxu0 0.0
    %10161 = vmatpush1.msra.mxu0 0.0
    %10162 = vmatprep.subr.mxu0 0.0
    %10163 = vmatpush1.msra.mxu0 0.0
    %10164 = vmatprep.subr.mxu0 0.0
    %10165 = vmatpush1.msra.mxu0 0.0
    %10166 = vmatprep.subr.mxu0 0.0
    %10167 = vmatpush1.msra.mxu0 0.0
    %10168 = vmatprep.subr.mxu0 0.0
    %10169 = vmatpush1.msra.mxu0 0.0
    %10170 = vmatprep.subr.mxu0 0.0
    %10171 = vmatpush1.msra.mxu0 0.0
    %10172 = vmatprep.subr.mxu0 0.0
    %10173 = vmatpush1.msra.mxu0 0.0
    %10174 = vmatprep.subr.mxu0 0.0
    %10175 = vmatpush1.msra.mxu0 0.0
    %10176 = vmatprep.subr.mxu0 0.0
    %10177 = vmatpush1.msra.mxu0 0.0
    %10178 = vmatprep.subr.mxu0 0.0
    %10179 = vmatpush1.msra.mxu0 0.0
    %10180 = vmatprep.mubr.f32.mxu0 0.0
    %v10181 = vand.u32 %v9751, 4294901760
    %v10182 = vsub.f32 %v9751, %v10181
    %v10183 = vand.u32 %v10182, 4294901760
    %10184 = vmatmul.mubr.f32.gmra.mrb[0].mxu0 %v10183
    %v10185 = vpop.f32.mrb[0].mxu0
    %v10186 = vadd.f32 %v10097, %v10185
    %v10187 = vpop.f32.mrb[0].mxu0
    %10188 = vdwg.mxu0
    %10189 = vmatprep.subr.mxu0 0.0
    %v10190 = vand.u32 %v1365, 4294901760
    %v10191 = vsub.f32 %v1365, %v10190
    %v10192 = vand.u32 %v10191, 4294901760
    %10193 = vmatpush1.msra.mxu0 %v10192
    %10194 = vmatprep.subr.mxu0 0.0
    %v10195 = vand.u32 %v1366, 4294901760
    %v10196 = vsub.f32 %v1366, %v10195
    %v10197 = vand.u32 %v10196, 4294901760
    %10198 = vmatpush1.msra.mxu0 %v10197
    %10199 = vmatprep.subr.mxu0 0.0
    %v10200 = vand.u32 %v1367, 4294901760
    %v10201 = vsub.f32 %v1367, %v10200
    %v10202 = vand.u32 %v10201, 4294901760
    %10203 = vmatpush1.msra.mxu0 %v10202
    %10204 = vmatprep.subr.mxu0 0.0
    %v10205 = vand.u32 %v1368, 4294901760
    %v10206 = vsub.f32 %v1368, %v10205
    %v10207 = vand.u32 %v10206, 4294901760
    %10208 = vmatpush1.msra.mxu0 %v10207
    %10209 = vmatprep.subr.mxu0 0.0
    %v10210 = vand.u32 %v1369, 4294901760
    %v10211 = vsub.f32 %v1369, %v10210
    %v10212 = vand.u32 %v10211, 4294901760
    %10213 = vmatpush1.msra.mxu0 %v10212
    %10214 = vmatprep.subr.mxu0 0.0
    %v10215 = vand.u32 %v1370, 4294901760
    %v10216 = vsub.f32 %v1370, %v10215
    %v10217 = vand.u32 %v10216, 4294901760
    %10218 = vmatpush1.msra.mxu0 %v10217
    %10219 = vmatprep.subr.mxu0 0.0
    %v10220 = vand.u32 %v1371, 4294901760
    %v10221 = vsub.f32 %v1371, %v10220
    %v10222 = vand.u32 %v10221, 4294901760
    %10223 = vmatpush1.msra.mxu0 %v10222
    %10224 = vmatprep.subr.mxu0 0.0
    %v10225 = vand.u32 %v1372, 4294901760
    %v10226 = vsub.f32 %v1372, %v10225
    %v10227 = vand.u32 %v10226, 4294901760
    %10228 = vmatpush1.msra.mxu0 %v10227
    %10229 = vmatprep.subr.mxu0 0.0
    %v10230 = vand.u32 %v1373, 4294901760
    %v10231 = vsub.f32 %v1373, %v10230
    %v10232 = vand.u32 %v10231, 4294901760
    %10233 = vmatpush1.msra.mxu0 %v10232
    %10234 = vmatprep.subr.mxu0 0.0
    %v10235 = vand.u32 %v1374, 4294901760
    %v10236 = vsub.f32 %v1374, %v10235
    %v10237 = vand.u32 %v10236, 4294901760
    %10238 = vmatpush1.msra.mxu0 %v10237
    %10239 = vmatprep.subr.mxu0 0.0
    %v10240 = vand.u32 %v1375, 4294901760
    %v10241 = vsub.f32 %v1375, %v10240
    %v10242 = vand.u32 %v10241, 4294901760
    %10243 = vmatpush1.msra.mxu0 %v10242
    %10244 = vmatprep.subr.mxu0 0.0
    %v10245 = vand.u32 %v1376, 4294901760
    %v10246 = vsub.f32 %v1376, %v10245
    %v10247 = vand.u32 %v10246, 4294901760
    %10248 = vmatpush1.msra.mxu0 %v10247
    %10249 = vmatprep.subr.mxu0 0.0
    %v10250 = vand.u32 %v1377, 4294901760
    %v10251 = vsub.f32 %v1377, %v10250
    %v10252 = vand.u32 %v10251, 4294901760
    %10253 = vmatpush1.msra.mxu0 %v10252
    %10254 = vmatprep.subr.mxu0 0.0
    %v10255 = vand.u32 %v1378, 4294901760
    %v10256 = vsub.f32 %v1378, %v10255
    %v10257 = vand.u32 %v10256, 4294901760
    %10258 = vmatpush1.msra.mxu0 %v10257
    %10259 = vmatprep.subr.mxu0 0.0
    %v10260 = vand.u32 %v1379, 4294901760
    %v10261 = vsub.f32 %v1379, %v10260
    %v10262 = vand.u32 %v10261, 4294901760
    %10263 = vmatpush1.msra.mxu0 %v10262
    %10264 = vmatprep.subr.mxu0 0.0
    %v10265 = vand.u32 %v1380, 4294901760
    %v10266 = vsub.f32 %v1380, %v10265
    %v10267 = vand.u32 %v10266, 4294901760
    %10268 = vmatpush1.msra.mxu0 %v10267
    %10269 = vmatprep.subr.mxu0 0.0
    %10270 = vmatpush1.msra.mxu0 0.0
    %10271 = vmatprep.subr.mxu0 0.0
    %10272 = vmatpush1.msra.mxu0 0.0
    %10273 = vmatprep.subr.mxu0 0.0
    %10274 = vmatpush1.msra.mxu0 0.0
    %10275 = vmatprep.subr.mxu0 0.0
    %10276 = vmatpush1.msra.mxu0 0.0
    %10277 = vmatprep.subr.mxu0 0.0
    %10278 = vmatpush1.msra.mxu0 0.0
    %10279 = vmatprep.subr.mxu0 0.0
    %10280 = vmatpush1.msra.mxu0 0.0
    %10281 = vmatprep.subr.mxu0 0.0
    %10282 = vmatpush1.msra.mxu0 0.0
    %10283 = vmatprep.subr.mxu0 0.0
    %10284 = vmatpush1.msra.mxu0 0.0
    %10285 = vmatprep.subr.mxu0 0.0
    %10286 = vmatpush1.msra.mxu0 0.0
    %10287 = vmatprep.subr.mxu0 0.0
    %10288 = vmatpush1.msra.mxu0 0.0
    %10289 = vmatprep.subr.mxu0 0.0
    %10290 = vmatpush1.msra.mxu0 0.0
    %10291 = vmatprep.subr.mxu0 0.0
    %10292 = vmatpush1.msra.mxu0 0.0
    %10293 = vmatprep.subr.mxu0 0.0
    %10294 = vmatpush1.msra.mxu0 0.0
    %10295 = vmatprep.subr.mxu0 0.0
    %10296 = vmatpush1.msra.mxu0 0.0
    %10297 = vmatprep.subr.mxu0 0.0
    %10298 = vmatpush1.msra.mxu0 0.0
    %10299 = vmatprep.subr.mxu0 0.0
    %10300 = vmatpush1.msra.mxu0 0.0
    %10301 = vmatprep.mubr.f32.mxu0 0.0
    %v10302 = vand.u32 %v9751, 4294901760
    %10303 = vmatmul.mubr.f32.gmra.mrb[0].mxu0 %v10302
    %v10304 = vpop.f32.mrb[0].mxu0
    %v10305 = vadd.f32 %v10186, %v10304
    %v10306 = vpop.f32.mrb[0].mxu0
    %10307 = vdwg.mxu0
    %10308 = vmatprep.subr.mxu0 0.0
    %v10309 = vand.u32 %v1365, 4294901760
    %10310 = vmatpush1.msra.mxu0 %v10309
    %10311 = vmatprep.subr.mxu0 0.0
    %v10312 = vand.u32 %v1366, 4294901760
    %10313 = vmatpush1.msra.mxu0 %v10312
    %10314 = vmatprep.subr.mxu0 0.0
    %v10315 = vand.u32 %v1367, 4294901760
    %10316 = vmatpush1.msra.mxu0 %v10315
    %10317 = vmatprep.subr.mxu0 0.0
    %v10318 = vand.u32 %v1368, 4294901760
    %10319 = vmatpush1.msra.mxu0 %v10318
    %10320 = vmatprep.subr.mxu0 0.0
    %v10321 = vand.u32 %v1369, 4294901760
    %10322 = vmatpush1.msra.mxu0 %v10321
    %10323 = vmatprep.subr.mxu0 0.0
    %v10324 = vand.u32 %v1370, 4294901760
    %10325 = vmatpush1.msra.mxu0 %v10324
    %10326 = vmatprep.subr.mxu0 0.0
    %v10327 = vand.u32 %v1371, 4294901760
    %10328 = vmatpush1.msra.mxu0 %v10327
    %10329 = vmatprep.subr.mxu0 0.0
    %v10330 = vand.u32 %v1372, 4294901760
    %10331 = vmatpush1.msra.mxu0 %v10330
    %10332 = vmatprep.subr.mxu0 0.0
    %v10333 = vand.u32 %v1373, 4294901760
    %10334 = vmatpush1.msra.mxu0 %v10333
    %10335 = vmatprep.subr.mxu0 0.0
    %v10336 = vand.u32 %v1374, 4294901760
    %10337 = vmatpush1.msra.mxu0 %v10336
    %10338 = vmatprep.subr.mxu0 0.0
    %v10339 = vand.u32 %v1375, 4294901760
    %10340 = vmatpush1.msra.mxu0 %v10339
    %10341 = vmatprep.subr.mxu0 0.0
    %v10342 = vand.u32 %v1376, 4294901760
    %10343 = vmatpush1.msra.mxu0 %v10342
    %10344 = vmatprep.subr.mxu0 0.0
    %v10345 = vand.u32 %v1377, 4294901760
    %10346 = vmatpush1.msra.mxu0 %v10345
    %10347 = vmatprep.subr.mxu0 0.0
    %v10348 = vand.u32 %v1378, 4294901760
    %10349 = vmatpush1.msra.mxu0 %v10348
    %10350 = vmatprep.subr.mxu0 0.0
    %v10351 = vand.u32 %v1379, 4294901760
    %10352 = vmatpush1.msra.mxu0 %v10351
    %10353 = vmatprep.subr.mxu0 0.0
    %v10354 = vand.u32 %v1380, 4294901760
    %10355 = vmatpush1.msra.mxu0 %v10354
    %10356 = vmatprep.subr.mxu0 0.0
    %10357 = vmatpush1.msra.mxu0 0.0
    %10358 = vmatprep.subr.mxu0 0.0
    %10359 = vmatpush1.msra.mxu0 0.0
    %10360 = vmatprep.subr.mxu0 0.0
    %10361 = vmatpush1.msra.mxu0 0.0
    %10362 = vmatprep.subr.mxu0 0.0
    %10363 = vmatpush1.msra.mxu0 0.0
    %10364 = vmatprep.subr.mxu0 0.0
    %10365 = vmatpush1.msra.mxu0 0.0
    %10366 = vmatprep.subr.mxu0 0.0
    %10367 = vmatpush1.msra.mxu0 0.0
    %10368 = vmatprep.subr.mxu0 0.0
    %10369 = vmatpush1.msra.mxu0 0.0
    %10370 = vmatprep.subr.mxu0 0.0
    %10371 = vmatpush1.msra.mxu0 0.0
    %10372 = vmatprep.subr.mxu0 0.0
    %10373 = vmatpush1.msra.mxu0 0.0
    %10374 = vmatprep.subr.mxu0 0.0
    %10375 = vmatpush1.msra.mxu0 0.0
    %10376 = vmatprep.subr.mxu0 0.0
    %10377 = vmatpush1.msra.mxu0 0.0
    %10378 = vmatprep.subr.mxu0 0.0
    %10379 = vmatpush1.msra.mxu0 0.0
    %10380 = vmatprep.subr.mxu0 0.0
    %10381 = vmatpush1.msra.mxu0 0.0
    %10382 = vmatprep.subr.mxu0 0.0
    %10383 = vmatpush1.msra.mxu0 0.0
    %10384 = vmatprep.subr.mxu0 0.0
    %10385 = vmatpush1.msra.mxu0 0.0
    %10386 = vmatprep.subr.mxu0 0.0
    %10387 = vmatpush1.msra.mxu0 0.0
    %10388 = vmatprep.mubr.f32.mxu0 0.0
    %v10389 = vand.u32 %v9751, 4294901760
    %10390 = vmatmul.mubr.f32.gmra.mrb[0].mxu0 %v10389
    %v10391 = vpop.f32.mrb[0].mxu0
    %v10392 = vadd.f32 %v10305, %v10391
    %v10393 = vpop.f32.mrb[0].mxu0
    %10394 = vdwg.mxu0
    %v10395 = vadd.f32 %v9753, %v10392
    %v10396 = vtanh.pop %v10395
    %s10397 = scalar_lea.vmem [#allocation2], 112
    %v10398 = vld [vmem:[%s10397] sm:$0xff]
    %10399 = vmatprep.subr.mxu0 0.0
    %v10400 = vand.u32 %v1365, 4294901760
    %10401 = vmatpush1.msra.mxu0 %v10400
    %10402 = vmatprep.subr.mxu0 0.0
    %v10403 = vand.u32 %v1366, 4294901760
    %10404 = vmatpush1.msra.mxu0 %v10403
    %10405 = vmatprep.subr.mxu0 0.0
    %v10406 = vand.u32 %v1367, 4294901760
    %10407 = vmatpush1.msra.mxu0 %v10406
    %10408 = vmatprep.subr.mxu0 0.0
    %v10409 = vand.u32 %v1368, 4294901760
    %10410 = vmatpush1.msra.mxu0 %v10409
    %10411 = vmatprep.subr.mxu0 0.0
    %v10412 = vand.u32 %v1369, 4294901760
    %10413 = vmatpush1.msra.mxu0 %v10412
    %10414 = vmatprep.subr.mxu0 0.0
    %v10415 = vand.u32 %v1370, 4294901760
    %10416 = vmatpush1.msra.mxu0 %v10415
    %10417 = vmatprep.subr.mxu0 0.0
    %v10418 = vand.u32 %v1371, 4294901760
    %10419 = vmatpush1.msra.mxu0 %v10418
    %10420 = vmatprep.subr.mxu0 0.0
    %v10421 = vand.u32 %v1372, 4294901760
    %10422 = vmatpush1.msra.mxu0 %v10421
    %10423 = vmatprep.subr.mxu0 0.0
    %v10424 = vand.u32 %v1373, 4294901760
    %10425 = vmatpush1.msra.mxu0 %v10424
    %10426 = vmatprep.subr.mxu0 0.0
    %v10427 = vand.u32 %v1374, 4294901760
    %10428 = vmatpush1.msra.mxu0 %v10427
    %10429 = vmatprep.subr.mxu0 0.0
    %v10430 = vand.u32 %v1375, 4294901760
    %10431 = vmatpush1.msra.mxu0 %v10430
    %10432 = vmatprep.subr.mxu0 0.0
    %v10433 = vand.u32 %v1376, 4294901760
    %10434 = vmatpush1.msra.mxu0 %v10433
    %10435 = vmatprep.subr.mxu0 0.0
    %v10436 = vand.u32 %v1377, 4294901760
    %10437 = vmatpush1.msra.mxu0 %v10436
    %10438 = vmatprep.subr.mxu0 0.0
    %v10439 = vand.u32 %v1378, 4294901760
    %10440 = vmatpush1.msra.mxu0 %v10439
    %10441 = vmatprep.subr.mxu0 0.0
    %v10442 = vand.u32 %v1379, 4294901760
    %10443 = vmatpush1.msra.mxu0 %v10442
    %10444 = vmatprep.subr.mxu0 0.0
    %v10445 = vand.u32 %v1380, 4294901760
    %10446 = vmatpush1.msra.mxu0 %v10445
    %10447 = vmatprep.subr.mxu0 0.0
    %10448 = vmatpush1.msra.mxu0 0.0
    %10449 = vmatprep.subr.mxu0 0.0
    %10450 = vmatpush1.msra.mxu0 0.0
    %10451 = vmatprep.subr.mxu0 0.0
    %10452 = vmatpush1.msra.mxu0 0.0
    %10453 = vmatprep.subr.mxu0 0.0
    %10454 = vmatpush1.msra.mxu0 0.0
    %10455 = vmatprep.subr.mxu0 0.0
    %10456 = vmatpush1.msra.mxu0 0.0
    %10457 = vmatprep.subr.mxu0 0.0
    %10458 = vmatpush1.msra.mxu0 0.0
    %10459 = vmatprep.subr.mxu0 0.0
    %10460 = vmatpush1.msra.mxu0 0.0
    %10461 = vmatprep.subr.mxu0 0.0
    %10462 = vmatpush1.msra.mxu0 0.0
    %10463 = vmatprep.subr.mxu0 0.0
    %10464 = vmatpush1.msra.mxu0 0.0
    %10465 = vmatprep.subr.mxu0 0.0
    %10466 = vmatpush1.msra.mxu0 0.0
    %10467 = vmatprep.subr.mxu0 0.0
    %10468 = vmatpush1.msra.mxu0 0.0
    %10469 = vmatprep.subr.mxu0 0.0
    %10470 = vmatpush1.msra.mxu0 0.0
    %10471 = vmatprep.subr.mxu0 0.0
    %10472 = vmatpush1.msra.mxu0 0.0
    %10473 = vmatprep.subr.mxu0 0.0
    %10474 = vmatpush1.msra.mxu0 0.0
    %10475 = vmatprep.subr.mxu0 0.0
    %10476 = vmatpush1.msra.mxu0 0.0
    %10477 = vmatprep.subr.mxu0 0.0
    %10478 = vmatpush1.msra.mxu0 0.0
    %10479 = vmatprep.mubr.f32.mxu0 0.0
    %v10480 = vand.u32 %v10396, 4294901760
    %v10481 = vsub.f32 %v10396, %v10480
    %v10482 = vand.u32 %v10481, 4294901760
    %v10483 = vsub.f32 %v10481, %v10482
    %v10484 = vand.u32 %v10483, 4294901760
    %10485 = vmatmul.mubr.f32.gmra.mrb[0].mxu0 %v10484
    %v10486 = vpop.f32.mrb[0].mxu0
    %v10487 = vadd.f32 0.0, %v10486
    %v10488 = vpop.f32.mrb[0].mxu0
    %10489 = vdwg.mxu0
    %10490 = vmatprep.subr.mxu0 0.0
    %v10491 = vand.u32 %v1365, 4294901760
    %v10492 = vsub.f32 %v1365, %v10491
    %v10493 = vand.u32 %v10492, 4294901760
    %v10494 = vsub.f32 %v10492, %v10493
    %v10495 = vand.u32 %v10494, 4294901760
    %10496 = vmatpush1.msra.mxu0 %v10495
    %10497 = vmatprep.subr.mxu0 0.0
    %v10498 = vand.u32 %v1366, 4294901760
    %v10499 = vsub.f32 %v1366, %v10498
    %v10500 = vand.u32 %v10499, 4294901760
    %v10501 = vsub.f32 %v10499, %v10500
    %v10502 = vand.u32 %v10501, 4294901760
    %10503 = vmatpush1.msra.mxu0 %v10502
    %10504 = vmatprep.subr.mxu0 0.0
    %v10505 = vand.u32 %v1367, 4294901760
    %v10506 = vsub.f32 %v1367, %v10505
    %v10507 = vand.u32 %v10506, 4294901760
    %v10508 = vsub.f32 %v10506, %v10507
    %v10509 = vand.u32 %v10508, 4294901760
    %10510 = vmatpush1.msra.mxu0 %v10509
    %10511 = vmatprep.subr.mxu0 0.0
    %v10512 = vand.u32 %v1368, 4294901760
    %v10513 = vsub.f32 %v1368, %v10512
    %v10514 = vand.u32 %v10513, 4294901760
    %v10515 = vsub.f32 %v10513, %v10514
    %v10516 = vand.u32 %v10515, 4294901760
    %10517 = vmatpush1.msra.mxu0 %v10516
    %10518 = vmatprep.subr.mxu0 0.0
    %v10519 = vand.u32 %v1369, 4294901760
    %v10520 = vsub.f32 %v1369, %v10519
    %v10521 = vand.u32 %v10520, 4294901760
    %v10522 = vsub.f32 %v10520, %v10521
    %v10523 = vand.u32 %v10522, 4294901760
    %10524 = vmatpush1.msra.mxu0 %v10523
    %10525 = vmatprep.subr.mxu0 0.0
    %v10526 = vand.u32 %v1370, 4294901760
    %v10527 = vsub.f32 %v1370, %v10526
    %v10528 = vand.u32 %v10527, 4294901760
    %v10529 = vsub.f32 %v10527, %v10528
    %v10530 = vand.u32 %v10529, 4294901760
    %10531 = vmatpush1.msra.mxu0 %v10530
    %10532 = vmatprep.subr.mxu0 0.0
    %v10533 = vand.u32 %v1371, 4294901760
    %v10534 = vsub.f32 %v1371, %v10533
    %v10535 = vand.u32 %v10534, 4294901760
    %v10536 = vsub.f32 %v10534, %v10535
    %v10537 = vand.u32 %v10536, 4294901760
    %10538 = vmatpush1.msra.mxu0 %v10537
    %10539 = vmatprep.subr.mxu0 0.0
    %v10540 = vand.u32 %v1372, 4294901760
    %v10541 = vsub.f32 %v1372, %v10540
    %v10542 = vand.u32 %v10541, 4294901760
    %v10543 = vsub.f32 %v10541, %v10542
    %v10544 = vand.u32 %v10543, 4294901760
    %10545 = vmatpush1.msra.mxu0 %v10544
    %10546 = vmatprep.subr.mxu0 0.0
    %v10547 = vand.u32 %v1373, 4294901760
    %v10548 = vsub.f32 %v1373, %v10547
    %v10549 = vand.u32 %v10548, 4294901760
    %v10550 = vsub.f32 %v10548, %v10549
    %v10551 = vand.u32 %v10550, 4294901760
    %10552 = vmatpush1.msra.mxu0 %v10551
    %10553 = vmatprep.subr.mxu0 0.0
    %v10554 = vand.u32 %v1374, 4294901760
    %v10555 = vsub.f32 %v1374, %v10554
    %v10556 = vand.u32 %v10555, 4294901760
    %v10557 = vsub.f32 %v10555, %v10556
    %v10558 = vand.u32 %v10557, 4294901760
    %10559 = vmatpush1.msra.mxu0 %v10558
    %10560 = vmatprep.subr.mxu0 0.0
    %v10561 = vand.u32 %v1375, 4294901760
    %v10562 = vsub.f32 %v1375, %v10561
    %v10563 = vand.u32 %v10562, 4294901760
    %v10564 = vsub.f32 %v10562, %v10563
    %v10565 = vand.u32 %v10564, 4294901760
    %10566 = vmatpush1.msra.mxu0 %v10565
    %10567 = vmatprep.subr.mxu0 0.0
    %v10568 = vand.u32 %v1376, 4294901760
    %v10569 = vsub.f32 %v1376, %v10568
    %v10570 = vand.u32 %v10569, 4294901760
    %v10571 = vsub.f32 %v10569, %v10570
    %v10572 = vand.u32 %v10571, 4294901760
    %10573 = vmatpush1.msra.mxu0 %v10572
    %10574 = vmatprep.subr.mxu0 0.0
    %v10575 = vand.u32 %v1377, 4294901760
    %v10576 = vsub.f32 %v1377, %v10575
    %v10577 = vand.u32 %v10576, 4294901760
    %v10578 = vsub.f32 %v10576, %v10577
    %v10579 = vand.u32 %v10578, 4294901760
    %10580 = vmatpush1.msra.mxu0 %v10579
    %10581 = vmatprep.subr.mxu0 0.0
    %v10582 = vand.u32 %v1378, 4294901760
    %v10583 = vsub.f32 %v1378, %v10582
    %v10584 = vand.u32 %v10583, 4294901760
    %v10585 = vsub.f32 %v10583, %v10584
    %v10586 = vand.u32 %v10585, 4294901760
    %10587 = vmatpush1.msra.mxu0 %v10586
    %10588 = vmatprep.subr.mxu0 0.0
    %v10589 = vand.u32 %v1379, 4294901760
    %v10590 = vsub.f32 %v1379, %v10589
    %v10591 = vand.u32 %v10590, 4294901760
    %v10592 = vsub.f32 %v10590, %v10591
    %v10593 = vand.u32 %v10592, 4294901760
    %10594 = vmatpush1.msra.mxu0 %v10593
    %10595 = vmatprep.subr.mxu0 0.0
    %v10596 = vand.u32 %v1380, 4294901760
    %v10597 = vsub.f32 %v1380, %v10596
    %v10598 = vand.u32 %v10597, 4294901760
    %v10599 = vsub.f32 %v10597, %v10598
    %v10600 = vand.u32 %v10599, 4294901760
    %10601 = vmatpush1.msra.mxu0 %v10600
    %10602 = vmatprep.subr.mxu0 0.0
    %10603 = vmatpush1.msra.mxu0 0.0
    %10604 = vmatprep.subr.mxu0 0.0
    %10605 = vmatpush1.msra.mxu0 0.0
    %10606 = vmatprep.subr.mxu0 0.0
    %10607 = vmatpush1.msra.mxu0 0.0
    %10608 = vmatprep.subr.mxu0 0.0
    %10609 = vmatpush1.msra.mxu0 0.0
    %10610 = vmatprep.subr.mxu0 0.0
    %10611 = vmatpush1.msra.mxu0 0.0
    %10612 = vmatprep.subr.mxu0 0.0
    %10613 = vmatpush1.msra.mxu0 0.0
    %10614 = vmatprep.subr.mxu0 0.0
    %10615 = vmatpush1.msra.mxu0 0.0
    %10616 = vmatprep.subr.mxu0 0.0
    %10617 = vmatpush1.msra.mxu0 0.0
    %10618 = vmatprep.subr.mxu0 0.0
    %10619 = vmatpush1.msra.mxu0 0.0
    %10620 = vmatprep.subr.mxu0 0.0
    %10621 = vmatpush1.msra.mxu0 0.0
    %10622 = vmatprep.subr.mxu0 0.0
    %10623 = vmatpush1.msra.mxu0 0.0
    %10624 = vmatprep.subr.mxu0 0.0
    %10625 = vmatpush1.msra.mxu0 0.0
    %10626 = vmatprep.subr.mxu0 0.0
    %10627 = vmatpush1.msra.mxu0 0.0
    %10628 = vmatprep.subr.mxu0 0.0
    %10629 = vmatpush1.msra.mxu0 0.0
    %10630 = vmatprep.subr.mxu0 0.0
    %10631 = vmatpush1.msra.mxu0 0.0
    %10632 = vmatprep.subr.mxu0 0.0
    %10633 = vmatpush1.msra.mxu0 0.0
    %10634 = vmatprep.mubr.f32.mxu0 0.0
    %v10635 = vand.u32 %v10396, 4294901760
    %10636 = vmatmul.mubr.f32.gmra.mrb[0].mxu0 %v10635
    %v10637 = vpop.f32.mrb[0].mxu0
    %v10638 = vadd.f32 %v10487, %v10637
    %v10639 = vpop.f32.mrb[0].mxu0
    %10640 = vdwg.mxu0
    %10641 = vmatprep.subr.mxu0 0.0
    %v10642 = vand.u32 %v1365, 4294901760
    %v10643 = vsub.f32 %v1365, %v10642
    %10644 = vmatpush1.msra.mxu0 %v10643
    %10645 = vmatprep.subr.mxu0 0.0
    %v10646 = vand.u32 %v1366, 4294901760
    %v10647 = vsub.f32 %v1366, %v10646
    %10648 = vmatpush1.msra.mxu0 %v10647
    %10649 = vmatprep.subr.mxu0 0.0
    %v10650 = vand.u32 %v1367, 4294901760
    %v10651 = vsub.f32 %v1367, %v10650
    %10652 = vmatpush1.msra.mxu0 %v10651
    %10653 = vmatprep.subr.mxu0 0.0
    %v10654 = vand.u32 %v1368, 4294901760
    %v10655 = vsub.f32 %v1368, %v10654
    %10656 = vmatpush1.msra.mxu0 %v10655
    %10657 = vmatprep.subr.mxu0 0.0
    %v10658 = vand.u32 %v1369, 4294901760
    %v10659 = vsub.f32 %v1369, %v10658
    %10660 = vmatpush1.msra.mxu0 %v10659
    %10661 = vmatprep.subr.mxu0 0.0
    %v10662 = vand.u32 %v1370, 4294901760
    %v10663 = vsub.f32 %v1370, %v10662
    %10664 = vmatpush1.msra.mxu0 %v10663
    %10665 = vmatprep.subr.mxu0 0.0
    %v10666 = vand.u32 %v1371, 4294901760
    %v10667 = vsub.f32 %v1371, %v10666
    %10668 = vmatpush1.msra.mxu0 %v10667
    %10669 = vmatprep.subr.mxu0 0.0
    %v10670 = vand.u32 %v1372, 4294901760
    %v10671 = vsub.f32 %v1372, %v10670
    %10672 = vmatpush1.msra.mxu0 %v10671
    %10673 = vmatprep.subr.mxu0 0.0
    %v10674 = vand.u32 %v1373, 4294901760
    %v10675 = vsub.f32 %v1373, %v10674
    %10676 = vmatpush1.msra.mxu0 %v10675
    %10677 = vmatprep.subr.mxu0 0.0
    %v10678 = vand.u32 %v1374, 4294901760
    %v10679 = vsub.f32 %v1374, %v10678
    %10680 = vmatpush1.msra.mxu0 %v10679
    %10681 = vmatprep.subr.mxu0 0.0
    %v10682 = vand.u32 %v1375, 4294901760
    %v10683 = vsub.f32 %v1375, %v10682
    %10684 = vmatpush1.msra.mxu0 %v10683
    %10685 = vmatprep.subr.mxu0 0.0
    %v10686 = vand.u32 %v1376, 4294901760
    %v10687 = vsub.f32 %v1376, %v10686
    %10688 = vmatpush1.msra.mxu0 %v10687
    %10689 = vmatprep.subr.mxu0 0.0
    %v10690 = vand.u32 %v1377, 4294901760
    %v10691 = vsub.f32 %v1377, %v10690
    %10692 = vmatpush1.msra.mxu0 %v10691
    %10693 = vmatprep.subr.mxu0 0.0
    %v10694 = vand.u32 %v1378, 4294901760
    %v10695 = vsub.f32 %v1378, %v10694
    %10696 = vmatpush1.msra.mxu0 %v10695
    %10697 = vmatprep.subr.mxu0 0.0
    %v10698 = vand.u32 %v1379, 4294901760
    %v10699 = vsub.f32 %v1379, %v10698
    %10700 = vmatpush1.msra.mxu0 %v10699
    %10701 = vmatprep.subr.mxu0 0.0
    %v10702 = vand.u32 %v1380, 4294901760
    %v10703 = vsub.f32 %v1380, %v10702
    %10704 = vmatpush1.msra.mxu0 %v10703
    %10705 = vmatprep.subr.mxu0 0.0
    %10706 = vmatpush1.msra.mxu0 0.0
    %10707 = vmatprep.subr.mxu0 0.0
    %10708 = vmatpush1.msra.mxu0 0.0
    %10709 = vmatprep.subr.mxu0 0.0
    %10710 = vmatpush1.msra.mxu0 0.0
    %10711 = vmatprep.subr.mxu0 0.0
    %10712 = vmatpush1.msra.mxu0 0.0
    %10713 = vmatprep.subr.mxu0 0.0
    %10714 = vmatpush1.msra.mxu0 0.0
    %10715 = vmatprep.subr.mxu0 0.0
    %10716 = vmatpush1.msra.mxu0 0.0
    %10717 = vmatprep.subr.mxu0 0.0
    %10718 = vmatpush1.msra.mxu0 0.0
    %10719 = vmatprep.subr.mxu0 0.0
    %10720 = vmatpush1.msra.mxu0 0.0
    %10721 = vmatprep.subr.mxu0 0.0
    %10722 = vmatpush1.msra.mxu0 0.0
    %10723 = vmatprep.subr.mxu0 0.0
    %10724 = vmatpush1.msra.mxu0 0.0
    %10725 = vmatprep.subr.mxu0 0.0
    %10726 = vmatpush1.msra.mxu0 0.0
    %10727 = vmatprep.subr.mxu0 0.0
    %10728 = vmatpush1.msra.mxu0 0.0
    %10729 = vmatprep.subr.mxu0 0.0
    %10730 = vmatpush1.msra.mxu0 0.0
    %10731 = vmatprep.subr.mxu0 0.0
    %10732 = vmatpush1.msra.mxu0 0.0
    %10733 = vmatprep.subr.mxu0 0.0
    %10734 = vmatpush1.msra.mxu0 0.0
    %10735 = vmatprep.subr.mxu0 0.0
    %10736 = vmatpush1.msra.mxu0 0.0
    %10737 = vmatprep.mubr.f32.mxu0 0.0
    %v10738 = vand.u32 %v10396, 4294901760
    %v10739 = vsub.f32 %v10396, %v10738
    %10740 = vmatmul.mubr.f32.gmra.mrb[0].mxu0 %v10739
    %v10741 = vpop.f32.mrb[0].mxu0
    %v10742 = vadd.f32 %v10638, %v10741
    %v10743 = vpop.f32.mrb[0].mxu0
    %10744 = vdwg.mxu0
    %10745 = vmatprep.subr.mxu0 0.0
    %v10746 = vand.u32 %v1365, 4294901760
    %10747 = vmatpush1.msra.mxu0 %v10746
    %10748 = vmatprep.subr.mxu0 0.0
    %v10749 = vand.u32 %v1366, 4294901760
    %10750 = vmatpush1.msra.mxu0 %v10749
    %10751 = vmatprep.subr.mxu0 0.0
    %v10752 = vand.u32 %v1367, 4294901760
    %10753 = vmatpush1.msra.mxu0 %v10752
    %10754 = vmatprep.subr.mxu0 0.0
    %v10755 = vand.u32 %v1368, 4294901760
    %10756 = vmatpush1.msra.mxu0 %v10755
    %10757 = vmatprep.subr.mxu0 0.0
    %v10758 = vand.u32 %v1369, 4294901760
    %10759 = vmatpush1.msra.mxu0 %v10758
    %10760 = vmatprep.subr.mxu0 0.0
    %v10761 = vand.u32 %v1370, 4294901760
    %10762 = vmatpush1.msra.mxu0 %v10761
    %10763 = vmatprep.subr.mxu0 0.0
    %v10764 = vand.u32 %v1371, 4294901760
    %10765 = vmatpush1.msra.mxu0 %v10764
    %10766 = vmatprep.subr.mxu0 0.0
    %v10767 = vand.u32 %v1372, 4294901760
    %10768 = vmatpush1.msra.mxu0 %v10767
    %10769 = vmatprep.subr.mxu0 0.0
    %v10770 = vand.u32 %v1373, 4294901760
    %10771 = vmatpush1.msra.mxu0 %v10770
    %10772 = vmatprep.subr.mxu0 0.0
    %v10773 = vand.u32 %v1374, 4294901760
    %10774 = vmatpush1.msra.mxu0 %v10773
    %10775 = vmatprep.subr.mxu0 0.0
    %v10776 = vand.u32 %v1375, 4294901760
    %10777 = vmatpush1.msra.mxu0 %v10776
    %10778 = vmatprep.subr.mxu0 0.0
    %v10779 = vand.u32 %v1376, 4294901760
    %10780 = vmatpush1.msra.mxu0 %v10779
    %10781 = vmatprep.subr.mxu0 0.0
    %v10782 = vand.u32 %v1377, 4294901760
    %10783 = vmatpush1.msra.mxu0 %v10782
    %10784 = vmatprep.subr.mxu0 0.0
    %v10785 = vand.u32 %v1378, 4294901760
    %10786 = vmatpush1.msra.mxu0 %v10785
    %10787 = vmatprep.subr.mxu0 0.0
    %v10788 = vand.u32 %v1379, 4294901760
    %10789 = vmatpush1.msra.mxu0 %v10788
    %10790 = vmatprep.subr.mxu0 0.0
    %v10791 = vand.u32 %v1380, 4294901760
    %10792 = vmatpush1.msra.mxu0 %v10791
    %10793 = vmatprep.subr.mxu0 0.0
    %10794 = vmatpush1.msra.mxu0 0.0
    %10795 = vmatprep.subr.mxu0 0.0
    %10796 = vmatpush1.msra.mxu0 0.0
    %10797 = vmatprep.subr.mxu0 0.0
    %10798 = vmatpush1.msra.mxu0 0.0
    %10799 = vmatprep.subr.mxu0 0.0
    %10800 = vmatpush1.msra.mxu0 0.0
    %10801 = vmatprep.subr.mxu0 0.0
    %10802 = vmatpush1.msra.mxu0 0.0
    %10803 = vmatprep.subr.mxu0 0.0
    %10804 = vmatpush1.msra.mxu0 0.0
    %10805 = vmatprep.subr.mxu0 0.0
    %10806 = vmatpush1.msra.mxu0 0.0
    %10807 = vmatprep.subr.mxu0 0.0
    %10808 = vmatpush1.msra.mxu0 0.0
    %10809 = vmatprep.subr.mxu0 0.0
    %10810 = vmatpush1.msra.mxu0 0.0
    %10811 = vmatprep.subr.mxu0 0.0
    %10812 = vmatpush1.msra.mxu0 0.0
    %10813 = vmatprep.subr.mxu0 0.0
    %10814 = vmatpush1.msra.mxu0 0.0
    %10815 = vmatprep.subr.mxu0 0.0
    %10816 = vmatpush1.msra.mxu0 0.0
    %10817 = vmatprep.subr.mxu0 0.0
    %10818 = vmatpush1.msra.mxu0 0.0
    %10819 = vmatprep.subr.mxu0 0.0
    %10820 = vmatpush1.msra.mxu0 0.0
    %10821 = vmatprep.subr.mxu0 0.0
    %10822 = vmatpush1.msra.mxu0 0.0
    %10823 = vmatprep.subr.mxu0 0.0
    %10824 = vmatpush1.msra.mxu0 0.0
    %10825 = vmatprep.mubr.f32.mxu0 0.0
    %v10826 = vand.u32 %v10396, 4294901760
    %v10827 = vsub.f32 %v10396, %v10826
    %v10828 = vand.u32 %v10827, 4294901760
    %10829 = vmatmul.mubr.f32.gmra.mrb[0].mxu0 %v10828
    %v10830 = vpop.f32.mrb[0].mxu0
    %v10831 = vadd.f32 %v10742, %v10830
    %v10832 = vpop.f32.mrb[0].mxu0
    %10833 = vdwg.mxu0
    %10834 = vmatprep.subr.mxu0 0.0
    %v10835 = vand.u32 %v1365, 4294901760
    %v10836 = vsub.f32 %v1365, %v10835
    %v10837 = vand.u32 %v10836, 4294901760
    %10838 = vmatpush1.msra.mxu0 %v10837
    %10839 = vmatprep.subr.mxu0 0.0
    %v10840 = vand.u32 %v1366, 4294901760
    %v10841 = vsub.f32 %v1366, %v10840
    %v10842 = vand.u32 %v10841, 4294901760
    %10843 = vmatpush1.msra.mxu0 %v10842
    %10844 = vmatprep.subr.mxu0 0.0
    %v10845 = vand.u32 %v1367, 4294901760
    %v10846 = vsub.f32 %v1367, %v10845
    %v10847 = vand.u32 %v10846, 4294901760
    %10848 = vmatpush1.msra.mxu0 %v10847
    %10849 = vmatprep.subr.mxu0 0.0
    %v10850 = vand.u32 %v1368, 4294901760
    %v10851 = vsub.f32 %v1368, %v10850
    %v10852 = vand.u32 %v10851, 4294901760
    %10853 = vmatpush1.msra.mxu0 %v10852
    %10854 = vmatprep.subr.mxu0 0.0
    %v10855 = vand.u32 %v1369, 4294901760
    %v10856 = vsub.f32 %v1369, %v10855
    %v10857 = vand.u32 %v10856, 4294901760
    %10858 = vmatpush1.msra.mxu0 %v10857
    %10859 = vmatprep.subr.mxu0 0.0
    %v10860 = vand.u32 %v1370, 4294901760
    %v10861 = vsub.f32 %v1370, %v10860
    %v10862 = vand.u32 %v10861, 4294901760
    %10863 = vmatpush1.msra.mxu0 %v10862
    %10864 = vmatprep.subr.mxu0 0.0
    %v10865 = vand.u32 %v1371, 4294901760
    %v10866 = vsub.f32 %v1371, %v10865
    %v10867 = vand.u32 %v10866, 4294901760
    %10868 = vmatpush1.msra.mxu0 %v10867
    %10869 = vmatprep.subr.mxu0 0.0
    %v10870 = vand.u32 %v1372, 4294901760
    %v10871 = vsub.f32 %v1372, %v10870
    %v10872 = vand.u32 %v10871, 4294901760
    %10873 = vmatpush1.msra.mxu0 %v10872
    %10874 = vmatprep.subr.mxu0 0.0
    %v10875 = vand.u32 %v1373, 4294901760
    %v10876 = vsub.f32 %v1373, %v10875
    %v10877 = vand.u32 %v10876, 4294901760
    %10878 = vmatpush1.msra.mxu0 %v10877
    %10879 = vmatprep.subr.mxu0 0.0
    %v10880 = vand.u32 %v1374, 4294901760
    %v10881 = vsub.f32 %v1374, %v10880
    %v10882 = vand.u32 %v10881, 4294901760
    %10883 = vmatpush1.msra.mxu0 %v10882
    %10884 = vmatprep.subr.mxu0 0.0
    %v10885 = vand.u32 %v1375, 4294901760
    %v10886 = vsub.f32 %v1375, %v10885
    %v10887 = vand.u32 %v10886, 4294901760
    %10888 = vmatpush1.msra.mxu0 %v10887
    %10889 = vmatprep.subr.mxu0 0.0
    %v10890 = vand.u32 %v1376, 4294901760
    %v10891 = vsub.f32 %v1376, %v10890
    %v10892 = vand.u32 %v10891, 4294901760
    %10893 = vmatpush1.msra.mxu0 %v10892
    %10894 = vmatprep.subr.mxu0 0.0
    %v10895 = vand.u32 %v1377, 4294901760
    %v10896 = vsub.f32 %v1377, %v10895
    %v10897 = vand.u32 %v10896, 4294901760
    %10898 = vmatpush1.msra.mxu0 %v10897
    %10899 = vmatprep.subr.mxu0 0.0
    %v10900 = vand.u32 %v1378, 4294901760
    %v10901 = vsub.f32 %v1378, %v10900
    %v10902 = vand.u32 %v10901, 4294901760
    %10903 = vmatpush1.msra.mxu0 %v10902
    %10904 = vmatprep.subr.mxu0 0.0
    %v10905 = vand.u32 %v1379, 4294901760
    %v10906 = vsub.f32 %v1379, %v10905
    %v10907 = vand.u32 %v10906, 4294901760
    %10908 = vmatpush1.msra.mxu0 %v10907
    %10909 = vmatprep.subr.mxu0 0.0
    %v10910 = vand.u32 %v1380, 4294901760
    %v10911 = vsub.f32 %v1380, %v10910
    %v10912 = vand.u32 %v10911, 4294901760
    %10913 = vmatpush1.msra.mxu0 %v10912
    %10914 = vmatprep.subr.mxu0 0.0
    %10915 = vmatpush1.msra.mxu0 0.0
    %10916 = vmatprep.subr.mxu0 0.0
    %10917 = vmatpush1.msra.mxu0 0.0
    %10918 = vmatprep.subr.mxu0 0.0
    %10919 = vmatpush1.msra.mxu0 0.0
    %10920 = vmatprep.subr.mxu0 0.0
    %10921 = vmatpush1.msra.mxu0 0.0
    %10922 = vmatprep.subr.mxu0 0.0
    %10923 = vmatpush1.msra.mxu0 0.0
    %10924 = vmatprep.subr.mxu0 0.0
    %10925 = vmatpush1.msra.mxu0 0.0
    %10926 = vmatprep.subr.mxu0 0.0
    %10927 = vmatpush1.msra.mxu0 0.0
    %10928 = vmatprep.subr.mxu0 0.0
    %10929 = vmatpush1.msra.mxu0 0.0
    %10930 = vmatprep.subr.mxu0 0.0
    %10931 = vmatpush1.msra.mxu0 0.0
    %10932 = vmatprep.subr.mxu0 0.0
    %10933 = vmatpush1.msra.mxu0 0.0
    %10934 = vmatprep.subr.mxu0 0.0
    %10935 = vmatpush1.msra.mxu0 0.0
    %10936 = vmatprep.subr.mxu0 0.0
    %10937 = vmatpush1.msra.mxu0 0.0
    %10938 = vmatprep.subr.mxu0 0.0
    %10939 = vmatpush1.msra.mxu0 0.0
    %10940 = vmatprep.subr.mxu0 0.0
    %10941 = vmatpush1.msra.mxu0 0.0
    %10942 = vmatprep.subr.mxu0 0.0
    %10943 = vmatpush1.msra.mxu0 0.0
    %10944 = vmatprep.subr.mxu0 0.0
    %10945 = vmatpush1.msra.mxu0 0.0
    %10946 = vmatprep.mubr.f32.mxu0 0.0
    %v10947 = vand.u32 %v10396, 4294901760
    %10948 = vmatmul.mubr.f32.gmra.mrb[0].mxu0 %v10947
    %v10949 = vpop.f32.mrb[0].mxu0
    %v10950 = vadd.f32 %v10831, %v10949
    %v10951 = vpop.f32.mrb[0].mxu0
    %10952 = vdwg.mxu0
    %10953 = vmatprep.subr.mxu0 0.0
    %v10954 = vand.u32 %v1365, 4294901760
    %10955 = vmatpush1.msra.mxu0 %v10954
    %10956 = vmatprep.subr.mxu0 0.0
    %v10957 = vand.u32 %v1366, 4294901760
    %10958 = vmatpush1.msra.mxu0 %v10957
    %10959 = vmatprep.subr.mxu0 0.0
    %v10960 = vand.u32 %v1367, 4294901760
    %10961 = vmatpush1.msra.mxu0 %v10960
    %10962 = vmatprep.subr.mxu0 0.0
    %v10963 = vand.u32 %v1368, 4294901760
    %10964 = vmatpush1.msra.mxu0 %v10963
    %10965 = vmatprep.subr.mxu0 0.0
    %v10966 = vand.u32 %v1369, 4294901760
    %10967 = vmatpush1.msra.mxu0 %v10966
    %10968 = vmatprep.subr.mxu0 0.0
    %v10969 = vand.u32 %v1370, 4294901760
    %10970 = vmatpush1.msra.mxu0 %v10969
    %10971 = vmatprep.subr.mxu0 0.0
    %v10972 = vand.u32 %v1371, 4294901760
    %10973 = vmatpush1.msra.mxu0 %v10972
    %10974 = vmatprep.subr.mxu0 0.0
    %v10975 = vand.u32 %v1372, 4294901760
    %10976 = vmatpush1.msra.mxu0 %v10975
    %10977 = vmatprep.subr.mxu0 0.0
    %v10978 = vand.u32 %v1373, 4294901760
    %10979 = vmatpush1.msra.mxu0 %v10978
    %10980 = vmatprep.subr.mxu0 0.0
    %v10981 = vand.u32 %v1374, 4294901760
    %10982 = vmatpush1.msra.mxu0 %v10981
    %10983 = vmatprep.subr.mxu0 0.0
    %v10984 = vand.u32 %v1375, 4294901760
    %10985 = vmatpush1.msra.mxu0 %v10984
    %10986 = vmatprep.subr.mxu0 0.0
    %v10987 = vand.u32 %v1376, 4294901760
    %10988 = vmatpush1.msra.mxu0 %v10987
    %10989 = vmatprep.subr.mxu0 0.0
    %v10990 = vand.u32 %v1377, 4294901760
    %10991 = vmatpush1.msra.mxu0 %v10990
    %10992 = vmatprep.subr.mxu0 0.0
    %v10993 = vand.u32 %v1378, 4294901760
    %10994 = vmatpush1.msra.mxu0 %v10993
    %10995 = vmatprep.subr.mxu0 0.0
    %v10996 = vand.u32 %v1379, 4294901760
    %10997 = vmatpush1.msra.mxu0 %v10996
    %10998 = vmatprep.subr.mxu0 0.0
    %v10999 = vand.u32 %v1380, 4294901760
    %11000 = vmatpush1.msra.mxu0 %v10999
    %11001 = vmatprep.subr.mxu0 0.0
    %11002 = vmatpush1.msra.mxu0 0.0
    %11003 = vmatprep.subr.mxu0 0.0
    %11004 = vmatpush1.msra.mxu0 0.0
    %11005 = vmatprep.subr.mxu0 0.0
    %11006 = vmatpush1.msra.mxu0 0.0
    %11007 = vmatprep.subr.mxu0 0.0
    %11008 = vmatpush1.msra.mxu0 0.0
    %11009 = vmatprep.subr.mxu0 0.0
    %11010 = vmatpush1.msra.mxu0 0.0
    %11011 = vmatprep.subr.mxu0 0.0
    %11012 = vmatpush1.msra.mxu0 0.0
    %11013 = vmatprep.subr.mxu0 0.0
    %11014 = vmatpush1.msra.mxu0 0.0
    %11015 = vmatprep.subr.mxu0 0.0
    %11016 = vmatpush1.msra.mxu0 0.0
    %11017 = vmatprep.subr.mxu0 0.0
    %11018 = vmatpush1.msra.mxu0 0.0
    %11019 = vmatprep.subr.mxu0 0.0
    %11020 = vmatpush1.msra.mxu0 0.0
    %11021 = vmatprep.subr.mxu0 0.0
    %11022 = vmatpush1.msra.mxu0 0.0
    %11023 = vmatprep.subr.mxu0 0.0
    %11024 = vmatpush1.msra.mxu0 0.0
    %11025 = vmatprep.subr.mxu0 0.0
    %11026 = vmatpush1.msra.mxu0 0.0
    %11027 = vmatprep.subr.mxu0 0.0
    %11028 = vmatpush1.msra.mxu0 0.0
    %11029 = vmatprep.subr.mxu0 0.0
    %11030 = vmatpush1.msra.mxu0 0.0
    %11031 = vmatprep.subr.mxu0 0.0
    %11032 = vmatpush1.msra.mxu0 0.0
    %11033 = vmatprep.mubr.f32.mxu0 0.0
    %v11034 = vand.u32 %v10396, 4294901760
    %11035 = vmatmul.mubr.f32.gmra.mrb[0].mxu0 %v11034
    %v11036 = vpop.f32.mrb[0].mxu0
    %v11037 = vadd.f32 %v10950, %v11036
    %v11038 = vpop.f32.mrb[0].mxu0
    %11039 = vdwg.mxu0
    %v11040 = vadd.f32 %v10398, %v11037
    %v11041 = vtanh.pop %v11040
    %s11042 = scalar_lea.vmem [#allocation2], 120
    %v11043 = vld [vmem:[%s11042] sm:$0xff]
    %11044 = vmatprep.subr.mxu0 0.0
    %v11045 = vand.u32 %v1365, 4294901760
    %11046 = vmatpush1.msra.mxu0 %v11045
    %11047 = vmatprep.subr.mxu0 0.0
    %v11048 = vand.u32 %v1366, 4294901760
    %11049 = vmatpush1.msra.mxu0 %v11048
    %11050 = vmatprep.subr.mxu0 0.0
    %v11051 = vand.u32 %v1367, 4294901760
    %11052 = vmatpush1.msra.mxu0 %v11051
    %11053 = vmatprep.subr.mxu0 0.0
    %v11054 = vand.u32 %v1368, 4294901760
    %11055 = vmatpush1.msra.mxu0 %v11054
    %11056 = vmatprep.subr.mxu0 0.0
    %v11057 = vand.u32 %v1369, 4294901760
    %11058 = vmatpush1.msra.mxu0 %v11057
    %11059 = vmatprep.subr.mxu0 0.0
    %v11060 = vand.u32 %v1370, 4294901760
    %11061 = vmatpush1.msra.mxu0 %v11060
    %11062 = vmatprep.subr.mxu0 0.0
    %v11063 = vand.u32 %v1371, 4294901760
    %11064 = vmatpush1.msra.mxu0 %v11063
    %11065 = vmatprep.subr.mxu0 0.0
    %v11066 = vand.u32 %v1372, 4294901760
    %11067 = vmatpush1.msra.mxu0 %v11066
    %11068 = vmatprep.subr.mxu0 0.0
    %v11069 = vand.u32 %v1373, 4294901760
    %11070 = vmatpush1.msra.mxu0 %v11069
    %11071 = vmatprep.subr.mxu0 0.0
    %v11072 = vand.u32 %v1374, 4294901760
    %11073 = vmatpush1.msra.mxu0 %v11072
    %11074 = vmatprep.subr.mxu0 0.0
    %v11075 = vand.u32 %v1375, 4294901760
    %11076 = vmatpush1.msra.mxu0 %v11075
    %11077 = vmatprep.subr.mxu0 0.0
    %v11078 = vand.u32 %v1376, 4294901760
    %11079 = vmatpush1.msra.mxu0 %v11078
    %11080 = vmatprep.subr.mxu0 0.0
    %v11081 = vand.u32 %v1377, 4294901760
    %11082 = vmatpush1.msra.mxu0 %v11081
    %11083 = vmatprep.subr.mxu0 0.0
    %v11084 = vand.u32 %v1378, 4294901760
    %11085 = vmatpush1.msra.mxu0 %v11084
    %11086 = vmatprep.subr.mxu0 0.0
    %v11087 = vand.u32 %v1379, 4294901760
    %11088 = vmatpush1.msra.mxu0 %v11087
    %11089 = vmatprep.subr.mxu0 0.0
    %v11090 = vand.u32 %v1380, 4294901760
    %11091 = vmatpush1.msra.mxu0 %v11090
    %11092 = vmatprep.subr.mxu0 0.0
    %11093 = vmatpush1.msra.mxu0 0.0
    %11094 = vmatprep.subr.mxu0 0.0
    %11095 = vmatpush1.msra.mxu0 0.0
    %11096 = vmatprep.subr.mxu0 0.0
    %11097 = vmatpush1.msra.mxu0 0.0
    %11098 = vmatprep.subr.mxu0 0.0
    %11099 = vmatpush1.msra.mxu0 0.0
    %11100 = vmatprep.subr.mxu0 0.0
    %11101 = vmatpush1.msra.mxu0 0.0
    %11102 = vmatprep.subr.mxu0 0.0
    %11103 = vmatpush1.msra.mxu0 0.0
    %11104 = vmatprep.subr.mxu0 0.0
    %11105 = vmatpush1.msra.mxu0 0.0
    %11106 = vmatprep.subr.mxu0 0.0
    %11107 = vmatpush1.msra.mxu0 0.0
    %11108 = vmatprep.subr.mxu0 0.0
    %11109 = vmatpush1.msra.mxu0 0.0
    %11110 = vmatprep.subr.mxu0 0.0
    %11111 = vmatpush1.msra.mxu0 0.0
    %11112 = vmatprep.subr.mxu0 0.0
    %11113 = vmatpush1.msra.mxu0 0.0
    %11114 = vmatprep.subr.mxu0 0.0
    %11115 = vmatpush1.msra.mxu0 0.0
    %11116 = vmatprep.subr.mxu0 0.0
    %11117 = vmatpush1.msra.mxu0 0.0
    %11118 = vmatprep.subr.mxu0 0.0
    %11119 = vmatpush1.msra.mxu0 0.0
    %11120 = vmatprep.subr.mxu0 0.0
    %11121 = vmatpush1.msra.mxu0 0.0
    %11122 = vmatprep.subr.mxu0 0.0
    %11123 = vmatpush1.msra.mxu0 0.0
    %11124 = vmatprep.mubr.f32.mxu0 0.0
    %v11125 = vand.u32 %v11041, 4294901760
    %v11126 = vsub.f32 %v11041, %v11125
    %v11127 = vand.u32 %v11126, 4294901760
    %v11128 = vsub.f32 %v11126, %v11127
    %v11129 = vand.u32 %v11128, 4294901760
    %11130 = vmatmul.mubr.f32.gmra.mrb[0].mxu0 %v11129
    %v11131 = vpop.f32.mrb[0].mxu0
    %v11132 = vadd.f32 0.0, %v11131
    %v11133 = vpop.f32.mrb[0].mxu0
    %11134 = vdwg.mxu0
    %11135 = vmatprep.subr.mxu0 0.0
    %v11136 = vand.u32 %v1365, 4294901760
    %v11137 = vsub.f32 %v1365, %v11136
    %v11138 = vand.u32 %v11137, 4294901760
    %v11139 = vsub.f32 %v11137, %v11138
    %v11140 = vand.u32 %v11139, 4294901760
    %11141 = vmatpush1.msra.mxu0 %v11140
    %11142 = vmatprep.subr.mxu0 0.0
    %v11143 = vand.u32 %v1366, 4294901760
    %v11144 = vsub.f32 %v1366, %v11143
    %v11145 = vand.u32 %v11144, 4294901760
    %v11146 = vsub.f32 %v11144, %v11145
    %v11147 = vand.u32 %v11146, 4294901760
    %11148 = vmatpush1.msra.mxu0 %v11147
    %11149 = vmatprep.subr.mxu0 0.0
    %v11150 = vand.u32 %v1367, 4294901760
    %v11151 = vsub.f32 %v1367, %v11150
    %v11152 = vand.u32 %v11151, 4294901760
    %v11153 = vsub.f32 %v11151, %v11152
    %v11154 = vand.u32 %v11153, 4294901760
    %11155 = vmatpush1.msra.mxu0 %v11154
    %11156 = vmatprep.subr.mxu0 0.0
    %v11157 = vand.u32 %v1368, 4294901760
    %v11158 = vsub.f32 %v1368, %v11157
    %v11159 = vand.u32 %v11158, 4294901760
    %v11160 = vsub.f32 %v11158, %v11159
    %v11161 = vand.u32 %v11160, 4294901760
    %11162 = vmatpush1.msra.mxu0 %v11161
    %11163 = vmatprep.subr.mxu0 0.0
    %v11164 = vand.u32 %v1369, 4294901760
    %v11165 = vsub.f32 %v1369, %v11164
    %v11166 = vand.u32 %v11165, 4294901760
    %v11167 = vsub.f32 %v11165, %v11166
    %v11168 = vand.u32 %v11167, 4294901760
    %11169 = vmatpush1.msra.mxu0 %v11168
    %11170 = vmatprep.subr.mxu0 0.0
    %v11171 = vand.u32 %v1370, 4294901760
    %v11172 = vsub.f32 %v1370, %v11171
    %v11173 = vand.u32 %v11172, 4294901760
    %v11174 = vsub.f32 %v11172, %v11173
    %v11175 = vand.u32 %v11174, 4294901760
    %11176 = vmatpush1.msra.mxu0 %v11175
    %11177 = vmatprep.subr.mxu0 0.0
    %v11178 = vand.u32 %v1371, 4294901760
    %v11179 = vsub.f32 %v1371, %v11178
    %v11180 = vand.u32 %v11179, 4294901760
    %v11181 = vsub.f32 %v11179, %v11180
    %v11182 = vand.u32 %v11181, 4294901760
    %11183 = vmatpush1.msra.mxu0 %v11182
    %11184 = vmatprep.subr.mxu0 0.0
    %v11185 = vand.u32 %v1372, 4294901760
    %v11186 = vsub.f32 %v1372, %v11185
    %v11187 = vand.u32 %v11186, 4294901760
    %v11188 = vsub.f32 %v11186, %v11187
    %v11189 = vand.u32 %v11188, 4294901760
    %11190 = vmatpush1.msra.mxu0 %v11189
    %11191 = vmatprep.subr.mxu0 0.0
    %v11192 = vand.u32 %v1373, 4294901760
    %v11193 = vsub.f32 %v1373, %v11192
    %v11194 = vand.u32 %v11193, 4294901760
    %v11195 = vsub.f32 %v11193, %v11194
    %v11196 = vand.u32 %v11195, 4294901760
    %11197 = vmatpush1.msra.mxu0 %v11196
    %11198 = vmatprep.subr.mxu0 0.0
    %v11199 = vand.u32 %v1374, 4294901760
    %v11200 = vsub.f32 %v1374, %v11199
    %v11201 = vand.u32 %v11200, 4294901760
    %v11202 = vsub.f32 %v11200, %v11201
    %v11203 = vand.u32 %v11202, 4294901760
    %11204 = vmatpush1.msra.mxu0 %v11203
    %11205 = vmatprep.subr.mxu0 0.0
    %v11206 = vand.u32 %v1375, 4294901760
    %v11207 = vsub.f32 %v1375, %v11206
    %v11208 = vand.u32 %v11207, 4294901760
    %v11209 = vsub.f32 %v11207, %v11208
    %v11210 = vand.u32 %v11209, 4294901760
    %11211 = vmatpush1.msra.mxu0 %v11210
    %11212 = vmatprep.subr.mxu0 0.0
    %v11213 = vand.u32 %v1376, 4294901760
    %v11214 = vsub.f32 %v1376, %v11213
    %v11215 = vand.u32 %v11214, 4294901760
    %v11216 = vsub.f32 %v11214, %v11215
    %v11217 = vand.u32 %v11216, 4294901760
    %11218 = vmatpush1.msra.mxu0 %v11217
    %11219 = vmatprep.subr.mxu0 0.0
    %v11220 = vand.u32 %v1377, 4294901760
    %v11221 = vsub.f32 %v1377, %v11220
    %v11222 = vand.u32 %v11221, 4294901760
    %v11223 = vsub.f32 %v11221, %v11222
    %v11224 = vand.u32 %v11223, 4294901760
    %11225 = vmatpush1.msra.mxu0 %v11224
    %11226 = vmatprep.subr.mxu0 0.0
    %v11227 = vand.u32 %v1378, 4294901760
    %v11228 = vsub.f32 %v1378, %v11227
    %v11229 = vand.u32 %v11228, 4294901760
    %v11230 = vsub.f32 %v11228, %v11229
    %v11231 = vand.u32 %v11230, 4294901760
    %11232 = vmatpush1.msra.mxu0 %v11231
    %11233 = vmatprep.subr.mxu0 0.0
    %v11234 = vand.u32 %v1379, 4294901760
    %v11235 = vsub.f32 %v1379, %v11234
    %v11236 = vand.u32 %v11235, 4294901760
    %v11237 = vsub.f32 %v11235, %v11236
    %v11238 = vand.u32 %v11237, 4294901760
    %11239 = vmatpush1.msra.mxu0 %v11238
    %11240 = vmatprep.subr.mxu0 0.0
    %v11241 = vand.u32 %v1380, 4294901760
    %v11242 = vsub.f32 %v1380, %v11241
    %v11243 = vand.u32 %v11242, 4294901760
    %v11244 = vsub.f32 %v11242, %v11243
    %v11245 = vand.u32 %v11244, 4294901760
    %11246 = vmatpush1.msra.mxu0 %v11245
    %11247 = vmatprep.subr.mxu0 0.0
    %11248 = vmatpush1.msra.mxu0 0.0
    %11249 = vmatprep.subr.mxu0 0.0
    %11250 = vmatpush1.msra.mxu0 0.0
    %11251 = vmatprep.subr.mxu0 0.0
    %11252 = vmatpush1.msra.mxu0 0.0
    %11253 = vmatprep.subr.mxu0 0.0
    %11254 = vmatpush1.msra.mxu0 0.0
    %11255 = vmatprep.subr.mxu0 0.0
    %11256 = vmatpush1.msra.mxu0 0.0
    %11257 = vmatprep.subr.mxu0 0.0
    %11258 = vmatpush1.msra.mxu0 0.0
    %11259 = vmatprep.subr.mxu0 0.0
    %11260 = vmatpush1.msra.mxu0 0.0
    %11261 = vmatprep.subr.mxu0 0.0
    %11262 = vmatpush1.msra.mxu0 0.0
    %11263 = vmatprep.subr.mxu0 0.0
    %11264 = vmatpush1.msra.mxu0 0.0
    %11265 = vmatprep.subr.mxu0 0.0
    %11266 = vmatpush1.msra.mxu0 0.0
    %11267 = vmatprep.subr.mxu0 0.0
    %11268 = vmatpush1.msra.mxu0 0.0
    %11269 = vmatprep.subr.mxu0 0.0
    %11270 = vmatpush1.msra.mxu0 0.0
    %11271 = vmatprep.subr.mxu0 0.0
    %11272 = vmatpush1.msra.mxu0 0.0
    %11273 = vmatprep.subr.mxu0 0.0
    %11274 = vmatpush1.msra.mxu0 0.0
    %11275 = vmatprep.subr.mxu0 0.0
    %11276 = vmatpush1.msra.mxu0 0.0
    %11277 = vmatprep.subr.mxu0 0.0
    %11278 = vmatpush1.msra.mxu0 0.0
    %11279 = vmatprep.mubr.f32.mxu0 0.0
    %v11280 = vand.u32 %v11041, 4294901760
    %11281 = vmatmul.mubr.f32.gmra.mrb[0].mxu0 %v11280
    %v11282 = vpop.f32.mrb[0].mxu0
    %v11283 = vadd.f32 %v11132, %v11282
    %v11284 = vpop.f32.mrb[0].mxu0
    %11285 = vdwg.mxu0
    %11286 = vmatprep.subr.mxu0 0.0
    %v11287 = vand.u32 %v1365, 4294901760
    %v11288 = vsub.f32 %v1365, %v11287
    %11289 = vmatpush1.msra.mxu0 %v11288
    %11290 = vmatprep.subr.mxu0 0.0
    %v11291 = vand.u32 %v1366, 4294901760
    %v11292 = vsub.f32 %v1366, %v11291
    %11293 = vmatpush1.msra.mxu0 %v11292
    %11294 = vmatprep.subr.mxu0 0.0
    %v11295 = vand.u32 %v1367, 4294901760
    %v11296 = vsub.f32 %v1367, %v11295
    %11297 = vmatpush1.msra.mxu0 %v11296
    %11298 = vmatprep.subr.mxu0 0.0
    %v11299 = vand.u32 %v1368, 4294901760
    %v11300 = vsub.f32 %v1368, %v11299
    %11301 = vmatpush1.msra.mxu0 %v11300
    %11302 = vmatprep.subr.mxu0 0.0
    %v11303 = vand.u32 %v1369, 4294901760
    %v11304 = vsub.f32 %v1369, %v11303
    %11305 = vmatpush1.msra.mxu0 %v11304
    %11306 = vmatprep.subr.mxu0 0.0
    %v11307 = vand.u32 %v1370, 4294901760
    %v11308 = vsub.f32 %v1370, %v11307
    %11309 = vmatpush1.msra.mxu0 %v11308
    %11310 = vmatprep.subr.mxu0 0.0
    %v11311 = vand.u32 %v1371, 4294901760
    %v11312 = vsub.f32 %v1371, %v11311
    %11313 = vmatpush1.msra.mxu0 %v11312
    %11314 = vmatprep.subr.mxu0 0.0
    %v11315 = vand.u32 %v1372, 4294901760
    %v11316 = vsub.f32 %v1372, %v11315
    %11317 = vmatpush1.msra.mxu0 %v11316
    %11318 = vmatprep.subr.mxu0 0.0
    %v11319 = vand.u32 %v1373, 4294901760
    %v11320 = vsub.f32 %v1373, %v11319
    %11321 = vmatpush1.msra.mxu0 %v11320
    %11322 = vmatprep.subr.mxu0 0.0
    %v11323 = vand.u32 %v1374, 4294901760
    %v11324 = vsub.f32 %v1374, %v11323
    %11325 = vmatpush1.msra.mxu0 %v11324
    %11326 = vmatprep.subr.mxu0 0.0
    %v11327 = vand.u32 %v1375, 4294901760
    %v11328 = vsub.f32 %v1375, %v11327
    %11329 = vmatpush1.msra.mxu0 %v11328
    %11330 = vmatprep.subr.mxu0 0.0
    %v11331 = vand.u32 %v1376, 4294901760
    %v11332 = vsub.f32 %v1376, %v11331
    %11333 = vmatpush1.msra.mxu0 %v11332
    %11334 = vmatprep.subr.mxu0 0.0
    %v11335 = vand.u32 %v1377, 4294901760
    %v11336 = vsub.f32 %v1377, %v11335
    %11337 = vmatpush1.msra.mxu0 %v11336
    %11338 = vmatprep.subr.mxu0 0.0
    %v11339 = vand.u32 %v1378, 4294901760
    %v11340 = vsub.f32 %v1378, %v11339
    %11341 = vmatpush1.msra.mxu0 %v11340
    %11342 = vmatprep.subr.mxu0 0.0
    %v11343 = vand.u32 %v1379, 4294901760
    %v11344 = vsub.f32 %v1379, %v11343
    %11345 = vmatpush1.msra.mxu0 %v11344
    %11346 = vmatprep.subr.mxu0 0.0
    %v11347 = vand.u32 %v1380, 4294901760
    %v11348 = vsub.f32 %v1380, %v11347
    %11349 = vmatpush1.msra.mxu0 %v11348
    %11350 = vmatprep.subr.mxu0 0.0
    %11351 = vmatpush1.msra.mxu0 0.0
    %11352 = vmatprep.subr.mxu0 0.0
    %11353 = vmatpush1.msra.mxu0 0.0
    %11354 = vmatprep.subr.mxu0 0.0
    %11355 = vmatpush1.msra.mxu0 0.0
    %11356 = vmatprep.subr.mxu0 0.0
    %11357 = vmatpush1.msra.mxu0 0.0
    %11358 = vmatprep.subr.mxu0 0.0
    %11359 = vmatpush1.msra.mxu0 0.0
    %11360 = vmatprep.subr.mxu0 0.0
    %11361 = vmatpush1.msra.mxu0 0.0
    %11362 = vmatprep.subr.mxu0 0.0
    %11363 = vmatpush1.msra.mxu0 0.0
    %11364 = vmatprep.subr.mxu0 0.0
    %11365 = vmatpush1.msra.mxu0 0.0
    %11366 = vmatprep.subr.mxu0 0.0
    %11367 = vmatpush1.msra.mxu0 0.0
    %11368 = vmatprep.subr.mxu0 0.0
    %11369 = vmatpush1.msra.mxu0 0.0
    %11370 = vmatprep.subr.mxu0 0.0
    %11371 = vmatpush1.msra.mxu0 0.0
    %11372 = vmatprep.subr.mxu0 0.0
    %11373 = vmatpush1.msra.mxu0 0.0
    %11374 = vmatprep.subr.mxu0 0.0
    %11375 = vmatpush1.msra.mxu0 0.0
    %11376 = vmatprep.subr.mxu0 0.0
    %11377 = vmatpush1.msra.mxu0 0.0
    %11378 = vmatprep.subr.mxu0 0.0
    %11379 = vmatpush1.msra.mxu0 0.0
    %11380 = vmatprep.subr.mxu0 0.0
    %11381 = vmatpush1.msra.mxu0 0.0
    %11382 = vmatprep.mubr.f32.mxu0 0.0
    %v11383 = vand.u32 %v11041, 4294901760
    %v11384 = vsub.f32 %v11041, %v11383
    %11385 = vmatmul.mubr.f32.gmra.mrb[0].mxu0 %v11384
    %v11386 = vpop.f32.mrb[0].mxu0
    %v11387 = vadd.f32 %v11283, %v11386
    %v11388 = vpop.f32.mrb[0].mxu0
    %11389 = vdwg.mxu0
    %11390 = vmatprep.subr.mxu0 0.0
    %v11391 = vand.u32 %v1365, 4294901760
    %11392 = vmatpush1.msra.mxu0 %v11391
    %11393 = vmatprep.subr.mxu0 0.0
    %v11394 = vand.u32 %v1366, 4294901760
    %11395 = vmatpush1.msra.mxu0 %v11394
    %11396 = vmatprep.subr.mxu0 0.0
    %v11397 = vand.u32 %v1367, 4294901760
    %11398 = vmatpush1.msra.mxu0 %v11397
    %11399 = vmatprep.subr.mxu0 0.0
    %v11400 = vand.u32 %v1368, 4294901760
    %11401 = vmatpush1.msra.mxu0 %v11400
    %11402 = vmatprep.subr.mxu0 0.0
    %v11403 = vand.u32 %v1369, 4294901760
    %11404 = vmatpush1.msra.mxu0 %v11403
    %11405 = vmatprep.subr.mxu0 0.0
    %v11406 = vand.u32 %v1370, 4294901760
    %11407 = vmatpush1.msra.mxu0 %v11406
    %11408 = vmatprep.subr.mxu0 0.0
    %v11409 = vand.u32 %v1371, 4294901760
    %11410 = vmatpush1.msra.mxu0 %v11409
    %11411 = vmatprep.subr.mxu0 0.0
    %v11412 = vand.u32 %v1372, 4294901760
    %11413 = vmatpush1.msra.mxu0 %v11412
    %11414 = vmatprep.subr.mxu0 0.0
    %v11415 = vand.u32 %v1373, 4294901760
    %11416 = vmatpush1.msra.mxu0 %v11415
    %11417 = vmatprep.subr.mxu0 0.0
    %v11418 = vand.u32 %v1374, 4294901760
    %11419 = vmatpush1.msra.mxu0 %v11418
    %11420 = vmatprep.subr.mxu0 0.0
    %v11421 = vand.u32 %v1375, 4294901760
    %11422 = vmatpush1.msra.mxu0 %v11421
    %11423 = vmatprep.subr.mxu0 0.0
    %v11424 = vand.u32 %v1376, 4294901760
    %11425 = vmatpush1.msra.mxu0 %v11424
    %11426 = vmatprep.subr.mxu0 0.0
    %v11427 = vand.u32 %v1377, 4294901760
    %11428 = vmatpush1.msra.mxu0 %v11427
    %11429 = vmatprep.subr.mxu0 0.0
    %v11430 = vand.u32 %v1378, 4294901760
    %11431 = vmatpush1.msra.mxu0 %v11430
    %11432 = vmatprep.subr.mxu0 0.0
    %v11433 = vand.u32 %v1379, 4294901760
    %11434 = vmatpush1.msra.mxu0 %v11433
    %11435 = vmatprep.subr.mxu0 0.0
    %v11436 = vand.u32 %v1380, 4294901760
    %11437 = vmatpush1.msra.mxu0 %v11436
    %11438 = vmatprep.subr.mxu0 0.0
    %11439 = vmatpush1.msra.mxu0 0.0
    %11440 = vmatprep.subr.mxu0 0.0
    %11441 = vmatpush1.msra.mxu0 0.0
    %11442 = vmatprep.subr.mxu0 0.0
    %11443 = vmatpush1.msra.mxu0 0.0
    %11444 = vmatprep.subr.mxu0 0.0
    %11445 = vmatpush1.msra.mxu0 0.0
    %11446 = vmatprep.subr.mxu0 0.0
    %11447 = vmatpush1.msra.mxu0 0.0
    %11448 = vmatprep.subr.mxu0 0.0
    %11449 = vmatpush1.msra.mxu0 0.0
    %11450 = vmatprep.subr.mxu0 0.0
    %11451 = vmatpush1.msra.mxu0 0.0
    %11452 = vmatprep.subr.mxu0 0.0
    %11453 = vmatpush1.msra.mxu0 0.0
    %11454 = vmatprep.subr.mxu0 0.0
    %11455 = vmatpush1.msra.mxu0 0.0
    %11456 = vmatprep.subr.mxu0 0.0
    %11457 = vmatpush1.msra.mxu0 0.0
    %11458 = vmatprep.subr.mxu0 0.0
    %11459 = vmatpush1.msra.mxu0 0.0
    %11460 = vmatprep.subr.mxu0 0.0
    %11461 = vmatpush1.msra.mxu0 0.0
    %11462 = vmatprep.subr.mxu0 0.0
    %11463 = vmatpush1.msra.mxu0 0.0
    %11464 = vmatprep.subr.mxu0 0.0
    %11465 = vmatpush1.msra.mxu0 0.0
    %11466 = vmatprep.subr.mxu0 0.0
    %11467 = vmatpush1.msra.mxu0 0.0
    %11468 = vmatprep.subr.mxu0 0.0
    %11469 = vmatpush1.msra.mxu0 0.0
    %11470 = vmatprep.mubr.f32.mxu0 0.0
    %v11471 = vand.u32 %v11041, 4294901760
    %v11472 = vsub.f32 %v11041, %v11471
    %v11473 = vand.u32 %v11472, 4294901760
    %11474 = vmatmul.mubr.f32.gmra.mrb[0].mxu0 %v11473
    %v11475 = vpop.f32.mrb[0].mxu0
    %v11476 = vadd.f32 %v11387, %v11475
    %v11477 = vpop.f32.mrb[0].mxu0
    %11478 = vdwg.mxu0
    %11479 = vmatprep.subr.mxu0 0.0
    %v11480 = vand.u32 %v1365, 4294901760
    %v11481 = vsub.f32 %v1365, %v11480
    %v11482 = vand.u32 %v11481, 4294901760
    %11483 = vmatpush1.msra.mxu0 %v11482
    %11484 = vmatprep.subr.mxu0 0.0
    %v11485 = vand.u32 %v1366, 4294901760
    %v11486 = vsub.f32 %v1366, %v11485
    %v11487 = vand.u32 %v11486, 4294901760
    %11488 = vmatpush1.msra.mxu0 %v11487
    %11489 = vmatprep.subr.mxu0 0.0
    %v11490 = vand.u32 %v1367, 4294901760
    %v11491 = vsub.f32 %v1367, %v11490
    %v11492 = vand.u32 %v11491, 4294901760
    %11493 = vmatpush1.msra.mxu0 %v11492
    %11494 = vmatprep.subr.mxu0 0.0
    %v11495 = vand.u32 %v1368, 4294901760
    %v11496 = vsub.f32 %v1368, %v11495
    %v11497 = vand.u32 %v11496, 4294901760
    %11498 = vmatpush1.msra.mxu0 %v11497
    %11499 = vmatprep.subr.mxu0 0.0
    %v11500 = vand.u32 %v1369, 4294901760
    %v11501 = vsub.f32 %v1369, %v11500
    %v11502 = vand.u32 %v11501, 4294901760
    %11503 = vmatpush1.msra.mxu0 %v11502
    %11504 = vmatprep.subr.mxu0 0.0
    %v11505 = vand.u32 %v1370, 4294901760
    %v11506 = vsub.f32 %v1370, %v11505
    %v11507 = vand.u32 %v11506, 4294901760
    %11508 = vmatpush1.msra.mxu0 %v11507
    %11509 = vmatprep.subr.mxu0 0.0
    %v11510 = vand.u32 %v1371, 4294901760
    %v11511 = vsub.f32 %v1371, %v11510
    %v11512 = vand.u32 %v11511, 4294901760
    %11513 = vmatpush1.msra.mxu0 %v11512
    %11514 = vmatprep.subr.mxu0 0.0
    %v11515 = vand.u32 %v1372, 4294901760
    %v11516 = vsub.f32 %v1372, %v11515
    %v11517 = vand.u32 %v11516, 4294901760
    %11518 = vmatpush1.msra.mxu0 %v11517
    %11519 = vmatprep.subr.mxu0 0.0
    %v11520 = vand.u32 %v1373, 4294901760
    %v11521 = vsub.f32 %v1373, %v11520
    %v11522 = vand.u32 %v11521, 4294901760
    %11523 = vmatpush1.msra.mxu0 %v11522
    %11524 = vmatprep.subr.mxu0 0.0
    %v11525 = vand.u32 %v1374, 4294901760
    %v11526 = vsub.f32 %v1374, %v11525
    %v11527 = vand.u32 %v11526, 4294901760
    %11528 = vmatpush1.msra.mxu0 %v11527
    %11529 = vmatprep.subr.mxu0 0.0
    %v11530 = vand.u32 %v1375, 4294901760
    %v11531 = vsub.f32 %v1375, %v11530
    %v11532 = vand.u32 %v11531, 4294901760
    %11533 = vmatpush1.msra.mxu0 %v11532
    %11534 = vmatprep.subr.mxu0 0.0
    %v11535 = vand.u32 %v1376, 4294901760
    %v11536 = vsub.f32 %v1376, %v11535
    %v11537 = vand.u32 %v11536, 4294901760
    %11538 = vmatpush1.msra.mxu0 %v11537
    %11539 = vmatprep.subr.mxu0 0.0
    %v11540 = vand.u32 %v1377, 4294901760
    %v11541 = vsub.f32 %v1377, %v11540
    %v11542 = vand.u32 %v11541, 4294901760
    %11543 = vmatpush1.msra.mxu0 %v11542
    %11544 = vmatprep.subr.mxu0 0.0
    %v11545 = vand.u32 %v1378, 4294901760
    %v11546 = vsub.f32 %v1378, %v11545
    %v11547 = vand.u32 %v11546, 4294901760
    %11548 = vmatpush1.msra.mxu0 %v11547
    %11549 = vmatprep.subr.mxu0 0.0
    %v11550 = vand.u32 %v1379, 4294901760
    %v11551 = vsub.f32 %v1379, %v11550
    %v11552 = vand.u32 %v11551, 4294901760
    %11553 = vmatpush1.msra.mxu0 %v11552
    %11554 = vmatprep.subr.mxu0 0.0
    %v11555 = vand.u32 %v1380, 4294901760
    %v11556 = vsub.f32 %v1380, %v11555
    %v11557 = vand.u32 %v11556, 4294901760
    %11558 = vmatpush1.msra.mxu0 %v11557
    %11559 = vmatprep.subr.mxu0 0.0
    %11560 = vmatpush1.msra.mxu0 0.0
    %11561 = vmatprep.subr.mxu0 0.0
    %11562 = vmatpush1.msra.mxu0 0.0
    %11563 = vmatprep.subr.mxu0 0.0
    %11564 = vmatpush1.msra.mxu0 0.0
    %11565 = vmatprep.subr.mxu0 0.0
    %11566 = vmatpush1.msra.mxu0 0.0
    %11567 = vmatprep.subr.mxu0 0.0
    %11568 = vmatpush1.msra.mxu0 0.0
    %11569 = vmatprep.subr.mxu0 0.0
    %11570 = vmatpush1.msra.mxu0 0.0
    %11571 = vmatprep.subr.mxu0 0.0
    %11572 = vmatpush1.msra.mxu0 0.0
    %11573 = vmatprep.subr.mxu0 0.0
    %11574 = vmatpush1.msra.mxu0 0.0
    %11575 = vmatprep.subr.mxu0 0.0
    %11576 = vmatpush1.msra.mxu0 0.0
    %11577 = vmatprep.subr.mxu0 0.0
    %11578 = vmatpush1.msra.mxu0 0.0
    %11579 = vmatprep.subr.mxu0 0.0
    %11580 = vmatpush1.msra.mxu0 0.0
    %11581 = vmatprep.subr.mxu0 0.0
    %11582 = vmatpush1.msra.mxu0 0.0
    %11583 = vmatprep.subr.mxu0 0.0
    %11584 = vmatpush1.msra.mxu0 0.0
    %11585 = vmatprep.subr.mxu0 0.0
    %11586 = vmatpush1.msra.mxu0 0.0
    %11587 = vmatprep.subr.mxu0 0.0
    %11588 = vmatpush1.msra.mxu0 0.0
    %11589 = vmatprep.subr.mxu0 0.0
    %11590 = vmatpush1.msra.mxu0 0.0
    %11591 = vmatprep.mubr.f32.mxu0 0.0
    %v11592 = vand.u32 %v11041, 4294901760
    %11593 = vmatmul.mubr.f32.gmra.mrb[0].mxu0 %v11592
    %v11594 = vpop.f32.mrb[0].mxu0
    %v11595 = vadd.f32 %v11476, %v11594
    %v11596 = vpop.f32.mrb[0].mxu0
    %11597 = vdwg.mxu0
    %11598 = vmatprep.subr.mxu0 0.0
    %v11599 = vand.u32 %v1365, 4294901760
    %11600 = vmatpush1.msra.mxu0 %v11599
    %11601 = vmatprep.subr.mxu0 0.0
    %v11602 = vand.u32 %v1366, 4294901760
    %11603 = vmatpush1.msra.mxu0 %v11602
    %11604 = vmatprep.subr.mxu0 0.0
    %v11605 = vand.u32 %v1367, 4294901760
    %11606 = vmatpush1.msra.mxu0 %v11605
    %11607 = vmatprep.subr.mxu0 0.0
    %v11608 = vand.u32 %v1368, 4294901760
    %11609 = vmatpush1.msra.mxu0 %v11608
    %11610 = vmatprep.subr.mxu0 0.0
    %v11611 = vand.u32 %v1369, 4294901760
    %11612 = vmatpush1.msra.mxu0 %v11611
    %11613 = vmatprep.subr.mxu0 0.0
    %v11614 = vand.u32 %v1370, 4294901760
    %11615 = vmatpush1.msra.mxu0 %v11614
    %11616 = vmatprep.subr.mxu0 0.0
    %v11617 = vand.u32 %v1371, 4294901760
    %11618 = vmatpush1.msra.mxu0 %v11617
    %11619 = vmatprep.subr.mxu0 0.0
    %v11620 = vand.u32 %v1372, 4294901760
    %11621 = vmatpush1.msra.mxu0 %v11620
    %11622 = vmatprep.subr.mxu0 0.0
    %v11623 = vand.u32 %v1373, 4294901760
    %11624 = vmatpush1.msra.mxu0 %v11623
    %11625 = vmatprep.subr.mxu0 0.0
    %v11626 = vand.u32 %v1374, 4294901760
    %11627 = vmatpush1.msra.mxu0 %v11626
    %11628 = vmatprep.subr.mxu0 0.0
    %v11629 = vand.u32 %v1375, 4294901760
    %11630 = vmatpush1.msra.mxu0 %v11629
    %11631 = vmatprep.subr.mxu0 0.0
    %v11632 = vand.u32 %v1376, 4294901760
    %11633 = vmatpush1.msra.mxu0 %v11632
    %11634 = vmatprep.subr.mxu0 0.0
    %v11635 = vand.u32 %v1377, 4294901760
    %11636 = vmatpush1.msra.mxu0 %v11635
    %11637 = vmatprep.subr.mxu0 0.0
    %v11638 = vand.u32 %v1378, 4294901760
    %11639 = vmatpush1.msra.mxu0 %v11638
    %11640 = vmatprep.subr.mxu0 0.0
    %v11641 = vand.u32 %v1379, 4294901760
    %11642 = vmatpush1.msra.mxu0 %v11641
    %11643 = vmatprep.subr.mxu0 0.0
    %v11644 = vand.u32 %v1380, 4294901760
    %11645 = vmatpush1.msra.mxu0 %v11644
    %11646 = vmatprep.subr.mxu0 0.0
    %11647 = vmatpush1.msra.mxu0 0.0
    %11648 = vmatprep.subr.mxu0 0.0
    %11649 = vmatpush1.msra.mxu0 0.0
    %11650 = vmatprep.subr.mxu0 0.0
    %11651 = vmatpush1.msra.mxu0 0.0
    %11652 = vmatprep.subr.mxu0 0.0
    %11653 = vmatpush1.msra.mxu0 0.0
    %11654 = vmatprep.subr.mxu0 0.0
    %11655 = vmatpush1.msra.mxu0 0.0
    %11656 = vmatprep.subr.mxu0 0.0
    %11657 = vmatpush1.msra.mxu0 0.0
    %11658 = vmatprep.subr.mxu0 0.0
    %11659 = vmatpush1.msra.mxu0 0.0
    %11660 = vmatprep.subr.mxu0 0.0
    %11661 = vmatpush1.msra.mxu0 0.0
    %11662 = vmatprep.subr.mxu0 0.0
    %11663 = vmatpush1.msra.mxu0 0.0
    %11664 = vmatprep.subr.mxu0 0.0
    %11665 = vmatpush1.msra.mxu0 0.0
    %11666 = vmatprep.subr.mxu0 0.0
    %11667 = vmatpush1.msra.mxu0 0.0
    %11668 = vmatprep.subr.mxu0 0.0
    %11669 = vmatpush1.msra.mxu0 0.0
    %11670 = vmatprep.subr.mxu0 0.0
    %11671 = vmatpush1.msra.mxu0 0.0
    %11672 = vmatprep.subr.mxu0 0.0
    %11673 = vmatpush1.msra.mxu0 0.0
    %11674 = vmatprep.subr.mxu0 0.0
    %11675 = vmatpush1.msra.mxu0 0.0
    %11676 = vmatprep.subr.mxu0 0.0
    %11677 = vmatpush1.msra.mxu0 0.0
    %11678 = vmatprep.mubr.f32.mxu0 0.0
    %v11679 = vand.u32 %v11041, 4294901760
    %11680 = vmatmul.mubr.f32.gmra.mrb[0].mxu0 %v11679
    %v11681 = vpop.f32.mrb[0].mxu0
    %v11682 = vadd.f32 %v11595, %v11681
    %v11683 = vpop.f32.mrb[0].mxu0
    %11684 = vdwg.mxu0
    %v11685 = vadd.f32 %v11043, %v11682
    %v11686 = vtanh.pop %v11685
    %v11687 = vld [vmem:[%s4] sm:$0xff]
    %v11688 = vld [vmem:[%s4 + $0x8] sm:$0xff]
    %v11689 = vld [vmem:[%s4 + $0x10] sm:$0xff]
    %v11690 = vld [vmem:[%s4 + $0x18] sm:$0xff]
    %v11691 = vld [vmem:[%s4 + $0x20] sm:$0xff]
    %v11692 = vld [vmem:[%s4 + $0x28] sm:$0xff]
    %v11693 = vld [vmem:[%s4 + $0x30] sm:$0xff]
    %v11694 = vld [vmem:[%s4 + $0x38] sm:$0xff]
    %v11695 = vld [vmem:[%s4 + $0x40] sm:$0xff]
    %v11696 = vld [vmem:[%s4 + $0x48] sm:$0xff]
    %v11697 = vld [vmem:[%s4 + $0x50] sm:$0xff]
    %v11698 = vld [vmem:[%s4 + $0x58] sm:$0xff]
    %v11699 = vld [vmem:[%s4 + $0x60] sm:$0xff]
    %v11700 = vld [vmem:[%s4 + $0x68] sm:$0xff]
    %v11701 = vld [vmem:[%s4 + $0x70] sm:$0xff]
    %v11702 = vld [vmem:[%s4 + $0x78] sm:$0xff]
    %v11703 = vld [vmem:[%s5] sm:$0x1]
    %v11705 = vlaneseq
    %v11706 = vshrl.u32 %v11705, 7
    %v11707 = vsub.s32 0, %v11706
    %v11708 = vrot.slane %v11703, %v11707
    %11710 = vmatprep.subr.mxu0 0.0
    %v11711 = vand.u32 %v11687, 4294901760
    %11712 = vmatpush1.msra.mxu0 %v11711
    %11713 = vmatprep.subr.mxu0 0.0
    %v11714 = vand.u32 %v11688, 4294901760
    %11715 = vmatpush1.msra.mxu0 %v11714
    %11716 = vmatprep.subr.mxu0 0.0
    %v11717 = vand.u32 %v11689, 4294901760
    %11718 = vmatpush1.msra.mxu0 %v11717
    %11719 = vmatprep.subr.mxu0 0.0
    %v11720 = vand.u32 %v11690, 4294901760
    %11721 = vmatpush1.msra.mxu0 %v11720
    %11722 = vmatprep.subr.mxu0 0.0
    %v11723 = vand.u32 %v11691, 4294901760
    %11724 = vmatpush1.msra.mxu0 %v11723
    %11725 = vmatprep.subr.mxu0 0.0
    %v11726 = vand.u32 %v11692, 4294901760
    %11727 = vmatpush1.msra.mxu0 %v11726
    %11728 = vmatprep.subr.mxu0 0.0
    %v11729 = vand.u32 %v11693, 4294901760
    %11730 = vmatpush1.msra.mxu0 %v11729
    %11731 = vmatprep.subr.mxu0 0.0
    %v11732 = vand.u32 %v11694, 4294901760
    %11733 = vmatpush1.msra.mxu0 %v11732
    %11734 = vmatprep.subr.mxu0 0.0
    %v11735 = vand.u32 %v11695, 4294901760
    %11736 = vmatpush1.msra.mxu0 %v11735
    %11737 = vmatprep.subr.mxu0 0.0
    %v11738 = vand.u32 %v11696, 4294901760
    %11739 = vmatpush1.msra.mxu0 %v11738
    %11740 = vmatprep.subr.mxu0 0.0
    %v11741 = vand.u32 %v11697, 4294901760
    %11742 = vmatpush1.msra.mxu0 %v11741
    %11743 = vmatprep.subr.mxu0 0.0
    %v11744 = vand.u32 %v11698, 4294901760
    %11745 = vmatpush1.msra.mxu0 %v11744
    %11746 = vmatprep.subr.mxu0 0.0
    %v11747 = vand.u32 %v11699, 4294901760
    %11748 = vmatpush1.msra.mxu0 %v11747
    %11749 = vmatprep.subr.mxu0 0.0
    %v11750 = vand.u32 %v11700, 4294901760
    %11751 = vmatpush1.msra.mxu0 %v11750
    %11752 = vmatprep.subr.mxu0 0.0
    %v11753 = vand.u32 %v11701, 4294901760
    %11754 = vmatpush1.msra.mxu0 %v11753
    %11755 = vmatprep.subr.mxu0 0.0
    %v11756 = vand.u32 %v11702, 4294901760
    %11757 = vmatpush1.msra.mxu0 %v11756
    %11758 = vmatprep.subr.mxu0 0.0
    %11759 = vmatpush1.msra.mxu0 0.0
    %11760 = vmatprep.subr.mxu0 0.0
    %11761 = vmatpush1.msra.mxu0 0.0
    %11762 = vmatprep.subr.mxu0 0.0
    %11763 = vmatpush1.msra.mxu0 0.0
    %11764 = vmatprep.subr.mxu0 0.0
    %11765 = vmatpush1.msra.mxu0 0.0
    %11766 = vmatprep.subr.mxu0 0.0
    %11767 = vmatpush1.msra.mxu0 0.0
    %11768 = vmatprep.subr.mxu0 0.0
    %11769 = vmatpush1.msra.mxu0 0.0
    %11770 = vmatprep.subr.mxu0 0.0
    %11771 = vmatpush1.msra.mxu0 0.0
    %11772 = vmatprep.subr.mxu0 0.0
    %11773 = vmatpush1.msra.mxu0 0.0
    %11774 = vmatprep.subr.mxu0 0.0
    %11775 = vmatpush1.msra.mxu0 0.0
    %11776 = vmatprep.subr.mxu0 0.0
    %11777 = vmatpush1.msra.mxu0 0.0
    %11778 = vmatprep.subr.mxu0 0.0
    %11779 = vmatpush1.msra.mxu0 0.0
    %11780 = vmatprep.subr.mxu0 0.0
    %11781 = vmatpush1.msra.mxu0 0.0
    %11782 = vmatprep.subr.mxu0 0.0
    %11783 = vmatpush1.msra.mxu0 0.0
    %11784 = vmatprep.subr.mxu0 0.0
    %11785 = vmatpush1.msra.mxu0 0.0
    %11786 = vmatprep.subr.mxu0 0.0
    %11787 = vmatpush1.msra.mxu0 0.0
    %11788 = vmatprep.subr.mxu0 0.0
    %11789 = vmatpush1.msra.mxu0 0.0
    %11790 = vmatprep.mubr.f32.mxu0 0.0
    %v11791 = vand.u32 %v11686, 4294901760
    %v11792 = vsub.f32 %v11686, %v11791
    %v11793 = vand.u32 %v11792, 4294901760
    %v11794 = vsub.f32 %v11792, %v11793
    %v11795 = vand.u32 %v11794, 4294901760
    %11796 = vmatmul.mubr.f32.gmra.mrb[0].mxu0 %v11795
    %v11797 = vpop.f32.mrb[0].mxu0
    %v11798 = vadd.f32 %v11708, %v11797
    %v11799 = vpop.f32.mrb[0].mxu0
    %11800 = vdwg.mxu0
    %11801 = vmatprep.subr.mxu0 0.0
    %v11802 = vand.u32 %v11687, 4294901760
    %v11803 = vsub.f32 %v11687, %v11802
    %v11804 = vand.u32 %v11803, 4294901760
    %v11805 = vsub.f32 %v11803, %v11804
    %v11806 = vand.u32 %v11805, 4294901760
    %11807 = vmatpush1.msra.mxu0 %v11806
    %11808 = vmatprep.subr.mxu0 0.0
    %v11809 = vand.u32 %v11688, 4294901760
    %v11810 = vsub.f32 %v11688, %v11809
    %v11811 = vand.u32 %v11810, 4294901760
    %v11812 = vsub.f32 %v11810, %v11811
    %v11813 = vand.u32 %v11812, 4294901760
    %11814 = vmatpush1.msra.mxu0 %v11813
    %11815 = vmatprep.subr.mxu0 0.0
    %v11816 = vand.u32 %v11689, 4294901760
    %v11817 = vsub.f32 %v11689, %v11816
    %v11818 = vand.u32 %v11817, 4294901760
    %v11819 = vsub.f32 %v11817, %v11818
    %v11820 = vand.u32 %v11819, 4294901760
    %11821 = vmatpush1.msra.mxu0 %v11820
    %11822 = vmatprep.subr.mxu0 0.0
    %v11823 = vand.u32 %v11690, 4294901760
    %v11824 = vsub.f32 %v11690, %v11823
    %v11825 = vand.u32 %v11824, 4294901760
    %v11826 = vsub.f32 %v11824, %v11825
    %v11827 = vand.u32 %v11826, 4294901760
    %11828 = vmatpush1.msra.mxu0 %v11827
    %11829 = vmatprep.subr.mxu0 0.0
    %v11830 = vand.u32 %v11691, 4294901760
    %v11831 = vsub.f32 %v11691, %v11830
    %v11832 = vand.u32 %v11831, 4294901760
    %v11833 = vsub.f32 %v11831, %v11832
    %v11834 = vand.u32 %v11833, 4294901760
    %11835 = vmatpush1.msra.mxu0 %v11834
    %11836 = vmatprep.subr.mxu0 0.0
    %v11837 = vand.u32 %v11692, 4294901760
    %v11838 = vsub.f32 %v11692, %v11837
    %v11839 = vand.u32 %v11838, 4294901760
    %v11840 = vsub.f32 %v11838, %v11839
    %v11841 = vand.u32 %v11840, 4294901760
    %11842 = vmatpush1.msra.mxu0 %v11841
    %11843 = vmatprep.subr.mxu0 0.0
    %v11844 = vand.u32 %v11693, 4294901760
    %v11845 = vsub.f32 %v11693, %v11844
    %v11846 = vand.u32 %v11845, 4294901760
    %v11847 = vsub.f32 %v11845, %v11846
    %v11848 = vand.u32 %v11847, 4294901760
    %11849 = vmatpush1.msra.mxu0 %v11848
    %11850 = vmatprep.subr.mxu0 0.0
    %v11851 = vand.u32 %v11694, 4294901760
    %v11852 = vsub.f32 %v11694, %v11851
    %v11853 = vand.u32 %v11852, 4294901760
    %v11854 = vsub.f32 %v11852, %v11853
    %v11855 = vand.u32 %v11854, 4294901760
    %11856 = vmatpush1.msra.mxu0 %v11855
    %11857 = vmatprep.subr.mxu0 0.0
    %v11858 = vand.u32 %v11695, 4294901760
    %v11859 = vsub.f32 %v11695, %v11858
    %v11860 = vand.u32 %v11859, 4294901760
    %v11861 = vsub.f32 %v11859, %v11860
    %v11862 = vand.u32 %v11861, 4294901760
    %11863 = vmatpush1.msra.mxu0 %v11862
    %11864 = vmatprep.subr.mxu0 0.0
    %v11865 = vand.u32 %v11696, 4294901760
    %v11866 = vsub.f32 %v11696, %v11865
    %v11867 = vand.u32 %v11866, 4294901760
    %v11868 = vsub.f32 %v11866, %v11867
    %v11869 = vand.u32 %v11868, 4294901760
    %11870 = vmatpush1.msra.mxu0 %v11869
    %11871 = vmatprep.subr.mxu0 0.0
    %v11872 = vand.u32 %v11697, 4294901760
    %v11873 = vsub.f32 %v11697, %v11872
    %v11874 = vand.u32 %v11873, 4294901760
    %v11875 = vsub.f32 %v11873, %v11874
    %v11876 = vand.u32 %v11875, 4294901760
    %11877 = vmatpush1.msra.mxu0 %v11876
    %11878 = vmatprep.subr.mxu0 0.0
    %v11879 = vand.u32 %v11698, 4294901760
    %v11880 = vsub.f32 %v11698, %v11879
    %v11881 = vand.u32 %v11880, 4294901760
    %v11882 = vsub.f32 %v11880, %v11881
    %v11883 = vand.u32 %v11882, 4294901760
    %11884 = vmatpush1.msra.mxu0 %v11883
    %11885 = vmatprep.subr.mxu0 0.0
    %v11886 = vand.u32 %v11699, 4294901760
    %v11887 = vsub.f32 %v11699, %v11886
    %v11888 = vand.u32 %v11887, 4294901760
    %v11889 = vsub.f32 %v11887, %v11888
    %v11890 = vand.u32 %v11889, 4294901760
    %11891 = vmatpush1.msra.mxu0 %v11890
    %11892 = vmatprep.subr.mxu0 0.0
    %v11893 = vand.u32 %v11700, 4294901760
    %v11894 = vsub.f32 %v11700, %v11893
    %v11895 = vand.u32 %v11894, 4294901760
    %v11896 = vsub.f32 %v11894, %v11895
    %v11897 = vand.u32 %v11896, 4294901760
    %11898 = vmatpush1.msra.mxu0 %v11897
    %11899 = vmatprep.subr.mxu0 0.0
    %v11900 = vand.u32 %v11701, 4294901760
    %v11901 = vsub.f32 %v11701, %v11900
    %v11902 = vand.u32 %v11901, 4294901760
    %v11903 = vsub.f32 %v11901, %v11902
    %v11904 = vand.u32 %v11903, 4294901760
    %11905 = vmatpush1.msra.mxu0 %v11904
    %11906 = vmatprep.subr.mxu0 0.0
    %v11907 = vand.u32 %v11702, 4294901760
    %v11908 = vsub.f32 %v11702, %v11907
    %v11909 = vand.u32 %v11908, 4294901760
    %v11910 = vsub.f32 %v11908, %v11909
    %v11911 = vand.u32 %v11910, 4294901760
    %11912 = vmatpush1.msra.mxu0 %v11911
    %11913 = vmatprep.subr.mxu0 0.0
    %11914 = vmatpush1.msra.mxu0 0.0
    %11915 = vmatprep.subr.mxu0 0.0
    %11916 = vmatpush1.msra.mxu0 0.0
    %11917 = vmatprep.subr.mxu0 0.0
    %11918 = vmatpush1.msra.mxu0 0.0
    %11919 = vmatprep.subr.mxu0 0.0
    %11920 = vmatpush1.msra.mxu0 0.0
    %11921 = vmatprep.subr.mxu0 0.0
    %11922 = vmatpush1.msra.mxu0 0.0
    %11923 = vmatprep.subr.mxu0 0.0
    %11924 = vmatpush1.msra.mxu0 0.0
    %11925 = vmatprep.subr.mxu0 0.0
    %11926 = vmatpush1.msra.mxu0 0.0
    %11927 = vmatprep.subr.mxu0 0.0
    %11928 = vmatpush1.msra.mxu0 0.0
    %11929 = vmatprep.subr.mxu0 0.0
    %11930 = vmatpush1.msra.mxu0 0.0
    %11931 = vmatprep.subr.mxu0 0.0
    %11932 = vmatpush1.msra.mxu0 0.0
    %11933 = vmatprep.subr.mxu0 0.0
    %11934 = vmatpush1.msra.mxu0 0.0
    %11935 = vmatprep.subr.mxu0 0.0
    %11936 = vmatpush1.msra.mxu0 0.0
    %11937 = vmatprep.subr.mxu0 0.0
    %11938 = vmatpush1.msra.mxu0 0.0
    %11939 = vmatprep.subr.mxu0 0.0
    %11940 = vmatpush1.msra.mxu0 0.0
    %11941 = vmatprep.subr.mxu0 0.0
    %11942 = vmatpush1.msra.mxu0 0.0
    %11943 = vmatprep.subr.mxu0 0.0
    %11944 = vmatpush1.msra.mxu0 0.0
    %11945 = vmatprep.mubr.f32.mxu0 0.0
    %v11946 = vand.u32 %v11686, 4294901760
    %11947 = vmatmul.mubr.f32.gmra.mrb[0].mxu0 %v11946
    %v11948 = vpop.f32.mrb[0].mxu0
    %v11949 = vadd.f32 %v11798, %v11948
    %v11950 = vpop.f32.mrb[0].mxu0
    %11951 = vdwg.mxu0
    %11952 = vmatprep.subr.mxu0 0.0
    %v11953 = vand.u32 %v11687, 4294901760
    %v11954 = vsub.f32 %v11687, %v11953
    %11955 = vmatpush1.msra.mxu0 %v11954
    %11956 = vmatprep.subr.mxu0 0.0
    %v11957 = vand.u32 %v11688, 4294901760
    %v11958 = vsub.f32 %v11688, %v11957
    %11959 = vmatpush1.msra.mxu0 %v11958
    %11960 = vmatprep.subr.mxu0 0.0
    %v11961 = vand.u32 %v11689, 4294901760
    %v11962 = vsub.f32 %v11689, %v11961
    %11963 = vmatpush1.msra.mxu0 %v11962
    %11964 = vmatprep.subr.mxu0 0.0
    %v11965 = vand.u32 %v11690, 4294901760
    %v11966 = vsub.f32 %v11690, %v11965
    %11967 = vmatpush1.msra.mxu0 %v11966
    %11968 = vmatprep.subr.mxu0 0.0
    %v11969 = vand.u32 %v11691, 4294901760
    %v11970 = vsub.f32 %v11691, %v11969
    %11971 = vmatpush1.msra.mxu0 %v11970
    %11972 = vmatprep.subr.mxu0 0.0
    %v11973 = vand.u32 %v11692, 4294901760
    %v11974 = vsub.f32 %v11692, %v11973
    %11975 = vmatpush1.msra.mxu0 %v11974
    %11976 = vmatprep.subr.mxu0 0.0
    %v11977 = vand.u32 %v11693, 4294901760
    %v11978 = vsub.f32 %v11693, %v11977
    %11979 = vmatpush1.msra.mxu0 %v11978
    %11980 = vmatprep.subr.mxu0 0.0
    %v11981 = vand.u32 %v11694, 4294901760
    %v11982 = vsub.f32 %v11694, %v11981
    %11983 = vmatpush1.msra.mxu0 %v11982
    %11984 = vmatprep.subr.mxu0 0.0
    %v11985 = vand.u32 %v11695, 4294901760
    %v11986 = vsub.f32 %v11695, %v11985
    %11987 = vmatpush1.msra.mxu0 %v11986
    %11988 = vmatprep.subr.mxu0 0.0
    %v11989 = vand.u32 %v11696, 4294901760
    %v11990 = vsub.f32 %v11696, %v11989
    %11991 = vmatpush1.msra.mxu0 %v11990
    %11992 = vmatprep.subr.mxu0 0.0
    %v11993 = vand.u32 %v11697, 4294901760
    %v11994 = vsub.f32 %v11697, %v11993
    %11995 = vmatpush1.msra.mxu0 %v11994
    %11996 = vmatprep.subr.mxu0 0.0
    %v11997 = vand.u32 %v11698, 4294901760
    %v11998 = vsub.f32 %v11698, %v11997
    %11999 = vmatpush1.msra.mxu0 %v11998
    %12000 = vmatprep.subr.mxu0 0.0
    %v12001 = vand.u32 %v11699, 4294901760
    %v12002 = vsub.f32 %v11699, %v12001
    %12003 = vmatpush1.msra.mxu0 %v12002
    %12004 = vmatprep.subr.mxu0 0.0
    %v12005 = vand.u32 %v11700, 4294901760
    %v12006 = vsub.f32 %v11700, %v12005
    %12007 = vmatpush1.msra.mxu0 %v12006
    %12008 = vmatprep.subr.mxu0 0.0
    %v12009 = vand.u32 %v11701, 4294901760
    %v12010 = vsub.f32 %v11701, %v12009
    %12011 = vmatpush1.msra.mxu0 %v12010
    %12012 = vmatprep.subr.mxu0 0.0
    %v12013 = vand.u32 %v11702, 4294901760
    %v12014 = vsub.f32 %v11702, %v12013
    %12015 = vmatpush1.msra.mxu0 %v12014
    %12016 = vmatprep.subr.mxu0 0.0
    %12017 = vmatpush1.msra.mxu0 0.0
    %12018 = vmatprep.subr.mxu0 0.0
    %12019 = vmatpush1.msra.mxu0 0.0
    %12020 = vmatprep.subr.mxu0 0.0
    %12021 = vmatpush1.msra.mxu0 0.0
    %12022 = vmatprep.subr.mxu0 0.0
    %12023 = vmatpush1.msra.mxu0 0.0
    %12024 = vmatprep.subr.mxu0 0.0
    %12025 = vmatpush1.msra.mxu0 0.0
    %12026 = vmatprep.subr.mxu0 0.0
    %12027 = vmatpush1.msra.mxu0 0.0
    %12028 = vmatprep.subr.mxu0 0.0
    %12029 = vmatpush1.msra.mxu0 0.0
    %12030 = vmatprep.subr.mxu0 0.0
    %12031 = vmatpush1.msra.mxu0 0.0
    %12032 = vmatprep.subr.mxu0 0.0
    %12033 = vmatpush1.msra.mxu0 0.0
    %12034 = vmatprep.subr.mxu0 0.0
    %12035 = vmatpush1.msra.mxu0 0.0
    %12036 = vmatprep.subr.mxu0 0.0
    %12037 = vmatpush1.msra.mxu0 0.0
    %12038 = vmatprep.subr.mxu0 0.0
    %12039 = vmatpush1.msra.mxu0 0.0
    %12040 = vmatprep.subr.mxu0 0.0
    %12041 = vmatpush1.msra.mxu0 0.0
    %12042 = vmatprep.subr.mxu0 0.0
    %12043 = vmatpush1.msra.mxu0 0.0
    %12044 = vmatprep.subr.mxu0 0.0
    %12045 = vmatpush1.msra.mxu0 0.0
    %12046 = vmatprep.subr.mxu0 0.0
    %12047 = vmatpush1.msra.mxu0 0.0
    %12048 = vmatprep.mubr.f32.mxu0 0.0
    %v12049 = vand.u32 %v11686, 4294901760
    %v12050 = vsub.f32 %v11686, %v12049
    %12051 = vmatmul.mubr.f32.gmra.mrb[0].mxu0 %v12050
    %v12052 = vpop.f32.mrb[0].mxu0
    %v12053 = vadd.f32 %v11949, %v12052
    %v12054 = vpop.f32.mrb[0].mxu0
    %12055 = vdwg.mxu0
    %12056 = vmatprep.subr.mxu0 0.0
    %v12057 = vand.u32 %v11687, 4294901760
    %12058 = vmatpush1.msra.mxu0 %v12057
    %12059 = vmatprep.subr.mxu0 0.0
    %v12060 = vand.u32 %v11688, 4294901760
    %12061 = vmatpush1.msra.mxu0 %v12060
    %12062 = vmatprep.subr.mxu0 0.0
    %v12063 = vand.u32 %v11689, 4294901760
    %12064 = vmatpush1.msra.mxu0 %v12063
    %12065 = vmatprep.subr.mxu0 0.0
    %v12066 = vand.u32 %v11690, 4294901760
    %12067 = vmatpush1.msra.mxu0 %v12066
    %12068 = vmatprep.subr.mxu0 0.0
    %v12069 = vand.u32 %v11691, 4294901760
    %12070 = vmatpush1.msra.mxu0 %v12069
    %12071 = vmatprep.subr.mxu0 0.0
    %v12072 = vand.u32 %v11692, 4294901760
    %12073 = vmatpush1.msra.mxu0 %v12072
    %12074 = vmatprep.subr.mxu0 0.0
    %v12075 = vand.u32 %v11693, 4294901760
    %12076 = vmatpush1.msra.mxu0 %v12075
    %12077 = vmatprep.subr.mxu0 0.0
    %v12078 = vand.u32 %v11694, 4294901760
    %12079 = vmatpush1.msra.mxu0 %v12078
    %12080 = vmatprep.subr.mxu0 0.0
    %v12081 = vand.u32 %v11695, 4294901760
    %12082 = vmatpush1.msra.mxu0 %v12081
    %12083 = vmatprep.subr.mxu0 0.0
    %v12084 = vand.u32 %v11696, 4294901760
    %12085 = vmatpush1.msra.mxu0 %v12084
    %12086 = vmatprep.subr.mxu0 0.0
    %v12087 = vand.u32 %v11697, 4294901760
    %12088 = vmatpush1.msra.mxu0 %v12087
    %12089 = vmatprep.subr.mxu0 0.0
    %v12090 = vand.u32 %v11698, 4294901760
    %12091 = vmatpush1.msra.mxu0 %v12090
    %12092 = vmatprep.subr.mxu0 0.0
    %v12093 = vand.u32 %v11699, 4294901760
    %12094 = vmatpush1.msra.mxu0 %v12093
    %12095 = vmatprep.subr.mxu0 0.0
    %v12096 = vand.u32 %v11700, 4294901760
    %12097 = vmatpush1.msra.mxu0 %v12096
    %12098 = vmatprep.subr.mxu0 0.0
    %v12099 = vand.u32 %v11701, 4294901760
    %12100 = vmatpush1.msra.mxu0 %v12099
    %12101 = vmatprep.subr.mxu0 0.0
    %v12102 = vand.u32 %v11702, 4294901760
    %12103 = vmatpush1.msra.mxu0 %v12102
    %12104 = vmatprep.subr.mxu0 0.0
    %12105 = vmatpush1.msra.mxu0 0.0
    %12106 = vmatprep.subr.mxu0 0.0
    %12107 = vmatpush1.msra.mxu0 0.0
    %12108 = vmatprep.subr.mxu0 0.0
    %12109 = vmatpush1.msra.mxu0 0.0
    %12110 = vmatprep.subr.mxu0 0.0
    %12111 = vmatpush1.msra.mxu0 0.0
    %12112 = vmatprep.subr.mxu0 0.0
    %12113 = vmatpush1.msra.mxu0 0.0
    %12114 = vmatprep.subr.mxu0 0.0
    %12115 = vmatpush1.msra.mxu0 0.0
    %12116 = vmatprep.subr.mxu0 0.0
    %12117 = vmatpush1.msra.mxu0 0.0
    %12118 = vmatprep.subr.mxu0 0.0
    %12119 = vmatpush1.msra.mxu0 0.0
    %12120 = vmatprep.subr.mxu0 0.0
    %12121 = vmatpush1.msra.mxu0 0.0
    %12122 = vmatprep.subr.mxu0 0.0
    %12123 = vmatpush1.msra.mxu0 0.0
    %12124 = vmatprep.subr.mxu0 0.0
    %12125 = vmatpush1.msra.mxu0 0.0
    %12126 = vmatprep.subr.mxu0 0.0
    %12127 = vmatpush1.msra.mxu0 0.0
    %12128 = vmatprep.subr.mxu0 0.0
    %12129 = vmatpush1.msra.mxu0 0.0
    %12130 = vmatprep.subr.mxu0 0.0
    %12131 = vmatpush1.msra.mxu0 0.0
    %12132 = vmatprep.subr.mxu0 0.0
    %12133 = vmatpush1.msra.mxu0 0.0
    %12134 = vmatprep.subr.mxu0 0.0
    %12135 = vmatpush1.msra.mxu0 0.0
    %12136 = vmatprep.mubr.f32.mxu0 0.0
    %v12137 = vand.u32 %v11686, 4294901760
    %v12138 = vsub.f32 %v11686, %v12137
    %v12139 = vand.u32 %v12138, 4294901760
    %12140 = vmatmul.mubr.f32.gmra.mrb[0].mxu0 %v12139
    %v12141 = vpop.f32.mrb[0].mxu0
    %v12142 = vadd.f32 %v12053, %v12141
    %v12143 = vpop.f32.mrb[0].mxu0
    %12144 = vdwg.mxu0
    %12145 = vmatprep.subr.mxu0 0.0
    %v12146 = vand.u32 %v11687, 4294901760
    %v12147 = vsub.f32 %v11687, %v12146
    %v12148 = vand.u32 %v12147, 4294901760
    %12149 = vmatpush1.msra.mxu0 %v12148
    %12150 = vmatprep.subr.mxu0 0.0
    %v12151 = vand.u32 %v11688, 4294901760
    %v12152 = vsub.f32 %v11688, %v12151
    %v12153 = vand.u32 %v12152, 4294901760
    %12154 = vmatpush1.msra.mxu0 %v12153
    %12155 = vmatprep.subr.mxu0 0.0
    %v12156 = vand.u32 %v11689, 4294901760
    %v12157 = vsub.f32 %v11689, %v12156
    %v12158 = vand.u32 %v12157, 4294901760
    %12159 = vmatpush1.msra.mxu0 %v12158
    %12160 = vmatprep.subr.mxu0 0.0
    %v12161 = vand.u32 %v11690, 4294901760
    %v12162 = vsub.f32 %v11690, %v12161
    %v12163 = vand.u32 %v12162, 4294901760
    %12164 = vmatpush1.msra.mxu0 %v12163
    %12165 = vmatprep.subr.mxu0 0.0
    %v12166 = vand.u32 %v11691, 4294901760
    %v12167 = vsub.f32 %v11691, %v12166
    %v12168 = vand.u32 %v12167, 4294901760
    %12169 = vmatpush1.msra.mxu0 %v12168
    %12170 = vmatprep.subr.mxu0 0.0
    %v12171 = vand.u32 %v11692, 4294901760
    %v12172 = vsub.f32 %v11692, %v12171
    %v12173 = vand.u32 %v12172, 4294901760
    %12174 = vmatpush1.msra.mxu0 %v12173
    %12175 = vmatprep.subr.mxu0 0.0
    %v12176 = vand.u32 %v11693, 4294901760
    %v12177 = vsub.f32 %v11693, %v12176
    %v12178 = vand.u32 %v12177, 4294901760
    %12179 = vmatpush1.msra.mxu0 %v12178
    %12180 = vmatprep.subr.mxu0 0.0
    %v12181 = vand.u32 %v11694, 4294901760
    %v12182 = vsub.f32 %v11694, %v12181
    %v12183 = vand.u32 %v12182, 4294901760
    %12184 = vmatpush1.msra.mxu0 %v12183
    %12185 = vmatprep.subr.mxu0 0.0
    %v12186 = vand.u32 %v11695, 4294901760
    %v12187 = vsub.f32 %v11695, %v12186
    %v12188 = vand.u32 %v12187, 4294901760
    %12189 = vmatpush1.msra.mxu0 %v12188
    %12190 = vmatprep.subr.mxu0 0.0
    %v12191 = vand.u32 %v11696, 4294901760
    %v12192 = vsub.f32 %v11696, %v12191
    %v12193 = vand.u32 %v12192, 4294901760
    %12194 = vmatpush1.msra.mxu0 %v12193
    %12195 = vmatprep.subr.mxu0 0.0
    %v12196 = vand.u32 %v11697, 4294901760
    %v12197 = vsub.f32 %v11697, %v12196
    %v12198 = vand.u32 %v12197, 4294901760
    %12199 = vmatpush1.msra.mxu0 %v12198
    %12200 = vmatprep.subr.mxu0 0.0
    %v12201 = vand.u32 %v11698, 4294901760
    %v12202 = vsub.f32 %v11698, %v12201
    %v12203 = vand.u32 %v12202, 4294901760
    %12204 = vmatpush1.msra.mxu0 %v12203
    %12205 = vmatprep.subr.mxu0 0.0
    %v12206 = vand.u32 %v11699, 4294901760
    %v12207 = vsub.f32 %v11699, %v12206
    %v12208 = vand.u32 %v12207, 4294901760
    %12209 = vmatpush1.msra.mxu0 %v12208
    %12210 = vmatprep.subr.mxu0 0.0
    %v12211 = vand.u32 %v11700, 4294901760
    %v12212 = vsub.f32 %v11700, %v12211
    %v12213 = vand.u32 %v12212, 4294901760
    %12214 = vmatpush1.msra.mxu0 %v12213
    %12215 = vmatprep.subr.mxu0 0.0
    %v12216 = vand.u32 %v11701, 4294901760
    %v12217 = vsub.f32 %v11701, %v12216
    %v12218 = vand.u32 %v12217, 4294901760
    %12219 = vmatpush1.msra.mxu0 %v12218
    %12220 = vmatprep.subr.mxu0 0.0
    %v12221 = vand.u32 %v11702, 4294901760
    %v12222 = vsub.f32 %v11702, %v12221
    %v12223 = vand.u32 %v12222, 4294901760
    %12224 = vmatpush1.msra.mxu0 %v12223
    %12225 = vmatprep.subr.mxu0 0.0
    %12226 = vmatpush1.msra.mxu0 0.0
    %12227 = vmatprep.subr.mxu0 0.0
    %12228 = vmatpush1.msra.mxu0 0.0
    %12229 = vmatprep.subr.mxu0 0.0
    %12230 = vmatpush1.msra.mxu0 0.0
    %12231 = vmatprep.subr.mxu0 0.0
    %12232 = vmatpush1.msra.mxu0 0.0
    %12233 = vmatprep.subr.mxu0 0.0
    %12234 = vmatpush1.msra.mxu0 0.0
    %12235 = vmatprep.subr.mxu0 0.0
    %12236 = vmatpush1.msra.mxu0 0.0
    %12237 = vmatprep.subr.mxu0 0.0
    %12238 = vmatpush1.msra.mxu0 0.0
    %12239 = vmatprep.subr.mxu0 0.0
    %12240 = vmatpush1.msra.mxu0 0.0
    %12241 = vmatprep.subr.mxu0 0.0
    %12242 = vmatpush1.msra.mxu0 0.0
    %12243 = vmatprep.subr.mxu0 0.0
    %12244 = vmatpush1.msra.mxu0 0.0
    %12245 = vmatprep.subr.mxu0 0.0
    %12246 = vmatpush1.msra.mxu0 0.0
    %12247 = vmatprep.subr.mxu0 0.0
    %12248 = vmatpush1.msra.mxu0 0.0
    %12249 = vmatprep.subr.mxu0 0.0
    %12250 = vmatpush1.msra.mxu0 0.0
    %12251 = vmatprep.subr.mxu0 0.0
    %12252 = vmatpush1.msra.mxu0 0.0
    %12253 = vmatprep.subr.mxu0 0.0
    %12254 = vmatpush1.msra.mxu0 0.0
    %12255 = vmatprep.subr.mxu0 0.0
    %12256 = vmatpush1.msra.mxu0 0.0
    %12257 = vmatprep.mubr.f32.mxu0 0.0
    %v12258 = vand.u32 %v11686, 4294901760
    %12259 = vmatmul.mubr.f32.gmra.mrb[0].mxu0 %v12258
    %v12260 = vpop.f32.mrb[0].mxu0
    %v12261 = vadd.f32 %v12142, %v12260
    %v12262 = vpop.f32.mrb[0].mxu0
    %12263 = vdwg.mxu0
    %12264 = vmatprep.subr.mxu0 0.0
    %v12265 = vand.u32 %v11687, 4294901760
    %12266 = vmatpush1.msra.mxu0 %v12265
    %12267 = vmatprep.subr.mxu0 0.0
    %v12268 = vand.u32 %v11688, 4294901760
    %12269 = vmatpush1.msra.mxu0 %v12268
    %12270 = vmatprep.subr.mxu0 0.0
    %v12271 = vand.u32 %v11689, 4294901760
    %12272 = vmatpush1.msra.mxu0 %v12271
    %12273 = vmatprep.subr.mxu0 0.0
    %v12274 = vand.u32 %v11690, 4294901760
    %12275 = vmatpush1.msra.mxu0 %v12274
    %12276 = vmatprep.subr.mxu0 0.0
    %v12277 = vand.u32 %v11691, 4294901760
    %12278 = vmatpush1.msra.mxu0 %v12277
    %12279 = vmatprep.subr.mxu0 0.0
    %v12280 = vand.u32 %v11692, 4294901760
    %12281 = vmatpush1.msra.mxu0 %v12280
    %12282 = vmatprep.subr.mxu0 0.0
    %v12283 = vand.u32 %v11693, 4294901760
    %12284 = vmatpush1.msra.mxu0 %v12283
    %12285 = vmatprep.subr.mxu0 0.0
    %v12286 = vand.u32 %v11694, 4294901760
    %12287 = vmatpush1.msra.mxu0 %v12286
    %12288 = vmatprep.subr.mxu0 0.0
    %v12289 = vand.u32 %v11695, 4294901760
    %12290 = vmatpush1.msra.mxu0 %v12289
    %12291 = vmatprep.subr.mxu0 0.0
    %v12292 = vand.u32 %v11696, 4294901760
    %12293 = vmatpush1.msra.mxu0 %v12292
    %12294 = vmatprep.subr.mxu0 0.0
    %v12295 = vand.u32 %v11697, 4294901760
    %12296 = vmatpush1.msra.mxu0 %v12295
    %12297 = vmatprep.subr.mxu0 0.0
    %v12298 = vand.u32 %v11698, 4294901760
    %12299 = vmatpush1.msra.mxu0 %v12298
    %12300 = vmatprep.subr.mxu0 0.0
    %v12301 = vand.u32 %v11699, 4294901760
    %12302 = vmatpush1.msra.mxu0 %v12301
    %12303 = vmatprep.subr.mxu0 0.0
    %v12304 = vand.u32 %v11700, 4294901760
    %12305 = vmatpush1.msra.mxu0 %v12304
    %12306 = vmatprep.subr.mxu0 0.0
    %v12307 = vand.u32 %v11701, 4294901760
    %12308 = vmatpush1.msra.mxu0 %v12307
    %12309 = vmatprep.subr.mxu0 0.0
    %v12310 = vand.u32 %v11702, 4294901760
    %12311 = vmatpush1.msra.mxu0 %v12310
    %12312 = vmatprep.subr.mxu0 0.0
    %12313 = vmatpush1.msra.mxu0 0.0
    %12314 = vmatprep.subr.mxu0 0.0
    %12315 = vmatpush1.msra.mxu0 0.0
    %12316 = vmatprep.subr.mxu0 0.0
    %12317 = vmatpush1.msra.mxu0 0.0
    %12318 = vmatprep.subr.mxu0 0.0
    %12319 = vmatpush1.msra.mxu0 0.0
    %12320 = vmatprep.subr.mxu0 0.0
    %12321 = vmatpush1.msra.mxu0 0.0
    %12322 = vmatprep.subr.mxu0 0.0
    %12323 = vmatpush1.msra.mxu0 0.0
    %12324 = vmatprep.subr.mxu0 0.0
    %12325 = vmatpush1.msra.mxu0 0.0
    %12326 = vmatprep.subr.mxu0 0.0
    %12327 = vmatpush1.msra.mxu0 0.0
    %12328 = vmatprep.subr.mxu0 0.0
    %12329 = vmatpush1.msra.mxu0 0.0
    %12330 = vmatprep.subr.mxu0 0.0
    %12331 = vmatpush1.msra.mxu0 0.0
    %12332 = vmatprep.subr.mxu0 0.0
    %12333 = vmatpush1.msra.mxu0 0.0
    %12334 = vmatprep.subr.mxu0 0.0
    %12335 = vmatpush1.msra.mxu0 0.0
    %12336 = vmatprep.subr.mxu0 0.0
    %12337 = vmatpush1.msra.mxu0 0.0
    %12338 = vmatprep.subr.mxu0 0.0
    %12339 = vmatpush1.msra.mxu0 0.0
    %12340 = vmatprep.subr.mxu0 0.0
    %12341 = vmatpush1.msra.mxu0 0.0
    %12342 = vmatprep.subr.mxu0 0.0
    %12343 = vmatpush1.msra.mxu0 0.0
    %12344 = vmatprep.mubr.f32.mxu0 0.0
    %v12345 = vand.u32 %v11686, 4294901760
    %12346 = vmatmul.mubr.f32.gmra.mrb[0].mxu0 %v12345
    %v12347 = vpop.f32.mrb[0].mxu0
    %v12348 = vadd.f32 %v12261, %v12347
    %v12349 = vpop.f32.mrb[0].mxu0
    %12350 = vdwg.mxu0
    %12351 = vst [vmem:[#allocation3] sm:$0xff] %v12348
    // Predicated region
    $region26: #{image_rnn_forward.1} parent=1 // pred_check
      _
    $region27: #{image_rnn_forward.1} parent=1 // pred_check_branch
      %12353 = sbr.rel (0) target = $region29
    $region28: #{image_rnn_forward.1} parent=1 // pred_region
      %s12355 = ssub.s32 128, 128
      %12356 = vsyncadd [#allocation4], %s12355
      %s12358 = sshll.u32 [#allocation3], 4
      %s12359 = int_to_ptr.vmem [resolvable:$true] %s12358
      %12361 = dma.vmem_to_hbm [thread:$0]  %s12359, 128, %s6, [#allocation4]
    $region29: #{image_rnn_forward.1} parent=1 // pred_fallthru
      _
    // Predicated region
    $region30: #{image_rnn_forward.1} parent=1 // pred_check
      _
    $region31: #{image_rnn_forward.1} parent=1 // pred_check_branch
      %12363 = sbr.rel (0) target = $region33
    $region32: #{image_rnn_forward.1} parent=1 // pred_region
      %12364 = dma.done [#allocation4], 128
    $region33: #{image_rnn_forward.1} parent=1 // pred_fallthru
      _
    %12365 = vsyncpa [#allocation4], 1

</llo_original>
